<compile_context>
chip_gen: v7x
topology: tpu7x:2x2x1
jax: 0.10.0
libtpu: 0.0.40
codegen_flags: <defaults>
</compile_context>

<pallas_src>
import functools

import jax
import jax.numpy as jnp
from jax.experimental import pallas as pl
from jax.experimental.pallas import tpu as pltpu


def _round_up(x, m):
    return ((x + m - 1) // m) * m


def _pad_to(a, shape):
    pads = [(0, t - s) for s, t in zip(a.shape, shape)]
    return jnp.pad(a, pads)


def _default_num_shards():
    """One batch shard per TensorCore: 2 on v7x, 1 on v5e/v6e."""
    try:
        kind = jax.devices()[0].device_kind.lower()
    except Exception:
        return 1
    return 2 if "v7" in kind else 1


# ----------------------------------------------------------------------------
# Kernel: whole MLP fused; weights resident in VMEM, tiled only over batch.
# ----------------------------------------------------------------------------
def _autoencoder_kernel(x_ref, w_in_ref, w_mid_ref, w_out_ref,
                        b_hid_ref, b_out_ref, out_ref, *, n_hidden):
    cdt = w_in_ref.dtype                      # compute dtype (f32 or bf16)

    def sigmoid(z):
        # sigmoid via tanh: EUP op, keeps the VALU slot free.
        return 0.5 * jnp.tanh(0.5 * z) + 0.5

    # Layer 0 (encoder input layer): true-width K = space_dim.
    z = jnp.dot(x_ref[...], w_in_ref[...],
                preferred_element_type=jnp.float32) + b_hid_ref[0]
    h = sigmoid(z).astype(cdt)                # carry activation in cdt

    # Middle layers (encoder hidden tail + latent + decoder hidden): P_h wide.
    n_mid = 2 * n_hidden
    for j in range(n_mid):
        z = jnp.dot(h, w_mid_ref[j],
                    preferred_element_type=jnp.float32) + b_hid_ref[j + 1]
        if j == n_hidden - 1:                 # latent layer: no activation
            h = z.astype(cdt)
        else:
            h = sigmoid(z).astype(cdt)

    # Last layer (decoder output): true-width N = space_dim, stored unpadded.
    z = jnp.dot(h, w_out_ref[...],
                preferred_element_type=jnp.float32) + b_out_ref[...]
    out_ref[...] = z.astype(out_ref.dtype)


# ----------------------------------------------------------------------------
# One-time parameter packing (keep OUT of the per-call hot path).
# ----------------------------------------------------------------------------
def pack_autoencoder_params(params, n_hidden, *, compute_dtype=jnp.bfloat16):
    """params: list of (W[in, out], b[1, out]) for the 2*(n_hidden+1) Linear
    layers in forward order (weights already [in, out], i.e. torch W^T).

    Padded weight rows/cols and bias lanes are zero by construction; that
    zero-padding is required for correctness of the padded-lane scheme.
    """
    n_layers = len(params)
    assert n_hidden >= 1 and n_layers == 2 * (n_hidden + 1)
    space_dim = params[0][0].shape[0]
    assert params[-1][0].shape[1] == space_dim

    # Common padded width for hidden/latent dims only (NOT space_dim).
    hidden_dims = [w.shape[1] for w, _ in params[:-1]]
    p_h = _round_up(max(hidden_dims), 128)

    w_in = _pad_to(params[0][0], (space_dim, p_h)).astype(compute_dtype)
    w_mid = jnp.stack([_pad_to(w, (p_h, p_h)) for w, _ in params[1:-1]]
                      ).astype(compute_dtype)                 # [L-2, P_h, P_h]
    w_out = _pad_to(params[-1][0], (p_h, space_dim)).astype(compute_dtype)
    b_hid = jnp.stack([_pad_to(b, (1, p_h)) for _, b in params[:-1]]
                      ).astype(jnp.float32)                   # [L-1, 1, P_h]
    b_out = params[-1][1].astype(jnp.float32)                 # [1, space_dim]

    return dict(w_in=w_in, w_mid=w_mid, w_out=w_out,
                b_hid=b_hid, b_out=b_out)


# ----------------------------------------------------------------------------
# Forward wrapper (jit-friendly): pads only the batch, calls the kernel.
# ----------------------------------------------------------------------------
def autoencoder_forward(x, packed, *, n_hidden, layer_dims, num_shards=None):
    batch, space_dim = x.shape
    w_in, w_mid, w_out = packed["w_in"], packed["w_mid"], packed["w_out"]
    b_hid, b_out = packed["b_hid"], packed["b_out"]
    p_h = w_in.shape[1]
    n_mid = w_mid.shape[0]
    n_bias = b_hid.shape[0]
    assert n_mid == 2 * n_hidden and n_bias == 2 * n_hidden + 1

    if num_shards is None:
        num_shards = _default_num_shards()

    # One grid step per TensorCore shard (per-step overhead dominates here).
    if num_shards <= 1:
        batch_tile, b_pad, grid_steps = batch, batch, 1
    else:
        batch_tile = _round_up((batch + num_shards - 1) // num_shards, 8)
        b_pad = batch_tile * num_shards
        grid_steps = num_shards

    # Ship x in the compute dtype with its true lane width.
    x_in = x.astype(w_in.dtype)
    if b_pad != batch:
        x_in = jnp.pad(x_in, ((0, b_pad - batch), (0, 0)))

    # Advisory cost from true (unpadded) layer dims; param bytes = real DMA.
    true_flops = 2 * batch * sum(layer_dims[i] * layer_dims[i + 1]
                                 for i in range(len(layer_dims) - 1))
    act_idx = [i for i in range(len(layer_dims) - 1)
               if i != n_hidden and i != 2 * n_hidden + 1]
    true_trans = batch * sum(layer_dims[i + 1] for i in act_idx)
    param_bytes = sum(int(a.size) * a.dtype.itemsize
                      for a in (w_in, w_mid, w_out, b_hid, b_out))
    cost = pl.CostEstimate(
        flops=true_flops,
        transcendentals=true_trans,
        bytes_accessed=batch * space_dim * (x_in.dtype.itemsize + 4)
                       + param_bytes,
    )

    # NOTE: weight/bias index_maps are constant across the grid, so Pallas
    # only fetches them once; for very large space_dim consider
    # pipeline_mode=pl.Buffered(1) on these specs to drop the second buffer.
    y_pad = pl.pallas_call(
        functools.partial(_autoencoder_kernel, n_hidden=n_hidden),
        out_shape=jax.ShapeDtypeStruct((b_pad, space_dim), jnp.float32),
        grid_spec=pltpu.PrefetchScalarGridSpec(
            num_scalar_prefetch=0,
            grid=(grid_steps,),
            in_specs=[
                pl.BlockSpec((batch_tile, space_dim), lambda i: (i, 0)),   # x
                pl.BlockSpec((space_dim, p_h), lambda i: (0, 0)),          # w_in
                pl.BlockSpec((n_mid, p_h, p_h), lambda i: (0, 0, 0)),      # w_mid
                pl.BlockSpec((p_h, space_dim), lambda i: (0, 0)),          # w_out
                pl.BlockSpec((n_bias, 1, p_h), lambda i: (0, 0, 0)),       # b_hid
                pl.BlockSpec((1, space_dim), lambda i: (0, 0)),            # b_out
            ],
            out_specs=pl.BlockSpec((batch_tile, space_dim), lambda i: (i, 0)),
        ),
        compiler_params=pltpu.CompilerParams(
            dimension_semantics=(("parallel",) if grid_steps > 1
                                 else ("arbitrary",)),
            vmem_limit_bytes=32 * 1024 * 1024,   # safe on v5e/v6e/v7x
        ),
        cost_estimate=cost,
    )(x_in, w_in, w_mid, w_out, b_hid, b_out)

    return y_pad[:batch] if b_pad != batch else y_pad


# ----------------------------------------------------------------------------
# Deterministic parameter construction (mirrors the PyTorch module's shapes).
# Weights are stored as [in, out] (already transposed vs. torch's [out, in]).
# ----------------------------------------------------------------------------
def make_params(key, space_dim, hidden_units, n_z):
    enc_dims = [space_dim] + list(hidden_units) + [n_z]
    dec_dims = [n_z] + list(hidden_units[::-1]) + [space_dim]

    params = []
    for dims in (enc_dims, dec_dims):
        for i in range(len(dims) - 1):
            fan_in, fan_out = dims[i], dims[i + 1]
            key, kw, kb = jax.random.split(key, 3)
            bound = 1.0 / jnp.sqrt(fan_in)
            w = jax.random.uniform(kw, (fan_in, fan_out), jnp.float32,
                                   -bound, bound)
            b = jax.random.uniform(kb, (1, fan_out), jnp.float32,
                                   -bound, bound)
            params.append((w, b))
    return params


def reference_forward(x, params, n_hidden):
    """Plain-JAX reference matching the PyTorch forward semantics."""
    hi = jax.lax.Precision.HIGHEST
    h = x
    idx = 0
    for _ in range(n_hidden):                       # encoder hidden
        w, b = params[idx]; idx += 1
        h = jax.nn.sigmoid(jnp.dot(h, w, precision=hi) + b)
    w, b = params[idx]; idx += 1                    # latent (no activation)
    h = jnp.dot(h, w, precision=hi) + b
    for _ in range(n_hidden):                       # decoder hidden
        w, b = params[idx]; idx += 1
        h = jax.nn.sigmoid(jnp.dot(h, w, precision=hi) + b)
    w, b = params[idx]; idx += 1                    # output (no activation)
    return jnp.dot(h, w, precision=hi) + b


if __name__ == "__main__":
    # Shapes consistent with the module: 1D Burgers snapshots (space_dim
    # points) through an MLP autoencoder with 2 hidden layers per side.
    space_dim = 16
    hidden_units = [32, 16]
    n_z = 4
    n_hidden = len(hidden_units)
    batch = 1000            # not a multiple of the tile -> exercises padding

    key = jax.random.PRNGKey(0)
    key, kx = jax.random.split(key)
    x = jax.random.normal(kx, (batch, space_dim), jnp.float32)
    params = make_params(key, space_dim, hidden_units, n_z)

    layer_dims = tuple([space_dim] + hidden_units + [n_z]
                       + hidden_units[::-1] + [space_dim])
    num_shards = _default_num_shards()

    y_ref = reference_forward(x, params, n_hidden)

    # f32-operand path: tight correctness check.
    # (Mosaic may decompose f32 matmuls; 1e-4 tolerance covers that.)
    packed_f32 = pack_autoencoder_params(params, n_hidden,
                                         compute_dtype=jnp.float32)
    fwd_f32 = jax.jit(functools.partial(
        autoencoder_forward, n_hidden=n_hidden, layer_dims=layer_dims,
        num_shards=num_shards))
    y_f32 = jax.block_until_ready(fwd_f32(x, packed_f32))
    assert y_f32.shape == (batch, space_dim)
    assert jnp.allclose(y_f32, y_ref, atol=1e-4, rtol=1e-4), "f32 mismatch"

    # bf16-operand / f32-accumulate path (MXU-native on v6e/v7x): loose check.
    packed_bf16 = pack_autoencoder_params(params, n_hidden,
                                          compute_dtype=jnp.bfloat16)
    fwd_bf16 = jax.jit(functools.partial(
        autoencoder_forward, n_hidden=n_hidden, layer_dims=layer_dims,
        num_shards=num_shards))
    y_bf16 = jax.block_until_ready(fwd_bf16(x, packed_bf16))
    assert y_bf16.shape == (batch, space_dim)
    assert jnp.allclose(y_bf16, y_ref, atol=5e-2, rtol=5e-2), "bf16 mismatch"

    print("KERNEL_OK")
</pallas_src>

<mosaic_0001>
module attributes {stable_mosaic.version = 11 : i64} {
  func.func @_autoencoder_kernel(%arg0: i32, %arg1: memref<1000x16xf32, #tpu.memory_space<vmem>>, %arg2: memref<16x128xf32, #tpu.memory_space<vmem>>, %arg3: memref<4x128x128xf32, #tpu.memory_space<vmem>>, %arg4: memref<128x16xf32, #tpu.memory_space<vmem>>, %arg5: memref<5x1x128xf32, #tpu.memory_space<vmem>>, %arg6: memref<1x16xf32, #tpu.memory_space<vmem>>, %arg7: memref<1000x16xf32, #tpu.memory_space<vmem>>) attributes {dimension_semantics = [#tpu.dimension_semantics<arbitrary>], iteration_bounds = array<i64: 1>, scalar_prefetch = 0 : i64, scratch_operands = 0 : i64, tpu.core_type = #tpu.core_type<tc>, window_params = [{transform_indices = @transform_0, window_bounds = array<i64: 1000, 16>}, {pipeline_mode = #tpu.pipeline_mode<synchronous>, transform_indices = @transform_1, window_bounds = array<i64: 16, 128>}, {pipeline_mode = #tpu.pipeline_mode<synchronous>, transform_indices = @transform_2, window_bounds = array<i64: 4, 128, 128>}, {pipeline_mode = #tpu.pipeline_mode<synchronous>, transform_indices = @transform_3, window_bounds = array<i64: 128, 16>}, {pipeline_mode = #tpu.pipeline_mode<synchronous>, transform_indices = @transform_4, window_bounds = array<i64: 5, 1, 128>}, {pipeline_mode = #tpu.pipeline_mode<synchronous>, transform_indices = @transform_5, window_bounds = array<i64: 1, 16>}, {transform_indices = @transform_6, window_bounds = array<i64: 1000, 16>}]} {
    %c0 = arith.constant 0 : index
    %c0_0 = arith.constant 0 : index
    %0 = vector.load %arg1[%c0, %c0_0] : memref<1000x16xf32, #tpu.memory_space<vmem>>, vector<1000x16xf32>
    %c0_1 = arith.constant 0 : index
    %c0_2 = arith.constant 0 : index
    %1 = vector.load %arg2[%c0_1, %c0_2] : memref<16x128xf32, #tpu.memory_space<vmem>>, vector<16x128xf32>
    %cst = arith.constant dense<0.000000e+00> : vector<1000x128xf32>
    %2 = tpu.matmul %0, %1, %cst {dimension_numbers = #tpu.dot_dimension_numbers<[1], [0], [0], [1], [0, 0, 1, 1], [], []>} : vector<1000x16xf32>, vector<16x128xf32>, vector<1000x128xf32> -> vector<1000x128xf32>
    %c0_3 = arith.constant 0 : index
    %c0_4 = arith.constant 0 : index
    %c0_5 = arith.constant 0 : index
    %3 = vector.load %arg5[%c0_3, %c0_4, %c0_5] : memref<5x1x128xf32, #tpu.memory_space<vmem>>, vector<1x1x128xf32>
    %4 = vector.shape_cast %3 : vector<1x1x128xf32> to vector<1x128xf32>
    %5 = vector.broadcast %4 : vector<1x128xf32> to vector<1000x128xf32>
    %6 = arith.addf %2, %5 : vector<1000x128xf32>
    %cst_6 = arith.constant 5.000000e-01 : f32
    %7 = vector.broadcast %cst_6 : f32 to vector<1000x128xf32>
    %8 = arith.mulf %7, %6 : vector<1000x128xf32>
    %9 = math.tanh %8 : vector<1000x128xf32>
    %cst_7 = arith.constant 5.000000e-01 : f32
    %10 = vector.broadcast %cst_7 : f32 to vector<1000x128xf32>
    %11 = arith.mulf %10, %9 : vector<1000x128xf32>
    %cst_8 = arith.constant 5.000000e-01 : f32
    %12 = vector.broadcast %cst_8 : f32 to vector<1000x128xf32>
    %13 = arith.addf %11, %12 : vector<1000x128xf32>
    %c0_9 = arith.constant 0 : index
    %c0_10 = arith.constant 0 : index
    %c0_11 = arith.constant 0 : index
    %14 = vector.load %arg3[%c0_9, %c0_10, %c0_11] : memref<4x128x128xf32, #tpu.memory_space<vmem>>, vector<1x128x128xf32>
    %15 = vector.shape_cast %14 : vector<1x128x128xf32> to vector<128x128xf32>
    %cst_12 = arith.constant dense<0.000000e+00> : vector<1000x128xf32>
    %16 = tpu.matmul %13, %15, %cst_12 {dimension_numbers = #tpu.dot_dimension_numbers<[1], [0], [0], [1], [0, 0, 1, 1], [], []>} : vector<1000x128xf32>, vector<128x128xf32>, vector<1000x128xf32> -> vector<1000x128xf32>
    %c1 = arith.constant 1 : index
    %c0_13 = arith.constant 0 : index
    %c0_14 = arith.constant 0 : index
    %17 = vector.load %arg5[%c1, %c0_13, %c0_14] : memref<5x1x128xf32, #tpu.memory_space<vmem>>, vector<1x1x128xf32>
    %18 = vector.shape_cast %17 : vector<1x1x128xf32> to vector<1x128xf32>
    %19 = vector.broadcast %18 : vector<1x128xf32> to vector<1000x128xf32>
    %20 = arith.addf %16, %19 : vector<1000x128xf32>
    %cst_15 = arith.constant 5.000000e-01 : f32
    %21 = vector.broadcast %cst_15 : f32 to vector<1000x128xf32>
    %22 = arith.mulf %21, %20 : vector<1000x128xf32>
    %23 = math.tanh %22 : vector<1000x128xf32>
    %cst_16 = arith.constant 5.000000e-01 : f32
    %24 = vector.broadcast %cst_16 : f32 to vector<1000x128xf32>
    %25 = arith.mulf %24, %23 : vector<1000x128xf32>
    %cst_17 = arith.constant 5.000000e-01 : f32
    %26 = vector.broadcast %cst_17 : f32 to vector<1000x128xf32>
    %27 = arith.addf %25, %26 : vector<1000x128xf32>
    %c1_18 = arith.constant 1 : index
    %c0_19 = arith.constant 0 : index
    %c0_20 = arith.constant 0 : index
    %28 = vector.load %arg3[%c1_18, %c0_19, %c0_20] : memref<4x128x128xf32, #tpu.memory_space<vmem>>, vector<1x128x128xf32>
    %29 = vector.shape_cast %28 : vector<1x128x128xf32> to vector<128x128xf32>
    %cst_21 = arith.constant dense<0.000000e+00> : vector<1000x128xf32>
    %30 = tpu.matmul %27, %29, %cst_21 {dimension_numbers = #tpu.dot_dimension_numbers<[1], [0], [0], [1], [0, 0, 1, 1], [], []>} : vector<1000x128xf32>, vector<128x128xf32>, vector<1000x128xf32> -> vector<1000x128xf32>
    %c2 = arith.constant 2 : index
    %c0_22 = arith.constant 0 : index
    %c0_23 = arith.constant 0 : index
    %31 = vector.load %arg5[%c2, %c0_22, %c0_23] : memref<5x1x128xf32, #tpu.memory_space<vmem>>, vector<1x1x128xf32>
    %32 = vector.shape_cast %31 : vector<1x1x128xf32> to vector<1x128xf32>
    %33 = vector.broadcast %32 : vector<1x128xf32> to vector<1000x128xf32>
    %34 = arith.addf %30, %33 : vector<1000x128xf32>
    %c2_24 = arith.constant 2 : index
    %c0_25 = arith.constant 0 : index
    %c0_26 = arith.constant 0 : index
    %35 = vector.load %arg3[%c2_24, %c0_25, %c0_26] : memref<4x128x128xf32, #tpu.memory_space<vmem>>, vector<1x128x128xf32>
    %36 = vector.shape_cast %35 : vector<1x128x128xf32> to vector<128x128xf32>
    %cst_27 = arith.constant dense<0.000000e+00> : vector<1000x128xf32>
    %37 = tpu.matmul %34, %36, %cst_27 {dimension_numbers = #tpu.dot_dimension_numbers<[1], [0], [0], [1], [0, 0, 1, 1], [], []>} : vector<1000x128xf32>, vector<128x128xf32>, vector<1000x128xf32> -> vector<1000x128xf32>
    %c3 = arith.constant 3 : index
    %c0_28 = arith.constant 0 : index
    %c0_29 = arith.constant 0 : index
    %38 = vector.load %arg5[%c3, %c0_28, %c0_29] : memref<5x1x128xf32, #tpu.memory_space<vmem>>, vector<1x1x128xf32>
    %39 = vector.shape_cast %38 : vector<1x1x128xf32> to vector<1x128xf32>
    %40 = vector.broadcast %39 : vector<1x128xf32> to vector<1000x128xf32>
    %41 = arith.addf %37, %40 : vector<1000x128xf32>
    %cst_30 = arith.constant 5.000000e-01 : f32
    %42 = vector.broadcast %cst_30 : f32 to vector<1000x128xf32>
    %43 = arith.mulf %42, %41 : vector<1000x128xf32>
    %44 = math.tanh %43 : vector<1000x128xf32>
    %cst_31 = arith.constant 5.000000e-01 : f32
    %45 = vector.broadcast %cst_31 : f32 to vector<1000x128xf32>
    %46 = arith.mulf %45, %44 : vector<1000x128xf32>
    %cst_32 = arith.constant 5.000000e-01 : f32
    %47 = vector.broadcast %cst_32 : f32 to vector<1000x128xf32>
    %48 = arith.addf %46, %47 : vector<1000x128xf32>
    %c3_33 = arith.constant 3 : index
    %c0_34 = arith.constant 0 : index
    %c0_35 = arith.constant 0 : index
    %49 = vector.load %arg3[%c3_33, %c0_34, %c0_35] : memref<4x128x128xf32, #tpu.memory_space<vmem>>, vector<1x128x128xf32>
    %50 = vector.shape_cast %49 : vector<1x128x128xf32> to vector<128x128xf32>
    %cst_36 = arith.constant dense<0.000000e+00> : vector<1000x128xf32>
    %51 = tpu.matmul %48, %50, %cst_36 {dimension_numbers = #tpu.dot_dimension_numbers<[1], [0], [0], [1], [0, 0, 1, 1], [], []>} : vector<1000x128xf32>, vector<128x128xf32>, vector<1000x128xf32> -> vector<1000x128xf32>
    %c4 = arith.constant 4 : index
    %c0_37 = arith.constant 0 : index
    %c0_38 = arith.constant 0 : index
    %52 = vector.load %arg5[%c4, %c0_37, %c0_38] : memref<5x1x128xf32, #tpu.memory_space<vmem>>, vector<1x1x128xf32>
    %53 = vector.shape_cast %52 : vector<1x1x128xf32> to vector<1x128xf32>
    %54 = vector.broadcast %53 : vector<1x128xf32> to vector<1000x128xf32>
    %55 = arith.addf %51, %54 : vector<1000x128xf32>
    %cst_39 = arith.constant 5.000000e-01 : f32
    %56 = vector.broadcast %cst_39 : f32 to vector<1000x128xf32>
    %57 = arith.mulf %56, %55 : vector<1000x128xf32>
    %58 = math.tanh %57 : vector<1000x128xf32>
    %cst_40 = arith.constant 5.000000e-01 : f32
    %59 = vector.broadcast %cst_40 : f32 to vector<1000x128xf32>
    %60 = arith.mulf %59, %58 : vector<1000x128xf32>
    %cst_41 = arith.constant 5.000000e-01 : f32
    %61 = vector.broadcast %cst_41 : f32 to vector<1000x128xf32>
    %62 = arith.addf %60, %61 : vector<1000x128xf32>
    %c0_42 = arith.constant 0 : index
    %c0_43 = arith.constant 0 : index
    %63 = vector.load %arg4[%c0_42, %c0_43] : memref<128x16xf32, #tpu.memory_space<vmem>>, vector<128x16xf32>
    %cst_44 = arith.constant dense<0.000000e+00> : vector<1000x16xf32>
    %64 = tpu.matmul %62, %63, %cst_44 {dimension_numbers = #tpu.dot_dimension_numbers<[1], [0], [0], [1], [0, 0, 1, 1], [], []>} : vector<1000x128xf32>, vector<128x16xf32>, vector<1000x16xf32> -> vector<1000x16xf32>
    %c0_45 = arith.constant 0 : index
    %c0_46 = arith.constant 0 : index
    %65 = vector.load %arg6[%c0_45, %c0_46] : memref<1x16xf32, #tpu.memory_space<vmem>>, vector<1x16xf32>
    %66 = vector.broadcast %65 : vector<1x16xf32> to vector<1000x16xf32>
    %67 = arith.addf %64, %66 : vector<1000x16xf32>
    %c0_47 = arith.constant 0 : index
    %c0_48 = arith.constant 0 : index
    %68 = vector.load %arg7[%c0_47, %c0_48] : memref<1000x16xf32, #tpu.memory_space<vmem>>, vector<1000x16xf32>
    tpu.vector_store %arg7[%c0_47, %c0_48], %67 {strides = array<i32>} : memref<1000x16xf32, #tpu.memory_space<vmem>>, vector<1000x16xf32>,
    return
  }
  func.func @transform_0(%arg0: i32) -> (i32, i32) {
    %c0_i32 = arith.constant 0 : i32
    %c0_i32_0 = arith.constant 0 : i32
    return %arg0, %c0_i32 : i32, i32
  }
  func.func @transform_1(%arg0: i32) -> (i32, i32) {
    %c0_i32 = arith.constant 0 : i32
    %c0_i32_0 = arith.constant 0 : i32
    %c0_i32_1 = arith.constant 0 : i32
    return %c0_i32, %c0_i32_0 : i32, i32
  }
  func.func @transform_2(%arg0: i32) -> (i32, i32, i32) {
    %c0_i32 = arith.constant 0 : i32
    %c0_i32_0 = arith.constant 0 : i32
    %c0_i32_1 = arith.constant 0 : i32
    %c0_i32_2 = arith.constant 0 : i32
    return %c0_i32, %c0_i32_0, %c0_i32_1 : i32, i32, i32
  }
  func.func @transform_3(%arg0: i32) -> (i32, i32) {
    %c0_i32 = arith.constant 0 : i32
    %c0_i32_0 = arith.constant 0 : i32
    %c0_i32_1 = arith.constant 0 : i32
    return %c0_i32, %c0_i32_0 : i32, i32
  }
  func.func @transform_4(%arg0: i32) -> (i32, i32, i32) {
    %c0_i32 = arith.constant 0 : i32
    %c0_i32_0 = arith.constant 0 : i32
    %c0_i32_1 = arith.constant 0 : i32
    %c0_i32_2 = arith.constant 0 : i32
    return %c0_i32, %c0_i32_0, %c0_i32_1 : i32, i32, i32
  }
  func.func @transform_5(%arg0: i32) -> (i32, i32) {
    %c0_i32 = arith.constant 0 : i32
    %c0_i32_0 = arith.constant 0 : i32
    %c0_i32_1 = arith.constant 0 : i32
    return %c0_i32, %c0_i32_0 : i32, i32
  }
  func.func @transform_6(%arg0: i32) -> (i32, i32) {
    %c0_i32 = arith.constant 0 : i32
    %c0_i32_0 = arith.constant 0 : i32
    return %arg0, %c0_i32 : i32, i32
  }
}

</mosaic_0001>

<llo_original>
// kernel: autoencoder_forward.1
$region0: #{autoencoder_forward.1}
  #allocation0 [shape = 'u32[]', space=smem, size = 0x4, offset = 0x4, fixed_abs, tag = 'smem constant byte address 0x4 - core index']
  #allocation1 [shape = 'u32[144,128]{1,0:T(1,128)}', space=vmem, size = 0x12000, scoped, tag = 'internal scratch']
  %s0 = inlined_call_operand.vmem [shape: f32[1000,16], index: 0, kind: input, shape index: {}]
  %s1 = inlined_call_operand.vmem [shape: f32[16,128], index: 1, kind: input, shape index: {}]
  %s2 = inlined_call_operand.vmem [shape: f32[4,128,128], index: 2, kind: input, shape index: {}]
  %s3 = inlined_call_operand.vmem [shape: f32[128,16], index: 3, kind: input, shape index: {}]
  %s4 = inlined_call_operand.vmem [shape: f32[5,1,128], index: 4, kind: input, shape index: {}]
  %s5 = inlined_call_operand.vmem [shape: f32[1,16], index: 5, kind: input, shape index: {}]
  %s6 = inlined_call_operand.vmem [shape: f32[1000,16], index: 6, kind: output, shape index: {}]
  %s7 = sld [smem:[#allocation0]]
  $region34: #{autoencoder_forward.1} parent=0
    _
  %s9 = ssub.s32 1, %s7
  %s10 = scalar_select 0, %s9, %s7
  // Predicated region
  $region2: #{autoencoder_forward.1} parent=0 // pred_check
    _
  $region3: #{autoencoder_forward.1} parent=0 // pred_check_branch
    %12 = sbr.rel (0) target = $region5
  $region4: #{autoencoder_forward.1} parent=0 // pred_region
    _
  $region5: #{autoencoder_forward.1} parent=0 // pred_fallthru
    _
  // Predicated region
  $region6: #{autoencoder_forward.1} parent=0 // pred_check
    _
  $region7: #{autoencoder_forward.1} parent=0 // pred_check_branch
    %14 = sbr.rel (0) target = $region9
  $region8: #{autoencoder_forward.1} parent=0 // pred_region
    _
  $region9: #{autoencoder_forward.1} parent=0 // pred_fallthru
    _
  // Predicated region
  $region10: #{autoencoder_forward.1} parent=0 // pred_check
    _
  $region11: #{autoencoder_forward.1} parent=0 // pred_check_branch
    %16 = sbr.rel (0) target = $region13
  $region12: #{autoencoder_forward.1} parent=0 // pred_region
    _
  $region13: #{autoencoder_forward.1} parent=0 // pred_fallthru
    _
  // Predicated region
  $region14: #{autoencoder_forward.1} parent=0 // pred_check
    _
  $region15: #{autoencoder_forward.1} parent=0 // pred_check_branch
    %18 = sbr.rel (0) target = $region17
  $region16: #{autoencoder_forward.1} parent=0 // pred_region
    _
  $region17: #{autoencoder_forward.1} parent=0 // pred_fallthru
    _
  // Predicated region
  $region18: #{autoencoder_forward.1} parent=0 // pred_check
    _
  $region19: #{autoencoder_forward.1} parent=0 // pred_check_branch
    %20 = sbr.rel (0) target = $region21
  $region20: #{autoencoder_forward.1} parent=0 // pred_region
    _
  $region21: #{autoencoder_forward.1} parent=0 // pred_fallthru
    _
  // Predicated region
  $region22: #{autoencoder_forward.1} parent=0 // pred_check
    _
  $region23: #{autoencoder_forward.1} parent=0 // pred_check_branch
    %22 = sbr.rel (0) target = $region25
  $region24: #{autoencoder_forward.1} parent=0 // pred_region
    _
  $region25: #{autoencoder_forward.1} parent=0 // pred_fallthru
    _
  %v23 = vld [vmem:[%s0] sm:$0xff]
  %v24 = vld [vmem:[%s0 + $0x8] sm:$0xff]
  %v25 = vld [vmem:[%s0 + $0x10] sm:$0xff]
  %v26 = vld [vmem:[%s0 + $0x18] sm:$0xff]
  %v27 = vld [vmem:[%s0 + $0x20] sm:$0xff]
  %v28 = vld [vmem:[%s0 + $0x28] sm:$0xff]
  %v29 = vld [vmem:[%s0 + $0x30] sm:$0xff]
  %v30 = vld [vmem:[%s0 + $0x38] sm:$0xff]
  %v31 = vld [vmem:[%s0 + $0x40] sm:$0xff]
  %v32 = vld [vmem:[%s0 + $0x48] sm:$0xff]
  %v33 = vld [vmem:[%s0 + $0x50] sm:$0xff]
  %v34 = vld [vmem:[%s0 + $0x58] sm:$0xff]
  %v35 = vld [vmem:[%s0 + $0x60] sm:$0xff]
  %v36 = vld [vmem:[%s0 + $0x68] sm:$0xff]
  %v37 = vld [vmem:[%s0 + $0x70] sm:$0xff]
  %v38 = vld [vmem:[%s0 + $0x78] sm:$0xff]
  %v39 = vld [vmem:[%s0 + $0x80] sm:$0xff]
  %v40 = vld [vmem:[%s0 + $0x88] sm:$0xff]
  %v41 = vld [vmem:[%s0 + $0x90] sm:$0xff]
  %v42 = vld [vmem:[%s0 + $0x98] sm:$0xff]
  %v43 = vld [vmem:[%s0 + $0xa0] sm:$0xff]
  %v44 = vld [vmem:[%s0 + $0xa8] sm:$0xff]
  %v45 = vld [vmem:[%s0 + $0xb0] sm:$0xff]
  %v46 = vld [vmem:[%s0 + $0xb8] sm:$0xff]
  %v47 = vld [vmem:[%s0 + $0xc0] sm:$0xff]
  %v48 = vld [vmem:[%s0 + $0xc8] sm:$0xff]
  %v49 = vld [vmem:[%s0 + $0xd0] sm:$0xff]
  %v50 = vld [vmem:[%s0 + $0xd8] sm:$0xff]
  %v51 = vld [vmem:[%s0 + $0xe0] sm:$0xff]
  %v52 = vld [vmem:[%s0 + $0xe8] sm:$0xff]
  %v53 = vld [vmem:[%s0 + $0xf0] sm:$0xff]
  %v54 = vld [vmem:[%s0 + $0xf8] sm:$0xff]
  %v55 = vld [vmem:[%s0 + $0x100] sm:$0xff]
  %v56 = vld [vmem:[%s0 + $0x108] sm:$0xff]
  %v57 = vld [vmem:[%s0 + $0x110] sm:$0xff]
  %v58 = vld [vmem:[%s0 + $0x118] sm:$0xff]
  %v59 = vld [vmem:[%s0 + $0x120] sm:$0xff]
  %v60 = vld [vmem:[%s0 + $0x128] sm:$0xff]
  %v61 = vld [vmem:[%s0 + $0x130] sm:$0xff]
  %v62 = vld [vmem:[%s0 + $0x138] sm:$0xff]
  %v63 = vld [vmem:[%s0 + $0x140] sm:$0xff]
  %v64 = vld [vmem:[%s0 + $0x148] sm:$0xff]
  %v65 = vld [vmem:[%s0 + $0x150] sm:$0xff]
  %v66 = vld [vmem:[%s0 + $0x158] sm:$0xff]
  %v67 = vld [vmem:[%s0 + $0x160] sm:$0xff]
  %v68 = vld [vmem:[%s0 + $0x168] sm:$0xff]
  %v69 = vld [vmem:[%s0 + $0x170] sm:$0xff]
  %v70 = vld [vmem:[%s0 + $0x178] sm:$0xff]
  %v71 = vld [vmem:[%s0 + $0x180] sm:$0xff]
  %v72 = vld [vmem:[%s0 + $0x188] sm:$0xff]
  %v73 = vld [vmem:[%s0 + $0x190] sm:$0xff]
  %v74 = vld [vmem:[%s0 + $0x198] sm:$0xff]
  %v75 = vld [vmem:[%s0 + $0x1a0] sm:$0xff]
  %v76 = vld [vmem:[%s0 + $0x1a8] sm:$0xff]
  %v77 = vld [vmem:[%s0 + $0x1b0] sm:$0xff]
  %v78 = vld [vmem:[%s0 + $0x1b8] sm:$0xff]
  %v79 = vld [vmem:[%s0 + $0x1c0] sm:$0xff]
  %v80 = vld [vmem:[%s0 + $0x1c8] sm:$0xff]
  %v81 = vld [vmem:[%s0 + $0x1d0] sm:$0xff]
  %v82 = vld [vmem:[%s0 + $0x1d8] sm:$0xff]
  %v83 = vld [vmem:[%s0 + $0x1e0] sm:$0xff]
  %v84 = vld [vmem:[%s0 + $0x1e8] sm:$0xff]
  %v85 = vld [vmem:[%s0 + $0x1f0] sm:$0xff]
  %v86 = vld [vmem:[%s0 + $0x1f8] sm:$0xff]
  %v87 = vld [vmem:[%s0 + $0x200] sm:$0xff]
  %v88 = vld [vmem:[%s0 + $0x208] sm:$0xff]
  %v89 = vld [vmem:[%s0 + $0x210] sm:$0xff]
  %v90 = vld [vmem:[%s0 + $0x218] sm:$0xff]
  %v91 = vld [vmem:[%s0 + $0x220] sm:$0xff]
  %v92 = vld [vmem:[%s0 + $0x228] sm:$0xff]
  %v93 = vld [vmem:[%s0 + $0x230] sm:$0xff]
  %v94 = vld [vmem:[%s0 + $0x238] sm:$0xff]
  %v95 = vld [vmem:[%s0 + $0x240] sm:$0xff]
  %v96 = vld [vmem:[%s0 + $0x248] sm:$0xff]
  %v97 = vld [vmem:[%s0 + $0x250] sm:$0xff]
  %v98 = vld [vmem:[%s0 + $0x258] sm:$0xff]
  %v99 = vld [vmem:[%s0 + $0x260] sm:$0xff]
  %v100 = vld [vmem:[%s0 + $0x268] sm:$0xff]
  %v101 = vld [vmem:[%s0 + $0x270] sm:$0xff]
  %v102 = vld [vmem:[%s0 + $0x278] sm:$0xff]
  %v103 = vld [vmem:[%s0 + $0x280] sm:$0xff]
  %v104 = vld [vmem:[%s0 + $0x288] sm:$0xff]
  %v105 = vld [vmem:[%s0 + $0x290] sm:$0xff]
  %v106 = vld [vmem:[%s0 + $0x298] sm:$0xff]
  %v107 = vld [vmem:[%s0 + $0x2a0] sm:$0xff]
  %v108 = vld [vmem:[%s0 + $0x2a8] sm:$0xff]
  %v109 = vld [vmem:[%s0 + $0x2b0] sm:$0xff]
  %v110 = vld [vmem:[%s0 + $0x2b8] sm:$0xff]
  %v111 = vld [vmem:[%s0 + $0x2c0] sm:$0xff]
  %v112 = vld [vmem:[%s0 + $0x2c8] sm:$0xff]
  %v113 = vld [vmem:[%s0 + $0x2d0] sm:$0xff]
  %v114 = vld [vmem:[%s0 + $0x2d8] sm:$0xff]
  %v115 = vld [vmem:[%s0 + $0x2e0] sm:$0xff]
  %v116 = vld [vmem:[%s0 + $0x2e8] sm:$0xff]
  %v117 = vld [vmem:[%s0 + $0x2f0] sm:$0xff]
  %v118 = vld [vmem:[%s0 + $0x2f8] sm:$0xff]
  %v119 = vld [vmem:[%s0 + $0x300] sm:$0xff]
  %v120 = vld [vmem:[%s0 + $0x308] sm:$0xff]
  %v121 = vld [vmem:[%s0 + $0x310] sm:$0xff]
  %v122 = vld [vmem:[%s0 + $0x318] sm:$0xff]
  %v123 = vld [vmem:[%s0 + $0x320] sm:$0xff]
  %v124 = vld [vmem:[%s0 + $0x328] sm:$0xff]
  %v125 = vld [vmem:[%s0 + $0x330] sm:$0xff]
  %v126 = vld [vmem:[%s0 + $0x338] sm:$0xff]
  %v127 = vld [vmem:[%s0 + $0x340] sm:$0xff]
  %v128 = vld [vmem:[%s0 + $0x348] sm:$0xff]
  %v129 = vld [vmem:[%s0 + $0x350] sm:$0xff]
  %v130 = vld [vmem:[%s0 + $0x358] sm:$0xff]
  %v131 = vld [vmem:[%s0 + $0x360] sm:$0xff]
  %v132 = vld [vmem:[%s0 + $0x368] sm:$0xff]
  %v133 = vld [vmem:[%s0 + $0x370] sm:$0xff]
  %v134 = vld [vmem:[%s0 + $0x378] sm:$0xff]
  %v135 = vld [vmem:[%s0 + $0x380] sm:$0xff]
  %v136 = vld [vmem:[%s0 + $0x388] sm:$0xff]
  %v137 = vld [vmem:[%s0 + $0x390] sm:$0xff]
  %v138 = vld [vmem:[%s0 + $0x398] sm:$0xff]
  %v139 = vld [vmem:[%s0 + $0x3a0] sm:$0xff]
  %v140 = vld [vmem:[%s0 + $0x3a8] sm:$0xff]
  %v141 = vld [vmem:[%s0 + $0x3b0] sm:$0xff]
  %v142 = vld [vmem:[%s0 + $0x3b8] sm:$0xff]
  %v143 = vld [vmem:[%s0 + $0x3c0] sm:$0xff]
  %v144 = vld [vmem:[%s0 + $0x3c8] sm:$0xff]
  %v145 = vld [vmem:[%s0 + $0x3d0] sm:$0xff]
  %v146 = vld [vmem:[%s0 + $0x3d8] sm:$0xff]
  %v147 = vld [vmem:[%s0 + $0x3e0] sm:$0xff]
  %v148 = vld [vmem:[%s1] sm:$0xff]
  %v149 = vld [vmem:[%s1 + $0x8] sm:$0xff]
  %v150 = vld [vmem:[%s4] sm:$0x1]
  %v152 = vlaneseq
  %v153 = vshrl.u32 %v152, 7
  %v154 = vsub.s32 0, %v153
  %v155 = vrot.slane %v150, %v154
  %vm157 = vcmask 130048
  %v159 = vsel %vm157, %v23, 0
  %v162 = vsel %vm157, %v24, 0
  %v165 = vsel %vm157, %v25, 0
  %v168 = vsel %vm157, %v26, 0
  %v171 = vsel %vm157, %v27, 0
  %v174 = vsel %vm157, %v28, 0
  %v177 = vsel %vm157, %v29, 0
  %v180 = vsel %vm157, %v30, 0
  %v183 = vsel %vm157, %v31, 0
  %v186 = vsel %vm157, %v32, 0
  %v189 = vsel %vm157, %v33, 0
  %v192 = vsel %vm157, %v34, 0
  %v195 = vsel %vm157, %v35, 0
  %v198 = vsel %vm157, %v36, 0
  %v201 = vsel %vm157, %v37, 0
  %v204 = vsel %vm157, %v38, 0
  %v207 = vsel %vm157, %v39, 0
  %v210 = vsel %vm157, %v40, 0
  %v213 = vsel %vm157, %v41, 0
  %v216 = vsel %vm157, %v42, 0
  %v219 = vsel %vm157, %v43, 0
  %v222 = vsel %vm157, %v44, 0
  %v225 = vsel %vm157, %v45, 0
  %v228 = vsel %vm157, %v46, 0
  %v231 = vsel %vm157, %v47, 0
  %v234 = vsel %vm157, %v48, 0
  %v237 = vsel %vm157, %v49, 0
  %v240 = vsel %vm157, %v50, 0
  %v243 = vsel %vm157, %v51, 0
  %v246 = vsel %vm157, %v52, 0
  %v249 = vsel %vm157, %v53, 0
  %v252 = vsel %vm157, %v54, 0
  %v255 = vsel %vm157, %v55, 0
  %v258 = vsel %vm157, %v56, 0
  %v261 = vsel %vm157, %v57, 0
  %v264 = vsel %vm157, %v58, 0
  %v267 = vsel %vm157, %v59, 0
  %v270 = vsel %vm157, %v60, 0
  %v273 = vsel %vm157, %v61, 0
  %v276 = vsel %vm157, %v62, 0
  %v279 = vsel %vm157, %v63, 0
  %v282 = vsel %vm157, %v64, 0
  %v285 = vsel %vm157, %v65, 0
  %v288 = vsel %vm157, %v66, 0
  %v291 = vsel %vm157, %v67, 0
  %v294 = vsel %vm157, %v68, 0
  %v297 = vsel %vm157, %v69, 0
  %v300 = vsel %vm157, %v70, 0
  %v303 = vsel %vm157, %v71, 0
  %v306 = vsel %vm157, %v72, 0
  %v309 = vsel %vm157, %v73, 0
  %v312 = vsel %vm157, %v74, 0
  %v315 = vsel %vm157, %v75, 0
  %v318 = vsel %vm157, %v76, 0
  %v321 = vsel %vm157, %v77, 0
  %v324 = vsel %vm157, %v78, 0
  %v327 = vsel %vm157, %v79, 0
  %v330 = vsel %vm157, %v80, 0
  %v333 = vsel %vm157, %v81, 0
  %v336 = vsel %vm157, %v82, 0
  %v339 = vsel %vm157, %v83, 0
  %v342 = vsel %vm157, %v84, 0
  %v345 = vsel %vm157, %v85, 0
  %v348 = vsel %vm157, %v86, 0
  %v351 = vsel %vm157, %v87, 0
  %v354 = vsel %vm157, %v88, 0
  %v357 = vsel %vm157, %v89, 0
  %v360 = vsel %vm157, %v90, 0
  %v363 = vsel %vm157, %v91, 0
  %v366 = vsel %vm157, %v92, 0
  %v369 = vsel %vm157, %v93, 0
  %v372 = vsel %vm157, %v94, 0
  %v375 = vsel %vm157, %v95, 0
  %v378 = vsel %vm157, %v96, 0
  %v381 = vsel %vm157, %v97, 0
  %v384 = vsel %vm157, %v98, 0
  %v387 = vsel %vm157, %v99, 0
  %v390 = vsel %vm157, %v100, 0
  %v393 = vsel %vm157, %v101, 0
  %v396 = vsel %vm157, %v102, 0
  %v399 = vsel %vm157, %v103, 0
  %v402 = vsel %vm157, %v104, 0
  %v405 = vsel %vm157, %v105, 0
  %v408 = vsel %vm157, %v106, 0
  %v411 = vsel %vm157, %v107, 0
  %v414 = vsel %vm157, %v108, 0
  %v417 = vsel %vm157, %v109, 0
  %v420 = vsel %vm157, %v110, 0
  %v423 = vsel %vm157, %v111, 0
  %v426 = vsel %vm157, %v112, 0
  %v429 = vsel %vm157, %v113, 0
  %v432 = vsel %vm157, %v114, 0
  %v435 = vsel %vm157, %v115, 0
  %v438 = vsel %vm157, %v116, 0
  %v441 = vsel %vm157, %v117, 0
  %v444 = vsel %vm157, %v118, 0
  %v447 = vsel %vm157, %v119, 0
  %v450 = vsel %vm157, %v120, 0
  %v453 = vsel %vm157, %v121, 0
  %v456 = vsel %vm157, %v122, 0
  %v459 = vsel %vm157, %v123, 0
  %v462 = vsel %vm157, %v124, 0
  %v465 = vsel %vm157, %v125, 0
  %v468 = vsel %vm157, %v126, 0
  %v471 = vsel %vm157, %v127, 0
  %v474 = vsel %vm157, %v128, 0
  %v477 = vsel %vm157, %v129, 0
  %v480 = vsel %vm157, %v130, 0
  %v483 = vsel %vm157, %v131, 0
  %v486 = vsel %vm157, %v132, 0
  %v489 = vsel %vm157, %v133, 0
  %v492 = vsel %vm157, %v134, 0
  %v495 = vsel %vm157, %v135, 0
  %v498 = vsel %vm157, %v136, 0
  %v501 = vsel %vm157, %v137, 0
  %v504 = vsel %vm157, %v138, 0
  %v507 = vsel %vm157, %v139, 0
  %v510 = vsel %vm157, %v140, 0
  %v513 = vsel %vm157, %v141, 0
  %v516 = vsel %vm157, %v142, 0
  %v519 = vsel %vm157, %v143, 0
  %v522 = vsel %vm157, %v144, 0
  %v525 = vsel %vm157, %v145, 0
  %v528 = vsel %vm157, %v146, 0
  %v531 = vsel %vm157, %v147, 0
  %533 = vmatprep.subr.mxu0 0.0
  %534 = vmatpush1.msra.mxu0 %v148
  %535 = vmatprep.subr.mxu0 0.0
  %536 = vmatpush1.msra.mxu0 %v149
  %537 = vmatprep.subr.mxu0 0.0
  %538 = vmatpush1.msra.mxu0 0.0
  %539 = vmatprep.subr.mxu0 0.0
  %540 = vmatpush1.msra.mxu0 0.0
  %541 = vmatprep.subr.mxu0 0.0
  %542 = vmatpush1.msra.mxu0 0.0
  %543 = vmatprep.subr.mxu0 0.0
  %544 = vmatpush1.msra.mxu0 0.0
  %545 = vmatprep.subr.mxu0 0.0
  %546 = vmatpush1.msra.mxu0 0.0
  %547 = vmatprep.subr.mxu0 0.0
  %548 = vmatpush1.msra.mxu0 0.0
  %549 = vmatprep.subr.mxu0 0.0
  %550 = vmatpush1.msra.mxu0 0.0
  %551 = vmatprep.subr.mxu0 0.0
  %552 = vmatpush1.msra.mxu0 0.0
  %553 = vmatprep.subr.mxu0 0.0
  %554 = vmatpush1.msra.mxu0 0.0
  %555 = vmatprep.subr.mxu0 0.0
  %556 = vmatpush1.msra.mxu0 0.0
  %557 = vmatprep.subr.mxu0 0.0
  %558 = vmatpush1.msra.mxu0 0.0
  %559 = vmatprep.subr.mxu0 0.0
  %560 = vmatpush1.msra.mxu0 0.0
  %561 = vmatprep.subr.mxu0 0.0
  %562 = vmatpush1.msra.mxu0 0.0
  %563 = vmatprep.subr.mxu0 0.0
  %564 = vmatpush1.msra.mxu0 0.0
  %565 = vmatprep.subr.mxu0 0.0
  %566 = vmatpush1.msra.mxu0 0.0
  %567 = vmatprep.subr.mxu0 0.0
  %568 = vmatpush1.msra.mxu0 0.0
  %569 = vmatprep.subr.mxu0 0.0
  %570 = vmatpush1.msra.mxu0 0.0
  %571 = vmatprep.subr.mxu0 0.0
  %572 = vmatpush1.msra.mxu0 0.0
  %573 = vmatprep.subr.mxu0 0.0
  %574 = vmatpush1.msra.mxu0 0.0
  %575 = vmatprep.subr.mxu0 0.0
  %576 = vmatpush1.msra.mxu0 0.0
  %577 = vmatprep.subr.mxu0 0.0
  %578 = vmatpush1.msra.mxu0 0.0
  %579 = vmatprep.subr.mxu0 0.0
  %580 = vmatpush1.msra.mxu0 0.0
  %581 = vmatprep.subr.mxu0 0.0
  %582 = vmatpush1.msra.mxu0 0.0
  %583 = vmatprep.subr.mxu0 0.0
  %584 = vmatpush1.msra.mxu0 0.0
  %585 = vmatprep.subr.mxu0 0.0
  %586 = vmatpush1.msra.mxu0 0.0
  %587 = vmatprep.subr.mxu0 0.0
  %588 = vmatpush1.msra.mxu0 0.0
  %589 = vmatprep.subr.mxu0 0.0
  %590 = vmatpush1.msra.mxu0 0.0
  %591 = vmatprep.subr.mxu0 0.0
  %592 = vmatpush1.msra.mxu0 0.0
  %593 = vmatprep.subr.mxu0 0.0
  %594 = vmatpush1.msra.mxu0 0.0
  %595 = vmatprep.subr.mxu0 0.0
  %596 = vmatpush1.msra.mxu0 0.0
  %597 = vmatprep.mubr.f32.mxu0 0.0
  %598 = vmatmul.mubr.f32.gmra.mrb[0].mxu0 %v159
  %v599 = vpop.f32.mrb[0].mxu0
  %v600 = vadd.f32 %v155, %v599
  %v601 = vpop.f32.mrb[0].mxu0
  %602 = vmatprep.mubr.f32.mxu0 0.0
  %603 = vmatmul.mubr.f32.gmra.mrb[0].mxu0 %v162
  %v604 = vpop.f32.mrb[0].mxu0
  %v605 = vadd.f32 %v155, %v604
  %v606 = vpop.f32.mrb[0].mxu0
  %607 = vmatprep.mubr.f32.mxu0 0.0
  %608 = vmatmul.mubr.f32.gmra.mrb[0].mxu0 %v165
  %v609 = vpop.f32.mrb[0].mxu0
  %v610 = vadd.f32 %v155, %v609
  %v611 = vpop.f32.mrb[0].mxu0
  %612 = vmatprep.mubr.f32.mxu0 0.0
  %613 = vmatmul.mubr.f32.gmra.mrb[0].mxu0 %v168
  %v614 = vpop.f32.mrb[0].mxu0
  %v615 = vadd.f32 %v155, %v614
  %v616 = vpop.f32.mrb[0].mxu0
  %617 = vmatprep.mubr.f32.mxu0 0.0
  %618 = vmatmul.mubr.f32.gmra.mrb[0].mxu0 %v171
  %v619 = vpop.f32.mrb[0].mxu0
  %v620 = vadd.f32 %v155, %v619
  %v621 = vpop.f32.mrb[0].mxu0
  %622 = vmatprep.mubr.f32.mxu0 0.0
  %623 = vmatmul.mubr.f32.gmra.mrb[0].mxu0 %v174
  %v624 = vpop.f32.mrb[0].mxu0
  %v625 = vadd.f32 %v155, %v624
  %v626 = vpop.f32.mrb[0].mxu0
  %627 = vmatprep.mubr.f32.mxu0 0.0
  %628 = vmatmul.mubr.f32.gmra.mrb[0].mxu0 %v177
  %v629 = vpop.f32.mrb[0].mxu0
  %v630 = vadd.f32 %v155, %v629
  %v631 = vpop.f32.mrb[0].mxu0
  %632 = vmatprep.mubr.f32.mxu0 0.0
  %633 = vmatmul.mubr.f32.gmra.mrb[0].mxu0 %v180
  %v634 = vpop.f32.mrb[0].mxu0
  %v635 = vadd.f32 %v155, %v634
  %v636 = vpop.f32.mrb[0].mxu0
  %637 = vmatprep.mubr.f32.mxu0 0.0
  %638 = vmatmul.mubr.f32.gmra.mrb[0].mxu0 %v183
  %v639 = vpop.f32.mrb[0].mxu0
  %v640 = vadd.f32 %v155, %v639
  %v641 = vpop.f32.mrb[0].mxu0
  %642 = vmatprep.mubr.f32.mxu0 0.0
  %643 = vmatmul.mubr.f32.gmra.mrb[0].mxu0 %v186
  %v644 = vpop.f32.mrb[0].mxu0
  %v645 = vadd.f32 %v155, %v644
  %v646 = vpop.f32.mrb[0].mxu0
  %647 = vmatprep.mubr.f32.mxu0 0.0
  %648 = vmatmul.mubr.f32.gmra.mrb[0].mxu0 %v189
  %v649 = vpop.f32.mrb[0].mxu0
  %v650 = vadd.f32 %v155, %v649
  %v651 = vpop.f32.mrb[0].mxu0
  %652 = vmatprep.mubr.f32.mxu0 0.0
  %653 = vmatmul.mubr.f32.gmra.mrb[0].mxu0 %v192
  %v654 = vpop.f32.mrb[0].mxu0
  %v655 = vadd.f32 %v155, %v654
  %v656 = vpop.f32.mrb[0].mxu0
  %657 = vmatprep.mubr.f32.mxu0 0.0
  %658 = vmatmul.mubr.f32.gmra.mrb[0].mxu0 %v195
  %v659 = vpop.f32.mrb[0].mxu0
  %v660 = vadd.f32 %v155, %v659
  %v661 = vpop.f32.mrb[0].mxu0
  %662 = vmatprep.mubr.f32.mxu0 0.0
  %663 = vmatmul.mubr.f32.gmra.mrb[0].mxu0 %v198
  %v664 = vpop.f32.mrb[0].mxu0
  %v665 = vadd.f32 %v155, %v664
  %v666 = vpop.f32.mrb[0].mxu0
  %667 = vmatprep.mubr.f32.mxu0 0.0
  %668 = vmatmul.mubr.f32.gmra.mrb[0].mxu0 %v201
  %v669 = vpop.f32.mrb[0].mxu0
  %v670 = vadd.f32 %v155, %v669
  %v671 = vpop.f32.mrb[0].mxu0
  %672 = vmatprep.mubr.f32.mxu0 0.0
  %673 = vmatmul.mubr.f32.gmra.mrb[0].mxu0 %v204
  %v674 = vpop.f32.mrb[0].mxu0
  %v675 = vadd.f32 %v155, %v674
  %v676 = vpop.f32.mrb[0].mxu0
  %677 = vmatprep.mubr.f32.mxu0 0.0
  %678 = vmatmul.mubr.f32.gmra.mrb[0].mxu0 %v207
  %v679 = vpop.f32.mrb[0].mxu0
  %v680 = vadd.f32 %v155, %v679
  %v681 = vpop.f32.mrb[0].mxu0
  %682 = vmatprep.mubr.f32.mxu0 0.0
  %683 = vmatmul.mubr.f32.gmra.mrb[0].mxu0 %v210
  %v684 = vpop.f32.mrb[0].mxu0
  %v685 = vadd.f32 %v155, %v684
  %v686 = vpop.f32.mrb[0].mxu0
  %687 = vmatprep.mubr.f32.mxu0 0.0
  %688 = vmatmul.mubr.f32.gmra.mrb[0].mxu0 %v213
  %v689 = vpop.f32.mrb[0].mxu0
  %v690 = vadd.f32 %v155, %v689
  %v691 = vpop.f32.mrb[0].mxu0
  %692 = vmatprep.mubr.f32.mxu0 0.0
  %693 = vmatmul.mubr.f32.gmra.mrb[0].mxu0 %v216
  %v694 = vpop.f32.mrb[0].mxu0
  %v695 = vadd.f32 %v155, %v694
  %v696 = vpop.f32.mrb[0].mxu0
  %697 = vmatprep.mubr.f32.mxu0 0.0
  %698 = vmatmul.mubr.f32.gmra.mrb[0].mxu0 %v219
  %v699 = vpop.f32.mrb[0].mxu0
  %v700 = vadd.f32 %v155, %v699
  %v701 = vpop.f32.mrb[0].mxu0
  %702 = vmatprep.mubr.f32.mxu0 0.0
  %703 = vmatmul.mubr.f32.gmra.mrb[0].mxu0 %v222
  %v704 = vpop.f32.mrb[0].mxu0
  %v705 = vadd.f32 %v155, %v704
  %v706 = vpop.f32.mrb[0].mxu0
  %707 = vmatprep.mubr.f32.mxu0 0.0
  %708 = vmatmul.mubr.f32.gmra.mrb[0].mxu0 %v225
  %v709 = vpop.f32.mrb[0].mxu0
  %v710 = vadd.f32 %v155, %v709
  %v711 = vpop.f32.mrb[0].mxu0
  %712 = vmatprep.mubr.f32.mxu0 0.0
  %713 = vmatmul.mubr.f32.gmra.mrb[0].mxu0 %v228
  %v714 = vpop.f32.mrb[0].mxu0
  %v715 = vadd.f32 %v155, %v714
  %v716 = vpop.f32.mrb[0].mxu0
  %717 = vmatprep.mubr.f32.mxu0 0.0
  %718 = vmatmul.mubr.f32.gmra.mrb[0].mxu0 %v231
  %v719 = vpop.f32.mrb[0].mxu0
  %v720 = vadd.f32 %v155, %v719
  %v721 = vpop.f32.mrb[0].mxu0
  %722 = vmatprep.mubr.f32.mxu0 0.0
  %723 = vmatmul.mubr.f32.gmra.mrb[0].mxu0 %v234
  %v724 = vpop.f32.mrb[0].mxu0
  %v725 = vadd.f32 %v155, %v724
  %v726 = vpop.f32.mrb[0].mxu0
  %727 = vmatprep.mubr.f32.mxu0 0.0
  %728 = vmatmul.mubr.f32.gmra.mrb[0].mxu0 %v237
  %v729 = vpop.f32.mrb[0].mxu0
  %v730 = vadd.f32 %v155, %v729
  %v731 = vpop.f32.mrb[0].mxu0
  %732 = vmatprep.mubr.f32.mxu0 0.0
  %733 = vmatmul.mubr.f32.gmra.mrb[0].mxu0 %v240
  %v734 = vpop.f32.mrb[0].mxu0
  %v735 = vadd.f32 %v155, %v734
  %v736 = vpop.f32.mrb[0].mxu0
  %737 = vmatprep.mubr.f32.mxu0 0.0
  %738 = vmatmul.mubr.f32.gmra.mrb[0].mxu0 %v243
  %v739 = vpop.f32.mrb[0].mxu0
  %v740 = vadd.f32 %v155, %v739
  %v741 = vpop.f32.mrb[0].mxu0
  %742 = vmatprep.mubr.f32.mxu0 0.0
  %743 = vmatmul.mubr.f32.gmra.mrb[0].mxu0 %v246
  %v744 = vpop.f32.mrb[0].mxu0
  %v745 = vadd.f32 %v155, %v744
  %v746 = vpop.f32.mrb[0].mxu0
  %747 = vmatprep.mubr.f32.mxu0 0.0
  %748 = vmatmul.mubr.f32.gmra.mrb[0].mxu0 %v249
  %v749 = vpop.f32.mrb[0].mxu0
  %v750 = vadd.f32 %v155, %v749
  %v751 = vpop.f32.mrb[0].mxu0
  %752 = vmatprep.mubr.f32.mxu0 0.0
  %753 = vmatmul.mubr.f32.gmra.mrb[0].mxu0 %v252
  %v754 = vpop.f32.mrb[0].mxu0
  %v755 = vadd.f32 %v155, %v754
  %v756 = vpop.f32.mrb[0].mxu0
  %757 = vmatprep.mubr.f32.mxu0 0.0
  %758 = vmatmul.mubr.f32.gmra.mrb[0].mxu0 %v255
  %v759 = vpop.f32.mrb[0].mxu0
  %v760 = vadd.f32 %v155, %v759
  %v761 = vpop.f32.mrb[0].mxu0
  %762 = vmatprep.mubr.f32.mxu0 0.0
  %763 = vmatmul.mubr.f32.gmra.mrb[0].mxu0 %v258
  %v764 = vpop.f32.mrb[0].mxu0
  %v765 = vadd.f32 %v155, %v764
  %v766 = vpop.f32.mrb[0].mxu0
  %767 = vmatprep.mubr.f32.mxu0 0.0
  %768 = vmatmul.mubr.f32.gmra.mrb[0].mxu0 %v261
  %v769 = vpop.f32.mrb[0].mxu0
  %v770 = vadd.f32 %v155, %v769
  %v771 = vpop.f32.mrb[0].mxu0
  %772 = vmatprep.mubr.f32.mxu0 0.0
  %773 = vmatmul.mubr.f32.gmra.mrb[0].mxu0 %v264
  %v774 = vpop.f32.mrb[0].mxu0
  %v775 = vadd.f32 %v155, %v774
  %v776 = vpop.f32.mrb[0].mxu0
  %777 = vmatprep.mubr.f32.mxu0 0.0
  %778 = vmatmul.mubr.f32.gmra.mrb[0].mxu0 %v267
  %v779 = vpop.f32.mrb[0].mxu0
  %v780 = vadd.f32 %v155, %v779
  %v781 = vpop.f32.mrb[0].mxu0
  %782 = vmatprep.mubr.f32.mxu0 0.0
  %783 = vmatmul.mubr.f32.gmra.mrb[0].mxu0 %v270
  %v784 = vpop.f32.mrb[0].mxu0
  %v785 = vadd.f32 %v155, %v784
  %v786 = vpop.f32.mrb[0].mxu0
  %787 = vmatprep.mubr.f32.mxu0 0.0
  %788 = vmatmul.mubr.f32.gmra.mrb[0].mxu0 %v273
  %v789 = vpop.f32.mrb[0].mxu0
  %v790 = vadd.f32 %v155, %v789
  %v791 = vpop.f32.mrb[0].mxu0
  %792 = vmatprep.mubr.f32.mxu0 0.0
  %793 = vmatmul.mubr.f32.gmra.mrb[0].mxu0 %v276
  %v794 = vpop.f32.mrb[0].mxu0
  %v795 = vadd.f32 %v155, %v794
  %v796 = vpop.f32.mrb[0].mxu0
  %797 = vmatprep.mubr.f32.mxu0 0.0
  %798 = vmatmul.mubr.f32.gmra.mrb[0].mxu0 %v279
  %v799 = vpop.f32.mrb[0].mxu0
  %v800 = vadd.f32 %v155, %v799
  %v801 = vpop.f32.mrb[0].mxu0
  %802 = vmatprep.mubr.f32.mxu0 0.0
  %803 = vmatmul.mubr.f32.gmra.mrb[0].mxu0 %v282
  %v804 = vpop.f32.mrb[0].mxu0
  %v805 = vadd.f32 %v155, %v804
  %v806 = vpop.f32.mrb[0].mxu0
  %807 = vmatprep.mubr.f32.mxu0 0.0
  %808 = vmatmul.mubr.f32.gmra.mrb[0].mxu0 %v285
  %v809 = vpop.f32.mrb[0].mxu0
  %v810 = vadd.f32 %v155, %v809
  %v811 = vpop.f32.mrb[0].mxu0
  %812 = vmatprep.mubr.f32.mxu0 0.0
  %813 = vmatmul.mubr.f32.gmra.mrb[0].mxu0 %v288
  %v814 = vpop.f32.mrb[0].mxu0
  %v815 = vadd.f32 %v155, %v814
  %v816 = vpop.f32.mrb[0].mxu0
  %817 = vmatprep.mubr.f32.mxu0 0.0
  %818 = vmatmul.mubr.f32.gmra.mrb[0].mxu0 %v291
  %v819 = vpop.f32.mrb[0].mxu0
  %v820 = vadd.f32 %v155, %v819
  %v821 = vpop.f32.mrb[0].mxu0
  %822 = vmatprep.mubr.f32.mxu0 0.0
  %823 = vmatmul.mubr.f32.gmra.mrb[0].mxu0 %v294
  %v824 = vpop.f32.mrb[0].mxu0
  %v825 = vadd.f32 %v155, %v824
  %v826 = vpop.f32.mrb[0].mxu0
  %827 = vmatprep.mubr.f32.mxu0 0.0
  %828 = vmatmul.mubr.f32.gmra.mrb[0].mxu0 %v297
  %v829 = vpop.f32.mrb[0].mxu0
  %v830 = vadd.f32 %v155, %v829
  %v831 = vpop.f32.mrb[0].mxu0
  %832 = vmatprep.mubr.f32.mxu0 0.0
  %833 = vmatmul.mubr.f32.gmra.mrb[0].mxu0 %v300
  %v834 = vpop.f32.mrb[0].mxu0
  %v835 = vadd.f32 %v155, %v834
  %v836 = vpop.f32.mrb[0].mxu0
  %837 = vmatprep.mubr.f32.mxu0 0.0
  %838 = vmatmul.mubr.f32.gmra.mrb[0].mxu0 %v303
  %v839 = vpop.f32.mrb[0].mxu0
  %v840 = vadd.f32 %v155, %v839
  %v841 = vpop.f32.mrb[0].mxu0
  %842 = vmatprep.mubr.f32.mxu0 0.0
  %843 = vmatmul.mubr.f32.gmra.mrb[0].mxu0 %v306
  %v844 = vpop.f32.mrb[0].mxu0
  %v845 = vadd.f32 %v155, %v844
  %v846 = vpop.f32.mrb[0].mxu0
  %847 = vmatprep.mubr.f32.mxu0 0.0
  %848 = vmatmul.mubr.f32.gmra.mrb[0].mxu0 %v309
  %v849 = vpop.f32.mrb[0].mxu0
  %v850 = vadd.f32 %v155, %v849
  %v851 = vpop.f32.mrb[0].mxu0
  %852 = vmatprep.mubr.f32.mxu0 0.0
  %853 = vmatmul.mubr.f32.gmra.mrb[0].mxu0 %v312
  %v854 = vpop.f32.mrb[0].mxu0
  %v855 = vadd.f32 %v155, %v854
  %v856 = vpop.f32.mrb[0].mxu0
  %857 = vmatprep.mubr.f32.mxu0 0.0
  %858 = vmatmul.mubr.f32.gmra.mrb[0].mxu0 %v315
  %v859 = vpop.f32.mrb[0].mxu0
  %v860 = vadd.f32 %v155, %v859
  %v861 = vpop.f32.mrb[0].mxu0
  %862 = vmatprep.mubr.f32.mxu0 0.0
  %863 = vmatmul.mubr.f32.gmra.mrb[0].mxu0 %v318
  %v864 = vpop.f32.mrb[0].mxu0
  %v865 = vadd.f32 %v155, %v864
  %v866 = vpop.f32.mrb[0].mxu0
  %867 = vmatprep.mubr.f32.mxu0 0.0
  %868 = vmatmul.mubr.f32.gmra.mrb[0].mxu0 %v321
  %v869 = vpop.f32.mrb[0].mxu0
  %v870 = vadd.f32 %v155, %v869
  %v871 = vpop.f32.mrb[0].mxu0
  %872 = vmatprep.mubr.f32.mxu0 0.0
  %873 = vmatmul.mubr.f32.gmra.mrb[0].mxu0 %v324
  %v874 = vpop.f32.mrb[0].mxu0
  %v875 = vadd.f32 %v155, %v874
  %v876 = vpop.f32.mrb[0].mxu0
  %877 = vmatprep.mubr.f32.mxu0 0.0
  %878 = vmatmul.mubr.f32.gmra.mrb[0].mxu0 %v327
  %v879 = vpop.f32.mrb[0].mxu0
  %v880 = vadd.f32 %v155, %v879
  %v881 = vpop.f32.mrb[0].mxu0
  %882 = vmatprep.mubr.f32.mxu0 0.0
  %883 = vmatmul.mubr.f32.gmra.mrb[0].mxu0 %v330
  %v884 = vpop.f32.mrb[0].mxu0
  %v885 = vadd.f32 %v155, %v884
  %v886 = vpop.f32.mrb[0].mxu0
  %887 = vmatprep.mubr.f32.mxu0 0.0
  %888 = vmatmul.mubr.f32.gmra.mrb[0].mxu0 %v333
  %v889 = vpop.f32.mrb[0].mxu0
  %v890 = vadd.f32 %v155, %v889
  %v891 = vpop.f32.mrb[0].mxu0
  %892 = vmatprep.mubr.f32.mxu0 0.0
  %893 = vmatmul.mubr.f32.gmra.mrb[0].mxu0 %v336
  %v894 = vpop.f32.mrb[0].mxu0
  %v895 = vadd.f32 %v155, %v894
  %v896 = vpop.f32.mrb[0].mxu0
  %897 = vmatprep.mubr.f32.mxu0 0.0
  %898 = vmatmul.mubr.f32.gmra.mrb[0].mxu0 %v339
  %v899 = vpop.f32.mrb[0].mxu0
  %v900 = vadd.f32 %v155, %v899
  %v901 = vpop.f32.mrb[0].mxu0
  %902 = vmatprep.mubr.f32.mxu0 0.0
  %903 = vmatmul.mubr.f32.gmra.mrb[0].mxu0 %v342
  %v904 = vpop.f32.mrb[0].mxu0
  %v905 = vadd.f32 %v155, %v904
  %v906 = vpop.f32.mrb[0].mxu0
  %907 = vmatprep.mubr.f32.mxu0 0.0
  %908 = vmatmul.mubr.f32.gmra.mrb[0].mxu0 %v345
  %v909 = vpop.f32.mrb[0].mxu0
  %v910 = vadd.f32 %v155, %v909
  %v911 = vpop.f32.mrb[0].mxu0
  %912 = vmatprep.mubr.f32.mxu0 0.0
  %913 = vmatmul.mubr.f32.gmra.mrb[0].mxu0 %v348
  %v914 = vpop.f32.mrb[0].mxu0
  %v915 = vadd.f32 %v155, %v914
  %v916 = vpop.f32.mrb[0].mxu0
  %917 = vmatprep.mubr.f32.mxu0 0.0
  %918 = vmatmul.mubr.f32.gmra.mrb[0].mxu0 %v351
  %v919 = vpop.f32.mrb[0].mxu0
  %v920 = vadd.f32 %v155, %v919
  %v921 = vpop.f32.mrb[0].mxu0
  %922 = vmatprep.mubr.f32.mxu0 0.0
  %923 = vmatmul.mubr.f32.gmra.mrb[0].mxu0 %v354
  %v924 = vpop.f32.mrb[0].mxu0
  %v925 = vadd.f32 %v155, %v924
  %v926 = vpop.f32.mrb[0].mxu0
  %927 = vmatprep.mubr.f32.mxu0 0.0
  %928 = vmatmul.mubr.f32.gmra.mrb[0].mxu0 %v357
  %v929 = vpop.f32.mrb[0].mxu0
  %v930 = vadd.f32 %v155, %v929
  %v931 = vpop.f32.mrb[0].mxu0
  %932 = vmatprep.mubr.f32.mxu0 0.0
  %933 = vmatmul.mubr.f32.gmra.mrb[0].mxu0 %v360
  %v934 = vpop.f32.mrb[0].mxu0
  %v935 = vadd.f32 %v155, %v934
  %v936 = vpop.f32.mrb[0].mxu0
  %937 = vmatprep.mubr.f32.mxu0 0.0
  %938 = vmatmul.mubr.f32.gmra.mrb[0].mxu0 %v363
  %v939 = vpop.f32.mrb[0].mxu0
  %v940 = vadd.f32 %v155, %v939
  %v941 = vpop.f32.mrb[0].mxu0
  %942 = vmatprep.mubr.f32.mxu0 0.0
  %943 = vmatmul.mubr.f32.gmra.mrb[0].mxu0 %v366
  %v944 = vpop.f32.mrb[0].mxu0
  %v945 = vadd.f32 %v155, %v944
  %v946 = vpop.f32.mrb[0].mxu0
  %947 = vmatprep.mubr.f32.mxu0 0.0
  %948 = vmatmul.mubr.f32.gmra.mrb[0].mxu0 %v369
  %v949 = vpop.f32.mrb[0].mxu0
  %v950 = vadd.f32 %v155, %v949
  %v951 = vpop.f32.mrb[0].mxu0
  %952 = vmatprep.mubr.f32.mxu0 0.0
  %953 = vmatmul.mubr.f32.gmra.mrb[0].mxu0 %v372
  %v954 = vpop.f32.mrb[0].mxu0
  %v955 = vadd.f32 %v155, %v954
  %v956 = vpop.f32.mrb[0].mxu0
  %957 = vmatprep.mubr.f32.mxu0 0.0
  %958 = vmatmul.mubr.f32.gmra.mrb[0].mxu0 %v375
  %v959 = vpop.f32.mrb[0].mxu0
  %v960 = vadd.f32 %v155, %v959
  %v961 = vpop.f32.mrb[0].mxu0
  %962 = vmatprep.mubr.f32.mxu0 0.0
  %963 = vmatmul.mubr.f32.gmra.mrb[0].mxu0 %v378
  %v964 = vpop.f32.mrb[0].mxu0
  %v965 = vadd.f32 %v155, %v964
  %v966 = vpop.f32.mrb[0].mxu0
  %967 = vmatprep.mubr.f32.mxu0 0.0
  %968 = vmatmul.mubr.f32.gmra.mrb[0].mxu0 %v381
  %v969 = vpop.f32.mrb[0].mxu0
  %v970 = vadd.f32 %v155, %v969
  %v971 = vpop.f32.mrb[0].mxu0
  %972 = vmatprep.mubr.f32.mxu0 0.0
  %973 = vmatmul.mubr.f32.gmra.mrb[0].mxu0 %v384
  %v974 = vpop.f32.mrb[0].mxu0
  %v975 = vadd.f32 %v155, %v974
  %v976 = vpop.f32.mrb[0].mxu0
  %977 = vmatprep.mubr.f32.mxu0 0.0
  %978 = vmatmul.mubr.f32.gmra.mrb[0].mxu0 %v387
  %v979 = vpop.f32.mrb[0].mxu0
  %v980 = vadd.f32 %v155, %v979
  %v981 = vpop.f32.mrb[0].mxu0
  %982 = vmatprep.mubr.f32.mxu0 0.0
  %983 = vmatmul.mubr.f32.gmra.mrb[0].mxu0 %v390
  %v984 = vpop.f32.mrb[0].mxu0
  %v985 = vadd.f32 %v155, %v984
  %v986 = vpop.f32.mrb[0].mxu0
  %987 = vmatprep.mubr.f32.mxu0 0.0
  %988 = vmatmul.mubr.f32.gmra.mrb[0].mxu0 %v393
  %v989 = vpop.f32.mrb[0].mxu0
  %v990 = vadd.f32 %v155, %v989
  %v991 = vpop.f32.mrb[0].mxu0
  %992 = vmatprep.mubr.f32.mxu0 0.0
  %993 = vmatmul.mubr.f32.gmra.mrb[0].mxu0 %v396
  %v994 = vpop.f32.mrb[0].mxu0
  %v995 = vadd.f32 %v155, %v994
  %v996 = vpop.f32.mrb[0].mxu0
  %997 = vmatprep.mubr.f32.mxu0 0.0
  %998 = vmatmul.mubr.f32.gmra.mrb[0].mxu0 %v399
  %v999 = vpop.f32.mrb[0].mxu0
  %v1000 = vadd.f32 %v155, %v999
  %v1001 = vpop.f32.mrb[0].mxu0
  %1002 = vmatprep.mubr.f32.mxu0 0.0
  %1003 = vmatmul.mubr.f32.gmra.mrb[0].mxu0 %v402
  %v1004 = vpop.f32.mrb[0].mxu0
  %v1005 = vadd.f32 %v155, %v1004
  %v1006 = vpop.f32.mrb[0].mxu0
  %1007 = vmatprep.mubr.f32.mxu0 0.0
  %1008 = vmatmul.mubr.f32.gmra.mrb[0].mxu0 %v405
  %v1009 = vpop.f32.mrb[0].mxu0
  %v1010 = vadd.f32 %v155, %v1009
  %v1011 = vpop.f32.mrb[0].mxu0
  %1012 = vmatprep.mubr.f32.mxu0 0.0
  %1013 = vmatmul.mubr.f32.gmra.mrb[0].mxu0 %v408
  %v1014 = vpop.f32.mrb[0].mxu0
  %v1015 = vadd.f32 %v155, %v1014
  %v1016 = vpop.f32.mrb[0].mxu0
  %1017 = vmatprep.mubr.f32.mxu0 0.0
  %1018 = vmatmul.mubr.f32.gmra.mrb[0].mxu0 %v411
  %v1019 = vpop.f32.mrb[0].mxu0
  %v1020 = vadd.f32 %v155, %v1019
  %v1021 = vpop.f32.mrb[0].mxu0
  %1022 = vmatprep.mubr.f32.mxu0 0.0
  %1023 = vmatmul.mubr.f32.gmra.mrb[0].mxu0 %v414
  %v1024 = vpop.f32.mrb[0].mxu0
  %v1025 = vadd.f32 %v155, %v1024
  %v1026 = vpop.f32.mrb[0].mxu0
  %1027 = vmatprep.mubr.f32.mxu0 0.0
  %1028 = vmatmul.mubr.f32.gmra.mrb[0].mxu0 %v417
  %v1029 = vpop.f32.mrb[0].mxu0
  %v1030 = vadd.f32 %v155, %v1029
  %v1031 = vpop.f32.mrb[0].mxu0
  %1032 = vmatprep.mubr.f32.mxu0 0.0
  %1033 = vmatmul.mubr.f32.gmra.mrb[0].mxu0 %v420
  %v1034 = vpop.f32.mrb[0].mxu0
  %v1035 = vadd.f32 %v155, %v1034
  %v1036 = vpop.f32.mrb[0].mxu0
  %1037 = vmatprep.mubr.f32.mxu0 0.0
  %1038 = vmatmul.mubr.f32.gmra.mrb[0].mxu0 %v423
  %v1039 = vpop.f32.mrb[0].mxu0
  %v1040 = vadd.f32 %v155, %v1039
  %v1041 = vpop.f32.mrb[0].mxu0
  %1042 = vmatprep.mubr.f32.mxu0 0.0
  %1043 = vmatmul.mubr.f32.gmra.mrb[0].mxu0 %v426
  %v1044 = vpop.f32.mrb[0].mxu0
  %v1045 = vadd.f32 %v155, %v1044
  %v1046 = vpop.f32.mrb[0].mxu0
  %1047 = vmatprep.mubr.f32.mxu0 0.0
  %1048 = vmatmul.mubr.f32.gmra.mrb[0].mxu0 %v429
  %v1049 = vpop.f32.mrb[0].mxu0
  %v1050 = vadd.f32 %v155, %v1049
  %v1051 = vpop.f32.mrb[0].mxu0
  %1052 = vmatprep.mubr.f32.mxu0 0.0
  %1053 = vmatmul.mubr.f32.gmra.mrb[0].mxu0 %v432
  %v1054 = vpop.f32.mrb[0].mxu0
  %v1055 = vadd.f32 %v155, %v1054
  %v1056 = vpop.f32.mrb[0].mxu0
  %1057 = vmatprep.mubr.f32.mxu0 0.0
  %1058 = vmatmul.mubr.f32.gmra.mrb[0].mxu0 %v435
  %v1059 = vpop.f32.mrb[0].mxu0
  %v1060 = vadd.f32 %v155, %v1059
  %v1061 = vpop.f32.mrb[0].mxu0
  %1062 = vmatprep.mubr.f32.mxu0 0.0
  %1063 = vmatmul.mubr.f32.gmra.mrb[0].mxu0 %v438
  %v1064 = vpop.f32.mrb[0].mxu0
  %v1065 = vadd.f32 %v155, %v1064
  %v1066 = vpop.f32.mrb[0].mxu0
  %1067 = vmatprep.mubr.f32.mxu0 0.0
  %1068 = vmatmul.mubr.f32.gmra.mrb[0].mxu0 %v441
  %v1069 = vpop.f32.mrb[0].mxu0
  %v1070 = vadd.f32 %v155, %v1069
  %v1071 = vpop.f32.mrb[0].mxu0
  %1072 = vmatprep.mubr.f32.mxu0 0.0
  %1073 = vmatmul.mubr.f32.gmra.mrb[0].mxu0 %v444
  %v1074 = vpop.f32.mrb[0].mxu0
  %v1075 = vadd.f32 %v155, %v1074
  %v1076 = vpop.f32.mrb[0].mxu0
  %1077 = vmatprep.mubr.f32.mxu0 0.0
  %1078 = vmatmul.mubr.f32.gmra.mrb[0].mxu0 %v447
  %v1079 = vpop.f32.mrb[0].mxu0
  %v1080 = vadd.f32 %v155, %v1079
  %v1081 = vpop.f32.mrb[0].mxu0
  %1082 = vmatprep.mubr.f32.mxu0 0.0
  %1083 = vmatmul.mubr.f32.gmra.mrb[0].mxu0 %v450
  %v1084 = vpop.f32.mrb[0].mxu0
  %v1085 = vadd.f32 %v155, %v1084
  %v1086 = vpop.f32.mrb[0].mxu0
  %1087 = vmatprep.mubr.f32.mxu0 0.0
  %1088 = vmatmul.mubr.f32.gmra.mrb[0].mxu0 %v453
  %v1089 = vpop.f32.mrb[0].mxu0
  %v1090 = vadd.f32 %v155, %v1089
  %v1091 = vpop.f32.mrb[0].mxu0
  %1092 = vmatprep.mubr.f32.mxu0 0.0
  %1093 = vmatmul.mubr.f32.gmra.mrb[0].mxu0 %v456
  %v1094 = vpop.f32.mrb[0].mxu0
  %v1095 = vadd.f32 %v155, %v1094
  %v1096 = vpop.f32.mrb[0].mxu0
  %1097 = vmatprep.mubr.f32.mxu0 0.0
  %1098 = vmatmul.mubr.f32.gmra.mrb[0].mxu0 %v459
  %v1099 = vpop.f32.mrb[0].mxu0
  %v1100 = vadd.f32 %v155, %v1099
  %v1101 = vpop.f32.mrb[0].mxu0
  %1102 = vmatprep.mubr.f32.mxu0 0.0
  %1103 = vmatmul.mubr.f32.gmra.mrb[0].mxu0 %v462
  %v1104 = vpop.f32.mrb[0].mxu0
  %v1105 = vadd.f32 %v155, %v1104
  %v1106 = vpop.f32.mrb[0].mxu0
  %1107 = vmatprep.mubr.f32.mxu0 0.0
  %1108 = vmatmul.mubr.f32.gmra.mrb[0].mxu0 %v465
  %v1109 = vpop.f32.mrb[0].mxu0
  %v1110 = vadd.f32 %v155, %v1109
  %v1111 = vpop.f32.mrb[0].mxu0
  %1112 = vmatprep.mubr.f32.mxu0 0.0
  %1113 = vmatmul.mubr.f32.gmra.mrb[0].mxu0 %v468
  %v1114 = vpop.f32.mrb[0].mxu0
  %v1115 = vadd.f32 %v155, %v1114
  %v1116 = vpop.f32.mrb[0].mxu0
  %1117 = vmatprep.mubr.f32.mxu0 0.0
  %1118 = vmatmul.mubr.f32.gmra.mrb[0].mxu0 %v471
  %v1119 = vpop.f32.mrb[0].mxu0
  %v1120 = vadd.f32 %v155, %v1119
  %v1121 = vpop.f32.mrb[0].mxu0
  %1122 = vmatprep.mubr.f32.mxu0 0.0
  %1123 = vmatmul.mubr.f32.gmra.mrb[0].mxu0 %v474
  %v1124 = vpop.f32.mrb[0].mxu0
  %v1125 = vadd.f32 %v155, %v1124
  %v1126 = vpop.f32.mrb[0].mxu0
  %1127 = vmatprep.mubr.f32.mxu0 0.0
  %1128 = vmatmul.mubr.f32.gmra.mrb[0].mxu0 %v477
  %v1129 = vpop.f32.mrb[0].mxu0
  %v1130 = vadd.f32 %v155, %v1129
  %v1131 = vpop.f32.mrb[0].mxu0
  %1132 = vmatprep.mubr.f32.mxu0 0.0
  %1133 = vmatmul.mubr.f32.gmra.mrb[0].mxu0 %v480
  %v1134 = vpop.f32.mrb[0].mxu0
  %v1135 = vadd.f32 %v155, %v1134
  %v1136 = vpop.f32.mrb[0].mxu0
  %1137 = vmatprep.mubr.f32.mxu0 0.0
  %1138 = vmatmul.mubr.f32.gmra.mrb[0].mxu0 %v483
  %v1139 = vpop.f32.mrb[0].mxu0
  %v1140 = vadd.f32 %v155, %v1139
  %v1141 = vpop.f32.mrb[0].mxu0
  %1142 = vmatprep.mubr.f32.mxu0 0.0
  %1143 = vmatmul.mubr.f32.gmra.mrb[0].mxu0 %v486
  %v1144 = vpop.f32.mrb[0].mxu0
  %v1145 = vadd.f32 %v155, %v1144
  %v1146 = vpop.f32.mrb[0].mxu0
  %1147 = vmatprep.mubr.f32.mxu0 0.0
  %1148 = vmatmul.mubr.f32.gmra.mrb[0].mxu0 %v489
  %v1149 = vpop.f32.mrb[0].mxu0
  %v1150 = vadd.f32 %v155, %v1149
  %v1151 = vpop.f32.mrb[0].mxu0
  %1152 = vmatprep.mubr.f32.mxu0 0.0
  %1153 = vmatmul.mubr.f32.gmra.mrb[0].mxu0 %v492
  %v1154 = vpop.f32.mrb[0].mxu0
  %v1155 = vadd.f32 %v155, %v1154
  %v1156 = vpop.f32.mrb[0].mxu0
  %1157 = vmatprep.mubr.f32.mxu0 0.0
  %1158 = vmatmul.mubr.f32.gmra.mrb[0].mxu0 %v495
  %v1159 = vpop.f32.mrb[0].mxu0
  %v1160 = vadd.f32 %v155, %v1159
  %v1161 = vpop.f32.mrb[0].mxu0
  %1162 = vmatprep.mubr.f32.mxu0 0.0
  %1163 = vmatmul.mubr.f32.gmra.mrb[0].mxu0 %v498
  %v1164 = vpop.f32.mrb[0].mxu0
  %v1165 = vadd.f32 %v155, %v1164
  %v1166 = vpop.f32.mrb[0].mxu0
  %1167 = vmatprep.mubr.f32.mxu0 0.0
  %1168 = vmatmul.mubr.f32.gmra.mrb[0].mxu0 %v501
  %v1169 = vpop.f32.mrb[0].mxu0
  %v1170 = vadd.f32 %v155, %v1169
  %v1171 = vpop.f32.mrb[0].mxu0
  %1172 = vmatprep.mubr.f32.mxu0 0.0
  %1173 = vmatmul.mubr.f32.gmra.mrb[0].mxu0 %v504
  %v1174 = vpop.f32.mrb[0].mxu0
  %v1175 = vadd.f32 %v155, %v1174
  %v1176 = vpop.f32.mrb[0].mxu0
  %1177 = vmatprep.mubr.f32.mxu0 0.0
  %1178 = vmatmul.mubr.f32.gmra.mrb[0].mxu0 %v507
  %v1179 = vpop.f32.mrb[0].mxu0
  %v1180 = vadd.f32 %v155, %v1179
  %v1181 = vpop.f32.mrb[0].mxu0
  %1182 = vmatprep.mubr.f32.mxu0 0.0
  %1183 = vmatmul.mubr.f32.gmra.mrb[0].mxu0 %v510
  %v1184 = vpop.f32.mrb[0].mxu0
  %v1185 = vadd.f32 %v155, %v1184
  %v1186 = vpop.f32.mrb[0].mxu0
  %1187 = vmatprep.mubr.f32.mxu0 0.0
  %1188 = vmatmul.mubr.f32.gmra.mrb[0].mxu0 %v513
  %v1189 = vpop.f32.mrb[0].mxu0
  %v1190 = vadd.f32 %v155, %v1189
  %v1191 = vpop.f32.mrb[0].mxu0
  %1192 = vmatprep.mubr.f32.mxu0 0.0
  %1193 = vmatmul.mubr.f32.gmra.mrb[0].mxu0 %v516
  %v1194 = vpop.f32.mrb[0].mxu0
  %v1195 = vadd.f32 %v155, %v1194
  %v1196 = vpop.f32.mrb[0].mxu0
  %1197 = vmatprep.mubr.f32.mxu0 0.0
  %1198 = vmatmul.mubr.f32.gmra.mrb[0].mxu0 %v519
  %v1199 = vpop.f32.mrb[0].mxu0
  %v1200 = vadd.f32 %v155, %v1199
  %v1201 = vpop.f32.mrb[0].mxu0
  %1202 = vmatprep.mubr.f32.mxu0 0.0
  %1203 = vmatmul.mubr.f32.gmra.mrb[0].mxu0 %v522
  %v1204 = vpop.f32.mrb[0].mxu0
  %v1205 = vadd.f32 %v155, %v1204
  %v1206 = vpop.f32.mrb[0].mxu0
  %1207 = vmatprep.mubr.f32.mxu0 0.0
  %1208 = vmatmul.mubr.f32.gmra.mrb[0].mxu0 %v525
  %v1209 = vpop.f32.mrb[0].mxu0
  %v1210 = vadd.f32 %v155, %v1209
  %v1211 = vpop.f32.mrb[0].mxu0
  %1212 = vmatprep.mubr.f32.mxu0 0.0
  %1213 = vmatmul.mubr.f32.gmra.mrb[0].mxu0 %v528
  %v1214 = vpop.f32.mrb[0].mxu0
  %v1215 = vadd.f32 %v155, %v1214
  %v1216 = vpop.f32.mrb[0].mxu0
  %1217 = vmatprep.mubr.f32.mxu0 0.0
  %1218 = vmatmul.mubr.f32.gmra.mrb[0].mxu0 %v531
  %v1219 = vpop.f32.mrb[0].mxu0
  %v1220 = vadd.f32 %v155, %v1219
  %v1221 = vpop.f32.mrb[0].mxu0
  %1222 = vdwg.mxu0
  %v1223 = vmul.f32 %v600, 0.5
  %v1224 = vmul.f32 %v605, 0.5
  %v1225 = vmul.f32 %v610, 0.5
  %v1226 = vmul.f32 %v615, 0.5
  %v1227 = vmul.f32 %v620, 0.5
  %v1228 = vmul.f32 %v625, 0.5
  %v1229 = vmul.f32 %v630, 0.5
  %v1230 = vmul.f32 %v635, 0.5
  %v1231 = vmul.f32 %v640, 0.5
  %v1232 = vmul.f32 %v645, 0.5
  %v1233 = vmul.f32 %v650, 0.5
  %v1234 = vmul.f32 %v655, 0.5
  %v1235 = vmul.f32 %v660, 0.5
  %v1236 = vmul.f32 %v665, 0.5
  %v1237 = vmul.f32 %v670, 0.5
  %v1238 = vmul.f32 %v675, 0.5
  %v1239 = vmul.f32 %v680, 0.5
  %v1240 = vmul.f32 %v685, 0.5
  %v1241 = vmul.f32 %v690, 0.5
  %v1242 = vmul.f32 %v695, 0.5
  %v1243 = vmul.f32 %v700, 0.5
  %v1244 = vmul.f32 %v705, 0.5
  %v1245 = vmul.f32 %v710, 0.5
  %v1246 = vmul.f32 %v715, 0.5
  %v1247 = vmul.f32 %v720, 0.5
  %v1248 = vmul.f32 %v725, 0.5
  %v1249 = vmul.f32 %v730, 0.5
  %v1250 = vmul.f32 %v735, 0.5
  %v1251 = vmul.f32 %v740, 0.5
  %v1252 = vmul.f32 %v745, 0.5
  %v1253 = vmul.f32 %v750, 0.5
  %v1254 = vmul.f32 %v755, 0.5
  %v1255 = vmul.f32 %v760, 0.5
  %v1256 = vmul.f32 %v765, 0.5
  %v1257 = vmul.f32 %v770, 0.5
  %v1258 = vmul.f32 %v775, 0.5
  %v1259 = vmul.f32 %v780, 0.5
  %v1260 = vmul.f32 %v785, 0.5
  %v1261 = vmul.f32 %v790, 0.5
  %v1262 = vmul.f32 %v795, 0.5
  %v1263 = vmul.f32 %v800, 0.5
  %v1264 = vmul.f32 %v805, 0.5
  %v1265 = vmul.f32 %v810, 0.5
  %v1266 = vmul.f32 %v815, 0.5
  %v1267 = vmul.f32 %v820, 0.5
  %v1268 = vmul.f32 %v825, 0.5
  %v1269 = vmul.f32 %v830, 0.5
  %v1270 = vmul.f32 %v835, 0.5
  %v1271 = vmul.f32 %v840, 0.5
  %v1272 = vmul.f32 %v845, 0.5
  %v1273 = vmul.f32 %v850, 0.5
  %v1274 = vmul.f32 %v855, 0.5
  %v1275 = vmul.f32 %v860, 0.5
  %v1276 = vmul.f32 %v865, 0.5
  %v1277 = vmul.f32 %v870, 0.5
  %v1278 = vmul.f32 %v875, 0.5
  %v1279 = vmul.f32 %v880, 0.5
  %v1280 = vmul.f32 %v885, 0.5
  %v1281 = vmul.f32 %v890, 0.5
  %v1282 = vmul.f32 %v895, 0.5
  %v1283 = vmul.f32 %v900, 0.5
  %v1284 = vmul.f32 %v905, 0.5
  %v1285 = vmul.f32 %v910, 0.5
  %v1286 = vmul.f32 %v915, 0.5
  %v1287 = vmul.f32 %v920, 0.5
  %v1288 = vmul.f32 %v925, 0.5
  %v1289 = vmul.f32 %v930, 0.5
  %v1290 = vmul.f32 %v935, 0.5
  %v1291 = vmul.f32 %v940, 0.5
  %v1292 = vmul.f32 %v945, 0.5
  %v1293 = vmul.f32 %v950, 0.5
  %v1294 = vmul.f32 %v955, 0.5
  %v1295 = vmul.f32 %v960, 0.5
  %v1296 = vmul.f32 %v965, 0.5
  %v1297 = vmul.f32 %v970, 0.5
  %v1298 = vmul.f32 %v975, 0.5
  %v1299 = vmul.f32 %v980, 0.5
  %v1300 = vmul.f32 %v985, 0.5
  %v1301 = vmul.f32 %v990, 0.5
  %v1302 = vmul.f32 %v995, 0.5
  %v1303 = vmul.f32 %v1000, 0.5
  %v1304 = vmul.f32 %v1005, 0.5
  %v1305 = vmul.f32 %v1010, 0.5
  %v1306 = vmul.f32 %v1015, 0.5
  %v1307 = vmul.f32 %v1020, 0.5
  %v1308 = vmul.f32 %v1025, 0.5
  %v1309 = vmul.f32 %v1030, 0.5
  %v1310 = vmul.f32 %v1035, 0.5
  %v1311 = vmul.f32 %v1040, 0.5
  %v1312 = vmul.f32 %v1045, 0.5
  %v1313 = vmul.f32 %v1050, 0.5
  %v1314 = vmul.f32 %v1055, 0.5
  %v1315 = vmul.f32 %v1060, 0.5
  %v1316 = vmul.f32 %v1065, 0.5
  %v1317 = vmul.f32 %v1070, 0.5
  %v1318 = vmul.f32 %v1075, 0.5
  %v1319 = vmul.f32 %v1080, 0.5
  %v1320 = vmul.f32 %v1085, 0.5
  %v1321 = vmul.f32 %v1090, 0.5
  %v1322 = vmul.f32 %v1095, 0.5
  %v1323 = vmul.f32 %v1100, 0.5
  %v1324 = vmul.f32 %v1105, 0.5
  %v1325 = vmul.f32 %v1110, 0.5
  %v1326 = vmul.f32 %v1115, 0.5
  %v1327 = vmul.f32 %v1120, 0.5
  %v1328 = vmul.f32 %v1125, 0.5
  %v1329 = vmul.f32 %v1130, 0.5
  %v1330 = vmul.f32 %v1135, 0.5
  %v1331 = vmul.f32 %v1140, 0.5
  %v1332 = vmul.f32 %v1145, 0.5
  %v1333 = vmul.f32 %v1150, 0.5
  %v1334 = vmul.f32 %v1155, 0.5
  %v1335 = vmul.f32 %v1160, 0.5
  %v1336 = vmul.f32 %v1165, 0.5
  %v1337 = vmul.f32 %v1170, 0.5
  %v1338 = vmul.f32 %v1175, 0.5
  %v1339 = vmul.f32 %v1180, 0.5
  %v1340 = vmul.f32 %v1185, 0.5
  %v1341 = vmul.f32 %v1190, 0.5
  %v1342 = vmul.f32 %v1195, 0.5
  %v1343 = vmul.f32 %v1200, 0.5
  %v1344 = vmul.f32 %v1205, 0.5
  %v1345 = vmul.f32 %v1210, 0.5
  %v1346 = vmul.f32 %v1215, 0.5
  %v1347 = vmul.f32 %v1220, 0.5
  %v1348 = vtanh.pop %v1223
  %v1349 = vtanh.pop %v1224
  %v1350 = vtanh.pop %v1225
  %v1351 = vtanh.pop %v1226
  %v1352 = vtanh.pop %v1227
  %v1353 = vtanh.pop %v1228
  %v1354 = vtanh.pop %v1229
  %v1355 = vtanh.pop %v1230
  %v1356 = vtanh.pop %v1231
  %v1357 = vtanh.pop %v1232
  %v1358 = vtanh.pop %v1233
  %v1359 = vtanh.pop %v1234
  %v1360 = vtanh.pop %v1235
  %v1361 = vtanh.pop %v1236
  %v1362 = vtanh.pop %v1237
  %v1363 = vtanh.pop %v1238
  %v1364 = vtanh.pop %v1239
  %v1365 = vtanh.pop %v1240
  %v1366 = vtanh.pop %v1241
  %v1367 = vtanh.pop %v1242
  %v1368 = vtanh.pop %v1243
  %v1369 = vtanh.pop %v1244
  %v1370 = vtanh.pop %v1245
  %v1371 = vtanh.pop %v1246
  %v1372 = vtanh.pop %v1247
  %v1373 = vtanh.pop %v1248
  %v1374 = vtanh.pop %v1249
  %v1375 = vtanh.pop %v1250
  %v1376 = vtanh.pop %v1251
  %v1377 = vtanh.pop %v1252
  %v1378 = vtanh.pop %v1253
  %v1379 = vtanh.pop %v1254
  %v1380 = vtanh.pop %v1255
  %v1381 = vtanh.pop %v1256
  %v1382 = vtanh.pop %v1257
  %v1383 = vtanh.pop %v1258
  %v1384 = vtanh.pop %v1259
  %v1385 = vtanh.pop %v1260
  %v1386 = vtanh.pop %v1261
  %v1387 = vtanh.pop %v1262
  %v1388 = vtanh.pop %v1263
  %v1389 = vtanh.pop %v1264
  %v1390 = vtanh.pop %v1265
  %v1391 = vtanh.pop %v1266
  %v1392 = vtanh.pop %v1267
  %v1393 = vtanh.pop %v1268
  %v1394 = vtanh.pop %v1269
  %v1395 = vtanh.pop %v1270
  %v1396 = vtanh.pop %v1271
  %v1397 = vtanh.pop %v1272
  %v1398 = vtanh.pop %v1273
  %v1399 = vtanh.pop %v1274
  %v1400 = vtanh.pop %v1275
  %v1401 = vtanh.pop %v1276
  %v1402 = vtanh.pop %v1277
  %v1403 = vtanh.pop %v1278
  %v1404 = vtanh.pop %v1279
  %v1405 = vtanh.pop %v1280
  %v1406 = vtanh.pop %v1281
  %v1407 = vtanh.pop %v1282
  %v1408 = vtanh.pop %v1283
  %v1409 = vtanh.pop %v1284
  %v1410 = vtanh.pop %v1285
  %v1411 = vtanh.pop %v1286
  %v1412 = vtanh.pop %v1287
  %v1413 = vtanh.pop %v1288
  %v1414 = vtanh.pop %v1289
  %v1415 = vtanh.pop %v1290
  %v1416 = vtanh.pop %v1291
  %v1417 = vtanh.pop %v1292
  %v1418 = vtanh.pop %v1293
  %v1419 = vtanh.pop %v1294
  %v1420 = vtanh.pop %v1295
  %v1421 = vtanh.pop %v1296
  %v1422 = vtanh.pop %v1297
  %v1423 = vtanh.pop %v1298
  %v1424 = vtanh.pop %v1299
  %v1425 = vtanh.pop %v1300
  %v1426 = vtanh.pop %v1301
  %v1427 = vtanh.pop %v1302
  %v1428 = vtanh.pop %v1303
  %v1429 = vtanh.pop %v1304
  %v1430 = vtanh.pop %v1305
  %v1431 = vtanh.pop %v1306
  %v1432 = vtanh.pop %v1307
  %v1433 = vtanh.pop %v1308
  %v1434 = vtanh.pop %v1309
  %v1435 = vtanh.pop %v1310
  %v1436 = vtanh.pop %v1311
  %v1437 = vtanh.pop %v1312
  %v1438 = vtanh.pop %v1313
  %v1439 = vtanh.pop %v1314
  %v1440 = vtanh.pop %v1315
  %v1441 = vtanh.pop %v1316
  %v1442 = vtanh.pop %v1317
  %v1443 = vtanh.pop %v1318
  %v1444 = vtanh.pop %v1319
  %v1445 = vtanh.pop %v1320
  %v1446 = vtanh.pop %v1321
  %v1447 = vtanh.pop %v1322
  %v1448 = vtanh.pop %v1323
  %v1449 = vtanh.pop %v1324
  %v1450 = vtanh.pop %v1325
  %v1451 = vtanh.pop %v1326
  %v1452 = vtanh.pop %v1327
  %v1453 = vtanh.pop %v1328
  %v1454 = vtanh.pop %v1329
  %v1455 = vtanh.pop %v1330
  %v1456 = vtanh.pop %v1331
  %v1457 = vtanh.pop %v1332
  %v1458 = vtanh.pop %v1333
  %v1459 = vtanh.pop %v1334
  %v1460 = vtanh.pop %v1335
  %v1461 = vtanh.pop %v1336
  %v1462 = vtanh.pop %v1337
  %v1463 = vtanh.pop %v1338
  %v1464 = vtanh.pop %v1339
  %v1465 = vtanh.pop %v1340
  %v1466 = vtanh.pop %v1341
  %v1467 = vtanh.pop %v1342
  %v1468 = vtanh.pop %v1343
  %v1469 = vtanh.pop %v1344
  %v1470 = vtanh.pop %v1345
  %v1471 = vtanh.pop %v1346
  %v1472 = vtanh.pop %v1347
  %v1473 = vmul.f32 %v1348, 0.5
  %v1474 = vmul.f32 %v1349, 0.5
  %v1475 = vmul.f32 %v1350, 0.5
  %v1476 = vmul.f32 %v1351, 0.5
  %v1477 = vmul.f32 %v1352, 0.5
  %v1478 = vmul.f32 %v1353, 0.5
  %v1479 = vmul.f32 %v1354, 0.5
  %v1480 = vmul.f32 %v1355, 0.5
  %v1481 = vmul.f32 %v1356, 0.5
  %v1482 = vmul.f32 %v1357, 0.5
  %v1483 = vmul.f32 %v1358, 0.5
  %v1484 = vmul.f32 %v1359, 0.5
  %v1485 = vmul.f32 %v1360, 0.5
  %v1486 = vmul.f32 %v1361, 0.5
  %v1487 = vmul.f32 %v1362, 0.5
  %v1488 = vmul.f32 %v1363, 0.5
  %v1489 = vmul.f32 %v1364, 0.5
  %v1490 = vmul.f32 %v1365, 0.5
  %v1491 = vmul.f32 %v1366, 0.5
  %v1492 = vmul.f32 %v1367, 0.5
  %v1493 = vmul.f32 %v1368, 0.5
  %v1494 = vmul.f32 %v1369, 0.5
  %v1495 = vmul.f32 %v1370, 0.5
  %v1496 = vmul.f32 %v1371, 0.5
  %v1497 = vmul.f32 %v1372, 0.5
  %v1498 = vmul.f32 %v1373, 0.5
  %v1499 = vmul.f32 %v1374, 0.5
  %v1500 = vmul.f32 %v1375, 0.5
  %v1501 = vmul.f32 %v1376, 0.5
  %v1502 = vmul.f32 %v1377, 0.5
  %v1503 = vmul.f32 %v1378, 0.5
  %v1504 = vmul.f32 %v1379, 0.5
  %v1505 = vmul.f32 %v1380, 0.5
  %v1506 = vmul.f32 %v1381, 0.5
  %v1507 = vmul.f32 %v1382, 0.5
  %v1508 = vmul.f32 %v1383, 0.5
  %v1509 = vmul.f32 %v1384, 0.5
  %v1510 = vmul.f32 %v1385, 0.5
  %v1511 = vmul.f32 %v1386, 0.5
  %v1512 = vmul.f32 %v1387, 0.5
  %v1513 = vmul.f32 %v1388, 0.5
  %v1514 = vmul.f32 %v1389, 0.5
  %v1515 = vmul.f32 %v1390, 0.5
  %v1516 = vmul.f32 %v1391, 0.5
  %v1517 = vmul.f32 %v1392, 0.5
  %v1518 = vmul.f32 %v1393, 0.5
  %v1519 = vmul.f32 %v1394, 0.5
  %v1520 = vmul.f32 %v1395, 0.5
  %v1521 = vmul.f32 %v1396, 0.5
  %v1522 = vmul.f32 %v1397, 0.5
  %v1523 = vmul.f32 %v1398, 0.5
  %v1524 = vmul.f32 %v1399, 0.5
  %v1525 = vmul.f32 %v1400, 0.5
  %v1526 = vmul.f32 %v1401, 0.5
  %v1527 = vmul.f32 %v1402, 0.5
  %v1528 = vmul.f32 %v1403, 0.5
  %v1529 = vmul.f32 %v1404, 0.5
  %v1530 = vmul.f32 %v1405, 0.5
  %v1531 = vmul.f32 %v1406, 0.5
  %v1532 = vmul.f32 %v1407, 0.5
  %v1533 = vmul.f32 %v1408, 0.5
  %v1534 = vmul.f32 %v1409, 0.5
  %v1535 = vmul.f32 %v1410, 0.5
  %v1536 = vmul.f32 %v1411, 0.5
  %v1537 = vmul.f32 %v1412, 0.5
  %v1538 = vmul.f32 %v1413, 0.5
  %v1539 = vmul.f32 %v1414, 0.5
  %v1540 = vmul.f32 %v1415, 0.5
  %v1541 = vmul.f32 %v1416, 0.5
  %v1542 = vmul.f32 %v1417, 0.5
  %v1543 = vmul.f32 %v1418, 0.5
  %v1544 = vmul.f32 %v1419, 0.5
  %v1545 = vmul.f32 %v1420, 0.5
  %v1546 = vmul.f32 %v1421, 0.5
  %v1547 = vmul.f32 %v1422, 0.5
  %v1548 = vmul.f32 %v1423, 0.5
  %v1549 = vmul.f32 %v1424, 0.5
  %v1550 = vmul.f32 %v1425, 0.5
  %v1551 = vmul.f32 %v1426, 0.5
  %v1552 = vmul.f32 %v1427, 0.5
  %v1553 = vmul.f32 %v1428, 0.5
  %v1554 = vmul.f32 %v1429, 0.5
  %v1555 = vmul.f32 %v1430, 0.5
  %v1556 = vmul.f32 %v1431, 0.5
  %v1557 = vmul.f32 %v1432, 0.5
  %v1558 = vmul.f32 %v1433, 0.5
  %v1559 = vmul.f32 %v1434, 0.5
  %v1560 = vmul.f32 %v1435, 0.5
  %v1561 = vmul.f32 %v1436, 0.5
  %v1562 = vmul.f32 %v1437, 0.5
  %v1563 = vmul.f32 %v1438, 0.5
  %v1564 = vmul.f32 %v1439, 0.5
  %v1565 = vmul.f32 %v1440, 0.5
  %v1566 = vmul.f32 %v1441, 0.5
  %v1567 = vmul.f32 %v1442, 0.5
  %v1568 = vmul.f32 %v1443, 0.5
  %v1569 = vmul.f32 %v1444, 0.5
  %v1570 = vmul.f32 %v1445, 0.5
  %v1571 = vmul.f32 %v1446, 0.5
  %v1572 = vmul.f32 %v1447, 0.5
  %v1573 = vmul.f32 %v1448, 0.5
  %v1574 = vmul.f32 %v1449, 0.5
  %v1575 = vmul.f32 %v1450, 0.5
  %v1576 = vmul.f32 %v1451, 0.5
  %v1577 = vmul.f32 %v1452, 0.5
  %v1578 = vmul.f32 %v1453, 0.5
  %v1579 = vmul.f32 %v1454, 0.5
  %v1580 = vmul.f32 %v1455, 0.5
  %v1581 = vmul.f32 %v1456, 0.5
  %v1582 = vmul.f32 %v1457, 0.5
  %v1583 = vmul.f32 %v1458, 0.5
  %v1584 = vmul.f32 %v1459, 0.5
  %v1585 = vmul.f32 %v1460, 0.5
  %v1586 = vmul.f32 %v1461, 0.5
  %v1587 = vmul.f32 %v1462, 0.5
  %v1588 = vmul.f32 %v1463, 0.5
  %v1589 = vmul.f32 %v1464, 0.5
  %v1590 = vmul.f32 %v1465, 0.5
  %v1591 = vmul.f32 %v1466, 0.5
  %v1592 = vmul.f32 %v1467, 0.5
  %v1593 = vmul.f32 %v1468, 0.5
  %v1594 = vmul.f32 %v1469, 0.5
  %v1595 = vmul.f32 %v1470, 0.5
  %v1596 = vmul.f32 %v1471, 0.5
  %v1597 = vmul.f32 %v1472, 0.5
  %v1598 = vadd.f32 %v1473, 0.5
  %v1599 = vadd.f32 %v1474, 0.5
  %v1600 = vadd.f32 %v1475, 0.5
  %v1601 = vadd.f32 %v1476, 0.5
  %v1602 = vadd.f32 %v1477, 0.5
  %v1603 = vadd.f32 %v1478, 0.5
  %v1604 = vadd.f32 %v1479, 0.5
  %v1605 = vadd.f32 %v1480, 0.5
  %v1606 = vadd.f32 %v1481, 0.5
  %v1607 = vadd.f32 %v1482, 0.5
  %v1608 = vadd.f32 %v1483, 0.5
  %v1609 = vadd.f32 %v1484, 0.5
  %v1610 = vadd.f32 %v1485, 0.5
  %v1611 = vadd.f32 %v1486, 0.5
  %v1612 = vadd.f32 %v1487, 0.5
  %v1613 = vadd.f32 %v1488, 0.5
  %v1614 = vadd.f32 %v1489, 0.5
  %v1615 = vadd.f32 %v1490, 0.5
  %v1616 = vadd.f32 %v1491, 0.5
  %v1617 = vadd.f32 %v1492, 0.5
  %v1618 = vadd.f32 %v1493, 0.5
  %v1619 = vadd.f32 %v1494, 0.5
  %v1620 = vadd.f32 %v1495, 0.5
  %v1621 = vadd.f32 %v1496, 0.5
  %v1622 = vadd.f32 %v1497, 0.5
  %v1623 = vadd.f32 %v1498, 0.5
  %v1624 = vadd.f32 %v1499, 0.5
  %v1625 = vadd.f32 %v1500, 0.5
  %v1626 = vadd.f32 %v1501, 0.5
  %v1627 = vadd.f32 %v1502, 0.5
  %v1628 = vadd.f32 %v1503, 0.5
  %v1629 = vadd.f32 %v1504, 0.5
  %v1630 = vadd.f32 %v1505, 0.5
  %v1631 = vadd.f32 %v1506, 0.5
  %v1632 = vadd.f32 %v1507, 0.5
  %v1633 = vadd.f32 %v1508, 0.5
  %v1634 = vadd.f32 %v1509, 0.5
  %v1635 = vadd.f32 %v1510, 0.5
  %v1636 = vadd.f32 %v1511, 0.5
  %v1637 = vadd.f32 %v1512, 0.5
  %v1638 = vadd.f32 %v1513, 0.5
  %v1639 = vadd.f32 %v1514, 0.5
  %v1640 = vadd.f32 %v1515, 0.5
  %v1641 = vadd.f32 %v1516, 0.5
  %v1642 = vadd.f32 %v1517, 0.5
  %v1643 = vadd.f32 %v1518, 0.5
  %v1644 = vadd.f32 %v1519, 0.5
  %v1645 = vadd.f32 %v1520, 0.5
  %v1646 = vadd.f32 %v1521, 0.5
  %v1647 = vadd.f32 %v1522, 0.5
  %v1648 = vadd.f32 %v1523, 0.5
  %v1649 = vadd.f32 %v1524, 0.5
  %v1650 = vadd.f32 %v1525, 0.5
  %v1651 = vadd.f32 %v1526, 0.5
  %v1652 = vadd.f32 %v1527, 0.5
  %v1653 = vadd.f32 %v1528, 0.5
  %v1654 = vadd.f32 %v1529, 0.5
  %v1655 = vadd.f32 %v1530, 0.5
  %v1656 = vadd.f32 %v1531, 0.5
  %v1657 = vadd.f32 %v1532, 0.5
  %v1658 = vadd.f32 %v1533, 0.5
  %v1659 = vadd.f32 %v1534, 0.5
  %v1660 = vadd.f32 %v1535, 0.5
  %v1661 = vadd.f32 %v1536, 0.5
  %v1662 = vadd.f32 %v1537, 0.5
  %v1663 = vadd.f32 %v1538, 0.5
  %v1664 = vadd.f32 %v1539, 0.5
  %v1665 = vadd.f32 %v1540, 0.5
  %v1666 = vadd.f32 %v1541, 0.5
  %v1667 = vadd.f32 %v1542, 0.5
  %v1668 = vadd.f32 %v1543, 0.5
  %v1669 = vadd.f32 %v1544, 0.5
  %v1670 = vadd.f32 %v1545, 0.5
  %v1671 = vadd.f32 %v1546, 0.5
  %v1672 = vadd.f32 %v1547, 0.5
  %v1673 = vadd.f32 %v1548, 0.5
  %v1674 = vadd.f32 %v1549, 0.5
  %v1675 = vadd.f32 %v1550, 0.5
  %v1676 = vadd.f32 %v1551, 0.5
  %v1677 = vadd.f32 %v1552, 0.5
  %v1678 = vadd.f32 %v1553, 0.5
  %v1679 = vadd.f32 %v1554, 0.5
  %v1680 = vadd.f32 %v1555, 0.5
  %v1681 = vadd.f32 %v1556, 0.5
  %v1682 = vadd.f32 %v1557, 0.5
  %v1683 = vadd.f32 %v1558, 0.5
  %v1684 = vadd.f32 %v1559, 0.5
  %v1685 = vadd.f32 %v1560, 0.5
  %v1686 = vadd.f32 %v1561, 0.5
  %v1687 = vadd.f32 %v1562, 0.5
  %v1688 = vadd.f32 %v1563, 0.5
  %v1689 = vadd.f32 %v1564, 0.5
  %v1690 = vadd.f32 %v1565, 0.5
  %v1691 = vadd.f32 %v1566, 0.5
  %v1692 = vadd.f32 %v1567, 0.5
  %v1693 = vadd.f32 %v1568, 0.5
  %v1694 = vadd.f32 %v1569, 0.5
  %v1695 = vadd.f32 %v1570, 0.5
  %v1696 = vadd.f32 %v1571, 0.5
  %v1697 = vadd.f32 %v1572, 0.5
  %v1698 = vadd.f32 %v1573, 0.5
  %v1699 = vadd.f32 %v1574, 0.5
  %v1700 = vadd.f32 %v1575, 0.5
  %v1701 = vadd.f32 %v1576, 0.5
  %v1702 = vadd.f32 %v1577, 0.5
  %v1703 = vadd.f32 %v1578, 0.5
  %v1704 = vadd.f32 %v1579, 0.5
  %v1705 = vadd.f32 %v1580, 0.5
  %v1706 = vadd.f32 %v1581, 0.5
  %v1707 = vadd.f32 %v1582, 0.5
  %v1708 = vadd.f32 %v1583, 0.5
  %v1709 = vadd.f32 %v1584, 0.5
  %v1710 = vadd.f32 %v1585, 0.5
  %v1711 = vadd.f32 %v1586, 0.5
  %v1712 = vadd.f32 %v1587, 0.5
  %v1713 = vadd.f32 %v1588, 0.5
  %v1714 = vadd.f32 %v1589, 0.5
  %v1715 = vadd.f32 %v1590, 0.5
  %v1716 = vadd.f32 %v1591, 0.5
  %v1717 = vadd.f32 %v1592, 0.5
  %v1718 = vadd.f32 %v1593, 0.5
  %v1719 = vadd.f32 %v1594, 0.5
  %v1720 = vadd.f32 %v1595, 0.5
  %v1721 = vadd.f32 %v1596, 0.5
  %v1722 = vadd.f32 %v1597, 0.5
  %v1723 = vld [vmem:[%s2] sm:$0xff]
  %v1724 = vld [vmem:[%s2 + $0x8] sm:$0xff]
  %v1725 = vld [vmem:[%s2 + $0x10] sm:$0xff]
  %v1726 = vld [vmem:[%s2 + $0x18] sm:$0xff]
  %v1727 = vld [vmem:[%s2 + $0x20] sm:$0xff]
  %v1728 = vld [vmem:[%s2 + $0x28] sm:$0xff]
  %v1729 = vld [vmem:[%s2 + $0x30] sm:$0xff]
  %v1730 = vld [vmem:[%s2 + $0x38] sm:$0xff]
  %v1731 = vld [vmem:[%s2 + $0x40] sm:$0xff]
  %v1732 = vld [vmem:[%s2 + $0x48] sm:$0xff]
  %v1733 = vld [vmem:[%s2 + $0x50] sm:$0xff]
  %v1734 = vld [vmem:[%s2 + $0x58] sm:$0xff]
  %v1735 = vld [vmem:[%s2 + $0x60] sm:$0xff]
  %v1736 = vld [vmem:[%s2 + $0x68] sm:$0xff]
  %v1737 = vld [vmem:[%s2 + $0x70] sm:$0xff]
  %v1738 = vld [vmem:[%s2 + $0x78] sm:$0xff]
  %s1739 = scalar_lea.vmem %s4, 1
  %v1740 = vld [vmem:[%s1739] sm:$0x1]
  %v1742 = vlaneseq
  %v1743 = vshrl.u32 %v1742, 7
  %v1744 = vsub.s32 0, %v1743
  %v1745 = vrot.slane %v1740, %v1744
  %1747 = vmatprep.subr.mxu0 0.0
  %1748 = vmatpush1.msra.mxu0 %v1723
  %1749 = vmatprep.subr.mxu0 0.0
  %1750 = vmatpush1.msra.mxu0 %v1724
  %1751 = vmatprep.subr.mxu0 0.0
  %1752 = vmatpush1.msra.mxu0 %v1725
  %1753 = vmatprep.subr.mxu0 0.0
  %1754 = vmatpush1.msra.mxu0 %v1726
  %1755 = vmatprep.subr.mxu0 0.0
  %1756 = vmatpush1.msra.mxu0 %v1727
  %1757 = vmatprep.subr.mxu0 0.0
  %1758 = vmatpush1.msra.mxu0 %v1728
  %1759 = vmatprep.subr.mxu0 0.0
  %1760 = vmatpush1.msra.mxu0 %v1729
  %1761 = vmatprep.subr.mxu0 0.0
  %1762 = vmatpush1.msra.mxu0 %v1730
  %1763 = vmatprep.subr.mxu0 0.0
  %1764 = vmatpush1.msra.mxu0 %v1731
  %1765 = vmatprep.subr.mxu0 0.0
  %1766 = vmatpush1.msra.mxu0 %v1732
  %1767 = vmatprep.subr.mxu0 0.0
  %1768 = vmatpush1.msra.mxu0 %v1733
  %1769 = vmatprep.subr.mxu0 0.0
  %1770 = vmatpush1.msra.mxu0 %v1734
  %1771 = vmatprep.subr.mxu0 0.0
  %1772 = vmatpush1.msra.mxu0 %v1735
  %1773 = vmatprep.subr.mxu0 0.0
  %1774 = vmatpush1.msra.mxu0 %v1736
  %1775 = vmatprep.subr.mxu0 0.0
  %1776 = vmatpush1.msra.mxu0 %v1737
  %1777 = vmatprep.subr.mxu0 0.0
  %1778 = vmatpush1.msra.mxu0 %v1738
  %1779 = vmatprep.subr.mxu0 0.0
  %1780 = vmatpush1.msra.mxu0 0.0
  %1781 = vmatprep.subr.mxu0 0.0
  %1782 = vmatpush1.msra.mxu0 0.0
  %1783 = vmatprep.subr.mxu0 0.0
  %1784 = vmatpush1.msra.mxu0 0.0
  %1785 = vmatprep.subr.mxu0 0.0
  %1786 = vmatpush1.msra.mxu0 0.0
  %1787 = vmatprep.subr.mxu0 0.0
  %1788 = vmatpush1.msra.mxu0 0.0
  %1789 = vmatprep.subr.mxu0 0.0
  %1790 = vmatpush1.msra.mxu0 0.0
  %1791 = vmatprep.subr.mxu0 0.0
  %1792 = vmatpush1.msra.mxu0 0.0
  %1793 = vmatprep.subr.mxu0 0.0
  %1794 = vmatpush1.msra.mxu0 0.0
  %1795 = vmatprep.subr.mxu0 0.0
  %1796 = vmatpush1.msra.mxu0 0.0
  %1797 = vmatprep.subr.mxu0 0.0
  %1798 = vmatpush1.msra.mxu0 0.0
  %1799 = vmatprep.subr.mxu0 0.0
  %1800 = vmatpush1.msra.mxu0 0.0
  %1801 = vmatprep.subr.mxu0 0.0
  %1802 = vmatpush1.msra.mxu0 0.0
  %1803 = vmatprep.subr.mxu0 0.0
  %1804 = vmatpush1.msra.mxu0 0.0
  %1805 = vmatprep.subr.mxu0 0.0
  %1806 = vmatpush1.msra.mxu0 0.0
  %1807 = vmatprep.subr.mxu0 0.0
  %1808 = vmatpush1.msra.mxu0 0.0
  %1809 = vmatprep.subr.mxu0 0.0
  %1810 = vmatpush1.msra.mxu0 0.0
  %1811 = vmatprep.mubr.f32.mxu0 0.0
  %1812 = vmatmul.mubr.f32.gmra.mrb[0].mxu0 %v1598
  %v1813 = vpop.f32.mrb[0].mxu0
  %v1814 = vadd.f32 %v1745, %v1813
  %v1815 = vpop.f32.mrb[0].mxu0
  %1816 = vmatprep.mubr.f32.mxu0 0.0
  %1817 = vmatmul.mubr.f32.gmra.mrb[0].mxu0 %v1599
  %v1818 = vpop.f32.mrb[0].mxu0
  %v1819 = vadd.f32 %v1745, %v1818
  %v1820 = vpop.f32.mrb[0].mxu0
  %1821 = vmatprep.mubr.f32.mxu0 0.0
  %1822 = vmatmul.mubr.f32.gmra.mrb[0].mxu0 %v1600
  %v1823 = vpop.f32.mrb[0].mxu0
  %v1824 = vadd.f32 %v1745, %v1823
  %v1825 = vpop.f32.mrb[0].mxu0
  %1826 = vmatprep.mubr.f32.mxu0 0.0
  %1827 = vmatmul.mubr.f32.gmra.mrb[0].mxu0 %v1601
  %v1828 = vpop.f32.mrb[0].mxu0
  %v1829 = vadd.f32 %v1745, %v1828
  %v1830 = vpop.f32.mrb[0].mxu0
  %1831 = vmatprep.mubr.f32.mxu0 0.0
  %1832 = vmatmul.mubr.f32.gmra.mrb[0].mxu0 %v1602
  %v1833 = vpop.f32.mrb[0].mxu0
  %v1834 = vadd.f32 %v1745, %v1833
  %v1835 = vpop.f32.mrb[0].mxu0
  %1836 = vmatprep.mubr.f32.mxu0 0.0
  %1837 = vmatmul.mubr.f32.gmra.mrb[0].mxu0 %v1603
  %v1838 = vpop.f32.mrb[0].mxu0
  %v1839 = vadd.f32 %v1745, %v1838
  %v1840 = vpop.f32.mrb[0].mxu0
  %1841 = vmatprep.mubr.f32.mxu0 0.0
  %1842 = vmatmul.mubr.f32.gmra.mrb[0].mxu0 %v1604
  %v1843 = vpop.f32.mrb[0].mxu0
  %v1844 = vadd.f32 %v1745, %v1843
  %v1845 = vpop.f32.mrb[0].mxu0
  %1846 = vmatprep.mubr.f32.mxu0 0.0
  %1847 = vmatmul.mubr.f32.gmra.mrb[0].mxu0 %v1605
  %v1848 = vpop.f32.mrb[0].mxu0
  %v1849 = vadd.f32 %v1745, %v1848
  %v1850 = vpop.f32.mrb[0].mxu0
  %1851 = vmatprep.mubr.f32.mxu0 0.0
  %1852 = vmatmul.mubr.f32.gmra.mrb[0].mxu0 %v1606
  %v1853 = vpop.f32.mrb[0].mxu0
  %v1854 = vadd.f32 %v1745, %v1853
  %v1855 = vpop.f32.mrb[0].mxu0
  %1856 = vmatprep.mubr.f32.mxu0 0.0
  %1857 = vmatmul.mubr.f32.gmra.mrb[0].mxu0 %v1607
  %v1858 = vpop.f32.mrb[0].mxu0
  %v1859 = vadd.f32 %v1745, %v1858
  %v1860 = vpop.f32.mrb[0].mxu0
  %1861 = vmatprep.mubr.f32.mxu0 0.0
  %1862 = vmatmul.mubr.f32.gmra.mrb[0].mxu0 %v1608
  %v1863 = vpop.f32.mrb[0].mxu0
  %v1864 = vadd.f32 %v1745, %v1863
  %v1865 = vpop.f32.mrb[0].mxu0
  %1866 = vmatprep.mubr.f32.mxu0 0.0
  %1867 = vmatmul.mubr.f32.gmra.mrb[0].mxu0 %v1609
  %v1868 = vpop.f32.mrb[0].mxu0
  %v1869 = vadd.f32 %v1745, %v1868
  %v1870 = vpop.f32.mrb[0].mxu0
  %1871 = vmatprep.mubr.f32.mxu0 0.0
  %1872 = vmatmul.mubr.f32.gmra.mrb[0].mxu0 %v1610
  %v1873 = vpop.f32.mrb[0].mxu0
  %v1874 = vadd.f32 %v1745, %v1873
  %v1875 = vpop.f32.mrb[0].mxu0
  %1876 = vmatprep.mubr.f32.mxu0 0.0
  %1877 = vmatmul.mubr.f32.gmra.mrb[0].mxu0 %v1611
  %v1878 = vpop.f32.mrb[0].mxu0
  %v1879 = vadd.f32 %v1745, %v1878
  %v1880 = vpop.f32.mrb[0].mxu0
  %1881 = vmatprep.mubr.f32.mxu0 0.0
  %1882 = vmatmul.mubr.f32.gmra.mrb[0].mxu0 %v1612
  %v1883 = vpop.f32.mrb[0].mxu0
  %v1884 = vadd.f32 %v1745, %v1883
  %v1885 = vpop.f32.mrb[0].mxu0
  %1886 = vmatprep.mubr.f32.mxu0 0.0
  %1887 = vmatmul.mubr.f32.gmra.mrb[0].mxu0 %v1613
  %v1888 = vpop.f32.mrb[0].mxu0
  %v1889 = vadd.f32 %v1745, %v1888
  %v1890 = vpop.f32.mrb[0].mxu0
  %1891 = vmatprep.mubr.f32.mxu0 0.0
  %1892 = vmatmul.mubr.f32.gmra.mrb[0].mxu0 %v1614
  %v1893 = vpop.f32.mrb[0].mxu0
  %v1894 = vadd.f32 %v1745, %v1893
  %v1895 = vpop.f32.mrb[0].mxu0
  %1896 = vmatprep.mubr.f32.mxu0 0.0
  %1897 = vmatmul.mubr.f32.gmra.mrb[0].mxu0 %v1615
  %v1898 = vpop.f32.mrb[0].mxu0
  %v1899 = vadd.f32 %v1745, %v1898
  %v1900 = vpop.f32.mrb[0].mxu0
  %1901 = vmatprep.mubr.f32.mxu0 0.0
  %1902 = vmatmul.mubr.f32.gmra.mrb[0].mxu0 %v1616
  %v1903 = vpop.f32.mrb[0].mxu0
  %v1904 = vadd.f32 %v1745, %v1903
  %v1905 = vpop.f32.mrb[0].mxu0
  %1906 = vmatprep.mubr.f32.mxu0 0.0
  %1907 = vmatmul.mubr.f32.gmra.mrb[0].mxu0 %v1617
  %v1908 = vpop.f32.mrb[0].mxu0
  %v1909 = vadd.f32 %v1745, %v1908
  %v1910 = vpop.f32.mrb[0].mxu0
  %1911 = vmatprep.mubr.f32.mxu0 0.0
  %1912 = vmatmul.mubr.f32.gmra.mrb[0].mxu0 %v1618
  %v1913 = vpop.f32.mrb[0].mxu0
  %v1914 = vadd.f32 %v1745, %v1913
  %v1915 = vpop.f32.mrb[0].mxu0
  %1916 = vmatprep.mubr.f32.mxu0 0.0
  %1917 = vmatmul.mubr.f32.gmra.mrb[0].mxu0 %v1619
  %v1918 = vpop.f32.mrb[0].mxu0
  %v1919 = vadd.f32 %v1745, %v1918
  %v1920 = vpop.f32.mrb[0].mxu0
  %1921 = vmatprep.mubr.f32.mxu0 0.0
  %1922 = vmatmul.mubr.f32.gmra.mrb[0].mxu0 %v1620
  %v1923 = vpop.f32.mrb[0].mxu0
  %v1924 = vadd.f32 %v1745, %v1923
  %v1925 = vpop.f32.mrb[0].mxu0
  %1926 = vmatprep.mubr.f32.mxu0 0.0
  %1927 = vmatmul.mubr.f32.gmra.mrb[0].mxu0 %v1621
  %v1928 = vpop.f32.mrb[0].mxu0
  %v1929 = vadd.f32 %v1745, %v1928
  %v1930 = vpop.f32.mrb[0].mxu0
  %1931 = vmatprep.mubr.f32.mxu0 0.0
  %1932 = vmatmul.mubr.f32.gmra.mrb[0].mxu0 %v1622
  %v1933 = vpop.f32.mrb[0].mxu0
  %v1934 = vadd.f32 %v1745, %v1933
  %v1935 = vpop.f32.mrb[0].mxu0
  %1936 = vmatprep.mubr.f32.mxu0 0.0
  %1937 = vmatmul.mubr.f32.gmra.mrb[0].mxu0 %v1623
  %v1938 = vpop.f32.mrb[0].mxu0
  %v1939 = vadd.f32 %v1745, %v1938
  %v1940 = vpop.f32.mrb[0].mxu0
  %1941 = vmatprep.mubr.f32.mxu0 0.0
  %1942 = vmatmul.mubr.f32.gmra.mrb[0].mxu0 %v1624
  %v1943 = vpop.f32.mrb[0].mxu0
  %v1944 = vadd.f32 %v1745, %v1943
  %v1945 = vpop.f32.mrb[0].mxu0
  %1946 = vmatprep.mubr.f32.mxu0 0.0
  %1947 = vmatmul.mubr.f32.gmra.mrb[0].mxu0 %v1625
  %v1948 = vpop.f32.mrb[0].mxu0
  %v1949 = vadd.f32 %v1745, %v1948
  %v1950 = vpop.f32.mrb[0].mxu0
  %1951 = vmatprep.mubr.f32.mxu0 0.0
  %1952 = vmatmul.mubr.f32.gmra.mrb[0].mxu0 %v1626
  %v1953 = vpop.f32.mrb[0].mxu0
  %v1954 = vadd.f32 %v1745, %v1953
  %v1955 = vpop.f32.mrb[0].mxu0
  %1956 = vmatprep.mubr.f32.mxu0 0.0
  %1957 = vmatmul.mubr.f32.gmra.mrb[0].mxu0 %v1627
  %v1958 = vpop.f32.mrb[0].mxu0
  %v1959 = vadd.f32 %v1745, %v1958
  %v1960 = vpop.f32.mrb[0].mxu0
  %1961 = vmatprep.mubr.f32.mxu0 0.0
  %1962 = vmatmul.mubr.f32.gmra.mrb[0].mxu0 %v1628
  %v1963 = vpop.f32.mrb[0].mxu0
  %v1964 = vadd.f32 %v1745, %v1963
  %v1965 = vpop.f32.mrb[0].mxu0
  %1966 = vmatprep.mubr.f32.mxu0 0.0
  %1967 = vmatmul.mubr.f32.gmra.mrb[0].mxu0 %v1629
  %v1968 = vpop.f32.mrb[0].mxu0
  %v1969 = vadd.f32 %v1745, %v1968
  %v1970 = vpop.f32.mrb[0].mxu0
  %1971 = vmatprep.mubr.f32.mxu0 0.0
  %1972 = vmatmul.mubr.f32.gmra.mrb[0].mxu0 %v1630
  %v1973 = vpop.f32.mrb[0].mxu0
  %v1974 = vadd.f32 %v1745, %v1973
  %v1975 = vpop.f32.mrb[0].mxu0
  %1976 = vmatprep.mubr.f32.mxu0 0.0
  %1977 = vmatmul.mubr.f32.gmra.mrb[0].mxu0 %v1631
  %v1978 = vpop.f32.mrb[0].mxu0
  %v1979 = vadd.f32 %v1745, %v1978
  %v1980 = vpop.f32.mrb[0].mxu0
  %1981 = vmatprep.mubr.f32.mxu0 0.0
  %1982 = vmatmul.mubr.f32.gmra.mrb[0].mxu0 %v1632
  %v1983 = vpop.f32.mrb[0].mxu0
  %v1984 = vadd.f32 %v1745, %v1983
  %v1985 = vpop.f32.mrb[0].mxu0
  %1986 = vmatprep.mubr.f32.mxu0 0.0
  %1987 = vmatmul.mubr.f32.gmra.mrb[0].mxu0 %v1633
  %v1988 = vpop.f32.mrb[0].mxu0
  %v1989 = vadd.f32 %v1745, %v1988
  %v1990 = vpop.f32.mrb[0].mxu0
  %1991 = vmatprep.mubr.f32.mxu0 0.0
  %1992 = vmatmul.mubr.f32.gmra.mrb[0].mxu0 %v1634
  %v1993 = vpop.f32.mrb[0].mxu0
  %v1994 = vadd.f32 %v1745, %v1993
  %v1995 = vpop.f32.mrb[0].mxu0
  %1996 = vmatprep.mubr.f32.mxu0 0.0
  %1997 = vmatmul.mubr.f32.gmra.mrb[0].mxu0 %v1635
  %v1998 = vpop.f32.mrb[0].mxu0
  %v1999 = vadd.f32 %v1745, %v1998
  %v2000 = vpop.f32.mrb[0].mxu0
  %2001 = vmatprep.mubr.f32.mxu0 0.0
  %2002 = vmatmul.mubr.f32.gmra.mrb[0].mxu0 %v1636
  %v2003 = vpop.f32.mrb[0].mxu0
  %v2004 = vadd.f32 %v1745, %v2003
  %v2005 = vpop.f32.mrb[0].mxu0
  %2006 = vmatprep.mubr.f32.mxu0 0.0
  %2007 = vmatmul.mubr.f32.gmra.mrb[0].mxu0 %v1637
  %v2008 = vpop.f32.mrb[0].mxu0
  %v2009 = vadd.f32 %v1745, %v2008
  %v2010 = vpop.f32.mrb[0].mxu0
  %2011 = vmatprep.mubr.f32.mxu0 0.0
  %2012 = vmatmul.mubr.f32.gmra.mrb[0].mxu0 %v1638
  %v2013 = vpop.f32.mrb[0].mxu0
  %v2014 = vadd.f32 %v1745, %v2013
  %v2015 = vpop.f32.mrb[0].mxu0
  %2016 = vmatprep.mubr.f32.mxu0 0.0
  %2017 = vmatmul.mubr.f32.gmra.mrb[0].mxu0 %v1639
  %v2018 = vpop.f32.mrb[0].mxu0
  %v2019 = vadd.f32 %v1745, %v2018
  %v2020 = vpop.f32.mrb[0].mxu0
  %2021 = vmatprep.mubr.f32.mxu0 0.0
  %2022 = vmatmul.mubr.f32.gmra.mrb[0].mxu0 %v1640
  %v2023 = vpop.f32.mrb[0].mxu0
  %v2024 = vadd.f32 %v1745, %v2023
  %v2025 = vpop.f32.mrb[0].mxu0
  %2026 = vmatprep.mubr.f32.mxu0 0.0
  %2027 = vmatmul.mubr.f32.gmra.mrb[0].mxu0 %v1641
  %v2028 = vpop.f32.mrb[0].mxu0
  %v2029 = vadd.f32 %v1745, %v2028
  %v2030 = vpop.f32.mrb[0].mxu0
  %2031 = vmatprep.mubr.f32.mxu0 0.0
  %2032 = vmatmul.mubr.f32.gmra.mrb[0].mxu0 %v1642
  %v2033 = vpop.f32.mrb[0].mxu0
  %v2034 = vadd.f32 %v1745, %v2033
  %v2035 = vpop.f32.mrb[0].mxu0
  %2036 = vmatprep.mubr.f32.mxu0 0.0
  %2037 = vmatmul.mubr.f32.gmra.mrb[0].mxu0 %v1643
  %v2038 = vpop.f32.mrb[0].mxu0
  %v2039 = vadd.f32 %v1745, %v2038
  %v2040 = vpop.f32.mrb[0].mxu0
  %2041 = vmatprep.mubr.f32.mxu0 0.0
  %2042 = vmatmul.mubr.f32.gmra.mrb[0].mxu0 %v1644
  %v2043 = vpop.f32.mrb[0].mxu0
  %v2044 = vadd.f32 %v1745, %v2043
  %v2045 = vpop.f32.mrb[0].mxu0
  %2046 = vmatprep.mubr.f32.mxu0 0.0
  %2047 = vmatmul.mubr.f32.gmra.mrb[0].mxu0 %v1645
  %v2048 = vpop.f32.mrb[0].mxu0
  %v2049 = vadd.f32 %v1745, %v2048
  %v2050 = vpop.f32.mrb[0].mxu0
  %2051 = vmatprep.mubr.f32.mxu0 0.0
  %2052 = vmatmul.mubr.f32.gmra.mrb[0].mxu0 %v1646
  %v2053 = vpop.f32.mrb[0].mxu0
  %v2054 = vadd.f32 %v1745, %v2053
  %v2055 = vpop.f32.mrb[0].mxu0
  %2056 = vmatprep.mubr.f32.mxu0 0.0
  %2057 = vmatmul.mubr.f32.gmra.mrb[0].mxu0 %v1647
  %v2058 = vpop.f32.mrb[0].mxu0
  %v2059 = vadd.f32 %v1745, %v2058
  %v2060 = vpop.f32.mrb[0].mxu0
  %2061 = vmatprep.mubr.f32.mxu0 0.0
  %2062 = vmatmul.mubr.f32.gmra.mrb[0].mxu0 %v1648
  %v2063 = vpop.f32.mrb[0].mxu0
  %v2064 = vadd.f32 %v1745, %v2063
  %v2065 = vpop.f32.mrb[0].mxu0
  %2066 = vmatprep.mubr.f32.mxu0 0.0
  %2067 = vmatmul.mubr.f32.gmra.mrb[0].mxu0 %v1649
  %v2068 = vpop.f32.mrb[0].mxu0
  %v2069 = vadd.f32 %v1745, %v2068
  %v2070 = vpop.f32.mrb[0].mxu0
  %2071 = vmatprep.mubr.f32.mxu0 0.0
  %2072 = vmatmul.mubr.f32.gmra.mrb[0].mxu0 %v1650
  %v2073 = vpop.f32.mrb[0].mxu0
  %v2074 = vadd.f32 %v1745, %v2073
  %v2075 = vpop.f32.mrb[0].mxu0
  %2076 = vmatprep.mubr.f32.mxu0 0.0
  %2077 = vmatmul.mubr.f32.gmra.mrb[0].mxu0 %v1651
  %v2078 = vpop.f32.mrb[0].mxu0
  %v2079 = vadd.f32 %v1745, %v2078
  %v2080 = vpop.f32.mrb[0].mxu0
  %2081 = vmatprep.mubr.f32.mxu0 0.0
  %2082 = vmatmul.mubr.f32.gmra.mrb[0].mxu0 %v1652
  %v2083 = vpop.f32.mrb[0].mxu0
  %v2084 = vadd.f32 %v1745, %v2083
  %v2085 = vpop.f32.mrb[0].mxu0
  %2086 = vmatprep.mubr.f32.mxu0 0.0
  %2087 = vmatmul.mubr.f32.gmra.mrb[0].mxu0 %v1653
  %v2088 = vpop.f32.mrb[0].mxu0
  %v2089 = vadd.f32 %v1745, %v2088
  %v2090 = vpop.f32.mrb[0].mxu0
  %2091 = vmatprep.mubr.f32.mxu0 0.0
  %2092 = vmatmul.mubr.f32.gmra.mrb[0].mxu0 %v1654
  %v2093 = vpop.f32.mrb[0].mxu0
  %v2094 = vadd.f32 %v1745, %v2093
  %v2095 = vpop.f32.mrb[0].mxu0
  %2096 = vmatprep.mubr.f32.mxu0 0.0
  %2097 = vmatmul.mubr.f32.gmra.mrb[0].mxu0 %v1655
  %v2098 = vpop.f32.mrb[0].mxu0
  %v2099 = vadd.f32 %v1745, %v2098
  %v2100 = vpop.f32.mrb[0].mxu0
  %2101 = vmatprep.mubr.f32.mxu0 0.0
  %2102 = vmatmul.mubr.f32.gmra.mrb[0].mxu0 %v1656
  %v2103 = vpop.f32.mrb[0].mxu0
  %v2104 = vadd.f32 %v1745, %v2103
  %v2105 = vpop.f32.mrb[0].mxu0
  %2106 = vmatprep.mubr.f32.mxu0 0.0
  %2107 = vmatmul.mubr.f32.gmra.mrb[0].mxu0 %v1657
  %v2108 = vpop.f32.mrb[0].mxu0
  %v2109 = vadd.f32 %v1745, %v2108
  %v2110 = vpop.f32.mrb[0].mxu0
  %2111 = vmatprep.mubr.f32.mxu0 0.0
  %2112 = vmatmul.mubr.f32.gmra.mrb[0].mxu0 %v1658
  %v2113 = vpop.f32.mrb[0].mxu0
  %v2114 = vadd.f32 %v1745, %v2113
  %v2115 = vpop.f32.mrb[0].mxu0
  %2116 = vmatprep.mubr.f32.mxu0 0.0
  %2117 = vmatmul.mubr.f32.gmra.mrb[0].mxu0 %v1659
  %v2118 = vpop.f32.mrb[0].mxu0
  %v2119 = vadd.f32 %v1745, %v2118
  %v2120 = vpop.f32.mrb[0].mxu0
  %2121 = vmatprep.mubr.f32.mxu0 0.0
  %2122 = vmatmul.mubr.f32.gmra.mrb[0].mxu0 %v1660
  %v2123 = vpop.f32.mrb[0].mxu0
  %v2124 = vadd.f32 %v1745, %v2123
  %v2125 = vpop.f32.mrb[0].mxu0
  %2126 = vmatprep.mubr.f32.mxu0 0.0
  %2127 = vmatmul.mubr.f32.gmra.mrb[0].mxu0 %v1661
  %v2128 = vpop.f32.mrb[0].mxu0
  %v2129 = vadd.f32 %v1745, %v2128
  %v2130 = vpop.f32.mrb[0].mxu0
  %2131 = vmatprep.mubr.f32.mxu0 0.0
  %2132 = vmatmul.mubr.f32.gmra.mrb[0].mxu0 %v1662
  %v2133 = vpop.f32.mrb[0].mxu0
  %v2134 = vadd.f32 %v1745, %v2133
  %v2135 = vpop.f32.mrb[0].mxu0
  %2136 = vmatprep.mubr.f32.mxu0 0.0
  %2137 = vmatmul.mubr.f32.gmra.mrb[0].mxu0 %v1663
  %v2138 = vpop.f32.mrb[0].mxu0
  %v2139 = vadd.f32 %v1745, %v2138
  %v2140 = vpop.f32.mrb[0].mxu0
  %2141 = vmatprep.mubr.f32.mxu0 0.0
  %2142 = vmatmul.mubr.f32.gmra.mrb[0].mxu0 %v1664
  %v2143 = vpop.f32.mrb[0].mxu0
  %v2144 = vadd.f32 %v1745, %v2143
  %v2145 = vpop.f32.mrb[0].mxu0
  %2146 = vmatprep.mubr.f32.mxu0 0.0
  %2147 = vmatmul.mubr.f32.gmra.mrb[0].mxu0 %v1665
  %v2148 = vpop.f32.mrb[0].mxu0
  %v2149 = vadd.f32 %v1745, %v2148
  %v2150 = vpop.f32.mrb[0].mxu0
  %2151 = vmatprep.mubr.f32.mxu0 0.0
  %2152 = vmatmul.mubr.f32.gmra.mrb[0].mxu0 %v1666
  %v2153 = vpop.f32.mrb[0].mxu0
  %v2154 = vadd.f32 %v1745, %v2153
  %v2155 = vpop.f32.mrb[0].mxu0
  %2156 = vmatprep.mubr.f32.mxu0 0.0
  %2157 = vmatmul.mubr.f32.gmra.mrb[0].mxu0 %v1667
  %v2158 = vpop.f32.mrb[0].mxu0
  %v2159 = vadd.f32 %v1745, %v2158
  %v2160 = vpop.f32.mrb[0].mxu0
  %2161 = vmatprep.mubr.f32.mxu0 0.0
  %2162 = vmatmul.mubr.f32.gmra.mrb[0].mxu0 %v1668
  %v2163 = vpop.f32.mrb[0].mxu0
  %v2164 = vadd.f32 %v1745, %v2163
  %v2165 = vpop.f32.mrb[0].mxu0
  %2166 = vmatprep.mubr.f32.mxu0 0.0
  %2167 = vmatmul.mubr.f32.gmra.mrb[0].mxu0 %v1669
  %v2168 = vpop.f32.mrb[0].mxu0
  %v2169 = vadd.f32 %v1745, %v2168
  %v2170 = vpop.f32.mrb[0].mxu0
  %2171 = vmatprep.mubr.f32.mxu0 0.0
  %2172 = vmatmul.mubr.f32.gmra.mrb[0].mxu0 %v1670
  %v2173 = vpop.f32.mrb[0].mxu0
  %v2174 = vadd.f32 %v1745, %v2173
  %v2175 = vpop.f32.mrb[0].mxu0
  %2176 = vmatprep.mubr.f32.mxu0 0.0
  %2177 = vmatmul.mubr.f32.gmra.mrb[0].mxu0 %v1671
  %v2178 = vpop.f32.mrb[0].mxu0
  %v2179 = vadd.f32 %v1745, %v2178
  %v2180 = vpop.f32.mrb[0].mxu0
  %2181 = vmatprep.mubr.f32.mxu0 0.0
  %2182 = vmatmul.mubr.f32.gmra.mrb[0].mxu0 %v1672
  %v2183 = vpop.f32.mrb[0].mxu0
  %v2184 = vadd.f32 %v1745, %v2183
  %v2185 = vpop.f32.mrb[0].mxu0
  %2186 = vmatprep.mubr.f32.mxu0 0.0
  %2187 = vmatmul.mubr.f32.gmra.mrb[0].mxu0 %v1673
  %v2188 = vpop.f32.mrb[0].mxu0
  %v2189 = vadd.f32 %v1745, %v2188
  %v2190 = vpop.f32.mrb[0].mxu0
  %2191 = vmatprep.mubr.f32.mxu0 0.0
  %2192 = vmatmul.mubr.f32.gmra.mrb[0].mxu0 %v1674
  %v2193 = vpop.f32.mrb[0].mxu0
  %v2194 = vadd.f32 %v1745, %v2193
  %v2195 = vpop.f32.mrb[0].mxu0
  %2196 = vmatprep.mubr.f32.mxu0 0.0
  %2197 = vmatmul.mubr.f32.gmra.mrb[0].mxu0 %v1675
  %v2198 = vpop.f32.mrb[0].mxu0
  %v2199 = vadd.f32 %v1745, %v2198
  %v2200 = vpop.f32.mrb[0].mxu0
  %2201 = vmatprep.mubr.f32.mxu0 0.0
  %2202 = vmatmul.mubr.f32.gmra.mrb[0].mxu0 %v1676
  %v2203 = vpop.f32.mrb[0].mxu0
  %v2204 = vadd.f32 %v1745, %v2203
  %v2205 = vpop.f32.mrb[0].mxu0
  %2206 = vmatprep.mubr.f32.mxu0 0.0
  %2207 = vmatmul.mubr.f32.gmra.mrb[0].mxu0 %v1677
  %v2208 = vpop.f32.mrb[0].mxu0
  %v2209 = vadd.f32 %v1745, %v2208
  %v2210 = vpop.f32.mrb[0].mxu0
  %2211 = vmatprep.mubr.f32.mxu0 0.0
  %2212 = vmatmul.mubr.f32.gmra.mrb[0].mxu0 %v1678
  %v2213 = vpop.f32.mrb[0].mxu0
  %v2214 = vadd.f32 %v1745, %v2213
  %v2215 = vpop.f32.mrb[0].mxu0
  %2216 = vmatprep.mubr.f32.mxu0 0.0
  %2217 = vmatmul.mubr.f32.gmra.mrb[0].mxu0 %v1679
  %v2218 = vpop.f32.mrb[0].mxu0
  %v2219 = vadd.f32 %v1745, %v2218
  %v2220 = vpop.f32.mrb[0].mxu0
  %2221 = vmatprep.mubr.f32.mxu0 0.0
  %2222 = vmatmul.mubr.f32.gmra.mrb[0].mxu0 %v1680
  %v2223 = vpop.f32.mrb[0].mxu0
  %v2224 = vadd.f32 %v1745, %v2223
  %v2225 = vpop.f32.mrb[0].mxu0
  %2226 = vmatprep.mubr.f32.mxu0 0.0
  %2227 = vmatmul.mubr.f32.gmra.mrb[0].mxu0 %v1681
  %v2228 = vpop.f32.mrb[0].mxu0
  %v2229 = vadd.f32 %v1745, %v2228
  %v2230 = vpop.f32.mrb[0].mxu0
  %2231 = vmatprep.mubr.f32.mxu0 0.0
  %2232 = vmatmul.mubr.f32.gmra.mrb[0].mxu0 %v1682
  %v2233 = vpop.f32.mrb[0].mxu0
  %v2234 = vadd.f32 %v1745, %v2233
  %v2235 = vpop.f32.mrb[0].mxu0
  %2236 = vmatprep.mubr.f32.mxu0 0.0
  %2237 = vmatmul.mubr.f32.gmra.mrb[0].mxu0 %v1683
  %v2238 = vpop.f32.mrb[0].mxu0
  %v2239 = vadd.f32 %v1745, %v2238
  %v2240 = vpop.f32.mrb[0].mxu0
  %2241 = vmatprep.mubr.f32.mxu0 0.0
  %2242 = vmatmul.mubr.f32.gmra.mrb[0].mxu0 %v1684
  %v2243 = vpop.f32.mrb[0].mxu0
  %v2244 = vadd.f32 %v1745, %v2243
  %v2245 = vpop.f32.mrb[0].mxu0
  %2246 = vmatprep.mubr.f32.mxu0 0.0
  %2247 = vmatmul.mubr.f32.gmra.mrb[0].mxu0 %v1685
  %v2248 = vpop.f32.mrb[0].mxu0
  %v2249 = vadd.f32 %v1745, %v2248
  %v2250 = vpop.f32.mrb[0].mxu0
  %2251 = vmatprep.mubr.f32.mxu0 0.0
  %2252 = vmatmul.mubr.f32.gmra.mrb[0].mxu0 %v1686
  %v2253 = vpop.f32.mrb[0].mxu0
  %v2254 = vadd.f32 %v1745, %v2253
  %v2255 = vpop.f32.mrb[0].mxu0
  %2256 = vmatprep.mubr.f32.mxu0 0.0
  %2257 = vmatmul.mubr.f32.gmra.mrb[0].mxu0 %v1687
  %v2258 = vpop.f32.mrb[0].mxu0
  %v2259 = vadd.f32 %v1745, %v2258
  %v2260 = vpop.f32.mrb[0].mxu0
  %2261 = vmatprep.mubr.f32.mxu0 0.0
  %2262 = vmatmul.mubr.f32.gmra.mrb[0].mxu0 %v1688
  %v2263 = vpop.f32.mrb[0].mxu0
  %v2264 = vadd.f32 %v1745, %v2263
  %v2265 = vpop.f32.mrb[0].mxu0
  %2266 = vmatprep.mubr.f32.mxu0 0.0
  %2267 = vmatmul.mubr.f32.gmra.mrb[0].mxu0 %v1689
  %v2268 = vpop.f32.mrb[0].mxu0
  %v2269 = vadd.f32 %v1745, %v2268
  %v2270 = vpop.f32.mrb[0].mxu0
  %2271 = vmatprep.mubr.f32.mxu0 0.0
  %2272 = vmatmul.mubr.f32.gmra.mrb[0].mxu0 %v1690
  %v2273 = vpop.f32.mrb[0].mxu0
  %v2274 = vadd.f32 %v1745, %v2273
  %v2275 = vpop.f32.mrb[0].mxu0
  %2276 = vmatprep.mubr.f32.mxu0 0.0
  %2277 = vmatmul.mubr.f32.gmra.mrb[0].mxu0 %v1691
  %v2278 = vpop.f32.mrb[0].mxu0
  %v2279 = vadd.f32 %v1745, %v2278
  %v2280 = vpop.f32.mrb[0].mxu0
  %2281 = vmatprep.mubr.f32.mxu0 0.0
  %2282 = vmatmul.mubr.f32.gmra.mrb[0].mxu0 %v1692
  %v2283 = vpop.f32.mrb[0].mxu0
  %v2284 = vadd.f32 %v1745, %v2283
  %v2285 = vpop.f32.mrb[0].mxu0
  %2286 = vmatprep.mubr.f32.mxu0 0.0
  %2287 = vmatmul.mubr.f32.gmra.mrb[0].mxu0 %v1693
  %v2288 = vpop.f32.mrb[0].mxu0
  %v2289 = vadd.f32 %v1745, %v2288
  %v2290 = vpop.f32.mrb[0].mxu0
  %2291 = vmatprep.mubr.f32.mxu0 0.0
  %2292 = vmatmul.mubr.f32.gmra.mrb[0].mxu0 %v1694
  %v2293 = vpop.f32.mrb[0].mxu0
  %v2294 = vadd.f32 %v1745, %v2293
  %v2295 = vpop.f32.mrb[0].mxu0
  %2296 = vmatprep.mubr.f32.mxu0 0.0
  %2297 = vmatmul.mubr.f32.gmra.mrb[0].mxu0 %v1695
  %v2298 = vpop.f32.mrb[0].mxu0
  %v2299 = vadd.f32 %v1745, %v2298
  %v2300 = vpop.f32.mrb[0].mxu0
  %2301 = vmatprep.mubr.f32.mxu0 0.0
  %2302 = vmatmul.mubr.f32.gmra.mrb[0].mxu0 %v1696
  %v2303 = vpop.f32.mrb[0].mxu0
  %v2304 = vadd.f32 %v1745, %v2303
  %v2305 = vpop.f32.mrb[0].mxu0
  %2306 = vmatprep.mubr.f32.mxu0 0.0
  %2307 = vmatmul.mubr.f32.gmra.mrb[0].mxu0 %v1697
  %v2308 = vpop.f32.mrb[0].mxu0
  %v2309 = vadd.f32 %v1745, %v2308
  %v2310 = vpop.f32.mrb[0].mxu0
  %2311 = vmatprep.mubr.f32.mxu0 0.0
  %2312 = vmatmul.mubr.f32.gmra.mrb[0].mxu0 %v1698
  %v2313 = vpop.f32.mrb[0].mxu0
  %v2314 = vadd.f32 %v1745, %v2313
  %v2315 = vpop.f32.mrb[0].mxu0
  %2316 = vmatprep.mubr.f32.mxu0 0.0
  %2317 = vmatmul.mubr.f32.gmra.mrb[0].mxu0 %v1699
  %v2318 = vpop.f32.mrb[0].mxu0
  %v2319 = vadd.f32 %v1745, %v2318
  %v2320 = vpop.f32.mrb[0].mxu0
  %2321 = vmatprep.mubr.f32.mxu0 0.0
  %2322 = vmatmul.mubr.f32.gmra.mrb[0].mxu0 %v1700
  %v2323 = vpop.f32.mrb[0].mxu0
  %v2324 = vadd.f32 %v1745, %v2323
  %v2325 = vpop.f32.mrb[0].mxu0
  %2326 = vmatprep.mubr.f32.mxu0 0.0
  %2327 = vmatmul.mubr.f32.gmra.mrb[0].mxu0 %v1701
  %v2328 = vpop.f32.mrb[0].mxu0
  %v2329 = vadd.f32 %v1745, %v2328
  %v2330 = vpop.f32.mrb[0].mxu0
  %2331 = vmatprep.mubr.f32.mxu0 0.0
  %2332 = vmatmul.mubr.f32.gmra.mrb[0].mxu0 %v1702
  %v2333 = vpop.f32.mrb[0].mxu0
  %v2334 = vadd.f32 %v1745, %v2333
  %v2335 = vpop.f32.mrb[0].mxu0
  %2336 = vmatprep.mubr.f32.mxu0 0.0
  %2337 = vmatmul.mubr.f32.gmra.mrb[0].mxu0 %v1703
  %v2338 = vpop.f32.mrb[0].mxu0
  %v2339 = vadd.f32 %v1745, %v2338
  %v2340 = vpop.f32.mrb[0].mxu0
  %2341 = vmatprep.mubr.f32.mxu0 0.0
  %2342 = vmatmul.mubr.f32.gmra.mrb[0].mxu0 %v1704
  %v2343 = vpop.f32.mrb[0].mxu0
  %v2344 = vadd.f32 %v1745, %v2343
  %v2345 = vpop.f32.mrb[0].mxu0
  %2346 = vmatprep.mubr.f32.mxu0 0.0
  %2347 = vmatmul.mubr.f32.gmra.mrb[0].mxu0 %v1705
  %v2348 = vpop.f32.mrb[0].mxu0
  %v2349 = vadd.f32 %v1745, %v2348
  %v2350 = vpop.f32.mrb[0].mxu0
  %2351 = vmatprep.mubr.f32.mxu0 0.0
  %2352 = vmatmul.mubr.f32.gmra.mrb[0].mxu0 %v1706
  %v2353 = vpop.f32.mrb[0].mxu0
  %v2354 = vadd.f32 %v1745, %v2353
  %v2355 = vpop.f32.mrb[0].mxu0
  %2356 = vmatprep.mubr.f32.mxu0 0.0
  %2357 = vmatmul.mubr.f32.gmra.mrb[0].mxu0 %v1707
  %v2358 = vpop.f32.mrb[0].mxu0
  %v2359 = vadd.f32 %v1745, %v2358
  %v2360 = vpop.f32.mrb[0].mxu0
  %2361 = vmatprep.mubr.f32.mxu0 0.0
  %2362 = vmatmul.mubr.f32.gmra.mrb[0].mxu0 %v1708
  %v2363 = vpop.f32.mrb[0].mxu0
  %v2364 = vadd.f32 %v1745, %v2363
  %v2365 = vpop.f32.mrb[0].mxu0
  %2366 = vmatprep.mubr.f32.mxu0 0.0
  %2367 = vmatmul.mubr.f32.gmra.mrb[0].mxu0 %v1709
  %v2368 = vpop.f32.mrb[0].mxu0
  %v2369 = vadd.f32 %v1745, %v2368
  %v2370 = vpop.f32.mrb[0].mxu0
  %2371 = vmatprep.mubr.f32.mxu0 0.0
  %2372 = vmatmul.mubr.f32.gmra.mrb[0].mxu0 %v1710
  %v2373 = vpop.f32.mrb[0].mxu0
  %v2374 = vadd.f32 %v1745, %v2373
  %v2375 = vpop.f32.mrb[0].mxu0
  %2376 = vmatprep.mubr.f32.mxu0 0.0
  %2377 = vmatmul.mubr.f32.gmra.mrb[0].mxu0 %v1711
  %v2378 = vpop.f32.mrb[0].mxu0
  %v2379 = vadd.f32 %v1745, %v2378
  %v2380 = vpop.f32.mrb[0].mxu0
  %2381 = vmatprep.mubr.f32.mxu0 0.0
  %2382 = vmatmul.mubr.f32.gmra.mrb[0].mxu0 %v1712
  %v2383 = vpop.f32.mrb[0].mxu0
  %v2384 = vadd.f32 %v1745, %v2383
  %v2385 = vpop.f32.mrb[0].mxu0
  %2386 = vmatprep.mubr.f32.mxu0 0.0
  %2387 = vmatmul.mubr.f32.gmra.mrb[0].mxu0 %v1713
  %v2388 = vpop.f32.mrb[0].mxu0
  %v2389 = vadd.f32 %v1745, %v2388
  %v2390 = vpop.f32.mrb[0].mxu0
  %2391 = vmatprep.mubr.f32.mxu0 0.0
  %2392 = vmatmul.mubr.f32.gmra.mrb[0].mxu0 %v1714
  %v2393 = vpop.f32.mrb[0].mxu0
  %v2394 = vadd.f32 %v1745, %v2393
  %v2395 = vpop.f32.mrb[0].mxu0
  %2396 = vmatprep.mubr.f32.mxu0 0.0
  %2397 = vmatmul.mubr.f32.gmra.mrb[0].mxu0 %v1715
  %v2398 = vpop.f32.mrb[0].mxu0
  %v2399 = vadd.f32 %v1745, %v2398
  %v2400 = vpop.f32.mrb[0].mxu0
  %2401 = vmatprep.mubr.f32.mxu0 0.0
  %2402 = vmatmul.mubr.f32.gmra.mrb[0].mxu0 %v1716
  %v2403 = vpop.f32.mrb[0].mxu0
  %v2404 = vadd.f32 %v1745, %v2403
  %v2405 = vpop.f32.mrb[0].mxu0
  %2406 = vmatprep.mubr.f32.mxu0 0.0
  %2407 = vmatmul.mubr.f32.gmra.mrb[0].mxu0 %v1717
  %v2408 = vpop.f32.mrb[0].mxu0
  %v2409 = vadd.f32 %v1745, %v2408
  %v2410 = vpop.f32.mrb[0].mxu0
  %2411 = vmatprep.mubr.f32.mxu0 0.0
  %2412 = vmatmul.mubr.f32.gmra.mrb[0].mxu0 %v1718
  %v2413 = vpop.f32.mrb[0].mxu0
  %v2414 = vadd.f32 %v1745, %v2413
  %v2415 = vpop.f32.mrb[0].mxu0
  %2416 = vmatprep.mubr.f32.mxu0 0.0
  %2417 = vmatmul.mubr.f32.gmra.mrb[0].mxu0 %v1719
  %v2418 = vpop.f32.mrb[0].mxu0
  %v2419 = vadd.f32 %v1745, %v2418
  %v2420 = vpop.f32.mrb[0].mxu0
  %2421 = vmatprep.mubr.f32.mxu0 0.0
  %2422 = vmatmul.mubr.f32.gmra.mrb[0].mxu0 %v1720
  %v2423 = vpop.f32.mrb[0].mxu0
  %v2424 = vadd.f32 %v1745, %v2423
  %v2425 = vpop.f32.mrb[0].mxu0
  %2426 = vmatprep.mubr.f32.mxu0 0.0
  %2427 = vmatmul.mubr.f32.gmra.mrb[0].mxu0 %v1721
  %v2428 = vpop.f32.mrb[0].mxu0
  %v2429 = vadd.f32 %v1745, %v2428
  %v2430 = vpop.f32.mrb[0].mxu0
  %2431 = vmatprep.mubr.f32.mxu0 0.0
  %2432 = vmatmul.mubr.f32.gmra.mrb[0].mxu0 %v1722
  %v2433 = vpop.f32.mrb[0].mxu0
  %v2434 = vadd.f32 %v1745, %v2433
  %v2435 = vpop.f32.mrb[0].mxu0
  %2436 = vdwg.mxu0
  %v2437 = vmul.f32 %v1814, 0.5
  %v2438 = vmul.f32 %v1819, 0.5
  %v2439 = vmul.f32 %v1824, 0.5
  %v2440 = vmul.f32 %v1829, 0.5
  %v2441 = vmul.f32 %v1834, 0.5
  %v2442 = vmul.f32 %v1839, 0.5
  %v2443 = vmul.f32 %v1844, 0.5
  %v2444 = vmul.f32 %v1849, 0.5
  %v2445 = vmul.f32 %v1854, 0.5
  %v2446 = vmul.f32 %v1859, 0.5
  %v2447 = vmul.f32 %v1864, 0.5
  %v2448 = vmul.f32 %v1869, 0.5
  %v2449 = vmul.f32 %v1874, 0.5
  %v2450 = vmul.f32 %v1879, 0.5
  %v2451 = vmul.f32 %v1884, 0.5
  %v2452 = vmul.f32 %v1889, 0.5
  %v2453 = vmul.f32 %v1894, 0.5
  %v2454 = vmul.f32 %v1899, 0.5
  %v2455 = vmul.f32 %v1904, 0.5
  %v2456 = vmul.f32 %v1909, 0.5
  %v2457 = vmul.f32 %v1914, 0.5
  %v2458 = vmul.f32 %v1919, 0.5
  %v2459 = vmul.f32 %v1924, 0.5
  %v2460 = vmul.f32 %v1929, 0.5
  %v2461 = vmul.f32 %v1934, 0.5
  %v2462 = vmul.f32 %v1939, 0.5
  %v2463 = vmul.f32 %v1944, 0.5
  %v2464 = vmul.f32 %v1949, 0.5
  %v2465 = vmul.f32 %v1954, 0.5
  %v2466 = vmul.f32 %v1959, 0.5
  %v2467 = vmul.f32 %v1964, 0.5
  %v2468 = vmul.f32 %v1969, 0.5
  %v2469 = vmul.f32 %v1974, 0.5
  %v2470 = vmul.f32 %v1979, 0.5
  %v2471 = vmul.f32 %v1984, 0.5
  %v2472 = vmul.f32 %v1989, 0.5
  %v2473 = vmul.f32 %v1994, 0.5
  %v2474 = vmul.f32 %v1999, 0.5
  %v2475 = vmul.f32 %v2004, 0.5
  %v2476 = vmul.f32 %v2009, 0.5
  %v2477 = vmul.f32 %v2014, 0.5
  %v2478 = vmul.f32 %v2019, 0.5
  %v2479 = vmul.f32 %v2024, 0.5
  %v2480 = vmul.f32 %v2029, 0.5
  %v2481 = vmul.f32 %v2034, 0.5
  %v2482 = vmul.f32 %v2039, 0.5
  %v2483 = vmul.f32 %v2044, 0.5
  %v2484 = vmul.f32 %v2049, 0.5
  %v2485 = vmul.f32 %v2054, 0.5
  %v2486 = vmul.f32 %v2059, 0.5
  %v2487 = vmul.f32 %v2064, 0.5
  %v2488 = vmul.f32 %v2069, 0.5
  %v2489 = vmul.f32 %v2074, 0.5
  %v2490 = vmul.f32 %v2079, 0.5
  %v2491 = vmul.f32 %v2084, 0.5
  %v2492 = vmul.f32 %v2089, 0.5
  %v2493 = vmul.f32 %v2094, 0.5
  %v2494 = vmul.f32 %v2099, 0.5
  %v2495 = vmul.f32 %v2104, 0.5
  %v2496 = vmul.f32 %v2109, 0.5
  %v2497 = vmul.f32 %v2114, 0.5
  %v2498 = vmul.f32 %v2119, 0.5
  %v2499 = vmul.f32 %v2124, 0.5
  %v2500 = vmul.f32 %v2129, 0.5
  %v2501 = vmul.f32 %v2134, 0.5
  %v2502 = vmul.f32 %v2139, 0.5
  %v2503 = vmul.f32 %v2144, 0.5
  %v2504 = vmul.f32 %v2149, 0.5
  %v2505 = vmul.f32 %v2154, 0.5
  %v2506 = vmul.f32 %v2159, 0.5
  %v2507 = vmul.f32 %v2164, 0.5
  %v2508 = vmul.f32 %v2169, 0.5
  %v2509 = vmul.f32 %v2174, 0.5
  %v2510 = vmul.f32 %v2179, 0.5
  %v2511 = vmul.f32 %v2184, 0.5
  %v2512 = vmul.f32 %v2189, 0.5
  %v2513 = vmul.f32 %v2194, 0.5
  %v2514 = vmul.f32 %v2199, 0.5
  %v2515 = vmul.f32 %v2204, 0.5
  %v2516 = vmul.f32 %v2209, 0.5
  %v2517 = vmul.f32 %v2214, 0.5
  %v2518 = vmul.f32 %v2219, 0.5
  %v2519 = vmul.f32 %v2224, 0.5
  %v2520 = vmul.f32 %v2229, 0.5
  %v2521 = vmul.f32 %v2234, 0.5
  %v2522 = vmul.f32 %v2239, 0.5
  %v2523 = vmul.f32 %v2244, 0.5
  %v2524 = vmul.f32 %v2249, 0.5
  %v2525 = vmul.f32 %v2254, 0.5
  %v2526 = vmul.f32 %v2259, 0.5
  %v2527 = vmul.f32 %v2264, 0.5
  %v2528 = vmul.f32 %v2269, 0.5
  %v2529 = vmul.f32 %v2274, 0.5
  %v2530 = vmul.f32 %v2279, 0.5
  %v2531 = vmul.f32 %v2284, 0.5
  %v2532 = vmul.f32 %v2289, 0.5
  %v2533 = vmul.f32 %v2294, 0.5
  %v2534 = vmul.f32 %v2299, 0.5
  %v2535 = vmul.f32 %v2304, 0.5
  %v2536 = vmul.f32 %v2309, 0.5
  %v2537 = vmul.f32 %v2314, 0.5
  %v2538 = vmul.f32 %v2319, 0.5
  %v2539 = vmul.f32 %v2324, 0.5
  %v2540 = vmul.f32 %v2329, 0.5
  %v2541 = vmul.f32 %v2334, 0.5
  %v2542 = vmul.f32 %v2339, 0.5
  %v2543 = vmul.f32 %v2344, 0.5
  %v2544 = vmul.f32 %v2349, 0.5
  %v2545 = vmul.f32 %v2354, 0.5
  %v2546 = vmul.f32 %v2359, 0.5
  %v2547 = vmul.f32 %v2364, 0.5
  %v2548 = vmul.f32 %v2369, 0.5
  %v2549 = vmul.f32 %v2374, 0.5
  %v2550 = vmul.f32 %v2379, 0.5
  %v2551 = vmul.f32 %v2384, 0.5
  %v2552 = vmul.f32 %v2389, 0.5
  %v2553 = vmul.f32 %v2394, 0.5
  %v2554 = vmul.f32 %v2399, 0.5
  %v2555 = vmul.f32 %v2404, 0.5
  %v2556 = vmul.f32 %v2409, 0.5
  %v2557 = vmul.f32 %v2414, 0.5
  %v2558 = vmul.f32 %v2419, 0.5
  %v2559 = vmul.f32 %v2424, 0.5
  %v2560 = vmul.f32 %v2429, 0.5
  %v2561 = vmul.f32 %v2434, 0.5
  %v2562 = vtanh.pop %v2437
  %v2563 = vtanh.pop %v2438
  %v2564 = vtanh.pop %v2439
  %v2565 = vtanh.pop %v2440
  %v2566 = vtanh.pop %v2441
  %v2567 = vtanh.pop %v2442
  %v2568 = vtanh.pop %v2443
  %v2569 = vtanh.pop %v2444
  %v2570 = vtanh.pop %v2445
  %v2571 = vtanh.pop %v2446
  %v2572 = vtanh.pop %v2447
  %v2573 = vtanh.pop %v2448
  %v2574 = vtanh.pop %v2449
  %v2575 = vtanh.pop %v2450
  %v2576 = vtanh.pop %v2451
  %v2577 = vtanh.pop %v2452
  %v2578 = vtanh.pop %v2453
  %v2579 = vtanh.pop %v2454
  %v2580 = vtanh.pop %v2455
  %v2581 = vtanh.pop %v2456
  %v2582 = vtanh.pop %v2457
  %v2583 = vtanh.pop %v2458
  %v2584 = vtanh.pop %v2459
  %v2585 = vtanh.pop %v2460
  %v2586 = vtanh.pop %v2461
  %v2587 = vtanh.pop %v2462
  %v2588 = vtanh.pop %v2463
  %v2589 = vtanh.pop %v2464
  %v2590 = vtanh.pop %v2465
  %v2591 = vtanh.pop %v2466
  %v2592 = vtanh.pop %v2467
  %v2593 = vtanh.pop %v2468
  %v2594 = vtanh.pop %v2469
  %v2595 = vtanh.pop %v2470
  %v2596 = vtanh.pop %v2471
  %v2597 = vtanh.pop %v2472
  %v2598 = vtanh.pop %v2473
  %v2599 = vtanh.pop %v2474
  %v2600 = vtanh.pop %v2475
  %v2601 = vtanh.pop %v2476
  %v2602 = vtanh.pop %v2477
  %v2603 = vtanh.pop %v2478
  %v2604 = vtanh.pop %v2479
  %v2605 = vtanh.pop %v2480
  %v2606 = vtanh.pop %v2481
  %v2607 = vtanh.pop %v2482
  %v2608 = vtanh.pop %v2483
  %v2609 = vtanh.pop %v2484
  %v2610 = vtanh.pop %v2485
  %v2611 = vtanh.pop %v2486
  %v2612 = vtanh.pop %v2487
  %v2613 = vtanh.pop %v2488
  %v2614 = vtanh.pop %v2489
  %v2615 = vtanh.pop %v2490
  %v2616 = vtanh.pop %v2491
  %v2617 = vtanh.pop %v2492
  %v2618 = vtanh.pop %v2493
  %v2619 = vtanh.pop %v2494
  %v2620 = vtanh.pop %v2495
  %v2621 = vtanh.pop %v2496
  %v2622 = vtanh.pop %v2497
  %v2623 = vtanh.pop %v2498
  %v2624 = vtanh.pop %v2499
  %v2625 = vtanh.pop %v2500
  %v2626 = vtanh.pop %v2501
  %v2627 = vtanh.pop %v2502
  %v2628 = vtanh.pop %v2503
  %v2629 = vtanh.pop %v2504
  %v2630 = vtanh.pop %v2505
  %v2631 = vtanh.pop %v2506
  %v2632 = vtanh.pop %v2507
  %v2633 = vtanh.pop %v2508
  %v2634 = vtanh.pop %v2509
  %v2635 = vtanh.pop %v2510
  %v2636 = vtanh.pop %v2511
  %v2637 = vtanh.pop %v2512
  %v2638 = vtanh.pop %v2513
  %v2639 = vtanh.pop %v2514
  %v2640 = vtanh.pop %v2515
  %v2641 = vtanh.pop %v2516
  %v2642 = vtanh.pop %v2517
  %v2643 = vtanh.pop %v2518
  %v2644 = vtanh.pop %v2519
  %v2645 = vtanh.pop %v2520
  %v2646 = vtanh.pop %v2521
  %v2647 = vtanh.pop %v2522
  %v2648 = vtanh.pop %v2523
  %v2649 = vtanh.pop %v2524
  %v2650 = vtanh.pop %v2525
  %v2651 = vtanh.pop %v2526
  %v2652 = vtanh.pop %v2527
  %v2653 = vtanh.pop %v2528
  %v2654 = vtanh.pop %v2529
  %v2655 = vtanh.pop %v2530
  %v2656 = vtanh.pop %v2531
  %v2657 = vtanh.pop %v2532
  %v2658 = vtanh.pop %v2533
  %v2659 = vtanh.pop %v2534
  %v2660 = vtanh.pop %v2535
  %v2661 = vtanh.pop %v2536
  %v2662 = vtanh.pop %v2537
  %v2663 = vtanh.pop %v2538
  %v2664 = vtanh.pop %v2539
  %v2665 = vtanh.pop %v2540
  %v2666 = vtanh.pop %v2541
  %v2667 = vtanh.pop %v2542
  %v2668 = vtanh.pop %v2543
  %v2669 = vtanh.pop %v2544
  %v2670 = vtanh.pop %v2545
  %v2671 = vtanh.pop %v2546
  %v2672 = vtanh.pop %v2547
  %v2673 = vtanh.pop %v2548
  %v2674 = vtanh.pop %v2549
  %v2675 = vtanh.pop %v2550
  %v2676 = vtanh.pop %v2551
  %v2677 = vtanh.pop %v2552
  %v2678 = vtanh.pop %v2553
  %v2679 = vtanh.pop %v2554
  %v2680 = vtanh.pop %v2555
  %v2681 = vtanh.pop %v2556
  %v2682 = vtanh.pop %v2557
  %v2683 = vtanh.pop %v2558
  %v2684 = vtanh.pop %v2559
  %v2685 = vtanh.pop %v2560
  %v2686 = vtanh.pop %v2561
  %v2687 = vmul.f32 %v2562, 0.5
  %v2688 = vmul.f32 %v2563, 0.5
  %v2689 = vmul.f32 %v2564, 0.5
  %v2690 = vmul.f32 %v2565, 0.5
  %v2691 = vmul.f32 %v2566, 0.5
  %v2692 = vmul.f32 %v2567, 0.5
  %v2693 = vmul.f32 %v2568, 0.5
  %v2694 = vmul.f32 %v2569, 0.5
  %v2695 = vmul.f32 %v2570, 0.5
  %v2696 = vmul.f32 %v2571, 0.5
  %v2697 = vmul.f32 %v2572, 0.5
  %v2698 = vmul.f32 %v2573, 0.5
  %v2699 = vmul.f32 %v2574, 0.5
  %v2700 = vmul.f32 %v2575, 0.5
  %v2701 = vmul.f32 %v2576, 0.5
  %v2702 = vmul.f32 %v2577, 0.5
  %v2703 = vmul.f32 %v2578, 0.5
  %v2704 = vmul.f32 %v2579, 0.5
  %v2705 = vmul.f32 %v2580, 0.5
  %v2706 = vmul.f32 %v2581, 0.5
  %v2707 = vmul.f32 %v2582, 0.5
  %v2708 = vmul.f32 %v2583, 0.5
  %v2709 = vmul.f32 %v2584, 0.5
  %v2710 = vmul.f32 %v2585, 0.5
  %v2711 = vmul.f32 %v2586, 0.5
  %v2712 = vmul.f32 %v2587, 0.5
  %v2713 = vmul.f32 %v2588, 0.5
  %v2714 = vmul.f32 %v2589, 0.5
  %v2715 = vmul.f32 %v2590, 0.5
  %v2716 = vmul.f32 %v2591, 0.5
  %v2717 = vmul.f32 %v2592, 0.5
  %v2718 = vmul.f32 %v2593, 0.5
  %v2719 = vmul.f32 %v2594, 0.5
  %v2720 = vmul.f32 %v2595, 0.5
  %v2721 = vmul.f32 %v2596, 0.5
  %v2722 = vmul.f32 %v2597, 0.5
  %v2723 = vmul.f32 %v2598, 0.5
  %v2724 = vmul.f32 %v2599, 0.5
  %v2725 = vmul.f32 %v2600, 0.5
  %v2726 = vmul.f32 %v2601, 0.5
  %v2727 = vmul.f32 %v2602, 0.5
  %v2728 = vmul.f32 %v2603, 0.5
  %v2729 = vmul.f32 %v2604, 0.5
  %v2730 = vmul.f32 %v2605, 0.5
  %v2731 = vmul.f32 %v2606, 0.5
  %v2732 = vmul.f32 %v2607, 0.5
  %v2733 = vmul.f32 %v2608, 0.5
  %v2734 = vmul.f32 %v2609, 0.5
  %v2735 = vmul.f32 %v2610, 0.5
  %v2736 = vmul.f32 %v2611, 0.5
  %v2737 = vmul.f32 %v2612, 0.5
  %v2738 = vmul.f32 %v2613, 0.5
  %v2739 = vmul.f32 %v2614, 0.5
  %v2740 = vmul.f32 %v2615, 0.5
  %v2741 = vmul.f32 %v2616, 0.5
  %v2742 = vmul.f32 %v2617, 0.5
  %v2743 = vmul.f32 %v2618, 0.5
  %v2744 = vmul.f32 %v2619, 0.5
  %v2745 = vmul.f32 %v2620, 0.5
  %v2746 = vmul.f32 %v2621, 0.5
  %v2747 = vmul.f32 %v2622, 0.5
  %v2748 = vmul.f32 %v2623, 0.5
  %v2749 = vmul.f32 %v2624, 0.5
  %v2750 = vmul.f32 %v2625, 0.5
  %v2751 = vmul.f32 %v2626, 0.5
  %v2752 = vmul.f32 %v2627, 0.5
  %v2753 = vmul.f32 %v2628, 0.5
  %v2754 = vmul.f32 %v2629, 0.5
  %v2755 = vmul.f32 %v2630, 0.5
  %v2756 = vmul.f32 %v2631, 0.5
  %v2757 = vmul.f32 %v2632, 0.5
  %v2758 = vmul.f32 %v2633, 0.5
  %v2759 = vmul.f32 %v2634, 0.5
  %v2760 = vmul.f32 %v2635, 0.5
  %v2761 = vmul.f32 %v2636, 0.5
  %v2762 = vmul.f32 %v2637, 0.5
  %v2763 = vmul.f32 %v2638, 0.5
  %v2764 = vmul.f32 %v2639, 0.5
  %v2765 = vmul.f32 %v2640, 0.5
  %v2766 = vmul.f32 %v2641, 0.5
  %v2767 = vmul.f32 %v2642, 0.5
  %v2768 = vmul.f32 %v2643, 0.5
  %v2769 = vmul.f32 %v2644, 0.5
  %v2770 = vmul.f32 %v2645, 0.5
  %v2771 = vmul.f32 %v2646, 0.5
  %v2772 = vmul.f32 %v2647, 0.5
  %v2773 = vmul.f32 %v2648, 0.5
  %v2774 = vmul.f32 %v2649, 0.5
  %v2775 = vmul.f32 %v2650, 0.5
  %v2776 = vmul.f32 %v2651, 0.5
  %v2777 = vmul.f32 %v2652, 0.5
  %v2778 = vmul.f32 %v2653, 0.5
  %v2779 = vmul.f32 %v2654, 0.5
  %v2780 = vmul.f32 %v2655, 0.5
  %v2781 = vmul.f32 %v2656, 0.5
  %v2782 = vmul.f32 %v2657, 0.5
  %v2783 = vmul.f32 %v2658, 0.5
  %v2784 = vmul.f32 %v2659, 0.5
  %v2785 = vmul.f32 %v2660, 0.5
  %v2786 = vmul.f32 %v2661, 0.5
  %v2787 = vmul.f32 %v2662, 0.5
  %v2788 = vmul.f32 %v2663, 0.5
  %v2789 = vmul.f32 %v2664, 0.5
  %v2790 = vmul.f32 %v2665, 0.5
  %v2791 = vmul.f32 %v2666, 0.5
  %v2792 = vmul.f32 %v2667, 0.5
  %v2793 = vmul.f32 %v2668, 0.5
  %v2794 = vmul.f32 %v2669, 0.5
  %v2795 = vmul.f32 %v2670, 0.5
  %v2796 = vmul.f32 %v2671, 0.5
  %v2797 = vmul.f32 %v2672, 0.5
  %v2798 = vmul.f32 %v2673, 0.5
  %v2799 = vmul.f32 %v2674, 0.5
  %v2800 = vmul.f32 %v2675, 0.5
  %v2801 = vmul.f32 %v2676, 0.5
  %v2802 = vmul.f32 %v2677, 0.5
  %v2803 = vmul.f32 %v2678, 0.5
  %v2804 = vmul.f32 %v2679, 0.5
  %v2805 = vmul.f32 %v2680, 0.5
  %v2806 = vmul.f32 %v2681, 0.5
  %v2807 = vmul.f32 %v2682, 0.5
  %v2808 = vmul.f32 %v2683, 0.5
  %v2809 = vmul.f32 %v2684, 0.5
  %v2810 = vmul.f32 %v2685, 0.5
  %v2811 = vmul.f32 %v2686, 0.5
  %v2812 = vadd.f32 %v2687, 0.5
  %v2813 = vadd.f32 %v2688, 0.5
  %v2814 = vadd.f32 %v2689, 0.5
  %v2815 = vadd.f32 %v2690, 0.5
  %v2816 = vadd.f32 %v2691, 0.5
  %v2817 = vadd.f32 %v2692, 0.5
  %v2818 = vadd.f32 %v2693, 0.5
  %v2819 = vadd.f32 %v2694, 0.5
  %v2820 = vadd.f32 %v2695, 0.5
  %v2821 = vadd.f32 %v2696, 0.5
  %v2822 = vadd.f32 %v2697, 0.5
  %v2823 = vadd.f32 %v2698, 0.5
  %v2824 = vadd.f32 %v2699, 0.5
  %v2825 = vadd.f32 %v2700, 0.5
  %v2826 = vadd.f32 %v2701, 0.5
  %v2827 = vadd.f32 %v2702, 0.5
  %v2828 = vadd.f32 %v2703, 0.5
  %v2829 = vadd.f32 %v2704, 0.5
  %v2830 = vadd.f32 %v2705, 0.5
  %v2831 = vadd.f32 %v2706, 0.5
  %v2832 = vadd.f32 %v2707, 0.5
  %v2833 = vadd.f32 %v2708, 0.5
  %v2834 = vadd.f32 %v2709, 0.5
  %v2835 = vadd.f32 %v2710, 0.5
  %v2836 = vadd.f32 %v2711, 0.5
  %v2837 = vadd.f32 %v2712, 0.5
  %v2838 = vadd.f32 %v2713, 0.5
  %v2839 = vadd.f32 %v2714, 0.5
  %v2840 = vadd.f32 %v2715, 0.5
  %v2841 = vadd.f32 %v2716, 0.5
  %v2842 = vadd.f32 %v2717, 0.5
  %v2843 = vadd.f32 %v2718, 0.5
  %v2844 = vadd.f32 %v2719, 0.5
  %v2845 = vadd.f32 %v2720, 0.5
  %v2846 = vadd.f32 %v2721, 0.5
  %v2847 = vadd.f32 %v2722, 0.5
  %v2848 = vadd.f32 %v2723, 0.5
  %v2849 = vadd.f32 %v2724, 0.5
  %v2850 = vadd.f32 %v2725, 0.5
  %v2851 = vadd.f32 %v2726, 0.5
  %v2852 = vadd.f32 %v2727, 0.5
  %v2853 = vadd.f32 %v2728, 0.5
  %v2854 = vadd.f32 %v2729, 0.5
  %v2855 = vadd.f32 %v2730, 0.5
  %v2856 = vadd.f32 %v2731, 0.5
  %v2857 = vadd.f32 %v2732, 0.5
  %v2858 = vadd.f32 %v2733, 0.5
  %v2859 = vadd.f32 %v2734, 0.5
  %v2860 = vadd.f32 %v2735, 0.5
  %v2861 = vadd.f32 %v2736, 0.5
  %v2862 = vadd.f32 %v2737, 0.5
  %v2863 = vadd.f32 %v2738, 0.5
  %v2864 = vadd.f32 %v2739, 0.5
  %v2865 = vadd.f32 %v2740, 0.5
  %v2866 = vadd.f32 %v2741, 0.5
  %v2867 = vadd.f32 %v2742, 0.5
  %v2868 = vadd.f32 %v2743, 0.5
  %v2869 = vadd.f32 %v2744, 0.5
  %v2870 = vadd.f32 %v2745, 0.5
  %v2871 = vadd.f32 %v2746, 0.5
  %v2872 = vadd.f32 %v2747, 0.5
  %v2873 = vadd.f32 %v2748, 0.5
  %v2874 = vadd.f32 %v2749, 0.5
  %v2875 = vadd.f32 %v2750, 0.5
  %v2876 = vadd.f32 %v2751, 0.5
  %v2877 = vadd.f32 %v2752, 0.5
  %v2878 = vadd.f32 %v2753, 0.5
  %v2879 = vadd.f32 %v2754, 0.5
  %v2880 = vadd.f32 %v2755, 0.5
  %v2881 = vadd.f32 %v2756, 0.5
  %v2882 = vadd.f32 %v2757, 0.5
  %v2883 = vadd.f32 %v2758, 0.5
  %v2884 = vadd.f32 %v2759, 0.5
  %v2885 = vadd.f32 %v2760, 0.5
  %v2886 = vadd.f32 %v2761, 0.5
  %v2887 = vadd.f32 %v2762, 0.5
  %v2888 = vadd.f32 %v2763, 0.5
  %v2889 = vadd.f32 %v2764, 0.5
  %v2890 = vadd.f32 %v2765, 0.5
  %v2891 = vadd.f32 %v2766, 0.5
  %v2892 = vadd.f32 %v2767, 0.5
  %v2893 = vadd.f32 %v2768, 0.5
  %v2894 = vadd.f32 %v2769, 0.5
  %v2895 = vadd.f32 %v2770, 0.5
  %v2896 = vadd.f32 %v2771, 0.5
  %v2897 = vadd.f32 %v2772, 0.5
  %v2898 = vadd.f32 %v2773, 0.5
  %v2899 = vadd.f32 %v2774, 0.5
  %v2900 = vadd.f32 %v2775, 0.5
  %v2901 = vadd.f32 %v2776, 0.5
  %v2902 = vadd.f32 %v2777, 0.5
  %v2903 = vadd.f32 %v2778, 0.5
  %v2904 = vadd.f32 %v2779, 0.5
  %v2905 = vadd.f32 %v2780, 0.5
  %v2906 = vadd.f32 %v2781, 0.5
  %v2907 = vadd.f32 %v2782, 0.5
  %v2908 = vadd.f32 %v2783, 0.5
  %v2909 = vadd.f32 %v2784, 0.5
  %v2910 = vadd.f32 %v2785, 0.5
  %v2911 = vadd.f32 %v2786, 0.5
  %v2912 = vadd.f32 %v2787, 0.5
  %v2913 = vadd.f32 %v2788, 0.5
  %v2914 = vadd.f32 %v2789, 0.5
  %v2915 = vadd.f32 %v2790, 0.5
  %v2916 = vadd.f32 %v2791, 0.5
  %v2917 = vadd.f32 %v2792, 0.5
  %v2918 = vadd.f32 %v2793, 0.5
  %v2919 = vadd.f32 %v2794, 0.5
  %v2920 = vadd.f32 %v2795, 0.5
  %v2921 = vadd.f32 %v2796, 0.5
  %v2922 = vadd.f32 %v2797, 0.5
  %v2923 = vadd.f32 %v2798, 0.5
  %v2924 = vadd.f32 %v2799, 0.5
  %v2925 = vadd.f32 %v2800, 0.5
  %v2926 = vadd.f32 %v2801, 0.5
  %v2927 = vadd.f32 %v2802, 0.5
  %v2928 = vadd.f32 %v2803, 0.5
  %v2929 = vadd.f32 %v2804, 0.5
  %v2930 = vadd.f32 %v2805, 0.5
  %v2931 = vadd.f32 %v2806, 0.5
  %v2932 = vadd.f32 %v2807, 0.5
  %v2933 = vadd.f32 %v2808, 0.5
  %v2934 = vadd.f32 %v2809, 0.5
  %v2935 = vadd.f32 %v2810, 0.5
  %v2936 = vadd.f32 %v2811, 0.5
  %s2937 = scalar_lea.vmem %s2, 128
  %v2938 = vld [vmem:[%s2937] sm:$0xff]
  %v2939 = vld [vmem:[%s2937 + $0x8] sm:$0xff]
  %v2940 = vld [vmem:[%s2937 + $0x10] sm:$0xff]
  %v2941 = vld [vmem:[%s2937 + $0x18] sm:$0xff]
  %v2942 = vld [vmem:[%s2937 + $0x20] sm:$0xff]
  %v2943 = vld [vmem:[%s2937 + $0x28] sm:$0xff]
  %v2944 = vld [vmem:[%s2937 + $0x30] sm:$0xff]
  %v2945 = vld [vmem:[%s2937 + $0x38] sm:$0xff]
  %v2946 = vld [vmem:[%s2937 + $0x40] sm:$0xff]
  %v2947 = vld [vmem:[%s2937 + $0x48] sm:$0xff]
  %v2948 = vld [vmem:[%s2937 + $0x50] sm:$0xff]
  %v2949 = vld [vmem:[%s2937 + $0x58] sm:$0xff]
  %v2950 = vld [vmem:[%s2937 + $0x60] sm:$0xff]
  %v2951 = vld [vmem:[%s2937 + $0x68] sm:$0xff]
  %v2952 = vld [vmem:[%s2937 + $0x70] sm:$0xff]
  %v2953 = vld [vmem:[%s2937 + $0x78] sm:$0xff]
  %s2954 = scalar_lea.vmem %s4, 2
  %v2955 = vld [vmem:[%s2954] sm:$0x1]
  %v2957 = vlaneseq
  %v2958 = vshrl.u32 %v2957, 7
  %v2959 = vsub.s32 0, %v2958
  %v2960 = vrot.slane %v2955, %v2959
  %2962 = vmatprep.subr.mxu0 0.0
  %2963 = vmatpush1.msra.mxu0 %v2938
  %2964 = vmatprep.subr.mxu0 0.0
  %2965 = vmatpush1.msra.mxu0 %v2939
  %2966 = vmatprep.subr.mxu0 0.0
  %2967 = vmatpush1.msra.mxu0 %v2940
  %2968 = vmatprep.subr.mxu0 0.0
  %2969 = vmatpush1.msra.mxu0 %v2941
  %2970 = vmatprep.subr.mxu0 0.0
  %2971 = vmatpush1.msra.mxu0 %v2942
  %2972 = vmatprep.subr.mxu0 0.0
  %2973 = vmatpush1.msra.mxu0 %v2943
  %2974 = vmatprep.subr.mxu0 0.0
  %2975 = vmatpush1.msra.mxu0 %v2944
  %2976 = vmatprep.subr.mxu0 0.0
  %2977 = vmatpush1.msra.mxu0 %v2945
  %2978 = vmatprep.subr.mxu0 0.0
  %2979 = vmatpush1.msra.mxu0 %v2946
  %2980 = vmatprep.subr.mxu0 0.0
  %2981 = vmatpush1.msra.mxu0 %v2947
  %2982 = vmatprep.subr.mxu0 0.0
  %2983 = vmatpush1.msra.mxu0 %v2948
  %2984 = vmatprep.subr.mxu0 0.0
  %2985 = vmatpush1.msra.mxu0 %v2949
  %2986 = vmatprep.subr.mxu0 0.0
  %2987 = vmatpush1.msra.mxu0 %v2950
  %2988 = vmatprep.subr.mxu0 0.0
  %2989 = vmatpush1.msra.mxu0 %v2951
  %2990 = vmatprep.subr.mxu0 0.0
  %2991 = vmatpush1.msra.mxu0 %v2952
  %2992 = vmatprep.subr.mxu0 0.0
  %2993 = vmatpush1.msra.mxu0 %v2953
  %2994 = vmatprep.subr.mxu0 0.0
  %2995 = vmatpush1.msra.mxu0 0.0
  %2996 = vmatprep.subr.mxu0 0.0
  %2997 = vmatpush1.msra.mxu0 0.0
  %2998 = vmatprep.subr.mxu0 0.0
  %2999 = vmatpush1.msra.mxu0 0.0
  %3000 = vmatprep.subr.mxu0 0.0
  %3001 = vmatpush1.msra.mxu0 0.0
  %3002 = vmatprep.subr.mxu0 0.0
  %3003 = vmatpush1.msra.mxu0 0.0
  %3004 = vmatprep.subr.mxu0 0.0
  %3005 = vmatpush1.msra.mxu0 0.0
  %3006 = vmatprep.subr.mxu0 0.0
  %3007 = vmatpush1.msra.mxu0 0.0
  %3008 = vmatprep.subr.mxu0 0.0
  %3009 = vmatpush1.msra.mxu0 0.0
  %3010 = vmatprep.subr.mxu0 0.0
  %3011 = vmatpush1.msra.mxu0 0.0
  %3012 = vmatprep.subr.mxu0 0.0
  %3013 = vmatpush1.msra.mxu0 0.0
  %3014 = vmatprep.subr.mxu0 0.0
  %3015 = vmatpush1.msra.mxu0 0.0
  %3016 = vmatprep.subr.mxu0 0.0
  %3017 = vmatpush1.msra.mxu0 0.0
  %3018 = vmatprep.subr.mxu0 0.0
  %3019 = vmatpush1.msra.mxu0 0.0
  %3020 = vmatprep.subr.mxu0 0.0
  %3021 = vmatpush1.msra.mxu0 0.0
  %3022 = vmatprep.subr.mxu0 0.0
  %3023 = vmatpush1.msra.mxu0 0.0
  %3024 = vmatprep.subr.mxu0 0.0
  %3025 = vmatpush1.msra.mxu0 0.0
  %3026 = vmatprep.mubr.f32.mxu0 0.0
  %3027 = vmatmul.mubr.f32.gmra.mrb[0].mxu0 %v2812
  %v3028 = vpop.f32.mrb[0].mxu0
  %v3029 = vadd.f32 %v2960, %v3028
  %v3030 = vpop.f32.mrb[0].mxu0
  %3031 = vmatprep.mubr.f32.mxu0 0.0
  %3032 = vmatmul.mubr.f32.gmra.mrb[0].mxu0 %v2813
  %v3033 = vpop.f32.mrb[0].mxu0
  %v3034 = vadd.f32 %v2960, %v3033
  %v3035 = vpop.f32.mrb[0].mxu0
  %3036 = vmatprep.mubr.f32.mxu0 0.0
  %3037 = vmatmul.mubr.f32.gmra.mrb[0].mxu0 %v2814
  %v3038 = vpop.f32.mrb[0].mxu0
  %v3039 = vadd.f32 %v2960, %v3038
  %v3040 = vpop.f32.mrb[0].mxu0
  %3041 = vmatprep.mubr.f32.mxu0 0.0
  %3042 = vmatmul.mubr.f32.gmra.mrb[0].mxu0 %v2815
  %v3043 = vpop.f32.mrb[0].mxu0
  %v3044 = vadd.f32 %v2960, %v3043
  %v3045 = vpop.f32.mrb[0].mxu0
  %3046 = vmatprep.mubr.f32.mxu0 0.0
  %3047 = vmatmul.mubr.f32.gmra.mrb[0].mxu0 %v2816
  %v3048 = vpop.f32.mrb[0].mxu0
  %v3049 = vadd.f32 %v2960, %v3048
  %v3050 = vpop.f32.mrb[0].mxu0
  %3051 = vmatprep.mubr.f32.mxu0 0.0
  %3052 = vmatmul.mubr.f32.gmra.mrb[0].mxu0 %v2817
  %v3053 = vpop.f32.mrb[0].mxu0
  %v3054 = vadd.f32 %v2960, %v3053
  %v3055 = vpop.f32.mrb[0].mxu0
  %3056 = vmatprep.mubr.f32.mxu0 0.0
  %3057 = vmatmul.mubr.f32.gmra.mrb[0].mxu0 %v2818
  %v3058 = vpop.f32.mrb[0].mxu0
  %v3059 = vadd.f32 %v2960, %v3058
  %v3060 = vpop.f32.mrb[0].mxu0
  %3061 = vmatprep.mubr.f32.mxu0 0.0
  %3062 = vmatmul.mubr.f32.gmra.mrb[0].mxu0 %v2819
  %v3063 = vpop.f32.mrb[0].mxu0
  %v3064 = vadd.f32 %v2960, %v3063
  %v3065 = vpop.f32.mrb[0].mxu0
  %3066 = vmatprep.mubr.f32.mxu0 0.0
  %3067 = vmatmul.mubr.f32.gmra.mrb[0].mxu0 %v2820
  %v3068 = vpop.f32.mrb[0].mxu0
  %v3069 = vadd.f32 %v2960, %v3068
  %v3070 = vpop.f32.mrb[0].mxu0
  %3071 = vmatprep.mubr.f32.mxu0 0.0
  %3072 = vmatmul.mubr.f32.gmra.mrb[0].mxu0 %v2821
  %v3073 = vpop.f32.mrb[0].mxu0
  %v3074 = vadd.f32 %v2960, %v3073
  %v3075 = vpop.f32.mrb[0].mxu0
  %3076 = vmatprep.mubr.f32.mxu0 0.0
  %3077 = vmatmul.mubr.f32.gmra.mrb[0].mxu0 %v2822
  %v3078 = vpop.f32.mrb[0].mxu0
  %v3079 = vadd.f32 %v2960, %v3078
  %v3080 = vpop.f32.mrb[0].mxu0
  %3081 = vmatprep.mubr.f32.mxu0 0.0
  %3082 = vmatmul.mubr.f32.gmra.mrb[0].mxu0 %v2823
  %v3083 = vpop.f32.mrb[0].mxu0
  %v3084 = vadd.f32 %v2960, %v3083
  %v3085 = vpop.f32.mrb[0].mxu0
  %3086 = vmatprep.mubr.f32.mxu0 0.0
  %3087 = vmatmul.mubr.f32.gmra.mrb[0].mxu0 %v2824
  %v3088 = vpop.f32.mrb[0].mxu0
  %v3089 = vadd.f32 %v2960, %v3088
  %v3090 = vpop.f32.mrb[0].mxu0
  %3091 = vmatprep.mubr.f32.mxu0 0.0
  %3092 = vmatmul.mubr.f32.gmra.mrb[0].mxu0 %v2825
  %v3093 = vpop.f32.mrb[0].mxu0
  %v3094 = vadd.f32 %v2960, %v3093
  %v3095 = vpop.f32.mrb[0].mxu0
  %3096 = vmatprep.mubr.f32.mxu0 0.0
  %3097 = vmatmul.mubr.f32.gmra.mrb[0].mxu0 %v2826
  %v3098 = vpop.f32.mrb[0].mxu0
  %v3099 = vadd.f32 %v2960, %v3098
  %v3100 = vpop.f32.mrb[0].mxu0
  %3101 = vmatprep.mubr.f32.mxu0 0.0
  %3102 = vmatmul.mubr.f32.gmra.mrb[0].mxu0 %v2827
  %v3103 = vpop.f32.mrb[0].mxu0
  %v3104 = vadd.f32 %v2960, %v3103
  %v3105 = vpop.f32.mrb[0].mxu0
  %3106 = vmatprep.mubr.f32.mxu0 0.0
  %3107 = vmatmul.mubr.f32.gmra.mrb[0].mxu0 %v2828
  %v3108 = vpop.f32.mrb[0].mxu0
  %v3109 = vadd.f32 %v2960, %v3108
  %v3110 = vpop.f32.mrb[0].mxu0
  %3111 = vmatprep.mubr.f32.mxu0 0.0
  %3112 = vmatmul.mubr.f32.gmra.mrb[0].mxu0 %v2829
  %v3113 = vpop.f32.mrb[0].mxu0
  %v3114 = vadd.f32 %v2960, %v3113
  %v3115 = vpop.f32.mrb[0].mxu0
  %3116 = vmatprep.mubr.f32.mxu0 0.0
  %3117 = vmatmul.mubr.f32.gmra.mrb[0].mxu0 %v2830
  %v3118 = vpop.f32.mrb[0].mxu0
  %v3119 = vadd.f32 %v2960, %v3118
  %v3120 = vpop.f32.mrb[0].mxu0
  %3121 = vmatprep.mubr.f32.mxu0 0.0
  %3122 = vmatmul.mubr.f32.gmra.mrb[0].mxu0 %v2831
  %v3123 = vpop.f32.mrb[0].mxu0
  %v3124 = vadd.f32 %v2960, %v3123
  %v3125 = vpop.f32.mrb[0].mxu0
  %3126 = vmatprep.mubr.f32.mxu0 0.0
  %3127 = vmatmul.mubr.f32.gmra.mrb[0].mxu0 %v2832
  %v3128 = vpop.f32.mrb[0].mxu0
  %v3129 = vadd.f32 %v2960, %v3128
  %v3130 = vpop.f32.mrb[0].mxu0
  %3131 = vmatprep.mubr.f32.mxu0 0.0
  %3132 = vmatmul.mubr.f32.gmra.mrb[0].mxu0 %v2833
  %v3133 = vpop.f32.mrb[0].mxu0
  %v3134 = vadd.f32 %v2960, %v3133
  %v3135 = vpop.f32.mrb[0].mxu0
  %3136 = vmatprep.mubr.f32.mxu0 0.0
  %3137 = vmatmul.mubr.f32.gmra.mrb[0].mxu0 %v2834
  %v3138 = vpop.f32.mrb[0].mxu0
  %v3139 = vadd.f32 %v2960, %v3138
  %v3140 = vpop.f32.mrb[0].mxu0
  %3141 = vmatprep.mubr.f32.mxu0 0.0
  %3142 = vmatmul.mubr.f32.gmra.mrb[0].mxu0 %v2835
  %v3143 = vpop.f32.mrb[0].mxu0
  %v3144 = vadd.f32 %v2960, %v3143
  %v3145 = vpop.f32.mrb[0].mxu0
  %3146 = vmatprep.mubr.f32.mxu0 0.0
  %3147 = vmatmul.mubr.f32.gmra.mrb[0].mxu0 %v2836
  %v3148 = vpop.f32.mrb[0].mxu0
  %v3149 = vadd.f32 %v2960, %v3148
  %v3150 = vpop.f32.mrb[0].mxu0
  %3151 = vmatprep.mubr.f32.mxu0 0.0
  %3152 = vmatmul.mubr.f32.gmra.mrb[0].mxu0 %v2837
  %v3153 = vpop.f32.mrb[0].mxu0
  %v3154 = vadd.f32 %v2960, %v3153
  %v3155 = vpop.f32.mrb[0].mxu0
  %3156 = vmatprep.mubr.f32.mxu0 0.0
  %3157 = vmatmul.mubr.f32.gmra.mrb[0].mxu0 %v2838
  %v3158 = vpop.f32.mrb[0].mxu0
  %v3159 = vadd.f32 %v2960, %v3158
  %v3160 = vpop.f32.mrb[0].mxu0
  %3161 = vmatprep.mubr.f32.mxu0 0.0
  %3162 = vmatmul.mubr.f32.gmra.mrb[0].mxu0 %v2839
  %v3163 = vpop.f32.mrb[0].mxu0
  %v3164 = vadd.f32 %v2960, %v3163
  %v3165 = vpop.f32.mrb[0].mxu0
  %3166 = vmatprep.mubr.f32.mxu0 0.0
  %3167 = vmatmul.mubr.f32.gmra.mrb[0].mxu0 %v2840
  %v3168 = vpop.f32.mrb[0].mxu0
  %v3169 = vadd.f32 %v2960, %v3168
  %v3170 = vpop.f32.mrb[0].mxu0
  %3171 = vmatprep.mubr.f32.mxu0 0.0
  %3172 = vmatmul.mubr.f32.gmra.mrb[0].mxu0 %v2841
  %v3173 = vpop.f32.mrb[0].mxu0
  %v3174 = vadd.f32 %v2960, %v3173
  %v3175 = vpop.f32.mrb[0].mxu0
  %3176 = vmatprep.mubr.f32.mxu0 0.0
  %3177 = vmatmul.mubr.f32.gmra.mrb[0].mxu0 %v2842
  %v3178 = vpop.f32.mrb[0].mxu0
  %v3179 = vadd.f32 %v2960, %v3178
  %v3180 = vpop.f32.mrb[0].mxu0
  %3181 = vmatprep.mubr.f32.mxu0 0.0
  %3182 = vmatmul.mubr.f32.gmra.mrb[0].mxu0 %v2843
  %v3183 = vpop.f32.mrb[0].mxu0
  %v3184 = vadd.f32 %v2960, %v3183
  %v3185 = vpop.f32.mrb[0].mxu0
  %3186 = vmatprep.mubr.f32.mxu0 0.0
  %3187 = vmatmul.mubr.f32.gmra.mrb[0].mxu0 %v2844
  %v3188 = vpop.f32.mrb[0].mxu0
  %v3189 = vadd.f32 %v2960, %v3188
  %v3190 = vpop.f32.mrb[0].mxu0
  %3191 = vmatprep.mubr.f32.mxu0 0.0
  %3192 = vmatmul.mubr.f32.gmra.mrb[0].mxu0 %v2845
  %v3193 = vpop.f32.mrb[0].mxu0
  %v3194 = vadd.f32 %v2960, %v3193
  %v3195 = vpop.f32.mrb[0].mxu0
  %3196 = vmatprep.mubr.f32.mxu0 0.0
  %3197 = vmatmul.mubr.f32.gmra.mrb[0].mxu0 %v2846
  %v3198 = vpop.f32.mrb[0].mxu0
  %v3199 = vadd.f32 %v2960, %v3198
  %v3200 = vpop.f32.mrb[0].mxu0
  %3201 = vmatprep.mubr.f32.mxu0 0.0
  %3202 = vmatmul.mubr.f32.gmra.mrb[0].mxu0 %v2847
  %v3203 = vpop.f32.mrb[0].mxu0
  %v3204 = vadd.f32 %v2960, %v3203
  %v3205 = vpop.f32.mrb[0].mxu0
  %3206 = vmatprep.mubr.f32.mxu0 0.0
  %3207 = vmatmul.mubr.f32.gmra.mrb[0].mxu0 %v2848
  %v3208 = vpop.f32.mrb[0].mxu0
  %v3209 = vadd.f32 %v2960, %v3208
  %v3210 = vpop.f32.mrb[0].mxu0
  %3211 = vmatprep.mubr.f32.mxu0 0.0
  %3212 = vmatmul.mubr.f32.gmra.mrb[0].mxu0 %v2849
  %v3213 = vpop.f32.mrb[0].mxu0
  %v3214 = vadd.f32 %v2960, %v3213
  %v3215 = vpop.f32.mrb[0].mxu0
  %3216 = vmatprep.mubr.f32.mxu0 0.0
  %3217 = vmatmul.mubr.f32.gmra.mrb[0].mxu0 %v2850
  %v3218 = vpop.f32.mrb[0].mxu0
  %v3219 = vadd.f32 %v2960, %v3218
  %v3220 = vpop.f32.mrb[0].mxu0
  %3221 = vmatprep.mubr.f32.mxu0 0.0
  %3222 = vmatmul.mubr.f32.gmra.mrb[0].mxu0 %v2851
  %v3223 = vpop.f32.mrb[0].mxu0
  %v3224 = vadd.f32 %v2960, %v3223
  %v3225 = vpop.f32.mrb[0].mxu0
  %3226 = vmatprep.mubr.f32.mxu0 0.0
  %3227 = vmatmul.mubr.f32.gmra.mrb[0].mxu0 %v2852
  %v3228 = vpop.f32.mrb[0].mxu0
  %v3229 = vadd.f32 %v2960, %v3228
  %v3230 = vpop.f32.mrb[0].mxu0
  %3231 = vmatprep.mubr.f32.mxu0 0.0
  %3232 = vmatmul.mubr.f32.gmra.mrb[0].mxu0 %v2853
  %v3233 = vpop.f32.mrb[0].mxu0
  %v3234 = vadd.f32 %v2960, %v3233
  %v3235 = vpop.f32.mrb[0].mxu0
  %3236 = vmatprep.mubr.f32.mxu0 0.0
  %3237 = vmatmul.mubr.f32.gmra.mrb[0].mxu0 %v2854
  %v3238 = vpop.f32.mrb[0].mxu0
  %v3239 = vadd.f32 %v2960, %v3238
  %v3240 = vpop.f32.mrb[0].mxu0
  %3241 = vmatprep.mubr.f32.mxu0 0.0
  %3242 = vmatmul.mubr.f32.gmra.mrb[0].mxu0 %v2855
  %v3243 = vpop.f32.mrb[0].mxu0
  %v3244 = vadd.f32 %v2960, %v3243
  %v3245 = vpop.f32.mrb[0].mxu0
  %3246 = vmatprep.mubr.f32.mxu0 0.0
  %3247 = vmatmul.mubr.f32.gmra.mrb[0].mxu0 %v2856
  %v3248 = vpop.f32.mrb[0].mxu0
  %v3249 = vadd.f32 %v2960, %v3248
  %v3250 = vpop.f32.mrb[0].mxu0
  %3251 = vmatprep.mubr.f32.mxu0 0.0
  %3252 = vmatmul.mubr.f32.gmra.mrb[0].mxu0 %v2857
  %v3253 = vpop.f32.mrb[0].mxu0
  %v3254 = vadd.f32 %v2960, %v3253
  %v3255 = vpop.f32.mrb[0].mxu0
  %3256 = vmatprep.mubr.f32.mxu0 0.0
  %3257 = vmatmul.mubr.f32.gmra.mrb[0].mxu0 %v2858
  %v3258 = vpop.f32.mrb[0].mxu0
  %v3259 = vadd.f32 %v2960, %v3258
  %v3260 = vpop.f32.mrb[0].mxu0
  %3261 = vmatprep.mubr.f32.mxu0 0.0
  %3262 = vmatmul.mubr.f32.gmra.mrb[0].mxu0 %v2859
  %v3263 = vpop.f32.mrb[0].mxu0
  %v3264 = vadd.f32 %v2960, %v3263
  %v3265 = vpop.f32.mrb[0].mxu0
  %3266 = vmatprep.mubr.f32.mxu0 0.0
  %3267 = vmatmul.mubr.f32.gmra.mrb[0].mxu0 %v2860
  %v3268 = vpop.f32.mrb[0].mxu0
  %v3269 = vadd.f32 %v2960, %v3268
  %v3270 = vpop.f32.mrb[0].mxu0
  %3271 = vmatprep.mubr.f32.mxu0 0.0
  %3272 = vmatmul.mubr.f32.gmra.mrb[0].mxu0 %v2861
  %v3273 = vpop.f32.mrb[0].mxu0
  %v3274 = vadd.f32 %v2960, %v3273
  %v3275 = vpop.f32.mrb[0].mxu0
  %3276 = vmatprep.mubr.f32.mxu0 0.0
  %3277 = vmatmul.mubr.f32.gmra.mrb[0].mxu0 %v2862
  %v3278 = vpop.f32.mrb[0].mxu0
  %v3279 = vadd.f32 %v2960, %v3278
  %v3280 = vpop.f32.mrb[0].mxu0
  %3281 = vmatprep.mubr.f32.mxu0 0.0
  %3282 = vmatmul.mubr.f32.gmra.mrb[0].mxu0 %v2863
  %v3283 = vpop.f32.mrb[0].mxu0
  %v3284 = vadd.f32 %v2960, %v3283
  %v3285 = vpop.f32.mrb[0].mxu0
  %3286 = vmatprep.mubr.f32.mxu0 0.0
  %3287 = vmatmul.mubr.f32.gmra.mrb[0].mxu0 %v2864
  %v3288 = vpop.f32.mrb[0].mxu0
  %v3289 = vadd.f32 %v2960, %v3288
  %v3290 = vpop.f32.mrb[0].mxu0
  %3291 = vmatprep.mubr.f32.mxu0 0.0
  %3292 = vmatmul.mubr.f32.gmra.mrb[0].mxu0 %v2865
  %v3293 = vpop.f32.mrb[0].mxu0
  %v3294 = vadd.f32 %v2960, %v3293
  %v3295 = vpop.f32.mrb[0].mxu0
  %3296 = vmatprep.mubr.f32.mxu0 0.0
  %3297 = vmatmul.mubr.f32.gmra.mrb[0].mxu0 %v2866
  %v3298 = vpop.f32.mrb[0].mxu0
  %v3299 = vadd.f32 %v2960, %v3298
  %v3300 = vpop.f32.mrb[0].mxu0
  %3301 = vmatprep.mubr.f32.mxu0 0.0
  %3302 = vmatmul.mubr.f32.gmra.mrb[0].mxu0 %v2867
  %v3303 = vpop.f32.mrb[0].mxu0
  %v3304 = vadd.f32 %v2960, %v3303
  %v3305 = vpop.f32.mrb[0].mxu0
  %3306 = vmatprep.mubr.f32.mxu0 0.0
  %3307 = vmatmul.mubr.f32.gmra.mrb[0].mxu0 %v2868
  %v3308 = vpop.f32.mrb[0].mxu0
  %v3309 = vadd.f32 %v2960, %v3308
  %v3310 = vpop.f32.mrb[0].mxu0
  %3311 = vmatprep.mubr.f32.mxu0 0.0
  %3312 = vmatmul.mubr.f32.gmra.mrb[0].mxu0 %v2869
  %v3313 = vpop.f32.mrb[0].mxu0
  %v3314 = vadd.f32 %v2960, %v3313
  %v3315 = vpop.f32.mrb[0].mxu0
  %3316 = vmatprep.mubr.f32.mxu0 0.0
  %3317 = vmatmul.mubr.f32.gmra.mrb[0].mxu0 %v2870
  %v3318 = vpop.f32.mrb[0].mxu0
  %v3319 = vadd.f32 %v2960, %v3318
  %v3320 = vpop.f32.mrb[0].mxu0
  %3321 = vmatprep.mubr.f32.mxu0 0.0
  %3322 = vmatmul.mubr.f32.gmra.mrb[0].mxu0 %v2871
  %v3323 = vpop.f32.mrb[0].mxu0
  %v3324 = vadd.f32 %v2960, %v3323
  %v3325 = vpop.f32.mrb[0].mxu0
  %3326 = vmatprep.mubr.f32.mxu0 0.0
  %3327 = vmatmul.mubr.f32.gmra.mrb[0].mxu0 %v2872
  %v3328 = vpop.f32.mrb[0].mxu0
  %v3329 = vadd.f32 %v2960, %v3328
  %v3330 = vpop.f32.mrb[0].mxu0
  %3331 = vmatprep.mubr.f32.mxu0 0.0
  %3332 = vmatmul.mubr.f32.gmra.mrb[0].mxu0 %v2873
  %v3333 = vpop.f32.mrb[0].mxu0
  %v3334 = vadd.f32 %v2960, %v3333
  %v3335 = vpop.f32.mrb[0].mxu0
  %3336 = vmatprep.mubr.f32.mxu0 0.0
  %3337 = vmatmul.mubr.f32.gmra.mrb[0].mxu0 %v2874
  %v3338 = vpop.f32.mrb[0].mxu0
  %v3339 = vadd.f32 %v2960, %v3338
  %v3340 = vpop.f32.mrb[0].mxu0
  %3341 = vmatprep.mubr.f32.mxu0 0.0
  %3342 = vmatmul.mubr.f32.gmra.mrb[0].mxu0 %v2875
  %v3343 = vpop.f32.mrb[0].mxu0
  %v3344 = vadd.f32 %v2960, %v3343
  %v3345 = vpop.f32.mrb[0].mxu0
  %3346 = vmatprep.mubr.f32.mxu0 0.0
  %3347 = vmatmul.mubr.f32.gmra.mrb[0].mxu0 %v2876
  %v3348 = vpop.f32.mrb[0].mxu0
  %v3349 = vadd.f32 %v2960, %v3348
  %v3350 = vpop.f32.mrb[0].mxu0
  %3351 = vmatprep.mubr.f32.mxu0 0.0
  %3352 = vmatmul.mubr.f32.gmra.mrb[0].mxu0 %v2877
  %v3353 = vpop.f32.mrb[0].mxu0
  %v3354 = vadd.f32 %v2960, %v3353
  %v3355 = vpop.f32.mrb[0].mxu0
  %3356 = vmatprep.mubr.f32.mxu0 0.0
  %3357 = vmatmul.mubr.f32.gmra.mrb[0].mxu0 %v2878
  %v3358 = vpop.f32.mrb[0].mxu0
  %v3359 = vadd.f32 %v2960, %v3358
  %v3360 = vpop.f32.mrb[0].mxu0
  %3361 = vmatprep.mubr.f32.mxu0 0.0
  %3362 = vmatmul.mubr.f32.gmra.mrb[0].mxu0 %v2879
  %v3363 = vpop.f32.mrb[0].mxu0
  %v3364 = vadd.f32 %v2960, %v3363
  %v3365 = vpop.f32.mrb[0].mxu0
  %3366 = vmatprep.mubr.f32.mxu0 0.0
  %3367 = vmatmul.mubr.f32.gmra.mrb[0].mxu0 %v2880
  %v3368 = vpop.f32.mrb[0].mxu0
  %v3369 = vadd.f32 %v2960, %v3368
  %v3370 = vpop.f32.mrb[0].mxu0
  %3371 = vmatprep.mubr.f32.mxu0 0.0
  %3372 = vmatmul.mubr.f32.gmra.mrb[0].mxu0 %v2881
  %v3373 = vpop.f32.mrb[0].mxu0
  %v3374 = vadd.f32 %v2960, %v3373
  %v3375 = vpop.f32.mrb[0].mxu0
  %3376 = vmatprep.mubr.f32.mxu0 0.0
  %3377 = vmatmul.mubr.f32.gmra.mrb[0].mxu0 %v2882
  %v3378 = vpop.f32.mrb[0].mxu0
  %v3379 = vadd.f32 %v2960, %v3378
  %v3380 = vpop.f32.mrb[0].mxu0
  %3381 = vmatprep.mubr.f32.mxu0 0.0
  %3382 = vmatmul.mubr.f32.gmra.mrb[0].mxu0 %v2883
  %v3383 = vpop.f32.mrb[0].mxu0
  %v3384 = vadd.f32 %v2960, %v3383
  %v3385 = vpop.f32.mrb[0].mxu0
  %3386 = vmatprep.mubr.f32.mxu0 0.0
  %3387 = vmatmul.mubr.f32.gmra.mrb[0].mxu0 %v2884
  %v3388 = vpop.f32.mrb[0].mxu0
  %v3389 = vadd.f32 %v2960, %v3388
  %v3390 = vpop.f32.mrb[0].mxu0
  %3391 = vmatprep.mubr.f32.mxu0 0.0
  %3392 = vmatmul.mubr.f32.gmra.mrb[0].mxu0 %v2885
  %v3393 = vpop.f32.mrb[0].mxu0
  %v3394 = vadd.f32 %v2960, %v3393
  %v3395 = vpop.f32.mrb[0].mxu0
  %3396 = vmatprep.mubr.f32.mxu0 0.0
  %3397 = vmatmul.mubr.f32.gmra.mrb[0].mxu0 %v2886
  %v3398 = vpop.f32.mrb[0].mxu0
  %v3399 = vadd.f32 %v2960, %v3398
  %v3400 = vpop.f32.mrb[0].mxu0
  %3401 = vmatprep.mubr.f32.mxu0 0.0
  %3402 = vmatmul.mubr.f32.gmra.mrb[0].mxu0 %v2887
  %v3403 = vpop.f32.mrb[0].mxu0
  %v3404 = vadd.f32 %v2960, %v3403
  %v3405 = vpop.f32.mrb[0].mxu0
  %3406 = vmatprep.mubr.f32.mxu0 0.0
  %3407 = vmatmul.mubr.f32.gmra.mrb[0].mxu0 %v2888
  %v3408 = vpop.f32.mrb[0].mxu0
  %v3409 = vadd.f32 %v2960, %v3408
  %v3410 = vpop.f32.mrb[0].mxu0
  %3411 = vmatprep.mubr.f32.mxu0 0.0
  %3412 = vmatmul.mubr.f32.gmra.mrb[0].mxu0 %v2889
  %v3413 = vpop.f32.mrb[0].mxu0
  %v3414 = vadd.f32 %v2960, %v3413
  %v3415 = vpop.f32.mrb[0].mxu0
  %3416 = vmatprep.mubr.f32.mxu0 0.0
  %3417 = vmatmul.mubr.f32.gmra.mrb[0].mxu0 %v2890
  %v3418 = vpop.f32.mrb[0].mxu0
  %v3419 = vadd.f32 %v2960, %v3418
  %v3420 = vpop.f32.mrb[0].mxu0
  %3421 = vmatprep.mubr.f32.mxu0 0.0
  %3422 = vmatmul.mubr.f32.gmra.mrb[0].mxu0 %v2891
  %v3423 = vpop.f32.mrb[0].mxu0
  %v3424 = vadd.f32 %v2960, %v3423
  %v3425 = vpop.f32.mrb[0].mxu0
  %3426 = vmatprep.mubr.f32.mxu0 0.0
  %3427 = vmatmul.mubr.f32.gmra.mrb[0].mxu0 %v2892
  %v3428 = vpop.f32.mrb[0].mxu0
  %v3429 = vadd.f32 %v2960, %v3428
  %v3430 = vpop.f32.mrb[0].mxu0
  %3431 = vmatprep.mubr.f32.mxu0 0.0
  %3432 = vmatmul.mubr.f32.gmra.mrb[0].mxu0 %v2893
  %v3433 = vpop.f32.mrb[0].mxu0
  %v3434 = vadd.f32 %v2960, %v3433
  %v3435 = vpop.f32.mrb[0].mxu0
  %3436 = vmatprep.mubr.f32.mxu0 0.0
  %3437 = vmatmul.mubr.f32.gmra.mrb[0].mxu0 %v2894
  %v3438 = vpop.f32.mrb[0].mxu0
  %v3439 = vadd.f32 %v2960, %v3438
  %v3440 = vpop.f32.mrb[0].mxu0
  %3441 = vmatprep.mubr.f32.mxu0 0.0
  %3442 = vmatmul.mubr.f32.gmra.mrb[0].mxu0 %v2895
  %v3443 = vpop.f32.mrb[0].mxu0
  %v3444 = vadd.f32 %v2960, %v3443
  %v3445 = vpop.f32.mrb[0].mxu0
  %3446 = vmatprep.mubr.f32.mxu0 0.0
  %3447 = vmatmul.mubr.f32.gmra.mrb[0].mxu0 %v2896
  %v3448 = vpop.f32.mrb[0].mxu0
  %v3449 = vadd.f32 %v2960, %v3448
  %v3450 = vpop.f32.mrb[0].mxu0
  %3451 = vmatprep.mubr.f32.mxu0 0.0
  %3452 = vmatmul.mubr.f32.gmra.mrb[0].mxu0 %v2897
  %v3453 = vpop.f32.mrb[0].mxu0
  %v3454 = vadd.f32 %v2960, %v3453
  %v3455 = vpop.f32.mrb[0].mxu0
  %3456 = vmatprep.mubr.f32.mxu0 0.0
  %3457 = vmatmul.mubr.f32.gmra.mrb[0].mxu0 %v2898
  %v3458 = vpop.f32.mrb[0].mxu0
  %v3459 = vadd.f32 %v2960, %v3458
  %v3460 = vpop.f32.mrb[0].mxu0
  %3461 = vmatprep.mubr.f32.mxu0 0.0
  %3462 = vmatmul.mubr.f32.gmra.mrb[0].mxu0 %v2899
  %v3463 = vpop.f32.mrb[0].mxu0
  %v3464 = vadd.f32 %v2960, %v3463
  %v3465 = vpop.f32.mrb[0].mxu0
  %3466 = vmatprep.mubr.f32.mxu0 0.0
  %3467 = vmatmul.mubr.f32.gmra.mrb[0].mxu0 %v2900
  %v3468 = vpop.f32.mrb[0].mxu0
  %v3469 = vadd.f32 %v2960, %v3468
  %v3470 = vpop.f32.mrb[0].mxu0
  %3471 = vmatprep.mubr.f32.mxu0 0.0
  %3472 = vmatmul.mubr.f32.gmra.mrb[0].mxu0 %v2901
  %v3473 = vpop.f32.mrb[0].mxu0
  %v3474 = vadd.f32 %v2960, %v3473
  %v3475 = vpop.f32.mrb[0].mxu0
  %3476 = vmatprep.mubr.f32.mxu0 0.0
  %3477 = vmatmul.mubr.f32.gmra.mrb[0].mxu0 %v2902
  %v3478 = vpop.f32.mrb[0].mxu0
  %v3479 = vadd.f32 %v2960, %v3478
  %v3480 = vpop.f32.mrb[0].mxu0
  %3481 = vmatprep.mubr.f32.mxu0 0.0
  %3482 = vmatmul.mubr.f32.gmra.mrb[0].mxu0 %v2903
  %v3483 = vpop.f32.mrb[0].mxu0
  %v3484 = vadd.f32 %v2960, %v3483
  %v3485 = vpop.f32.mrb[0].mxu0
  %3486 = vmatprep.mubr.f32.mxu0 0.0
  %3487 = vmatmul.mubr.f32.gmra.mrb[0].mxu0 %v2904
  %v3488 = vpop.f32.mrb[0].mxu0
  %v3489 = vadd.f32 %v2960, %v3488
  %v3490 = vpop.f32.mrb[0].mxu0
  %3491 = vmatprep.mubr.f32.mxu0 0.0
  %3492 = vmatmul.mubr.f32.gmra.mrb[0].mxu0 %v2905
  %v3493 = vpop.f32.mrb[0].mxu0
  %v3494 = vadd.f32 %v2960, %v3493
  %v3495 = vpop.f32.mrb[0].mxu0
  %3496 = vmatprep.mubr.f32.mxu0 0.0
  %3497 = vmatmul.mubr.f32.gmra.mrb[0].mxu0 %v2906
  %v3498 = vpop.f32.mrb[0].mxu0
  %v3499 = vadd.f32 %v2960, %v3498
  %v3500 = vpop.f32.mrb[0].mxu0
  %3501 = vmatprep.mubr.f32.mxu0 0.0
  %3502 = vmatmul.mubr.f32.gmra.mrb[0].mxu0 %v2907
  %v3503 = vpop.f32.mrb[0].mxu0
  %v3504 = vadd.f32 %v2960, %v3503
  %v3505 = vpop.f32.mrb[0].mxu0
  %3506 = vmatprep.mubr.f32.mxu0 0.0
  %3507 = vmatmul.mubr.f32.gmra.mrb[0].mxu0 %v2908
  %v3508 = vpop.f32.mrb[0].mxu0
  %v3509 = vadd.f32 %v2960, %v3508
  %v3510 = vpop.f32.mrb[0].mxu0
  %3511 = vmatprep.mubr.f32.mxu0 0.0
  %3512 = vmatmul.mubr.f32.gmra.mrb[0].mxu0 %v2909
  %v3513 = vpop.f32.mrb[0].mxu0
  %v3514 = vadd.f32 %v2960, %v3513
  %v3515 = vpop.f32.mrb[0].mxu0
  %3516 = vmatprep.mubr.f32.mxu0 0.0
  %3517 = vmatmul.mubr.f32.gmra.mrb[0].mxu0 %v2910
  %v3518 = vpop.f32.mrb[0].mxu0
  %v3519 = vadd.f32 %v2960, %v3518
  %v3520 = vpop.f32.mrb[0].mxu0
  %3521 = vmatprep.mubr.f32.mxu0 0.0
  %3522 = vmatmul.mubr.f32.gmra.mrb[0].mxu0 %v2911
  %v3523 = vpop.f32.mrb[0].mxu0
  %v3524 = vadd.f32 %v2960, %v3523
  %v3525 = vpop.f32.mrb[0].mxu0
  %3526 = vmatprep.mubr.f32.mxu0 0.0
  %3527 = vmatmul.mubr.f32.gmra.mrb[0].mxu0 %v2912
  %v3528 = vpop.f32.mrb[0].mxu0
  %v3529 = vadd.f32 %v2960, %v3528
  %v3530 = vpop.f32.mrb[0].mxu0
  %3531 = vmatprep.mubr.f32.mxu0 0.0
  %3532 = vmatmul.mubr.f32.gmra.mrb[0].mxu0 %v2913
  %v3533 = vpop.f32.mrb[0].mxu0
  %v3534 = vadd.f32 %v2960, %v3533
  %v3535 = vpop.f32.mrb[0].mxu0
  %3536 = vmatprep.mubr.f32.mxu0 0.0
  %3537 = vmatmul.mubr.f32.gmra.mrb[0].mxu0 %v2914
  %v3538 = vpop.f32.mrb[0].mxu0
  %v3539 = vadd.f32 %v2960, %v3538
  %v3540 = vpop.f32.mrb[0].mxu0
  %3541 = vmatprep.mubr.f32.mxu0 0.0
  %3542 = vmatmul.mubr.f32.gmra.mrb[0].mxu0 %v2915
  %v3543 = vpop.f32.mrb[0].mxu0
  %v3544 = vadd.f32 %v2960, %v3543
  %v3545 = vpop.f32.mrb[0].mxu0
  %3546 = vmatprep.mubr.f32.mxu0 0.0
  %3547 = vmatmul.mubr.f32.gmra.mrb[0].mxu0 %v2916
  %v3548 = vpop.f32.mrb[0].mxu0
  %v3549 = vadd.f32 %v2960, %v3548
  %v3550 = vpop.f32.mrb[0].mxu0
  %3551 = vmatprep.mubr.f32.mxu0 0.0
  %3552 = vmatmul.mubr.f32.gmra.mrb[0].mxu0 %v2917
  %v3553 = vpop.f32.mrb[0].mxu0
  %v3554 = vadd.f32 %v2960, %v3553
  %v3555 = vpop.f32.mrb[0].mxu0
  %3556 = vmatprep.mubr.f32.mxu0 0.0
  %3557 = vmatmul.mubr.f32.gmra.mrb[0].mxu0 %v2918
  %v3558 = vpop.f32.mrb[0].mxu0
  %v3559 = vadd.f32 %v2960, %v3558
  %v3560 = vpop.f32.mrb[0].mxu0
  %3561 = vmatprep.mubr.f32.mxu0 0.0
  %3562 = vmatmul.mubr.f32.gmra.mrb[0].mxu0 %v2919
  %v3563 = vpop.f32.mrb[0].mxu0
  %v3564 = vadd.f32 %v2960, %v3563
  %v3565 = vpop.f32.mrb[0].mxu0
  %3566 = vmatprep.mubr.f32.mxu0 0.0
  %3567 = vmatmul.mubr.f32.gmra.mrb[0].mxu0 %v2920
  %v3568 = vpop.f32.mrb[0].mxu0
  %v3569 = vadd.f32 %v2960, %v3568
  %v3570 = vpop.f32.mrb[0].mxu0
  %3571 = vmatprep.mubr.f32.mxu0 0.0
  %3572 = vmatmul.mubr.f32.gmra.mrb[0].mxu0 %v2921
  %v3573 = vpop.f32.mrb[0].mxu0
  %v3574 = vadd.f32 %v2960, %v3573
  %v3575 = vpop.f32.mrb[0].mxu0
  %3576 = vmatprep.mubr.f32.mxu0 0.0
  %3577 = vmatmul.mubr.f32.gmra.mrb[0].mxu0 %v2922
  %v3578 = vpop.f32.mrb[0].mxu0
  %v3579 = vadd.f32 %v2960, %v3578
  %v3580 = vpop.f32.mrb[0].mxu0
  %3581 = vmatprep.mubr.f32.mxu0 0.0
  %3582 = vmatmul.mubr.f32.gmra.mrb[0].mxu0 %v2923
  %v3583 = vpop.f32.mrb[0].mxu0
  %v3584 = vadd.f32 %v2960, %v3583
  %v3585 = vpop.f32.mrb[0].mxu0
  %3586 = vmatprep.mubr.f32.mxu0 0.0
  %3587 = vmatmul.mubr.f32.gmra.mrb[0].mxu0 %v2924
  %v3588 = vpop.f32.mrb[0].mxu0
  %v3589 = vadd.f32 %v2960, %v3588
  %v3590 = vpop.f32.mrb[0].mxu0
  %3591 = vmatprep.mubr.f32.mxu0 0.0
  %3592 = vmatmul.mubr.f32.gmra.mrb[0].mxu0 %v2925
  %v3593 = vpop.f32.mrb[0].mxu0
  %v3594 = vadd.f32 %v2960, %v3593
  %v3595 = vpop.f32.mrb[0].mxu0
  %3596 = vmatprep.mubr.f32.mxu0 0.0
  %3597 = vmatmul.mubr.f32.gmra.mrb[0].mxu0 %v2926
  %v3598 = vpop.f32.mrb[0].mxu0
  %v3599 = vadd.f32 %v2960, %v3598
  %v3600 = vpop.f32.mrb[0].mxu0
  %3601 = vmatprep.mubr.f32.mxu0 0.0
  %3602 = vmatmul.mubr.f32.gmra.mrb[0].mxu0 %v2927
  %v3603 = vpop.f32.mrb[0].mxu0
  %v3604 = vadd.f32 %v2960, %v3603
  %v3605 = vpop.f32.mrb[0].mxu0
  %3606 = vmatprep.mubr.f32.mxu0 0.0
  %3607 = vmatmul.mubr.f32.gmra.mrb[0].mxu0 %v2928
  %v3608 = vpop.f32.mrb[0].mxu0
  %v3609 = vadd.f32 %v2960, %v3608
  %v3610 = vpop.f32.mrb[0].mxu0
  %3611 = vmatprep.mubr.f32.mxu0 0.0
  %3612 = vmatmul.mubr.f32.gmra.mrb[0].mxu0 %v2929
  %v3613 = vpop.f32.mrb[0].mxu0
  %v3614 = vadd.f32 %v2960, %v3613
  %v3615 = vpop.f32.mrb[0].mxu0
  %3616 = vmatprep.mubr.f32.mxu0 0.0
  %3617 = vmatmul.mubr.f32.gmra.mrb[0].mxu0 %v2930
  %v3618 = vpop.f32.mrb[0].mxu0
  %v3619 = vadd.f32 %v2960, %v3618
  %v3620 = vpop.f32.mrb[0].mxu0
  %3621 = vmatprep.mubr.f32.mxu0 0.0
  %3622 = vmatmul.mubr.f32.gmra.mrb[0].mxu0 %v2931
  %v3623 = vpop.f32.mrb[0].mxu0
  %v3624 = vadd.f32 %v2960, %v3623
  %v3625 = vpop.f32.mrb[0].mxu0
  %3626 = vmatprep.mubr.f32.mxu0 0.0
  %3627 = vmatmul.mubr.f32.gmra.mrb[0].mxu0 %v2932
  %v3628 = vpop.f32.mrb[0].mxu0
  %v3629 = vadd.f32 %v2960, %v3628
  %v3630 = vpop.f32.mrb[0].mxu0
  %3631 = vmatprep.mubr.f32.mxu0 0.0
  %3632 = vmatmul.mubr.f32.gmra.mrb[0].mxu0 %v2933
  %v3633 = vpop.f32.mrb[0].mxu0
  %v3634 = vadd.f32 %v2960, %v3633
  %v3635 = vpop.f32.mrb[0].mxu0
  %3636 = vmatprep.mubr.f32.mxu0 0.0
  %3637 = vmatmul.mubr.f32.gmra.mrb[0].mxu0 %v2934
  %v3638 = vpop.f32.mrb[0].mxu0
  %v3639 = vadd.f32 %v2960, %v3638
  %v3640 = vpop.f32.mrb[0].mxu0
  %3641 = vmatprep.mubr.f32.mxu0 0.0
  %3642 = vmatmul.mubr.f32.gmra.mrb[0].mxu0 %v2935
  %v3643 = vpop.f32.mrb[0].mxu0
  %v3644 = vadd.f32 %v2960, %v3643
  %v3645 = vpop.f32.mrb[0].mxu0
  %3646 = vmatprep.mubr.f32.mxu0 0.0
  %3647 = vmatmul.mubr.f32.gmra.mrb[0].mxu0 %v2936
  %v3648 = vpop.f32.mrb[0].mxu0
  %v3649 = vadd.f32 %v2960, %v3648
  %v3650 = vpop.f32.mrb[0].mxu0
  %3651 = vdwg.mxu0
  %s3652 = scalar_lea.vmem %s2, 256
  %v3653 = vld [vmem:[%s3652] sm:$0xff]
  %v3654 = vld [vmem:[%s3652 + $0x8] sm:$0xff]
  %v3655 = vld [vmem:[%s3652 + $0x10] sm:$0xff]
  %v3656 = vld [vmem:[%s3652 + $0x18] sm:$0xff]
  %v3657 = vld [vmem:[%s3652 + $0x20] sm:$0xff]
  %v3658 = vld [vmem:[%s3652 + $0x28] sm:$0xff]
  %v3659 = vld [vmem:[%s3652 + $0x30] sm:$0xff]
  %v3660 = vld [vmem:[%s3652 + $0x38] sm:$0xff]
  %v3661 = vld [vmem:[%s3652 + $0x40] sm:$0xff]
  %v3662 = vld [vmem:[%s3652 + $0x48] sm:$0xff]
  %v3663 = vld [vmem:[%s3652 + $0x50] sm:$0xff]
  %v3664 = vld [vmem:[%s3652 + $0x58] sm:$0xff]
  %v3665 = vld [vmem:[%s3652 + $0x60] sm:$0xff]
  %v3666 = vld [vmem:[%s3652 + $0x68] sm:$0xff]
  %v3667 = vld [vmem:[%s3652 + $0x70] sm:$0xff]
  %v3668 = vld [vmem:[%s3652 + $0x78] sm:$0xff]
  %s3669 = scalar_lea.vmem %s4, 3
  %v3670 = vld [vmem:[%s3669] sm:$0x1]
  %v3672 = vlaneseq
  %v3673 = vshrl.u32 %v3672, 7
  %v3674 = vsub.s32 0, %v3673
  %v3675 = vrot.slane %v3670, %v3674
  %3677 = vmatprep.subr.mxu0 0.0
  %3678 = vmatpush1.msra.mxu0 %v3653
  %3679 = vmatprep.subr.mxu0 0.0
  %3680 = vmatpush1.msra.mxu0 %v3654
  %3681 = vmatprep.subr.mxu0 0.0
  %3682 = vmatpush1.msra.mxu0 %v3655
  %3683 = vmatprep.subr.mxu0 0.0
  %3684 = vmatpush1.msra.mxu0 %v3656
  %3685 = vmatprep.subr.mxu0 0.0
  %3686 = vmatpush1.msra.mxu0 %v3657
  %3687 = vmatprep.subr.mxu0 0.0
  %3688 = vmatpush1.msra.mxu0 %v3658
  %3689 = vmatprep.subr.mxu0 0.0
  %3690 = vmatpush1.msra.mxu0 %v3659
  %3691 = vmatprep.subr.mxu0 0.0
  %3692 = vmatpush1.msra.mxu0 %v3660
  %3693 = vmatprep.subr.mxu0 0.0
  %3694 = vmatpush1.msra.mxu0 %v3661
  %3695 = vmatprep.subr.mxu0 0.0
  %3696 = vmatpush1.msra.mxu0 %v3662
  %3697 = vmatprep.subr.mxu0 0.0
  %3698 = vmatpush1.msra.mxu0 %v3663
  %3699 = vmatprep.subr.mxu0 0.0
  %3700 = vmatpush1.msra.mxu0 %v3664
  %3701 = vmatprep.subr.mxu0 0.0
  %3702 = vmatpush1.msra.mxu0 %v3665
  %3703 = vmatprep.subr.mxu0 0.0
  %3704 = vmatpush1.msra.mxu0 %v3666
  %3705 = vmatprep.subr.mxu0 0.0
  %3706 = vmatpush1.msra.mxu0 %v3667
  %3707 = vmatprep.subr.mxu0 0.0
  %3708 = vmatpush1.msra.mxu0 %v3668
  %3709 = vmatprep.subr.mxu0 0.0
  %3710 = vmatpush1.msra.mxu0 0.0
  %3711 = vmatprep.subr.mxu0 0.0
  %3712 = vmatpush1.msra.mxu0 0.0
  %3713 = vmatprep.subr.mxu0 0.0
  %3714 = vmatpush1.msra.mxu0 0.0
  %3715 = vmatprep.subr.mxu0 0.0
  %3716 = vmatpush1.msra.mxu0 0.0
  %3717 = vmatprep.subr.mxu0 0.0
  %3718 = vmatpush1.msra.mxu0 0.0
  %3719 = vmatprep.subr.mxu0 0.0
  %3720 = vmatpush1.msra.mxu0 0.0
  %3721 = vmatprep.subr.mxu0 0.0
  %3722 = vmatpush1.msra.mxu0 0.0
  %3723 = vmatprep.subr.mxu0 0.0
  %3724 = vmatpush1.msra.mxu0 0.0
  %3725 = vmatprep.subr.mxu0 0.0
  %3726 = vmatpush1.msra.mxu0 0.0
  %3727 = vmatprep.subr.mxu0 0.0
  %3728 = vmatpush1.msra.mxu0 0.0
  %3729 = vmatprep.subr.mxu0 0.0
  %3730 = vmatpush1.msra.mxu0 0.0
  %3731 = vmatprep.subr.mxu0 0.0
  %3732 = vmatpush1.msra.mxu0 0.0
  %3733 = vmatprep.subr.mxu0 0.0
  %3734 = vmatpush1.msra.mxu0 0.0
  %3735 = vmatprep.subr.mxu0 0.0
  %3736 = vmatpush1.msra.mxu0 0.0
  %3737 = vmatprep.subr.mxu0 0.0
  %3738 = vmatpush1.msra.mxu0 0.0
  %3739 = vmatprep.subr.mxu0 0.0
  %3740 = vmatpush1.msra.mxu0 0.0
  %3741 = vmatprep.mubr.f32.mxu0 0.0
  %3742 = vmatmul.mubr.f32.gmra.mrb[0].mxu0 %v3029
  %v3743 = vpop.f32.mrb[0].mxu0
  %v3744 = vadd.f32 %v3675, %v3743
  %v3745 = vpop.f32.mrb[0].mxu0
  %3746 = vmatprep.mubr.f32.mxu0 0.0
  %3747 = vmatmul.mubr.f32.gmra.mrb[0].mxu0 %v3034
  %v3748 = vpop.f32.mrb[0].mxu0
  %v3749 = vadd.f32 %v3675, %v3748
  %v3750 = vpop.f32.mrb[0].mxu0
  %3751 = vmatprep.mubr.f32.mxu0 0.0
  %3752 = vmatmul.mubr.f32.gmra.mrb[0].mxu0 %v3039
  %v3753 = vpop.f32.mrb[0].mxu0
  %v3754 = vadd.f32 %v3675, %v3753
  %v3755 = vpop.f32.mrb[0].mxu0
  %3756 = vmatprep.mubr.f32.mxu0 0.0
  %3757 = vmatmul.mubr.f32.gmra.mrb[0].mxu0 %v3044
  %v3758 = vpop.f32.mrb[0].mxu0
  %v3759 = vadd.f32 %v3675, %v3758
  %v3760 = vpop.f32.mrb[0].mxu0
  %3761 = vmatprep.mubr.f32.mxu0 0.0
  %3762 = vmatmul.mubr.f32.gmra.mrb[0].mxu0 %v3049
  %v3763 = vpop.f32.mrb[0].mxu0
  %v3764 = vadd.f32 %v3675, %v3763
  %v3765 = vpop.f32.mrb[0].mxu0
  %3766 = vmatprep.mubr.f32.mxu0 0.0
  %3767 = vmatmul.mubr.f32.gmra.mrb[0].mxu0 %v3054
  %v3768 = vpop.f32.mrb[0].mxu0
  %v3769 = vadd.f32 %v3675, %v3768
  %v3770 = vpop.f32.mrb[0].mxu0
  %3771 = vmatprep.mubr.f32.mxu0 0.0
  %3772 = vmatmul.mubr.f32.gmra.mrb[0].mxu0 %v3059
  %v3773 = vpop.f32.mrb[0].mxu0
  %v3774 = vadd.f32 %v3675, %v3773
  %v3775 = vpop.f32.mrb[0].mxu0
  %3776 = vmatprep.mubr.f32.mxu0 0.0
  %3777 = vmatmul.mubr.f32.gmra.mrb[0].mxu0 %v3064
  %v3778 = vpop.f32.mrb[0].mxu0
  %v3779 = vadd.f32 %v3675, %v3778
  %v3780 = vpop.f32.mrb[0].mxu0
  %3781 = vmatprep.mubr.f32.mxu0 0.0
  %3782 = vmatmul.mubr.f32.gmra.mrb[0].mxu0 %v3069
  %v3783 = vpop.f32.mrb[0].mxu0
  %v3784 = vadd.f32 %v3675, %v3783
  %v3785 = vpop.f32.mrb[0].mxu0
  %3786 = vmatprep.mubr.f32.mxu0 0.0
  %3787 = vmatmul.mubr.f32.gmra.mrb[0].mxu0 %v3074
  %v3788 = vpop.f32.mrb[0].mxu0
  %v3789 = vadd.f32 %v3675, %v3788
  %v3790 = vpop.f32.mrb[0].mxu0
  %3791 = vmatprep.mubr.f32.mxu0 0.0
  %3792 = vmatmul.mubr.f32.gmra.mrb[0].mxu0 %v3079
  %v3793 = vpop.f32.mrb[0].mxu0
  %v3794 = vadd.f32 %v3675, %v3793
  %v3795 = vpop.f32.mrb[0].mxu0
  %3796 = vmatprep.mubr.f32.mxu0 0.0
  %3797 = vmatmul.mubr.f32.gmra.mrb[0].mxu0 %v3084
  %v3798 = vpop.f32.mrb[0].mxu0
  %v3799 = vadd.f32 %v3675, %v3798
  %v3800 = vpop.f32.mrb[0].mxu0
  %3801 = vmatprep.mubr.f32.mxu0 0.0
  %3802 = vmatmul.mubr.f32.gmra.mrb[0].mxu0 %v3089
  %v3803 = vpop.f32.mrb[0].mxu0
  %v3804 = vadd.f32 %v3675, %v3803
  %v3805 = vpop.f32.mrb[0].mxu0
  %3806 = vmatprep.mubr.f32.mxu0 0.0
  %3807 = vmatmul.mubr.f32.gmra.mrb[0].mxu0 %v3094
  %v3808 = vpop.f32.mrb[0].mxu0
  %v3809 = vadd.f32 %v3675, %v3808
  %v3810 = vpop.f32.mrb[0].mxu0
  %3811 = vmatprep.mubr.f32.mxu0 0.0
  %3812 = vmatmul.mubr.f32.gmra.mrb[0].mxu0 %v3099
  %v3813 = vpop.f32.mrb[0].mxu0
  %v3814 = vadd.f32 %v3675, %v3813
  %v3815 = vpop.f32.mrb[0].mxu0
  %3816 = vmatprep.mubr.f32.mxu0 0.0
  %3817 = vmatmul.mubr.f32.gmra.mrb[0].mxu0 %v3104
  %v3818 = vpop.f32.mrb[0].mxu0
  %v3819 = vadd.f32 %v3675, %v3818
  %v3820 = vpop.f32.mrb[0].mxu0
  %3821 = vmatprep.mubr.f32.mxu0 0.0
  %3822 = vmatmul.mubr.f32.gmra.mrb[0].mxu0 %v3109
  %v3823 = vpop.f32.mrb[0].mxu0
  %v3824 = vadd.f32 %v3675, %v3823
  %v3825 = vpop.f32.mrb[0].mxu0
  %3826 = vmatprep.mubr.f32.mxu0 0.0
  %3827 = vmatmul.mubr.f32.gmra.mrb[0].mxu0 %v3114
  %v3828 = vpop.f32.mrb[0].mxu0
  %v3829 = vadd.f32 %v3675, %v3828
  %v3830 = vpop.f32.mrb[0].mxu0
  %3831 = vmatprep.mubr.f32.mxu0 0.0
  %3832 = vmatmul.mubr.f32.gmra.mrb[0].mxu0 %v3119
  %v3833 = vpop.f32.mrb[0].mxu0
  %v3834 = vadd.f32 %v3675, %v3833
  %v3835 = vpop.f32.mrb[0].mxu0
  %3836 = vmatprep.mubr.f32.mxu0 0.0
  %3837 = vmatmul.mubr.f32.gmra.mrb[0].mxu0 %v3124
  %v3838 = vpop.f32.mrb[0].mxu0
  %v3839 = vadd.f32 %v3675, %v3838
  %v3840 = vpop.f32.mrb[0].mxu0
  %3841 = vmatprep.mubr.f32.mxu0 0.0
  %3842 = vmatmul.mubr.f32.gmra.mrb[0].mxu0 %v3129
  %v3843 = vpop.f32.mrb[0].mxu0
  %v3844 = vadd.f32 %v3675, %v3843
  %v3845 = vpop.f32.mrb[0].mxu0
  %3846 = vmatprep.mubr.f32.mxu0 0.0
  %3847 = vmatmul.mubr.f32.gmra.mrb[0].mxu0 %v3134
  %v3848 = vpop.f32.mrb[0].mxu0
  %v3849 = vadd.f32 %v3675, %v3848
  %v3850 = vpop.f32.mrb[0].mxu0
  %3851 = vmatprep.mubr.f32.mxu0 0.0
  %3852 = vmatmul.mubr.f32.gmra.mrb[0].mxu0 %v3139
  %v3853 = vpop.f32.mrb[0].mxu0
  %v3854 = vadd.f32 %v3675, %v3853
  %v3855 = vpop.f32.mrb[0].mxu0
  %3856 = vmatprep.mubr.f32.mxu0 0.0
  %3857 = vmatmul.mubr.f32.gmra.mrb[0].mxu0 %v3144
  %v3858 = vpop.f32.mrb[0].mxu0
  %v3859 = vadd.f32 %v3675, %v3858
  %v3860 = vpop.f32.mrb[0].mxu0
  %3861 = vmatprep.mubr.f32.mxu0 0.0
  %3862 = vmatmul.mubr.f32.gmra.mrb[0].mxu0 %v3149
  %v3863 = vpop.f32.mrb[0].mxu0
  %v3864 = vadd.f32 %v3675, %v3863
  %v3865 = vpop.f32.mrb[0].mxu0
  %3866 = vmatprep.mubr.f32.mxu0 0.0
  %3867 = vmatmul.mubr.f32.gmra.mrb[0].mxu0 %v3154
  %v3868 = vpop.f32.mrb[0].mxu0
  %v3869 = vadd.f32 %v3675, %v3868
  %v3870 = vpop.f32.mrb[0].mxu0
  %3871 = vmatprep.mubr.f32.mxu0 0.0
  %3872 = vmatmul.mubr.f32.gmra.mrb[0].mxu0 %v3159
  %v3873 = vpop.f32.mrb[0].mxu0
  %v3874 = vadd.f32 %v3675, %v3873
  %v3875 = vpop.f32.mrb[0].mxu0
  %3876 = vmatprep.mubr.f32.mxu0 0.0
  %3877 = vmatmul.mubr.f32.gmra.mrb[0].mxu0 %v3164
  %v3878 = vpop.f32.mrb[0].mxu0
  %v3879 = vadd.f32 %v3675, %v3878
  %v3880 = vpop.f32.mrb[0].mxu0
  %3881 = vmatprep.mubr.f32.mxu0 0.0
  %3882 = vmatmul.mubr.f32.gmra.mrb[0].mxu0 %v3169
  %v3883 = vpop.f32.mrb[0].mxu0
  %v3884 = vadd.f32 %v3675, %v3883
  %v3885 = vpop.f32.mrb[0].mxu0
  %3886 = vmatprep.mubr.f32.mxu0 0.0
  %3887 = vmatmul.mubr.f32.gmra.mrb[0].mxu0 %v3174
  %v3888 = vpop.f32.mrb[0].mxu0
  %v3889 = vadd.f32 %v3675, %v3888
  %v3890 = vpop.f32.mrb[0].mxu0
  %3891 = vmatprep.mubr.f32.mxu0 0.0
  %3892 = vmatmul.mubr.f32.gmra.mrb[0].mxu0 %v3179
  %v3893 = vpop.f32.mrb[0].mxu0
  %v3894 = vadd.f32 %v3675, %v3893
  %v3895 = vpop.f32.mrb[0].mxu0
  %3896 = vmatprep.mubr.f32.mxu0 0.0
  %3897 = vmatmul.mubr.f32.gmra.mrb[0].mxu0 %v3184
  %v3898 = vpop.f32.mrb[0].mxu0
  %v3899 = vadd.f32 %v3675, %v3898
  %v3900 = vpop.f32.mrb[0].mxu0
  %3901 = vmatprep.mubr.f32.mxu0 0.0
  %3902 = vmatmul.mubr.f32.gmra.mrb[0].mxu0 %v3189
  %v3903 = vpop.f32.mrb[0].mxu0
  %v3904 = vadd.f32 %v3675, %v3903
  %v3905 = vpop.f32.mrb[0].mxu0
  %3906 = vmatprep.mubr.f32.mxu0 0.0
  %3907 = vmatmul.mubr.f32.gmra.mrb[0].mxu0 %v3194
  %v3908 = vpop.f32.mrb[0].mxu0
  %v3909 = vadd.f32 %v3675, %v3908
  %v3910 = vpop.f32.mrb[0].mxu0
  %3911 = vmatprep.mubr.f32.mxu0 0.0
  %3912 = vmatmul.mubr.f32.gmra.mrb[0].mxu0 %v3199
  %v3913 = vpop.f32.mrb[0].mxu0
  %v3914 = vadd.f32 %v3675, %v3913
  %v3915 = vpop.f32.mrb[0].mxu0
  %3916 = vmatprep.mubr.f32.mxu0 0.0
  %3917 = vmatmul.mubr.f32.gmra.mrb[0].mxu0 %v3204
  %v3918 = vpop.f32.mrb[0].mxu0
  %v3919 = vadd.f32 %v3675, %v3918
  %v3920 = vpop.f32.mrb[0].mxu0
  %3921 = vmatprep.mubr.f32.mxu0 0.0
  %3922 = vmatmul.mubr.f32.gmra.mrb[0].mxu0 %v3209
  %v3923 = vpop.f32.mrb[0].mxu0
  %v3924 = vadd.f32 %v3675, %v3923
  %v3925 = vpop.f32.mrb[0].mxu0
  %3926 = vmatprep.mubr.f32.mxu0 0.0
  %3927 = vmatmul.mubr.f32.gmra.mrb[0].mxu0 %v3214
  %v3928 = vpop.f32.mrb[0].mxu0
  %v3929 = vadd.f32 %v3675, %v3928
  %v3930 = vpop.f32.mrb[0].mxu0
  %3931 = vmatprep.mubr.f32.mxu0 0.0
  %3932 = vmatmul.mubr.f32.gmra.mrb[0].mxu0 %v3219
  %v3933 = vpop.f32.mrb[0].mxu0
  %v3934 = vadd.f32 %v3675, %v3933
  %v3935 = vpop.f32.mrb[0].mxu0
  %3936 = vmatprep.mubr.f32.mxu0 0.0
  %3937 = vmatmul.mubr.f32.gmra.mrb[0].mxu0 %v3224
  %v3938 = vpop.f32.mrb[0].mxu0
  %v3939 = vadd.f32 %v3675, %v3938
  %v3940 = vpop.f32.mrb[0].mxu0
  %3941 = vmatprep.mubr.f32.mxu0 0.0
  %3942 = vmatmul.mubr.f32.gmra.mrb[0].mxu0 %v3229
  %v3943 = vpop.f32.mrb[0].mxu0
  %v3944 = vadd.f32 %v3675, %v3943
  %v3945 = vpop.f32.mrb[0].mxu0
  %3946 = vmatprep.mubr.f32.mxu0 0.0
  %3947 = vmatmul.mubr.f32.gmra.mrb[0].mxu0 %v3234
  %v3948 = vpop.f32.mrb[0].mxu0
  %v3949 = vadd.f32 %v3675, %v3948
  %v3950 = vpop.f32.mrb[0].mxu0
  %3951 = vmatprep.mubr.f32.mxu0 0.0
  %3952 = vmatmul.mubr.f32.gmra.mrb[0].mxu0 %v3239
  %v3953 = vpop.f32.mrb[0].mxu0
  %v3954 = vadd.f32 %v3675, %v3953
  %v3955 = vpop.f32.mrb[0].mxu0
  %3956 = vmatprep.mubr.f32.mxu0 0.0
  %3957 = vmatmul.mubr.f32.gmra.mrb[0].mxu0 %v3244
  %v3958 = vpop.f32.mrb[0].mxu0
  %v3959 = vadd.f32 %v3675, %v3958
  %v3960 = vpop.f32.mrb[0].mxu0
  %3961 = vmatprep.mubr.f32.mxu0 0.0
  %3962 = vmatmul.mubr.f32.gmra.mrb[0].mxu0 %v3249
  %v3963 = vpop.f32.mrb[0].mxu0
  %v3964 = vadd.f32 %v3675, %v3963
  %v3965 = vpop.f32.mrb[0].mxu0
  %3966 = vmatprep.mubr.f32.mxu0 0.0
  %3967 = vmatmul.mubr.f32.gmra.mrb[0].mxu0 %v3254
  %v3968 = vpop.f32.mrb[0].mxu0
  %v3969 = vadd.f32 %v3675, %v3968
  %v3970 = vpop.f32.mrb[0].mxu0
  %3971 = vmatprep.mubr.f32.mxu0 0.0
  %3972 = vmatmul.mubr.f32.gmra.mrb[0].mxu0 %v3259
  %v3973 = vpop.f32.mrb[0].mxu0
  %v3974 = vadd.f32 %v3675, %v3973
  %v3975 = vpop.f32.mrb[0].mxu0
  %3976 = vmatprep.mubr.f32.mxu0 0.0
  %3977 = vmatmul.mubr.f32.gmra.mrb[0].mxu0 %v3264
  %v3978 = vpop.f32.mrb[0].mxu0
  %v3979 = vadd.f32 %v3675, %v3978
  %v3980 = vpop.f32.mrb[0].mxu0
  %3981 = vmatprep.mubr.f32.mxu0 0.0
  %3982 = vmatmul.mubr.f32.gmra.mrb[0].mxu0 %v3269
  %v3983 = vpop.f32.mrb[0].mxu0
  %v3984 = vadd.f32 %v3675, %v3983
  %v3985 = vpop.f32.mrb[0].mxu0
  %3986 = vmatprep.mubr.f32.mxu0 0.0
  %3987 = vmatmul.mubr.f32.gmra.mrb[0].mxu0 %v3274
  %v3988 = vpop.f32.mrb[0].mxu0
  %v3989 = vadd.f32 %v3675, %v3988
  %v3990 = vpop.f32.mrb[0].mxu0
  %3991 = vmatprep.mubr.f32.mxu0 0.0
  %3992 = vmatmul.mubr.f32.gmra.mrb[0].mxu0 %v3279
  %v3993 = vpop.f32.mrb[0].mxu0
  %v3994 = vadd.f32 %v3675, %v3993
  %v3995 = vpop.f32.mrb[0].mxu0
  %3996 = vmatprep.mubr.f32.mxu0 0.0
  %3997 = vmatmul.mubr.f32.gmra.mrb[0].mxu0 %v3284
  %v3998 = vpop.f32.mrb[0].mxu0
  %v3999 = vadd.f32 %v3675, %v3998
  %v4000 = vpop.f32.mrb[0].mxu0
  %4001 = vmatprep.mubr.f32.mxu0 0.0
  %4002 = vmatmul.mubr.f32.gmra.mrb[0].mxu0 %v3289
  %v4003 = vpop.f32.mrb[0].mxu0
  %v4004 = vadd.f32 %v3675, %v4003
  %v4005 = vpop.f32.mrb[0].mxu0
  %4006 = vmatprep.mubr.f32.mxu0 0.0
  %4007 = vmatmul.mubr.f32.gmra.mrb[0].mxu0 %v3294
  %v4008 = vpop.f32.mrb[0].mxu0
  %v4009 = vadd.f32 %v3675, %v4008
  %v4010 = vpop.f32.mrb[0].mxu0
  %4011 = vmatprep.mubr.f32.mxu0 0.0
  %4012 = vmatmul.mubr.f32.gmra.mrb[0].mxu0 %v3299
  %v4013 = vpop.f32.mrb[0].mxu0
  %v4014 = vadd.f32 %v3675, %v4013
  %v4015 = vpop.f32.mrb[0].mxu0
  %4016 = vmatprep.mubr.f32.mxu0 0.0
  %4017 = vmatmul.mubr.f32.gmra.mrb[0].mxu0 %v3304
  %v4018 = vpop.f32.mrb[0].mxu0
  %v4019 = vadd.f32 %v3675, %v4018
  %v4020 = vpop.f32.mrb[0].mxu0
  %4021 = vmatprep.mubr.f32.mxu0 0.0
  %4022 = vmatmul.mubr.f32.gmra.mrb[0].mxu0 %v3309
  %v4023 = vpop.f32.mrb[0].mxu0
  %v4024 = vadd.f32 %v3675, %v4023
  %v4025 = vpop.f32.mrb[0].mxu0
  %4026 = vmatprep.mubr.f32.mxu0 0.0
  %4027 = vmatmul.mubr.f32.gmra.mrb[0].mxu0 %v3314
  %v4028 = vpop.f32.mrb[0].mxu0
  %v4029 = vadd.f32 %v3675, %v4028
  %v4030 = vpop.f32.mrb[0].mxu0
  %4031 = vmatprep.mubr.f32.mxu0 0.0
  %4032 = vmatmul.mubr.f32.gmra.mrb[0].mxu0 %v3319
  %v4033 = vpop.f32.mrb[0].mxu0
  %v4034 = vadd.f32 %v3675, %v4033
  %v4035 = vpop.f32.mrb[0].mxu0
  %4036 = vmatprep.mubr.f32.mxu0 0.0
  %4037 = vmatmul.mubr.f32.gmra.mrb[0].mxu0 %v3324
  %v4038 = vpop.f32.mrb[0].mxu0
  %v4039 = vadd.f32 %v3675, %v4038
  %v4040 = vpop.f32.mrb[0].mxu0
  %4041 = vmatprep.mubr.f32.mxu0 0.0
  %4042 = vmatmul.mubr.f32.gmra.mrb[0].mxu0 %v3329
  %v4043 = vpop.f32.mrb[0].mxu0
  %v4044 = vadd.f32 %v3675, %v4043
  %v4045 = vpop.f32.mrb[0].mxu0
  %4046 = vmatprep.mubr.f32.mxu0 0.0
  %4047 = vmatmul.mubr.f32.gmra.mrb[0].mxu0 %v3334
  %v4048 = vpop.f32.mrb[0].mxu0
  %v4049 = vadd.f32 %v3675, %v4048
  %v4050 = vpop.f32.mrb[0].mxu0
  %4051 = vmatprep.mubr.f32.mxu0 0.0
  %4052 = vmatmul.mubr.f32.gmra.mrb[0].mxu0 %v3339
  %v4053 = vpop.f32.mrb[0].mxu0
  %v4054 = vadd.f32 %v3675, %v4053
  %v4055 = vpop.f32.mrb[0].mxu0
  %4056 = vmatprep.mubr.f32.mxu0 0.0
  %4057 = vmatmul.mubr.f32.gmra.mrb[0].mxu0 %v3344
  %v4058 = vpop.f32.mrb[0].mxu0
  %v4059 = vadd.f32 %v3675, %v4058
  %v4060 = vpop.f32.mrb[0].mxu0
  %4061 = vmatprep.mubr.f32.mxu0 0.0
  %4062 = vmatmul.mubr.f32.gmra.mrb[0].mxu0 %v3349
  %v4063 = vpop.f32.mrb[0].mxu0
  %v4064 = vadd.f32 %v3675, %v4063
  %v4065 = vpop.f32.mrb[0].mxu0
  %4066 = vmatprep.mubr.f32.mxu0 0.0
  %4067 = vmatmul.mubr.f32.gmra.mrb[0].mxu0 %v3354
  %v4068 = vpop.f32.mrb[0].mxu0
  %v4069 = vadd.f32 %v3675, %v4068
  %v4070 = vpop.f32.mrb[0].mxu0
  %4071 = vmatprep.mubr.f32.mxu0 0.0
  %4072 = vmatmul.mubr.f32.gmra.mrb[0].mxu0 %v3359
  %v4073 = vpop.f32.mrb[0].mxu0
  %v4074 = vadd.f32 %v3675, %v4073
  %v4075 = vpop.f32.mrb[0].mxu0
  %4076 = vmatprep.mubr.f32.mxu0 0.0
  %4077 = vmatmul.mubr.f32.gmra.mrb[0].mxu0 %v3364
  %v4078 = vpop.f32.mrb[0].mxu0
  %v4079 = vadd.f32 %v3675, %v4078
  %v4080 = vpop.f32.mrb[0].mxu0
  %4081 = vmatprep.mubr.f32.mxu0 0.0
  %4082 = vmatmul.mubr.f32.gmra.mrb[0].mxu0 %v3369
  %v4083 = vpop.f32.mrb[0].mxu0
  %v4084 = vadd.f32 %v3675, %v4083
  %v4085 = vpop.f32.mrb[0].mxu0
  %4086 = vmatprep.mubr.f32.mxu0 0.0
  %4087 = vmatmul.mubr.f32.gmra.mrb[0].mxu0 %v3374
  %v4088 = vpop.f32.mrb[0].mxu0
  %v4089 = vadd.f32 %v3675, %v4088
  %v4090 = vpop.f32.mrb[0].mxu0
  %4091 = vmatprep.mubr.f32.mxu0 0.0
  %4092 = vmatmul.mubr.f32.gmra.mrb[0].mxu0 %v3379
  %v4093 = vpop.f32.mrb[0].mxu0
  %v4094 = vadd.f32 %v3675, %v4093
  %v4095 = vpop.f32.mrb[0].mxu0
  %4096 = vmatprep.mubr.f32.mxu0 0.0
  %4097 = vmatmul.mubr.f32.gmra.mrb[0].mxu0 %v3384
  %v4098 = vpop.f32.mrb[0].mxu0
  %v4099 = vadd.f32 %v3675, %v4098
  %v4100 = vpop.f32.mrb[0].mxu0
  %4101 = vmatprep.mubr.f32.mxu0 0.0
  %4102 = vmatmul.mubr.f32.gmra.mrb[0].mxu0 %v3389
  %v4103 = vpop.f32.mrb[0].mxu0
  %v4104 = vadd.f32 %v3675, %v4103
  %v4105 = vpop.f32.mrb[0].mxu0
  %4106 = vmatprep.mubr.f32.mxu0 0.0
  %4107 = vmatmul.mubr.f32.gmra.mrb[0].mxu0 %v3394
  %v4108 = vpop.f32.mrb[0].mxu0
  %v4109 = vadd.f32 %v3675, %v4108
  %v4110 = vpop.f32.mrb[0].mxu0
  %4111 = vmatprep.mubr.f32.mxu0 0.0
  %4112 = vmatmul.mubr.f32.gmra.mrb[0].mxu0 %v3399
  %v4113 = vpop.f32.mrb[0].mxu0
  %v4114 = vadd.f32 %v3675, %v4113
  %v4115 = vpop.f32.mrb[0].mxu0
  %4116 = vmatprep.mubr.f32.mxu0 0.0
  %4117 = vmatmul.mubr.f32.gmra.mrb[0].mxu0 %v3404
  %v4118 = vpop.f32.mrb[0].mxu0
  %v4119 = vadd.f32 %v3675, %v4118
  %v4120 = vpop.f32.mrb[0].mxu0
  %4121 = vmatprep.mubr.f32.mxu0 0.0
  %4122 = vmatmul.mubr.f32.gmra.mrb[0].mxu0 %v3409
  %v4123 = vpop.f32.mrb[0].mxu0
  %v4124 = vadd.f32 %v3675, %v4123
  %v4125 = vpop.f32.mrb[0].mxu0
  %4126 = vmatprep.mubr.f32.mxu0 0.0
  %4127 = vmatmul.mubr.f32.gmra.mrb[0].mxu0 %v3414
  %v4128 = vpop.f32.mrb[0].mxu0
  %v4129 = vadd.f32 %v3675, %v4128
  %v4130 = vpop.f32.mrb[0].mxu0
  %4131 = vmatprep.mubr.f32.mxu0 0.0
  %4132 = vmatmul.mubr.f32.gmra.mrb[0].mxu0 %v3419
  %v4133 = vpop.f32.mrb[0].mxu0
  %v4134 = vadd.f32 %v3675, %v4133
  %v4135 = vpop.f32.mrb[0].mxu0
  %4136 = vmatprep.mubr.f32.mxu0 0.0
  %4137 = vmatmul.mubr.f32.gmra.mrb[0].mxu0 %v3424
  %v4138 = vpop.f32.mrb[0].mxu0
  %v4139 = vadd.f32 %v3675, %v4138
  %v4140 = vpop.f32.mrb[0].mxu0
  %4141 = vmatprep.mubr.f32.mxu0 0.0
  %4142 = vmatmul.mubr.f32.gmra.mrb[0].mxu0 %v3429
  %v4143 = vpop.f32.mrb[0].mxu0
  %v4144 = vadd.f32 %v3675, %v4143
  %v4145 = vpop.f32.mrb[0].mxu0
  %4146 = vmatprep.mubr.f32.mxu0 0.0
  %4147 = vmatmul.mubr.f32.gmra.mrb[0].mxu0 %v3434
  %v4148 = vpop.f32.mrb[0].mxu0
  %v4149 = vadd.f32 %v3675, %v4148
  %v4150 = vpop.f32.mrb[0].mxu0
  %4151 = vmatprep.mubr.f32.mxu0 0.0
  %4152 = vmatmul.mubr.f32.gmra.mrb[0].mxu0 %v3439
  %v4153 = vpop.f32.mrb[0].mxu0
  %v4154 = vadd.f32 %v3675, %v4153
  %v4155 = vpop.f32.mrb[0].mxu0
  %4156 = vmatprep.mubr.f32.mxu0 0.0
  %4157 = vmatmul.mubr.f32.gmra.mrb[0].mxu0 %v3444
  %v4158 = vpop.f32.mrb[0].mxu0
  %v4159 = vadd.f32 %v3675, %v4158
  %v4160 = vpop.f32.mrb[0].mxu0
  %4161 = vmatprep.mubr.f32.mxu0 0.0
  %4162 = vmatmul.mubr.f32.gmra.mrb[0].mxu0 %v3449
  %v4163 = vpop.f32.mrb[0].mxu0
  %v4164 = vadd.f32 %v3675, %v4163
  %v4165 = vpop.f32.mrb[0].mxu0
  %4166 = vmatprep.mubr.f32.mxu0 0.0
  %4167 = vmatmul.mubr.f32.gmra.mrb[0].mxu0 %v3454
  %v4168 = vpop.f32.mrb[0].mxu0
  %v4169 = vadd.f32 %v3675, %v4168
  %v4170 = vpop.f32.mrb[0].mxu0
  %4171 = vmatprep.mubr.f32.mxu0 0.0
  %4172 = vmatmul.mubr.f32.gmra.mrb[0].mxu0 %v3459
  %v4173 = vpop.f32.mrb[0].mxu0
  %v4174 = vadd.f32 %v3675, %v4173
  %v4175 = vpop.f32.mrb[0].mxu0
  %4176 = vmatprep.mubr.f32.mxu0 0.0
  %4177 = vmatmul.mubr.f32.gmra.mrb[0].mxu0 %v3464
  %v4178 = vpop.f32.mrb[0].mxu0
  %v4179 = vadd.f32 %v3675, %v4178
  %v4180 = vpop.f32.mrb[0].mxu0
  %4181 = vmatprep.mubr.f32.mxu0 0.0
  %4182 = vmatmul.mubr.f32.gmra.mrb[0].mxu0 %v3469
  %v4183 = vpop.f32.mrb[0].mxu0
  %v4184 = vadd.f32 %v3675, %v4183
  %v4185 = vpop.f32.mrb[0].mxu0
  %4186 = vmatprep.mubr.f32.mxu0 0.0
  %4187 = vmatmul.mubr.f32.gmra.mrb[0].mxu0 %v3474
  %v4188 = vpop.f32.mrb[0].mxu0
  %v4189 = vadd.f32 %v3675, %v4188
  %v4190 = vpop.f32.mrb[0].mxu0
  %4191 = vmatprep.mubr.f32.mxu0 0.0
  %4192 = vmatmul.mubr.f32.gmra.mrb[0].mxu0 %v3479
  %v4193 = vpop.f32.mrb[0].mxu0
  %v4194 = vadd.f32 %v3675, %v4193
  %v4195 = vpop.f32.mrb[0].mxu0
  %4196 = vmatprep.mubr.f32.mxu0 0.0
  %4197 = vmatmul.mubr.f32.gmra.mrb[0].mxu0 %v3484
  %v4198 = vpop.f32.mrb[0].mxu0
  %v4199 = vadd.f32 %v3675, %v4198
  %v4200 = vpop.f32.mrb[0].mxu0
  %4201 = vmatprep.mubr.f32.mxu0 0.0
  %4202 = vmatmul.mubr.f32.gmra.mrb[0].mxu0 %v3489
  %v4203 = vpop.f32.mrb[0].mxu0
  %v4204 = vadd.f32 %v3675, %v4203
  %v4205 = vpop.f32.mrb[0].mxu0
  %4206 = vmatprep.mubr.f32.mxu0 0.0
  %4207 = vmatmul.mubr.f32.gmra.mrb[0].mxu0 %v3494
  %v4208 = vpop.f32.mrb[0].mxu0
  %v4209 = vadd.f32 %v3675, %v4208
  %v4210 = vpop.f32.mrb[0].mxu0
  %4211 = vmatprep.mubr.f32.mxu0 0.0
  %4212 = vmatmul.mubr.f32.gmra.mrb[0].mxu0 %v3499
  %v4213 = vpop.f32.mrb[0].mxu0
  %v4214 = vadd.f32 %v3675, %v4213
  %v4215 = vpop.f32.mrb[0].mxu0
  %4216 = vmatprep.mubr.f32.mxu0 0.0
  %4217 = vmatmul.mubr.f32.gmra.mrb[0].mxu0 %v3504
  %v4218 = vpop.f32.mrb[0].mxu0
  %v4219 = vadd.f32 %v3675, %v4218
  %v4220 = vpop.f32.mrb[0].mxu0
  %4221 = vmatprep.mubr.f32.mxu0 0.0
  %4222 = vmatmul.mubr.f32.gmra.mrb[0].mxu0 %v3509
  %v4223 = vpop.f32.mrb[0].mxu0
  %v4224 = vadd.f32 %v3675, %v4223
  %v4225 = vpop.f32.mrb[0].mxu0
  %4226 = vmatprep.mubr.f32.mxu0 0.0
  %4227 = vmatmul.mubr.f32.gmra.mrb[0].mxu0 %v3514
  %v4228 = vpop.f32.mrb[0].mxu0
  %v4229 = vadd.f32 %v3675, %v4228
  %v4230 = vpop.f32.mrb[0].mxu0
  %4231 = vmatprep.mubr.f32.mxu0 0.0
  %4232 = vmatmul.mubr.f32.gmra.mrb[0].mxu0 %v3519
  %v4233 = vpop.f32.mrb[0].mxu0
  %v4234 = vadd.f32 %v3675, %v4233
  %v4235 = vpop.f32.mrb[0].mxu0
  %4236 = vmatprep.mubr.f32.mxu0 0.0
  %4237 = vmatmul.mubr.f32.gmra.mrb[0].mxu0 %v3524
  %v4238 = vpop.f32.mrb[0].mxu0
  %v4239 = vadd.f32 %v3675, %v4238
  %v4240 = vpop.f32.mrb[0].mxu0
  %4241 = vmatprep.mubr.f32.mxu0 0.0
  %4242 = vmatmul.mubr.f32.gmra.mrb[0].mxu0 %v3529
  %v4243 = vpop.f32.mrb[0].mxu0
  %v4244 = vadd.f32 %v3675, %v4243
  %v4245 = vpop.f32.mrb[0].mxu0
  %4246 = vmatprep.mubr.f32.mxu0 0.0
  %4247 = vmatmul.mubr.f32.gmra.mrb[0].mxu0 %v3534
  %v4248 = vpop.f32.mrb[0].mxu0
  %v4249 = vadd.f32 %v3675, %v4248
  %v4250 = vpop.f32.mrb[0].mxu0
  %4251 = vmatprep.mubr.f32.mxu0 0.0
  %4252 = vmatmul.mubr.f32.gmra.mrb[0].mxu0 %v3539
  %v4253 = vpop.f32.mrb[0].mxu0
  %v4254 = vadd.f32 %v3675, %v4253
  %v4255 = vpop.f32.mrb[0].mxu0
  %4256 = vmatprep.mubr.f32.mxu0 0.0
  %4257 = vmatmul.mubr.f32.gmra.mrb[0].mxu0 %v3544
  %v4258 = vpop.f32.mrb[0].mxu0
  %v4259 = vadd.f32 %v3675, %v4258
  %v4260 = vpop.f32.mrb[0].mxu0
  %4261 = vmatprep.mubr.f32.mxu0 0.0
  %4262 = vmatmul.mubr.f32.gmra.mrb[0].mxu0 %v3549
  %v4263 = vpop.f32.mrb[0].mxu0
  %v4264 = vadd.f32 %v3675, %v4263
  %v4265 = vpop.f32.mrb[0].mxu0
  %4266 = vmatprep.mubr.f32.mxu0 0.0
  %4267 = vmatmul.mubr.f32.gmra.mrb[0].mxu0 %v3554
  %v4268 = vpop.f32.mrb[0].mxu0
  %v4269 = vadd.f32 %v3675, %v4268
  %v4270 = vpop.f32.mrb[0].mxu0
  %4271 = vmatprep.mubr.f32.mxu0 0.0
  %4272 = vmatmul.mubr.f32.gmra.mrb[0].mxu0 %v3559
  %v4273 = vpop.f32.mrb[0].mxu0
  %v4274 = vadd.f32 %v3675, %v4273
  %v4275 = vpop.f32.mrb[0].mxu0
  %4276 = vmatprep.mubr.f32.mxu0 0.0
  %4277 = vmatmul.mubr.f32.gmra.mrb[0].mxu0 %v3564
  %v4278 = vpop.f32.mrb[0].mxu0
  %v4279 = vadd.f32 %v3675, %v4278
  %v4280 = vpop.f32.mrb[0].mxu0
  %4281 = vmatprep.mubr.f32.mxu0 0.0
  %4282 = vmatmul.mubr.f32.gmra.mrb[0].mxu0 %v3569
  %v4283 = vpop.f32.mrb[0].mxu0
  %v4284 = vadd.f32 %v3675, %v4283
  %v4285 = vpop.f32.mrb[0].mxu0
  %4286 = vmatprep.mubr.f32.mxu0 0.0
  %4287 = vmatmul.mubr.f32.gmra.mrb[0].mxu0 %v3574
  %v4288 = vpop.f32.mrb[0].mxu0
  %v4289 = vadd.f32 %v3675, %v4288
  %v4290 = vpop.f32.mrb[0].mxu0
  %4291 = vmatprep.mubr.f32.mxu0 0.0
  %4292 = vmatmul.mubr.f32.gmra.mrb[0].mxu0 %v3579
  %v4293 = vpop.f32.mrb[0].mxu0
  %v4294 = vadd.f32 %v3675, %v4293
  %v4295 = vpop.f32.mrb[0].mxu0
  %4296 = vmatprep.mubr.f32.mxu0 0.0
  %4297 = vmatmul.mubr.f32.gmra.mrb[0].mxu0 %v3584
  %v4298 = vpop.f32.mrb[0].mxu0
  %v4299 = vadd.f32 %v3675, %v4298
  %v4300 = vpop.f32.mrb[0].mxu0
  %4301 = vmatprep.mubr.f32.mxu0 0.0
  %4302 = vmatmul.mubr.f32.gmra.mrb[0].mxu0 %v3589
  %v4303 = vpop.f32.mrb[0].mxu0
  %v4304 = vadd.f32 %v3675, %v4303
  %v4305 = vpop.f32.mrb[0].mxu0
  %4306 = vmatprep.mubr.f32.mxu0 0.0
  %4307 = vmatmul.mubr.f32.gmra.mrb[0].mxu0 %v3594
  %v4308 = vpop.f32.mrb[0].mxu0
  %v4309 = vadd.f32 %v3675, %v4308
  %v4310 = vpop.f32.mrb[0].mxu0
  %4311 = vmatprep.mubr.f32.mxu0 0.0
  %4312 = vmatmul.mubr.f32.gmra.mrb[0].mxu0 %v3599
  %v4313 = vpop.f32.mrb[0].mxu0
  %v4314 = vadd.f32 %v3675, %v4313
  %v4315 = vpop.f32.mrb[0].mxu0
  %4316 = vmatprep.mubr.f32.mxu0 0.0
  %4317 = vmatmul.mubr.f32.gmra.mrb[0].mxu0 %v3604
  %v4318 = vpop.f32.mrb[0].mxu0
  %v4319 = vadd.f32 %v3675, %v4318
  %v4320 = vpop.f32.mrb[0].mxu0
  %4321 = vmatprep.mubr.f32.mxu0 0.0
  %4322 = vmatmul.mubr.f32.gmra.mrb[0].mxu0 %v3609
  %v4323 = vpop.f32.mrb[0].mxu0
  %v4324 = vadd.f32 %v3675, %v4323
  %v4325 = vpop.f32.mrb[0].mxu0
  %4326 = vmatprep.mubr.f32.mxu0 0.0
  %4327 = vmatmul.mubr.f32.gmra.mrb[0].mxu0 %v3614
  %v4328 = vpop.f32.mrb[0].mxu0
  %v4329 = vadd.f32 %v3675, %v4328
  %v4330 = vpop.f32.mrb[0].mxu0
  %4331 = vmatprep.mubr.f32.mxu0 0.0
  %4332 = vmatmul.mubr.f32.gmra.mrb[0].mxu0 %v3619
  %v4333 = vpop.f32.mrb[0].mxu0
  %v4334 = vadd.f32 %v3675, %v4333
  %v4335 = vpop.f32.mrb[0].mxu0
  %4336 = vmatprep.mubr.f32.mxu0 0.0
  %4337 = vmatmul.mubr.f32.gmra.mrb[0].mxu0 %v3624
  %v4338 = vpop.f32.mrb[0].mxu0
  %v4339 = vadd.f32 %v3675, %v4338
  %v4340 = vpop.f32.mrb[0].mxu0
  %4341 = vmatprep.mubr.f32.mxu0 0.0
  %4342 = vmatmul.mubr.f32.gmra.mrb[0].mxu0 %v3629
  %v4343 = vpop.f32.mrb[0].mxu0
  %v4344 = vadd.f32 %v3675, %v4343
  %v4345 = vpop.f32.mrb[0].mxu0
  %4346 = vmatprep.mubr.f32.mxu0 0.0
  %4347 = vmatmul.mubr.f32.gmra.mrb[0].mxu0 %v3634
  %v4348 = vpop.f32.mrb[0].mxu0
  %v4349 = vadd.f32 %v3675, %v4348
  %v4350 = vpop.f32.mrb[0].mxu0
  %4351 = vmatprep.mubr.f32.mxu0 0.0
  %4352 = vmatmul.mubr.f32.gmra.mrb[0].mxu0 %v3639
  %v4353 = vpop.f32.mrb[0].mxu0
  %v4354 = vadd.f32 %v3675, %v4353
  %v4355 = vpop.f32.mrb[0].mxu0
  %4356 = vmatprep.mubr.f32.mxu0 0.0
  %4357 = vmatmul.mubr.f32.gmra.mrb[0].mxu0 %v3644
  %v4358 = vpop.f32.mrb[0].mxu0
  %v4359 = vadd.f32 %v3675, %v4358
  %v4360 = vpop.f32.mrb[0].mxu0
  %4361 = vmatprep.mubr.f32.mxu0 0.0
  %4362 = vmatmul.mubr.f32.gmra.mrb[0].mxu0 %v3649
  %v4363 = vpop.f32.mrb[0].mxu0
  %v4364 = vadd.f32 %v3675, %v4363
  %v4365 = vpop.f32.mrb[0].mxu0
  %4366 = vdwg.mxu0
  %v4367 = vmul.f32 %v3744, 0.5
  %v4368 = vmul.f32 %v3749, 0.5
  %v4369 = vmul.f32 %v3754, 0.5
  %v4370 = vmul.f32 %v3759, 0.5
  %v4371 = vmul.f32 %v3764, 0.5
  %v4372 = vmul.f32 %v3769, 0.5
  %v4373 = vmul.f32 %v3774, 0.5
  %v4374 = vmul.f32 %v3779, 0.5
  %v4375 = vmul.f32 %v3784, 0.5
  %v4376 = vmul.f32 %v3789, 0.5
  %v4377 = vmul.f32 %v3794, 0.5
  %v4378 = vmul.f32 %v3799, 0.5
  %v4379 = vmul.f32 %v3804, 0.5
  %v4380 = vmul.f32 %v3809, 0.5
  %v4381 = vmul.f32 %v3814, 0.5
  %v4382 = vmul.f32 %v3819, 0.5
  %v4383 = vmul.f32 %v3824, 0.5
  %v4384 = vmul.f32 %v3829, 0.5
  %v4385 = vmul.f32 %v3834, 0.5
  %v4386 = vmul.f32 %v3839, 0.5
  %v4387 = vmul.f32 %v3844, 0.5
  %v4388 = vmul.f32 %v3849, 0.5
  %v4389 = vmul.f32 %v3854, 0.5
  %v4390 = vmul.f32 %v3859, 0.5
  %v4391 = vmul.f32 %v3864, 0.5
  %v4392 = vmul.f32 %v3869, 0.5
  %v4393 = vmul.f32 %v3874, 0.5
  %v4394 = vmul.f32 %v3879, 0.5
  %v4395 = vmul.f32 %v3884, 0.5
  %v4396 = vmul.f32 %v3889, 0.5
  %v4397 = vmul.f32 %v3894, 0.5
  %v4398 = vmul.f32 %v3899, 0.5
  %v4399 = vmul.f32 %v3904, 0.5
  %v4400 = vmul.f32 %v3909, 0.5
  %v4401 = vmul.f32 %v3914, 0.5
  %v4402 = vmul.f32 %v3919, 0.5
  %v4403 = vmul.f32 %v3924, 0.5
  %v4404 = vmul.f32 %v3929, 0.5
  %v4405 = vmul.f32 %v3934, 0.5
  %v4406 = vmul.f32 %v3939, 0.5
  %v4407 = vmul.f32 %v3944, 0.5
  %v4408 = vmul.f32 %v3949, 0.5
  %v4409 = vmul.f32 %v3954, 0.5
  %v4410 = vmul.f32 %v3959, 0.5
  %v4411 = vmul.f32 %v3964, 0.5
  %v4412 = vmul.f32 %v3969, 0.5
  %v4413 = vmul.f32 %v3974, 0.5
  %v4414 = vmul.f32 %v3979, 0.5
  %v4415 = vmul.f32 %v3984, 0.5
  %v4416 = vmul.f32 %v3989, 0.5
  %v4417 = vmul.f32 %v3994, 0.5
  %v4418 = vmul.f32 %v3999, 0.5
  %v4419 = vmul.f32 %v4004, 0.5
  %v4420 = vmul.f32 %v4009, 0.5
  %v4421 = vmul.f32 %v4014, 0.5
  %v4422 = vmul.f32 %v4019, 0.5
  %v4423 = vmul.f32 %v4024, 0.5
  %v4424 = vmul.f32 %v4029, 0.5
  %v4425 = vmul.f32 %v4034, 0.5
  %v4426 = vmul.f32 %v4039, 0.5
  %v4427 = vmul.f32 %v4044, 0.5
  %v4428 = vmul.f32 %v4049, 0.5
  %v4429 = vmul.f32 %v4054, 0.5
  %v4430 = vmul.f32 %v4059, 0.5
  %v4431 = vmul.f32 %v4064, 0.5
  %v4432 = vmul.f32 %v4069, 0.5
  %v4433 = vmul.f32 %v4074, 0.5
  %v4434 = vmul.f32 %v4079, 0.5
  %v4435 = vmul.f32 %v4084, 0.5
  %v4436 = vmul.f32 %v4089, 0.5
  %v4437 = vmul.f32 %v4094, 0.5
  %v4438 = vmul.f32 %v4099, 0.5
  %v4439 = vmul.f32 %v4104, 0.5
  %v4440 = vmul.f32 %v4109, 0.5
  %v4441 = vmul.f32 %v4114, 0.5
  %v4442 = vmul.f32 %v4119, 0.5
  %v4443 = vmul.f32 %v4124, 0.5
  %v4444 = vmul.f32 %v4129, 0.5
  %v4445 = vmul.f32 %v4134, 0.5
  %v4446 = vmul.f32 %v4139, 0.5
  %v4447 = vmul.f32 %v4144, 0.5
  %v4448 = vmul.f32 %v4149, 0.5
  %v4449 = vmul.f32 %v4154, 0.5
  %v4450 = vmul.f32 %v4159, 0.5
  %v4451 = vmul.f32 %v4164, 0.5
  %v4452 = vmul.f32 %v4169, 0.5
  %v4453 = vmul.f32 %v4174, 0.5
  %v4454 = vmul.f32 %v4179, 0.5
  %v4455 = vmul.f32 %v4184, 0.5
  %v4456 = vmul.f32 %v4189, 0.5
  %v4457 = vmul.f32 %v4194, 0.5
  %v4458 = vmul.f32 %v4199, 0.5
  %v4459 = vmul.f32 %v4204, 0.5
  %v4460 = vmul.f32 %v4209, 0.5
  %v4461 = vmul.f32 %v4214, 0.5
  %v4462 = vmul.f32 %v4219, 0.5
  %v4463 = vmul.f32 %v4224, 0.5
  %v4464 = vmul.f32 %v4229, 0.5
  %v4465 = vmul.f32 %v4234, 0.5
  %v4466 = vmul.f32 %v4239, 0.5
  %v4467 = vmul.f32 %v4244, 0.5
  %v4468 = vmul.f32 %v4249, 0.5
  %v4469 = vmul.f32 %v4254, 0.5
  %v4470 = vmul.f32 %v4259, 0.5
  %v4471 = vmul.f32 %v4264, 0.5
  %v4472 = vmul.f32 %v4269, 0.5
  %v4473 = vmul.f32 %v4274, 0.5
  %v4474 = vmul.f32 %v4279, 0.5
  %v4475 = vmul.f32 %v4284, 0.5
  %v4476 = vmul.f32 %v4289, 0.5
  %v4477 = vmul.f32 %v4294, 0.5
  %v4478 = vmul.f32 %v4299, 0.5
  %v4479 = vmul.f32 %v4304, 0.5
  %v4480 = vmul.f32 %v4309, 0.5
  %v4481 = vmul.f32 %v4314, 0.5
  %v4482 = vmul.f32 %v4319, 0.5
  %v4483 = vmul.f32 %v4324, 0.5
  %v4484 = vmul.f32 %v4329, 0.5
  %v4485 = vmul.f32 %v4334, 0.5
  %v4486 = vmul.f32 %v4339, 0.5
  %v4487 = vmul.f32 %v4344, 0.5
  %v4488 = vmul.f32 %v4349, 0.5
  %v4489 = vmul.f32 %v4354, 0.5
  %v4490 = vmul.f32 %v4359, 0.5
  %v4491 = vmul.f32 %v4364, 0.5
  %v4492 = vtanh.pop %v4367
  %v4493 = vtanh.pop %v4368
  %v4494 = vtanh.pop %v4369
  %v4495 = vtanh.pop %v4370
  %v4496 = vtanh.pop %v4371
  %v4497 = vtanh.pop %v4372
  %v4498 = vtanh.pop %v4373
  %v4499 = vtanh.pop %v4374
  %v4500 = vtanh.pop %v4375
  %v4501 = vtanh.pop %v4376
  %v4502 = vtanh.pop %v4377
  %v4503 = vtanh.pop %v4378
  %v4504 = vtanh.pop %v4379
  %v4505 = vtanh.pop %v4380
  %v4506 = vtanh.pop %v4381
  %v4507 = vtanh.pop %v4382
  %v4508 = vtanh.pop %v4383
  %v4509 = vtanh.pop %v4384
  %v4510 = vtanh.pop %v4385
  %v4511 = vtanh.pop %v4386
  %v4512 = vtanh.pop %v4387
  %v4513 = vtanh.pop %v4388
  %v4514 = vtanh.pop %v4389
  %v4515 = vtanh.pop %v4390
  %v4516 = vtanh.pop %v4391
  %v4517 = vtanh.pop %v4392
  %v4518 = vtanh.pop %v4393
  %v4519 = vtanh.pop %v4394
  %v4520 = vtanh.pop %v4395
  %v4521 = vtanh.pop %v4396
  %v4522 = vtanh.pop %v4397
  %v4523 = vtanh.pop %v4398
  %v4524 = vtanh.pop %v4399
  %v4525 = vtanh.pop %v4400
  %v4526 = vtanh.pop %v4401
  %v4527 = vtanh.pop %v4402
  %v4528 = vtanh.pop %v4403
  %v4529 = vtanh.pop %v4404
  %v4530 = vtanh.pop %v4405
  %v4531 = vtanh.pop %v4406
  %v4532 = vtanh.pop %v4407
  %v4533 = vtanh.pop %v4408
  %v4534 = vtanh.pop %v4409
  %v4535 = vtanh.pop %v4410
  %v4536 = vtanh.pop %v4411
  %v4537 = vtanh.pop %v4412
  %v4538 = vtanh.pop %v4413
  %v4539 = vtanh.pop %v4414
  %v4540 = vtanh.pop %v4415
  %v4541 = vtanh.pop %v4416
  %v4542 = vtanh.pop %v4417
  %v4543 = vtanh.pop %v4418
  %v4544 = vtanh.pop %v4419
  %v4545 = vtanh.pop %v4420
  %v4546 = vtanh.pop %v4421
  %v4547 = vtanh.pop %v4422
  %v4548 = vtanh.pop %v4423
  %v4549 = vtanh.pop %v4424
  %v4550 = vtanh.pop %v4425
  %v4551 = vtanh.pop %v4426
  %v4552 = vtanh.pop %v4427
  %v4553 = vtanh.pop %v4428
  %v4554 = vtanh.pop %v4429
  %v4555 = vtanh.pop %v4430
  %v4556 = vtanh.pop %v4431
  %v4557 = vtanh.pop %v4432
  %v4558 = vtanh.pop %v4433
  %v4559 = vtanh.pop %v4434
  %v4560 = vtanh.pop %v4435
  %v4561 = vtanh.pop %v4436
  %v4562 = vtanh.pop %v4437
  %v4563 = vtanh.pop %v4438
  %v4564 = vtanh.pop %v4439
  %v4565 = vtanh.pop %v4440
  %v4566 = vtanh.pop %v4441
  %v4567 = vtanh.pop %v4442
  %v4568 = vtanh.pop %v4443
  %v4569 = vtanh.pop %v4444
  %v4570 = vtanh.pop %v4445
  %v4571 = vtanh.pop %v4446
  %v4572 = vtanh.pop %v4447
  %v4573 = vtanh.pop %v4448
  %v4574 = vtanh.pop %v4449
  %v4575 = vtanh.pop %v4450
  %v4576 = vtanh.pop %v4451
  %v4577 = vtanh.pop %v4452
  %v4578 = vtanh.pop %v4453
  %v4579 = vtanh.pop %v4454
  %v4580 = vtanh.pop %v4455
  %v4581 = vtanh.pop %v4456
  %v4582 = vtanh.pop %v4457
  %v4583 = vtanh.pop %v4458
  %v4584 = vtanh.pop %v4459
  %v4585 = vtanh.pop %v4460
  %v4586 = vtanh.pop %v4461
  %v4587 = vtanh.pop %v4462
  %v4588 = vtanh.pop %v4463
  %v4589 = vtanh.pop %v4464
  %v4590 = vtanh.pop %v4465
  %v4591 = vtanh.pop %v4466
  %v4592 = vtanh.pop %v4467
  %v4593 = vtanh.pop %v4468
  %v4594 = vtanh.pop %v4469
  %v4595 = vtanh.pop %v4470
  %v4596 = vtanh.pop %v4471
  %v4597 = vtanh.pop %v4472
  %v4598 = vtanh.pop %v4473
  %v4599 = vtanh.pop %v4474
  %v4600 = vtanh.pop %v4475
  %v4601 = vtanh.pop %v4476
  %v4602 = vtanh.pop %v4477
  %v4603 = vtanh.pop %v4478
  %v4604 = vtanh.pop %v4479
  %v4605 = vtanh.pop %v4480
  %v4606 = vtanh.pop %v4481
  %v4607 = vtanh.pop %v4482
  %v4608 = vtanh.pop %v4483
  %v4609 = vtanh.pop %v4484
  %v4610 = vtanh.pop %v4485
  %v4611 = vtanh.pop %v4486
  %v4612 = vtanh.pop %v4487
  %v4613 = vtanh.pop %v4488
  %v4614 = vtanh.pop %v4489
  %v4615 = vtanh.pop %v4490
  %v4616 = vtanh.pop %v4491
  %v4617 = vmul.f32 %v4492, 0.5
  %v4618 = vmul.f32 %v4493, 0.5
  %v4619 = vmul.f32 %v4494, 0.5
  %v4620 = vmul.f32 %v4495, 0.5
  %v4621 = vmul.f32 %v4496, 0.5
  %v4622 = vmul.f32 %v4497, 0.5
  %v4623 = vmul.f32 %v4498, 0.5
  %v4624 = vmul.f32 %v4499, 0.5
  %v4625 = vmul.f32 %v4500, 0.5
  %v4626 = vmul.f32 %v4501, 0.5
  %v4627 = vmul.f32 %v4502, 0.5
  %v4628 = vmul.f32 %v4503, 0.5
  %v4629 = vmul.f32 %v4504, 0.5
  %v4630 = vmul.f32 %v4505, 0.5
  %v4631 = vmul.f32 %v4506, 0.5
  %v4632 = vmul.f32 %v4507, 0.5
  %v4633 = vmul.f32 %v4508, 0.5
  %v4634 = vmul.f32 %v4509, 0.5
  %v4635 = vmul.f32 %v4510, 0.5
  %v4636 = vmul.f32 %v4511, 0.5
  %v4637 = vmul.f32 %v4512, 0.5
  %v4638 = vmul.f32 %v4513, 0.5
  %v4639 = vmul.f32 %v4514, 0.5
  %v4640 = vmul.f32 %v4515, 0.5
  %v4641 = vmul.f32 %v4516, 0.5
  %v4642 = vmul.f32 %v4517, 0.5
  %v4643 = vmul.f32 %v4518, 0.5
  %v4644 = vmul.f32 %v4519, 0.5
  %v4645 = vmul.f32 %v4520, 0.5
  %v4646 = vmul.f32 %v4521, 0.5
  %v4647 = vmul.f32 %v4522, 0.5
  %v4648 = vmul.f32 %v4523, 0.5
  %v4649 = vmul.f32 %v4524, 0.5
  %v4650 = vmul.f32 %v4525, 0.5
  %v4651 = vmul.f32 %v4526, 0.5
  %v4652 = vmul.f32 %v4527, 0.5
  %v4653 = vmul.f32 %v4528, 0.5
  %v4654 = vmul.f32 %v4529, 0.5
  %v4655 = vmul.f32 %v4530, 0.5
  %v4656 = vmul.f32 %v4531, 0.5
  %v4657 = vmul.f32 %v4532, 0.5
  %v4658 = vmul.f32 %v4533, 0.5
  %v4659 = vmul.f32 %v4534, 0.5
  %v4660 = vmul.f32 %v4535, 0.5
  %v4661 = vmul.f32 %v4536, 0.5
  %v4662 = vmul.f32 %v4537, 0.5
  %v4663 = vmul.f32 %v4538, 0.5
  %v4664 = vmul.f32 %v4539, 0.5
  %v4665 = vmul.f32 %v4540, 0.5
  %v4666 = vmul.f32 %v4541, 0.5
  %v4667 = vmul.f32 %v4542, 0.5
  %v4668 = vmul.f32 %v4543, 0.5
  %v4669 = vmul.f32 %v4544, 0.5
  %v4670 = vmul.f32 %v4545, 0.5
  %v4671 = vmul.f32 %v4546, 0.5
  %v4672 = vmul.f32 %v4547, 0.5
  %v4673 = vmul.f32 %v4548, 0.5
  %v4674 = vmul.f32 %v4549, 0.5
  %v4675 = vmul.f32 %v4550, 0.5
  %v4676 = vmul.f32 %v4551, 0.5
  %v4677 = vmul.f32 %v4552, 0.5
  %v4678 = vmul.f32 %v4553, 0.5
  %v4679 = vmul.f32 %v4554, 0.5
  %v4680 = vmul.f32 %v4555, 0.5
  %v4681 = vmul.f32 %v4556, 0.5
  %v4682 = vmul.f32 %v4557, 0.5
  %v4683 = vmul.f32 %v4558, 0.5
  %v4684 = vmul.f32 %v4559, 0.5
  %v4685 = vmul.f32 %v4560, 0.5
  %v4686 = vmul.f32 %v4561, 0.5
  %v4687 = vmul.f32 %v4562, 0.5
  %v4688 = vmul.f32 %v4563, 0.5
  %v4689 = vmul.f32 %v4564, 0.5
  %v4690 = vmul.f32 %v4565, 0.5
  %v4691 = vmul.f32 %v4566, 0.5
  %v4692 = vmul.f32 %v4567, 0.5
  %v4693 = vmul.f32 %v4568, 0.5
  %v4694 = vmul.f32 %v4569, 0.5
  %v4695 = vmul.f32 %v4570, 0.5
  %v4696 = vmul.f32 %v4571, 0.5
  %v4697 = vmul.f32 %v4572, 0.5
  %v4698 = vmul.f32 %v4573, 0.5
  %v4699 = vmul.f32 %v4574, 0.5
  %v4700 = vmul.f32 %v4575, 0.5
  %v4701 = vmul.f32 %v4576, 0.5
  %v4702 = vmul.f32 %v4577, 0.5
  %v4703 = vmul.f32 %v4578, 0.5
  %v4704 = vmul.f32 %v4579, 0.5
  %v4705 = vmul.f32 %v4580, 0.5
  %v4706 = vmul.f32 %v4581, 0.5
  %v4707 = vmul.f32 %v4582, 0.5
  %v4708 = vmul.f32 %v4583, 0.5
  %v4709 = vmul.f32 %v4584, 0.5
  %v4710 = vmul.f32 %v4585, 0.5
  %v4711 = vmul.f32 %v4586, 0.5
  %v4712 = vmul.f32 %v4587, 0.5
  %v4713 = vmul.f32 %v4588, 0.5
  %v4714 = vmul.f32 %v4589, 0.5
  %v4715 = vmul.f32 %v4590, 0.5
  %v4716 = vmul.f32 %v4591, 0.5
  %v4717 = vmul.f32 %v4592, 0.5
  %v4718 = vmul.f32 %v4593, 0.5
  %v4719 = vmul.f32 %v4594, 0.5
  %v4720 = vmul.f32 %v4595, 0.5
  %v4721 = vmul.f32 %v4596, 0.5
  %v4722 = vmul.f32 %v4597, 0.5
  %v4723 = vmul.f32 %v4598, 0.5
  %v4724 = vmul.f32 %v4599, 0.5
  %v4725 = vmul.f32 %v4600, 0.5
  %v4726 = vmul.f32 %v4601, 0.5
  %v4727 = vmul.f32 %v4602, 0.5
  %v4728 = vmul.f32 %v4603, 0.5
  %v4729 = vmul.f32 %v4604, 0.5
  %v4730 = vmul.f32 %v4605, 0.5
  %v4731 = vmul.f32 %v4606, 0.5
  %v4732 = vmul.f32 %v4607, 0.5
  %v4733 = vmul.f32 %v4608, 0.5
  %v4734 = vmul.f32 %v4609, 0.5
  %v4735 = vmul.f32 %v4610, 0.5
  %v4736 = vmul.f32 %v4611, 0.5
  %v4737 = vmul.f32 %v4612, 0.5
  %v4738 = vmul.f32 %v4613, 0.5
  %v4739 = vmul.f32 %v4614, 0.5
  %v4740 = vmul.f32 %v4615, 0.5
  %v4741 = vmul.f32 %v4616, 0.5
  %v4742 = vadd.f32 %v4617, 0.5
  %v4743 = vadd.f32 %v4618, 0.5
  %v4744 = vadd.f32 %v4619, 0.5
  %v4745 = vadd.f32 %v4620, 0.5
  %v4746 = vadd.f32 %v4621, 0.5
  %v4747 = vadd.f32 %v4622, 0.5
  %v4748 = vadd.f32 %v4623, 0.5
  %v4749 = vadd.f32 %v4624, 0.5
  %v4750 = vadd.f32 %v4625, 0.5
  %v4751 = vadd.f32 %v4626, 0.5
  %v4752 = vadd.f32 %v4627, 0.5
  %v4753 = vadd.f32 %v4628, 0.5
  %v4754 = vadd.f32 %v4629, 0.5
  %v4755 = vadd.f32 %v4630, 0.5
  %v4756 = vadd.f32 %v4631, 0.5
  %v4757 = vadd.f32 %v4632, 0.5
  %v4758 = vadd.f32 %v4633, 0.5
  %v4759 = vadd.f32 %v4634, 0.5
  %v4760 = vadd.f32 %v4635, 0.5
  %v4761 = vadd.f32 %v4636, 0.5
  %v4762 = vadd.f32 %v4637, 0.5
  %v4763 = vadd.f32 %v4638, 0.5
  %v4764 = vadd.f32 %v4639, 0.5
  %v4765 = vadd.f32 %v4640, 0.5
  %v4766 = vadd.f32 %v4641, 0.5
  %v4767 = vadd.f32 %v4642, 0.5
  %v4768 = vadd.f32 %v4643, 0.5
  %v4769 = vadd.f32 %v4644, 0.5
  %v4770 = vadd.f32 %v4645, 0.5
  %v4771 = vadd.f32 %v4646, 0.5
  %v4772 = vadd.f32 %v4647, 0.5
  %v4773 = vadd.f32 %v4648, 0.5
  %v4774 = vadd.f32 %v4649, 0.5
  %v4775 = vadd.f32 %v4650, 0.5
  %v4776 = vadd.f32 %v4651, 0.5
  %v4777 = vadd.f32 %v4652, 0.5
  %v4778 = vadd.f32 %v4653, 0.5
  %v4779 = vadd.f32 %v4654, 0.5
  %v4780 = vadd.f32 %v4655, 0.5
  %v4781 = vadd.f32 %v4656, 0.5
  %v4782 = vadd.f32 %v4657, 0.5
  %v4783 = vadd.f32 %v4658, 0.5
  %v4784 = vadd.f32 %v4659, 0.5
  %v4785 = vadd.f32 %v4660, 0.5
  %v4786 = vadd.f32 %v4661, 0.5
  %v4787 = vadd.f32 %v4662, 0.5
  %v4788 = vadd.f32 %v4663, 0.5
  %v4789 = vadd.f32 %v4664, 0.5
  %v4790 = vadd.f32 %v4665, 0.5
  %v4791 = vadd.f32 %v4666, 0.5
  %v4792 = vadd.f32 %v4667, 0.5
  %v4793 = vadd.f32 %v4668, 0.5
  %v4794 = vadd.f32 %v4669, 0.5
  %v4795 = vadd.f32 %v4670, 0.5
  %v4796 = vadd.f32 %v4671, 0.5
  %v4797 = vadd.f32 %v4672, 0.5
  %v4798 = vadd.f32 %v4673, 0.5
  %v4799 = vadd.f32 %v4674, 0.5
  %v4800 = vadd.f32 %v4675, 0.5
  %v4801 = vadd.f32 %v4676, 0.5
  %v4802 = vadd.f32 %v4677, 0.5
  %v4803 = vadd.f32 %v4678, 0.5
  %v4804 = vadd.f32 %v4679, 0.5
  %v4805 = vadd.f32 %v4680, 0.5
  %v4806 = vadd.f32 %v4681, 0.5
  %v4807 = vadd.f32 %v4682, 0.5
  %v4808 = vadd.f32 %v4683, 0.5
  %v4809 = vadd.f32 %v4684, 0.5
  %v4810 = vadd.f32 %v4685, 0.5
  %v4811 = vadd.f32 %v4686, 0.5
  %v4812 = vadd.f32 %v4687, 0.5
  %v4813 = vadd.f32 %v4688, 0.5
  %v4814 = vadd.f32 %v4689, 0.5
  %v4815 = vadd.f32 %v4690, 0.5
  %v4816 = vadd.f32 %v4691, 0.5
  %v4817 = vadd.f32 %v4692, 0.5
  %v4818 = vadd.f32 %v4693, 0.5
  %v4819 = vadd.f32 %v4694, 0.5
  %v4820 = vadd.f32 %v4695, 0.5
  %v4821 = vadd.f32 %v4696, 0.5
  %v4822 = vadd.f32 %v4697, 0.5
  %v4823 = vadd.f32 %v4698, 0.5
  %v4824 = vadd.f32 %v4699, 0.5
  %v4825 = vadd.f32 %v4700, 0.5
  %v4826 = vadd.f32 %v4701, 0.5
  %v4827 = vadd.f32 %v4702, 0.5
  %v4828 = vadd.f32 %v4703, 0.5
  %v4829 = vadd.f32 %v4704, 0.5
  %v4830 = vadd.f32 %v4705, 0.5
  %v4831 = vadd.f32 %v4706, 0.5
  %v4832 = vadd.f32 %v4707, 0.5
  %v4833 = vadd.f32 %v4708, 0.5
  %v4834 = vadd.f32 %v4709, 0.5
  %v4835 = vadd.f32 %v4710, 0.5
  %v4836 = vadd.f32 %v4711, 0.5
  %v4837 = vadd.f32 %v4712, 0.5
  %v4838 = vadd.f32 %v4713, 0.5
  %v4839 = vadd.f32 %v4714, 0.5
  %v4840 = vadd.f32 %v4715, 0.5
  %v4841 = vadd.f32 %v4716, 0.5
  %v4842 = vadd.f32 %v4717, 0.5
  %v4843 = vadd.f32 %v4718, 0.5
  %v4844 = vadd.f32 %v4719, 0.5
  %v4845 = vadd.f32 %v4720, 0.5
  %v4846 = vadd.f32 %v4721, 0.5
  %v4847 = vadd.f32 %v4722, 0.5
  %v4848 = vadd.f32 %v4723, 0.5
  %v4849 = vadd.f32 %v4724, 0.5
  %v4850 = vadd.f32 %v4725, 0.5
  %v4851 = vadd.f32 %v4726, 0.5
  %v4852 = vadd.f32 %v4727, 0.5
  %v4853 = vadd.f32 %v4728, 0.5
  %v4854 = vadd.f32 %v4729, 0.5
  %v4855 = vadd.f32 %v4730, 0.5
  %v4856 = vadd.f32 %v4731, 0.5
  %v4857 = vadd.f32 %v4732, 0.5
  %v4858 = vadd.f32 %v4733, 0.5
  %v4859 = vadd.f32 %v4734, 0.5
  %v4860 = vadd.f32 %v4735, 0.5
  %v4861 = vadd.f32 %v4736, 0.5
  %v4862 = vadd.f32 %v4737, 0.5
  %v4863 = vadd.f32 %v4738, 0.5
  %v4864 = vadd.f32 %v4739, 0.5
  %v4865 = vadd.f32 %v4740, 0.5
  %v4866 = vadd.f32 %v4741, 0.5
  %s4867 = scalar_lea.vmem %s2, 384
  %v4868 = vld [vmem:[%s4867] sm:$0xff]
  %v4869 = vld [vmem:[%s4867 + $0x8] sm:$0xff]
  %v4870 = vld [vmem:[%s4867 + $0x10] sm:$0xff]
  %v4871 = vld [vmem:[%s4867 + $0x18] sm:$0xff]
  %v4872 = vld [vmem:[%s4867 + $0x20] sm:$0xff]
  %v4873 = vld [vmem:[%s4867 + $0x28] sm:$0xff]
  %v4874 = vld [vmem:[%s4867 + $0x30] sm:$0xff]
  %v4875 = vld [vmem:[%s4867 + $0x38] sm:$0xff]
  %v4876 = vld [vmem:[%s4867 + $0x40] sm:$0xff]
  %v4877 = vld [vmem:[%s4867 + $0x48] sm:$0xff]
  %v4878 = vld [vmem:[%s4867 + $0x50] sm:$0xff]
  %v4879 = vld [vmem:[%s4867 + $0x58] sm:$0xff]
  %v4880 = vld [vmem:[%s4867 + $0x60] sm:$0xff]
  %v4881 = vld [vmem:[%s4867 + $0x68] sm:$0xff]
  %v4882 = vld [vmem:[%s4867 + $0x70] sm:$0xff]
  %v4883 = vld [vmem:[%s4867 + $0x78] sm:$0xff]
  %s4884 = scalar_lea.vmem %s4, 4
  %v4885 = vld [vmem:[%s4884] sm:$0x1]
  %v4887 = vlaneseq
  %v4888 = vshrl.u32 %v4887, 7
  %v4889 = vsub.s32 0, %v4888
  %v4890 = vrot.slane %v4885, %v4889
  %4892 = vmatprep.subr.mxu0 0.0
  %4893 = vmatpush1.msra.mxu0 %v4868
  %4894 = vmatprep.subr.mxu0 0.0
  %4895 = vmatpush1.msra.mxu0 %v4869
  %4896 = vmatprep.subr.mxu0 0.0
  %4897 = vmatpush1.msra.mxu0 %v4870
  %4898 = vmatprep.subr.mxu0 0.0
  %4899 = vmatpush1.msra.mxu0 %v4871
  %4900 = vmatprep.subr.mxu0 0.0
  %4901 = vmatpush1.msra.mxu0 %v4872
  %4902 = vmatprep.subr.mxu0 0.0
  %4903 = vmatpush1.msra.mxu0 %v4873
  %4904 = vmatprep.subr.mxu0 0.0
  %4905 = vmatpush1.msra.mxu0 %v4874
  %4906 = vmatprep.subr.mxu0 0.0
  %4907 = vmatpush1.msra.mxu0 %v4875
  %4908 = vmatprep.subr.mxu0 0.0
  %4909 = vmatpush1.msra.mxu0 %v4876
  %4910 = vmatprep.subr.mxu0 0.0
  %4911 = vmatpush1.msra.mxu0 %v4877
  %4912 = vmatprep.subr.mxu0 0.0
  %4913 = vmatpush1.msra.mxu0 %v4878
  %4914 = vmatprep.subr.mxu0 0.0
  %4915 = vmatpush1.msra.mxu0 %v4879
  %4916 = vmatprep.subr.mxu0 0.0
  %4917 = vmatpush1.msra.mxu0 %v4880
  %4918 = vmatprep.subr.mxu0 0.0
  %4919 = vmatpush1.msra.mxu0 %v4881
  %4920 = vmatprep.subr.mxu0 0.0
  %4921 = vmatpush1.msra.mxu0 %v4882
  %4922 = vmatprep.subr.mxu0 0.0
  %4923 = vmatpush1.msra.mxu0 %v4883
  %4924 = vmatprep.subr.mxu0 0.0
  %4925 = vmatpush1.msra.mxu0 0.0
  %4926 = vmatprep.subr.mxu0 0.0
  %4927 = vmatpush1.msra.mxu0 0.0
  %4928 = vmatprep.subr.mxu0 0.0
  %4929 = vmatpush1.msra.mxu0 0.0
  %4930 = vmatprep.subr.mxu0 0.0
  %4931 = vmatpush1.msra.mxu0 0.0
  %4932 = vmatprep.subr.mxu0 0.0
  %4933 = vmatpush1.msra.mxu0 0.0
  %4934 = vmatprep.subr.mxu0 0.0
  %4935 = vmatpush1.msra.mxu0 0.0
  %4936 = vmatprep.subr.mxu0 0.0
  %4937 = vmatpush1.msra.mxu0 0.0
  %4938 = vmatprep.subr.mxu0 0.0
  %4939 = vmatpush1.msra.mxu0 0.0
  %4940 = vmatprep.subr.mxu0 0.0
  %4941 = vmatpush1.msra.mxu0 0.0
  %4942 = vmatprep.subr.mxu0 0.0
  %4943 = vmatpush1.msra.mxu0 0.0
  %4944 = vmatprep.subr.mxu0 0.0
  %4945 = vmatpush1.msra.mxu0 0.0
  %4946 = vmatprep.subr.mxu0 0.0
  %4947 = vmatpush1.msra.mxu0 0.0
  %4948 = vmatprep.subr.mxu0 0.0
  %4949 = vmatpush1.msra.mxu0 0.0
  %4950 = vmatprep.subr.mxu0 0.0
  %4951 = vmatpush1.msra.mxu0 0.0
  %4952 = vmatprep.subr.mxu0 0.0
  %4953 = vmatpush1.msra.mxu0 0.0
  %4954 = vmatprep.subr.mxu0 0.0
  %4955 = vmatpush1.msra.mxu0 0.0
  %4956 = vmatprep.mubr.f32.mxu0 0.0
  %4957 = vmatmul.mubr.f32.gmra.mrb[0].mxu0 %v4742
  %v4958 = vpop.f32.mrb[0].mxu0
  %v4959 = vadd.f32 %v4890, %v4958
  %v4960 = vpop.f32.mrb[0].mxu0
  %4961 = vmatprep.mubr.f32.mxu0 0.0
  %4962 = vmatmul.mubr.f32.gmra.mrb[0].mxu0 %v4743
  %v4963 = vpop.f32.mrb[0].mxu0
  %v4964 = vadd.f32 %v4890, %v4963
  %v4965 = vpop.f32.mrb[0].mxu0
  %4966 = vmatprep.mubr.f32.mxu0 0.0
  %4967 = vmatmul.mubr.f32.gmra.mrb[0].mxu0 %v4744
  %v4968 = vpop.f32.mrb[0].mxu0
  %v4969 = vadd.f32 %v4890, %v4968
  %v4970 = vpop.f32.mrb[0].mxu0
  %4971 = vmatprep.mubr.f32.mxu0 0.0
  %4972 = vmatmul.mubr.f32.gmra.mrb[0].mxu0 %v4745
  %v4973 = vpop.f32.mrb[0].mxu0
  %v4974 = vadd.f32 %v4890, %v4973
  %v4975 = vpop.f32.mrb[0].mxu0
  %4976 = vmatprep.mubr.f32.mxu0 0.0
  %4977 = vmatmul.mubr.f32.gmra.mrb[0].mxu0 %v4746
  %v4978 = vpop.f32.mrb[0].mxu0
  %v4979 = vadd.f32 %v4890, %v4978
  %v4980 = vpop.f32.mrb[0].mxu0
  %4981 = vmatprep.mubr.f32.mxu0 0.0
  %4982 = vmatmul.mubr.f32.gmra.mrb[0].mxu0 %v4747
  %v4983 = vpop.f32.mrb[0].mxu0
  %v4984 = vadd.f32 %v4890, %v4983
  %v4985 = vpop.f32.mrb[0].mxu0
  %4986 = vmatprep.mubr.f32.mxu0 0.0
  %4987 = vmatmul.mubr.f32.gmra.mrb[0].mxu0 %v4748
  %v4988 = vpop.f32.mrb[0].mxu0
  %v4989 = vadd.f32 %v4890, %v4988
  %v4990 = vpop.f32.mrb[0].mxu0
  %4991 = vmatprep.mubr.f32.mxu0 0.0
  %4992 = vmatmul.mubr.f32.gmra.mrb[0].mxu0 %v4749
  %v4993 = vpop.f32.mrb[0].mxu0
  %v4994 = vadd.f32 %v4890, %v4993
  %v4995 = vpop.f32.mrb[0].mxu0
  %4996 = vmatprep.mubr.f32.mxu0 0.0
  %4997 = vmatmul.mubr.f32.gmra.mrb[0].mxu0 %v4750
  %v4998 = vpop.f32.mrb[0].mxu0
  %v4999 = vadd.f32 %v4890, %v4998
  %v5000 = vpop.f32.mrb[0].mxu0
  %5001 = vmatprep.mubr.f32.mxu0 0.0
  %5002 = vmatmul.mubr.f32.gmra.mrb[0].mxu0 %v4751
  %v5003 = vpop.f32.mrb[0].mxu0
  %v5004 = vadd.f32 %v4890, %v5003
  %v5005 = vpop.f32.mrb[0].mxu0
  %5006 = vmatprep.mubr.f32.mxu0 0.0
  %5007 = vmatmul.mubr.f32.gmra.mrb[0].mxu0 %v4752
  %v5008 = vpop.f32.mrb[0].mxu0
  %v5009 = vadd.f32 %v4890, %v5008
  %v5010 = vpop.f32.mrb[0].mxu0
  %5011 = vmatprep.mubr.f32.mxu0 0.0
  %5012 = vmatmul.mubr.f32.gmra.mrb[0].mxu0 %v4753
  %v5013 = vpop.f32.mrb[0].mxu0
  %v5014 = vadd.f32 %v4890, %v5013
  %v5015 = vpop.f32.mrb[0].mxu0
  %5016 = vmatprep.mubr.f32.mxu0 0.0
  %5017 = vmatmul.mubr.f32.gmra.mrb[0].mxu0 %v4754
  %v5018 = vpop.f32.mrb[0].mxu0
  %v5019 = vadd.f32 %v4890, %v5018
  %v5020 = vpop.f32.mrb[0].mxu0
  %5021 = vmatprep.mubr.f32.mxu0 0.0
  %5022 = vmatmul.mubr.f32.gmra.mrb[0].mxu0 %v4755
  %v5023 = vpop.f32.mrb[0].mxu0
  %v5024 = vadd.f32 %v4890, %v5023
  %v5025 = vpop.f32.mrb[0].mxu0
  %5026 = vmatprep.mubr.f32.mxu0 0.0
  %5027 = vmatmul.mubr.f32.gmra.mrb[0].mxu0 %v4756
  %v5028 = vpop.f32.mrb[0].mxu0
  %v5029 = vadd.f32 %v4890, %v5028
  %v5030 = vpop.f32.mrb[0].mxu0
  %5031 = vmatprep.mubr.f32.mxu0 0.0
  %5032 = vmatmul.mubr.f32.gmra.mrb[0].mxu0 %v4757
  %v5033 = vpop.f32.mrb[0].mxu0
  %v5034 = vadd.f32 %v4890, %v5033
  %v5035 = vpop.f32.mrb[0].mxu0
  %5036 = vmatprep.mubr.f32.mxu0 0.0
  %5037 = vmatmul.mubr.f32.gmra.mrb[0].mxu0 %v4758
  %v5038 = vpop.f32.mrb[0].mxu0
  %v5039 = vadd.f32 %v4890, %v5038
  %v5040 = vpop.f32.mrb[0].mxu0
  %5041 = vmatprep.mubr.f32.mxu0 0.0
  %5042 = vmatmul.mubr.f32.gmra.mrb[0].mxu0 %v4759
  %v5043 = vpop.f32.mrb[0].mxu0
  %v5044 = vadd.f32 %v4890, %v5043
  %v5045 = vpop.f32.mrb[0].mxu0
  %5046 = vmatprep.mubr.f32.mxu0 0.0
  %5047 = vmatmul.mubr.f32.gmra.mrb[0].mxu0 %v4760
  %v5048 = vpop.f32.mrb[0].mxu0
  %v5049 = vadd.f32 %v4890, %v5048
  %v5050 = vpop.f32.mrb[0].mxu0
  %5051 = vmatprep.mubr.f32.mxu0 0.0
  %5052 = vmatmul.mubr.f32.gmra.mrb[0].mxu0 %v4761
  %v5053 = vpop.f32.mrb[0].mxu0
  %v5054 = vadd.f32 %v4890, %v5053
  %v5055 = vpop.f32.mrb[0].mxu0
  %5056 = vmatprep.mubr.f32.mxu0 0.0
  %5057 = vmatmul.mubr.f32.gmra.mrb[0].mxu0 %v4762
  %v5058 = vpop.f32.mrb[0].mxu0
  %v5059 = vadd.f32 %v4890, %v5058
  %v5060 = vpop.f32.mrb[0].mxu0
  %5061 = vmatprep.mubr.f32.mxu0 0.0
  %5062 = vmatmul.mubr.f32.gmra.mrb[0].mxu0 %v4763
  %v5063 = vpop.f32.mrb[0].mxu0
  %v5064 = vadd.f32 %v4890, %v5063
  %v5065 = vpop.f32.mrb[0].mxu0
  %5066 = vmatprep.mubr.f32.mxu0 0.0
  %5067 = vmatmul.mubr.f32.gmra.mrb[0].mxu0 %v4764
  %v5068 = vpop.f32.mrb[0].mxu0
  %v5069 = vadd.f32 %v4890, %v5068
  %v5070 = vpop.f32.mrb[0].mxu0
  %5071 = vmatprep.mubr.f32.mxu0 0.0
  %5072 = vmatmul.mubr.f32.gmra.mrb[0].mxu0 %v4765
  %v5073 = vpop.f32.mrb[0].mxu0
  %v5074 = vadd.f32 %v4890, %v5073
  %v5075 = vpop.f32.mrb[0].mxu0
  %5076 = vmatprep.mubr.f32.mxu0 0.0
  %5077 = vmatmul.mubr.f32.gmra.mrb[0].mxu0 %v4766
  %v5078 = vpop.f32.mrb[0].mxu0
  %v5079 = vadd.f32 %v4890, %v5078
  %v5080 = vpop.f32.mrb[0].mxu0
  %5081 = vmatprep.mubr.f32.mxu0 0.0
  %5082 = vmatmul.mubr.f32.gmra.mrb[0].mxu0 %v4767
  %v5083 = vpop.f32.mrb[0].mxu0
  %v5084 = vadd.f32 %v4890, %v5083
  %v5085 = vpop.f32.mrb[0].mxu0
  %5086 = vmatprep.mubr.f32.mxu0 0.0
  %5087 = vmatmul.mubr.f32.gmra.mrb[0].mxu0 %v4768
  %v5088 = vpop.f32.mrb[0].mxu0
  %v5089 = vadd.f32 %v4890, %v5088
  %v5090 = vpop.f32.mrb[0].mxu0
  %5091 = vmatprep.mubr.f32.mxu0 0.0
  %5092 = vmatmul.mubr.f32.gmra.mrb[0].mxu0 %v4769
  %v5093 = vpop.f32.mrb[0].mxu0
  %v5094 = vadd.f32 %v4890, %v5093
  %v5095 = vpop.f32.mrb[0].mxu0
  %5096 = vmatprep.mubr.f32.mxu0 0.0
  %5097 = vmatmul.mubr.f32.gmra.mrb[0].mxu0 %v4770
  %v5098 = vpop.f32.mrb[0].mxu0
  %v5099 = vadd.f32 %v4890, %v5098
  %v5100 = vpop.f32.mrb[0].mxu0
  %5101 = vmatprep.mubr.f32.mxu0 0.0
  %5102 = vmatmul.mubr.f32.gmra.mrb[0].mxu0 %v4771
  %v5103 = vpop.f32.mrb[0].mxu0
  %v5104 = vadd.f32 %v4890, %v5103
  %v5105 = vpop.f32.mrb[0].mxu0
  %5106 = vmatprep.mubr.f32.mxu0 0.0
  %5107 = vmatmul.mubr.f32.gmra.mrb[0].mxu0 %v4772
  %v5108 = vpop.f32.mrb[0].mxu0
  %v5109 = vadd.f32 %v4890, %v5108
  %v5110 = vpop.f32.mrb[0].mxu0
  %5111 = vmatprep.mubr.f32.mxu0 0.0
  %5112 = vmatmul.mubr.f32.gmra.mrb[0].mxu0 %v4773
  %v5113 = vpop.f32.mrb[0].mxu0
  %v5114 = vadd.f32 %v4890, %v5113
  %v5115 = vpop.f32.mrb[0].mxu0
  %5116 = vmatprep.mubr.f32.mxu0 0.0
  %5117 = vmatmul.mubr.f32.gmra.mrb[0].mxu0 %v4774
  %v5118 = vpop.f32.mrb[0].mxu0
  %v5119 = vadd.f32 %v4890, %v5118
  %v5120 = vpop.f32.mrb[0].mxu0
  %5121 = vmatprep.mubr.f32.mxu0 0.0
  %5122 = vmatmul.mubr.f32.gmra.mrb[0].mxu0 %v4775
  %v5123 = vpop.f32.mrb[0].mxu0
  %v5124 = vadd.f32 %v4890, %v5123
  %v5125 = vpop.f32.mrb[0].mxu0
  %5126 = vmatprep.mubr.f32.mxu0 0.0
  %5127 = vmatmul.mubr.f32.gmra.mrb[0].mxu0 %v4776
  %v5128 = vpop.f32.mrb[0].mxu0
  %v5129 = vadd.f32 %v4890, %v5128
  %v5130 = vpop.f32.mrb[0].mxu0
  %5131 = vmatprep.mubr.f32.mxu0 0.0
  %5132 = vmatmul.mubr.f32.gmra.mrb[0].mxu0 %v4777
  %v5133 = vpop.f32.mrb[0].mxu0
  %v5134 = vadd.f32 %v4890, %v5133
  %v5135 = vpop.f32.mrb[0].mxu0
  %5136 = vmatprep.mubr.f32.mxu0 0.0
  %5137 = vmatmul.mubr.f32.gmra.mrb[0].mxu0 %v4778
  %v5138 = vpop.f32.mrb[0].mxu0
  %v5139 = vadd.f32 %v4890, %v5138
  %v5140 = vpop.f32.mrb[0].mxu0
  %5141 = vmatprep.mubr.f32.mxu0 0.0
  %5142 = vmatmul.mubr.f32.gmra.mrb[0].mxu0 %v4779
  %v5143 = vpop.f32.mrb[0].mxu0
  %v5144 = vadd.f32 %v4890, %v5143
  %v5145 = vpop.f32.mrb[0].mxu0
  %5146 = vmatprep.mubr.f32.mxu0 0.0
  %5147 = vmatmul.mubr.f32.gmra.mrb[0].mxu0 %v4780
  %v5148 = vpop.f32.mrb[0].mxu0
  %v5149 = vadd.f32 %v4890, %v5148
  %v5150 = vpop.f32.mrb[0].mxu0
  %5151 = vmatprep.mubr.f32.mxu0 0.0
  %5152 = vmatmul.mubr.f32.gmra.mrb[0].mxu0 %v4781
  %v5153 = vpop.f32.mrb[0].mxu0
  %v5154 = vadd.f32 %v4890, %v5153
  %v5155 = vpop.f32.mrb[0].mxu0
  %5156 = vmatprep.mubr.f32.mxu0 0.0
  %5157 = vmatmul.mubr.f32.gmra.mrb[0].mxu0 %v4782
  %v5158 = vpop.f32.mrb[0].mxu0
  %v5159 = vadd.f32 %v4890, %v5158
  %v5160 = vpop.f32.mrb[0].mxu0
  %5161 = vmatprep.mubr.f32.mxu0 0.0
  %5162 = vmatmul.mubr.f32.gmra.mrb[0].mxu0 %v4783
  %v5163 = vpop.f32.mrb[0].mxu0
  %v5164 = vadd.f32 %v4890, %v5163
  %v5165 = vpop.f32.mrb[0].mxu0
  %5166 = vmatprep.mubr.f32.mxu0 0.0
  %5167 = vmatmul.mubr.f32.gmra.mrb[0].mxu0 %v4784
  %v5168 = vpop.f32.mrb[0].mxu0
  %v5169 = vadd.f32 %v4890, %v5168
  %v5170 = vpop.f32.mrb[0].mxu0
  %5171 = vmatprep.mubr.f32.mxu0 0.0
  %5172 = vmatmul.mubr.f32.gmra.mrb[0].mxu0 %v4785
  %v5173 = vpop.f32.mrb[0].mxu0
  %v5174 = vadd.f32 %v4890, %v5173
  %v5175 = vpop.f32.mrb[0].mxu0
  %5176 = vmatprep.mubr.f32.mxu0 0.0
  %5177 = vmatmul.mubr.f32.gmra.mrb[0].mxu0 %v4786
  %v5178 = vpop.f32.mrb[0].mxu0
  %v5179 = vadd.f32 %v4890, %v5178
  %v5180 = vpop.f32.mrb[0].mxu0
  %5181 = vmatprep.mubr.f32.mxu0 0.0
  %5182 = vmatmul.mubr.f32.gmra.mrb[0].mxu0 %v4787
  %v5183 = vpop.f32.mrb[0].mxu0
  %v5184 = vadd.f32 %v4890, %v5183
  %v5185 = vpop.f32.mrb[0].mxu0
  %5186 = vmatprep.mubr.f32.mxu0 0.0
  %5187 = vmatmul.mubr.f32.gmra.mrb[0].mxu0 %v4788
  %v5188 = vpop.f32.mrb[0].mxu0
  %v5189 = vadd.f32 %v4890, %v5188
  %v5190 = vpop.f32.mrb[0].mxu0
  %5191 = vmatprep.mubr.f32.mxu0 0.0
  %5192 = vmatmul.mubr.f32.gmra.mrb[0].mxu0 %v4789
  %v5193 = vpop.f32.mrb[0].mxu0
  %v5194 = vadd.f32 %v4890, %v5193
  %v5195 = vpop.f32.mrb[0].mxu0
  %5196 = vmatprep.mubr.f32.mxu0 0.0
  %5197 = vmatmul.mubr.f32.gmra.mrb[0].mxu0 %v4790
  %v5198 = vpop.f32.mrb[0].mxu0
  %v5199 = vadd.f32 %v4890, %v5198
  %v5200 = vpop.f32.mrb[0].mxu0
  %5201 = vmatprep.mubr.f32.mxu0 0.0
  %5202 = vmatmul.mubr.f32.gmra.mrb[0].mxu0 %v4791
  %v5203 = vpop.f32.mrb[0].mxu0
  %v5204 = vadd.f32 %v4890, %v5203
  %v5205 = vpop.f32.mrb[0].mxu0
  %5206 = vmatprep.mubr.f32.mxu0 0.0
  %5207 = vmatmul.mubr.f32.gmra.mrb[0].mxu0 %v4792
  %v5208 = vpop.f32.mrb[0].mxu0
  %v5209 = vadd.f32 %v4890, %v5208
  %v5210 = vpop.f32.mrb[0].mxu0
  %5211 = vmatprep.mubr.f32.mxu0 0.0
  %5212 = vmatmul.mubr.f32.gmra.mrb[0].mxu0 %v4793
  %v5213 = vpop.f32.mrb[0].mxu0
  %v5214 = vadd.f32 %v4890, %v5213
  %v5215 = vpop.f32.mrb[0].mxu0
  %5216 = vmatprep.mubr.f32.mxu0 0.0
  %5217 = vmatmul.mubr.f32.gmra.mrb[0].mxu0 %v4794
  %v5218 = vpop.f32.mrb[0].mxu0
  %v5219 = vadd.f32 %v4890, %v5218
  %v5220 = vpop.f32.mrb[0].mxu0
  %5221 = vmatprep.mubr.f32.mxu0 0.0
  %5222 = vmatmul.mubr.f32.gmra.mrb[0].mxu0 %v4795
  %v5223 = vpop.f32.mrb[0].mxu0
  %v5224 = vadd.f32 %v4890, %v5223
  %v5225 = vpop.f32.mrb[0].mxu0
  %5226 = vmatprep.mubr.f32.mxu0 0.0
  %5227 = vmatmul.mubr.f32.gmra.mrb[0].mxu0 %v4796
  %v5228 = vpop.f32.mrb[0].mxu0
  %v5229 = vadd.f32 %v4890, %v5228
  %v5230 = vpop.f32.mrb[0].mxu0
  %5231 = vmatprep.mubr.f32.mxu0 0.0
  %5232 = vmatmul.mubr.f32.gmra.mrb[0].mxu0 %v4797
  %v5233 = vpop.f32.mrb[0].mxu0
  %v5234 = vadd.f32 %v4890, %v5233
  %v5235 = vpop.f32.mrb[0].mxu0
  %5236 = vmatprep.mubr.f32.mxu0 0.0
  %5237 = vmatmul.mubr.f32.gmra.mrb[0].mxu0 %v4798
  %v5238 = vpop.f32.mrb[0].mxu0
  %v5239 = vadd.f32 %v4890, %v5238
  %v5240 = vpop.f32.mrb[0].mxu0
  %5241 = vmatprep.mubr.f32.mxu0 0.0
  %5242 = vmatmul.mubr.f32.gmra.mrb[0].mxu0 %v4799
  %v5243 = vpop.f32.mrb[0].mxu0
  %v5244 = vadd.f32 %v4890, %v5243
  %v5245 = vpop.f32.mrb[0].mxu0
  %5246 = vmatprep.mubr.f32.mxu0 0.0
  %5247 = vmatmul.mubr.f32.gmra.mrb[0].mxu0 %v4800
  %v5248 = vpop.f32.mrb[0].mxu0
  %v5249 = vadd.f32 %v4890, %v5248
  %v5250 = vpop.f32.mrb[0].mxu0
  %5251 = vmatprep.mubr.f32.mxu0 0.0
  %5252 = vmatmul.mubr.f32.gmra.mrb[0].mxu0 %v4801
  %v5253 = vpop.f32.mrb[0].mxu0
  %v5254 = vadd.f32 %v4890, %v5253
  %v5255 = vpop.f32.mrb[0].mxu0
  %5256 = vmatprep.mubr.f32.mxu0 0.0
  %5257 = vmatmul.mubr.f32.gmra.mrb[0].mxu0 %v4802
  %v5258 = vpop.f32.mrb[0].mxu0
  %v5259 = vadd.f32 %v4890, %v5258
  %v5260 = vpop.f32.mrb[0].mxu0
  %5261 = vmatprep.mubr.f32.mxu0 0.0
  %5262 = vmatmul.mubr.f32.gmra.mrb[0].mxu0 %v4803
  %v5263 = vpop.f32.mrb[0].mxu0
  %v5264 = vadd.f32 %v4890, %v5263
  %v5265 = vpop.f32.mrb[0].mxu0
  %5266 = vmatprep.mubr.f32.mxu0 0.0
  %5267 = vmatmul.mubr.f32.gmra.mrb[0].mxu0 %v4804
  %v5268 = vpop.f32.mrb[0].mxu0
  %v5269 = vadd.f32 %v4890, %v5268
  %v5270 = vpop.f32.mrb[0].mxu0
  %5271 = vmatprep.mubr.f32.mxu0 0.0
  %5272 = vmatmul.mubr.f32.gmra.mrb[0].mxu0 %v4805
  %v5273 = vpop.f32.mrb[0].mxu0
  %v5274 = vadd.f32 %v4890, %v5273
  %v5275 = vpop.f32.mrb[0].mxu0
  %5276 = vmatprep.mubr.f32.mxu0 0.0
  %5277 = vmatmul.mubr.f32.gmra.mrb[0].mxu0 %v4806
  %v5278 = vpop.f32.mrb[0].mxu0
  %v5279 = vadd.f32 %v4890, %v5278
  %v5280 = vpop.f32.mrb[0].mxu0
  %5281 = vmatprep.mubr.f32.mxu0 0.0
  %5282 = vmatmul.mubr.f32.gmra.mrb[0].mxu0 %v4807
  %v5283 = vpop.f32.mrb[0].mxu0
  %v5284 = vadd.f32 %v4890, %v5283
  %v5285 = vpop.f32.mrb[0].mxu0
  %5286 = vmatprep.mubr.f32.mxu0 0.0
  %5287 = vmatmul.mubr.f32.gmra.mrb[0].mxu0 %v4808
  %v5288 = vpop.f32.mrb[0].mxu0
  %v5289 = vadd.f32 %v4890, %v5288
  %v5290 = vpop.f32.mrb[0].mxu0
  %5291 = vmatprep.mubr.f32.mxu0 0.0
  %5292 = vmatmul.mubr.f32.gmra.mrb[0].mxu0 %v4809
  %v5293 = vpop.f32.mrb[0].mxu0
  %v5294 = vadd.f32 %v4890, %v5293
  %v5295 = vpop.f32.mrb[0].mxu0
  %5296 = vmatprep.mubr.f32.mxu0 0.0
  %5297 = vmatmul.mubr.f32.gmra.mrb[0].mxu0 %v4810
  %v5298 = vpop.f32.mrb[0].mxu0
  %v5299 = vadd.f32 %v4890, %v5298
  %v5300 = vpop.f32.mrb[0].mxu0
  %5301 = vmatprep.mubr.f32.mxu0 0.0
  %5302 = vmatmul.mubr.f32.gmra.mrb[0].mxu0 %v4811
  %v5303 = vpop.f32.mrb[0].mxu0
  %v5304 = vadd.f32 %v4890, %v5303
  %v5305 = vpop.f32.mrb[0].mxu0
  %5306 = vmatprep.mubr.f32.mxu0 0.0
  %5307 = vmatmul.mubr.f32.gmra.mrb[0].mxu0 %v4812
  %v5308 = vpop.f32.mrb[0].mxu0
  %v5309 = vadd.f32 %v4890, %v5308
  %v5310 = vpop.f32.mrb[0].mxu0
  %5311 = vmatprep.mubr.f32.mxu0 0.0
  %5312 = vmatmul.mubr.f32.gmra.mrb[0].mxu0 %v4813
  %v5313 = vpop.f32.mrb[0].mxu0
  %v5314 = vadd.f32 %v4890, %v5313
  %v5315 = vpop.f32.mrb[0].mxu0
  %5316 = vmatprep.mubr.f32.mxu0 0.0
  %5317 = vmatmul.mubr.f32.gmra.mrb[0].mxu0 %v4814
  %v5318 = vpop.f32.mrb[0].mxu0
  %v5319 = vadd.f32 %v4890, %v5318
  %v5320 = vpop.f32.mrb[0].mxu0
  %5321 = vmatprep.mubr.f32.mxu0 0.0
  %5322 = vmatmul.mubr.f32.gmra.mrb[0].mxu0 %v4815
  %v5323 = vpop.f32.mrb[0].mxu0
  %v5324 = vadd.f32 %v4890, %v5323
  %v5325 = vpop.f32.mrb[0].mxu0
  %5326 = vmatprep.mubr.f32.mxu0 0.0
  %5327 = vmatmul.mubr.f32.gmra.mrb[0].mxu0 %v4816
  %v5328 = vpop.f32.mrb[0].mxu0
  %v5329 = vadd.f32 %v4890, %v5328
  %v5330 = vpop.f32.mrb[0].mxu0
  %5331 = vmatprep.mubr.f32.mxu0 0.0
  %5332 = vmatmul.mubr.f32.gmra.mrb[0].mxu0 %v4817
  %v5333 = vpop.f32.mrb[0].mxu0
  %v5334 = vadd.f32 %v4890, %v5333
  %v5335 = vpop.f32.mrb[0].mxu0
  %5336 = vmatprep.mubr.f32.mxu0 0.0
  %5337 = vmatmul.mubr.f32.gmra.mrb[0].mxu0 %v4818
  %v5338 = vpop.f32.mrb[0].mxu0
  %v5339 = vadd.f32 %v4890, %v5338
  %v5340 = vpop.f32.mrb[0].mxu0
  %5341 = vmatprep.mubr.f32.mxu0 0.0
  %5342 = vmatmul.mubr.f32.gmra.mrb[0].mxu0 %v4819
  %v5343 = vpop.f32.mrb[0].mxu0
  %v5344 = vadd.f32 %v4890, %v5343
  %v5345 = vpop.f32.mrb[0].mxu0
  %5346 = vmatprep.mubr.f32.mxu0 0.0
  %5347 = vmatmul.mubr.f32.gmra.mrb[0].mxu0 %v4820
  %v5348 = vpop.f32.mrb[0].mxu0
  %v5349 = vadd.f32 %v4890, %v5348
  %v5350 = vpop.f32.mrb[0].mxu0
  %5351 = vmatprep.mubr.f32.mxu0 0.0
  %5352 = vmatmul.mubr.f32.gmra.mrb[0].mxu0 %v4821
  %v5353 = vpop.f32.mrb[0].mxu0
  %v5354 = vadd.f32 %v4890, %v5353
  %v5355 = vpop.f32.mrb[0].mxu0
  %5356 = vmatprep.mubr.f32.mxu0 0.0
  %5357 = vmatmul.mubr.f32.gmra.mrb[0].mxu0 %v4822
  %v5358 = vpop.f32.mrb[0].mxu0
  %v5359 = vadd.f32 %v4890, %v5358
  %v5360 = vpop.f32.mrb[0].mxu0
  %5361 = vmatprep.mubr.f32.mxu0 0.0
  %5362 = vmatmul.mubr.f32.gmra.mrb[0].mxu0 %v4823
  %v5363 = vpop.f32.mrb[0].mxu0
  %v5364 = vadd.f32 %v4890, %v5363
  %v5365 = vpop.f32.mrb[0].mxu0
  %5366 = vmatprep.mubr.f32.mxu0 0.0
  %5367 = vmatmul.mubr.f32.gmra.mrb[0].mxu0 %v4824
  %v5368 = vpop.f32.mrb[0].mxu0
  %v5369 = vadd.f32 %v4890, %v5368
  %v5370 = vpop.f32.mrb[0].mxu0
  %5371 = vmatprep.mubr.f32.mxu0 0.0
  %5372 = vmatmul.mubr.f32.gmra.mrb[0].mxu0 %v4825
  %v5373 = vpop.f32.mrb[0].mxu0
  %v5374 = vadd.f32 %v4890, %v5373
  %v5375 = vpop.f32.mrb[0].mxu0
  %5376 = vmatprep.mubr.f32.mxu0 0.0
  %5377 = vmatmul.mubr.f32.gmra.mrb[0].mxu0 %v4826
  %v5378 = vpop.f32.mrb[0].mxu0
  %v5379 = vadd.f32 %v4890, %v5378
  %v5380 = vpop.f32.mrb[0].mxu0
  %5381 = vmatprep.mubr.f32.mxu0 0.0
  %5382 = vmatmul.mubr.f32.gmra.mrb[0].mxu0 %v4827
  %v5383 = vpop.f32.mrb[0].mxu0
  %v5384 = vadd.f32 %v4890, %v5383
  %v5385 = vpop.f32.mrb[0].mxu0
  %5386 = vmatprep.mubr.f32.mxu0 0.0
  %5387 = vmatmul.mubr.f32.gmra.mrb[0].mxu0 %v4828
  %v5388 = vpop.f32.mrb[0].mxu0
  %v5389 = vadd.f32 %v4890, %v5388
  %v5390 = vpop.f32.mrb[0].mxu0
  %5391 = vmatprep.mubr.f32.mxu0 0.0
  %5392 = vmatmul.mubr.f32.gmra.mrb[0].mxu0 %v4829
  %v5393 = vpop.f32.mrb[0].mxu0
  %v5394 = vadd.f32 %v4890, %v5393
  %v5395 = vpop.f32.mrb[0].mxu0
  %5396 = vmatprep.mubr.f32.mxu0 0.0
  %5397 = vmatmul.mubr.f32.gmra.mrb[0].mxu0 %v4830
  %v5398 = vpop.f32.mrb[0].mxu0
  %v5399 = vadd.f32 %v4890, %v5398
  %v5400 = vpop.f32.mrb[0].mxu0
  %5401 = vmatprep.mubr.f32.mxu0 0.0
  %5402 = vmatmul.mubr.f32.gmra.mrb[0].mxu0 %v4831
  %v5403 = vpop.f32.mrb[0].mxu0
  %v5404 = vadd.f32 %v4890, %v5403
  %v5405 = vpop.f32.mrb[0].mxu0
  %5406 = vmatprep.mubr.f32.mxu0 0.0
  %5407 = vmatmul.mubr.f32.gmra.mrb[0].mxu0 %v4832
  %v5408 = vpop.f32.mrb[0].mxu0
  %v5409 = vadd.f32 %v4890, %v5408
  %v5410 = vpop.f32.mrb[0].mxu0
  %5411 = vmatprep.mubr.f32.mxu0 0.0
  %5412 = vmatmul.mubr.f32.gmra.mrb[0].mxu0 %v4833
  %v5413 = vpop.f32.mrb[0].mxu0
  %v5414 = vadd.f32 %v4890, %v5413
  %v5415 = vpop.f32.mrb[0].mxu0
  %5416 = vmatprep.mubr.f32.mxu0 0.0
  %5417 = vmatmul.mubr.f32.gmra.mrb[0].mxu0 %v4834
  %v5418 = vpop.f32.mrb[0].mxu0
  %v5419 = vadd.f32 %v4890, %v5418
  %v5420 = vpop.f32.mrb[0].mxu0
  %5421 = vmatprep.mubr.f32.mxu0 0.0
  %5422 = vmatmul.mubr.f32.gmra.mrb[0].mxu0 %v4835
  %v5423 = vpop.f32.mrb[0].mxu0
  %v5424 = vadd.f32 %v4890, %v5423
  %v5425 = vpop.f32.mrb[0].mxu0
  %5426 = vmatprep.mubr.f32.mxu0 0.0
  %5427 = vmatmul.mubr.f32.gmra.mrb[0].mxu0 %v4836
  %v5428 = vpop.f32.mrb[0].mxu0
  %v5429 = vadd.f32 %v4890, %v5428
  %v5430 = vpop.f32.mrb[0].mxu0
  %5431 = vmatprep.mubr.f32.mxu0 0.0
  %5432 = vmatmul.mubr.f32.gmra.mrb[0].mxu0 %v4837
  %v5433 = vpop.f32.mrb[0].mxu0
  %v5434 = vadd.f32 %v4890, %v5433
  %v5435 = vpop.f32.mrb[0].mxu0
  %5436 = vmatprep.mubr.f32.mxu0 0.0
  %5437 = vmatmul.mubr.f32.gmra.mrb[0].mxu0 %v4838
  %v5438 = vpop.f32.mrb[0].mxu0
  %v5439 = vadd.f32 %v4890, %v5438
  %v5440 = vpop.f32.mrb[0].mxu0
  %5441 = vmatprep.mubr.f32.mxu0 0.0
  %5442 = vmatmul.mubr.f32.gmra.mrb[0].mxu0 %v4839
  %v5443 = vpop.f32.mrb[0].mxu0
  %v5444 = vadd.f32 %v4890, %v5443
  %v5445 = vpop.f32.mrb[0].mxu0
  %5446 = vmatprep.mubr.f32.mxu0 0.0
  %5447 = vmatmul.mubr.f32.gmra.mrb[0].mxu0 %v4840
  %v5448 = vpop.f32.mrb[0].mxu0
  %v5449 = vadd.f32 %v4890, %v5448
  %v5450 = vpop.f32.mrb[0].mxu0
  %5451 = vmatprep.mubr.f32.mxu0 0.0
  %5452 = vmatmul.mubr.f32.gmra.mrb[0].mxu0 %v4841
  %v5453 = vpop.f32.mrb[0].mxu0
  %v5454 = vadd.f32 %v4890, %v5453
  %v5455 = vpop.f32.mrb[0].mxu0
  %5456 = vmatprep.mubr.f32.mxu0 0.0
  %5457 = vmatmul.mubr.f32.gmra.mrb[0].mxu0 %v4842
  %v5458 = vpop.f32.mrb[0].mxu0
  %v5459 = vadd.f32 %v4890, %v5458
  %v5460 = vpop.f32.mrb[0].mxu0
  %5461 = vmatprep.mubr.f32.mxu0 0.0
  %5462 = vmatmul.mubr.f32.gmra.mrb[0].mxu0 %v4843
  %v5463 = vpop.f32.mrb[0].mxu0
  %v5464 = vadd.f32 %v4890, %v5463
  %v5465 = vpop.f32.mrb[0].mxu0
  %5466 = vmatprep.mubr.f32.mxu0 0.0
  %5467 = vmatmul.mubr.f32.gmra.mrb[0].mxu0 %v4844
  %v5468 = vpop.f32.mrb[0].mxu0
  %v5469 = vadd.f32 %v4890, %v5468
  %v5470 = vpop.f32.mrb[0].mxu0
  %5471 = vmatprep.mubr.f32.mxu0 0.0
  %5472 = vmatmul.mubr.f32.gmra.mrb[0].mxu0 %v4845
  %v5473 = vpop.f32.mrb[0].mxu0
  %v5474 = vadd.f32 %v4890, %v5473
  %v5475 = vpop.f32.mrb[0].mxu0
  %5476 = vmatprep.mubr.f32.mxu0 0.0
  %5477 = vmatmul.mubr.f32.gmra.mrb[0].mxu0 %v4846
  %v5478 = vpop.f32.mrb[0].mxu0
  %v5479 = vadd.f32 %v4890, %v5478
  %v5480 = vpop.f32.mrb[0].mxu0
  %5481 = vmatprep.mubr.f32.mxu0 0.0
  %5482 = vmatmul.mubr.f32.gmra.mrb[0].mxu0 %v4847
  %v5483 = vpop.f32.mrb[0].mxu0
  %v5484 = vadd.f32 %v4890, %v5483
  %v5485 = vpop.f32.mrb[0].mxu0
  %5486 = vmatprep.mubr.f32.mxu0 0.0
  %5487 = vmatmul.mubr.f32.gmra.mrb[0].mxu0 %v4848
  %v5488 = vpop.f32.mrb[0].mxu0
  %v5489 = vadd.f32 %v4890, %v5488
  %v5490 = vpop.f32.mrb[0].mxu0
  %5491 = vmatprep.mubr.f32.mxu0 0.0
  %5492 = vmatmul.mubr.f32.gmra.mrb[0].mxu0 %v4849
  %v5493 = vpop.f32.mrb[0].mxu0
  %v5494 = vadd.f32 %v4890, %v5493
  %v5495 = vpop.f32.mrb[0].mxu0
  %5496 = vmatprep.mubr.f32.mxu0 0.0
  %5497 = vmatmul.mubr.f32.gmra.mrb[0].mxu0 %v4850
  %v5498 = vpop.f32.mrb[0].mxu0
  %v5499 = vadd.f32 %v4890, %v5498
  %v5500 = vpop.f32.mrb[0].mxu0
  %5501 = vmatprep.mubr.f32.mxu0 0.0
  %5502 = vmatmul.mubr.f32.gmra.mrb[0].mxu0 %v4851
  %v5503 = vpop.f32.mrb[0].mxu0
  %v5504 = vadd.f32 %v4890, %v5503
  %v5505 = vpop.f32.mrb[0].mxu0
  %5506 = vmatprep.mubr.f32.mxu0 0.0
  %5507 = vmatmul.mubr.f32.gmra.mrb[0].mxu0 %v4852
  %v5508 = vpop.f32.mrb[0].mxu0
  %v5509 = vadd.f32 %v4890, %v5508
  %v5510 = vpop.f32.mrb[0].mxu0
  %5511 = vmatprep.mubr.f32.mxu0 0.0
  %5512 = vmatmul.mubr.f32.gmra.mrb[0].mxu0 %v4853
  %v5513 = vpop.f32.mrb[0].mxu0
  %v5514 = vadd.f32 %v4890, %v5513
  %v5515 = vpop.f32.mrb[0].mxu0
  %5516 = vmatprep.mubr.f32.mxu0 0.0
  %5517 = vmatmul.mubr.f32.gmra.mrb[0].mxu0 %v4854
  %v5518 = vpop.f32.mrb[0].mxu0
  %v5519 = vadd.f32 %v4890, %v5518
  %v5520 = vpop.f32.mrb[0].mxu0
  %5521 = vmatprep.mubr.f32.mxu0 0.0
  %5522 = vmatmul.mubr.f32.gmra.mrb[0].mxu0 %v4855
  %v5523 = vpop.f32.mrb[0].mxu0
  %v5524 = vadd.f32 %v4890, %v5523
  %v5525 = vpop.f32.mrb[0].mxu0
  %5526 = vmatprep.mubr.f32.mxu0 0.0
  %5527 = vmatmul.mubr.f32.gmra.mrb[0].mxu0 %v4856
  %v5528 = vpop.f32.mrb[0].mxu0
  %v5529 = vadd.f32 %v4890, %v5528
  %v5530 = vpop.f32.mrb[0].mxu0
  %5531 = vmatprep.mubr.f32.mxu0 0.0
  %5532 = vmatmul.mubr.f32.gmra.mrb[0].mxu0 %v4857
  %v5533 = vpop.f32.mrb[0].mxu0
  %v5534 = vadd.f32 %v4890, %v5533
  %v5535 = vpop.f32.mrb[0].mxu0
  %5536 = vmatprep.mubr.f32.mxu0 0.0
  %5537 = vmatmul.mubr.f32.gmra.mrb[0].mxu0 %v4858
  %v5538 = vpop.f32.mrb[0].mxu0
  %v5539 = vadd.f32 %v4890, %v5538
  %v5540 = vpop.f32.mrb[0].mxu0
  %5541 = vmatprep.mubr.f32.mxu0 0.0
  %5542 = vmatmul.mubr.f32.gmra.mrb[0].mxu0 %v4859
  %v5543 = vpop.f32.mrb[0].mxu0
  %v5544 = vadd.f32 %v4890, %v5543
  %v5545 = vpop.f32.mrb[0].mxu0
  %5546 = vmatprep.mubr.f32.mxu0 0.0
  %5547 = vmatmul.mubr.f32.gmra.mrb[0].mxu0 %v4860
  %v5548 = vpop.f32.mrb[0].mxu0
  %v5549 = vadd.f32 %v4890, %v5548
  %v5550 = vpop.f32.mrb[0].mxu0
  %5551 = vmatprep.mubr.f32.mxu0 0.0
  %5552 = vmatmul.mubr.f32.gmra.mrb[0].mxu0 %v4861
  %v5553 = vpop.f32.mrb[0].mxu0
  %v5554 = vadd.f32 %v4890, %v5553
  %v5555 = vpop.f32.mrb[0].mxu0
  %5556 = vmatprep.mubr.f32.mxu0 0.0
  %5557 = vmatmul.mubr.f32.gmra.mrb[0].mxu0 %v4862
  %v5558 = vpop.f32.mrb[0].mxu0
  %v5559 = vadd.f32 %v4890, %v5558
  %v5560 = vpop.f32.mrb[0].mxu0
  %5561 = vmatprep.mubr.f32.mxu0 0.0
  %5562 = vmatmul.mubr.f32.gmra.mrb[0].mxu0 %v4863
  %v5563 = vpop.f32.mrb[0].mxu0
  %v5564 = vadd.f32 %v4890, %v5563
  %v5565 = vpop.f32.mrb[0].mxu0
  %5566 = vmatprep.mubr.f32.mxu0 0.0
  %5567 = vmatmul.mubr.f32.gmra.mrb[0].mxu0 %v4864
  %v5568 = vpop.f32.mrb[0].mxu0
  %v5569 = vadd.f32 %v4890, %v5568
  %v5570 = vpop.f32.mrb[0].mxu0
  %5571 = vmatprep.mubr.f32.mxu0 0.0
  %5572 = vmatmul.mubr.f32.gmra.mrb[0].mxu0 %v4865
  %v5573 = vpop.f32.mrb[0].mxu0
  %v5574 = vadd.f32 %v4890, %v5573
  %v5575 = vpop.f32.mrb[0].mxu0
  %5576 = vmatprep.mubr.f32.mxu0 0.0
  %5577 = vmatmul.mubr.f32.gmra.mrb[0].mxu0 %v4866
  %v5578 = vpop.f32.mrb[0].mxu0
  %v5579 = vadd.f32 %v4890, %v5578
  %v5580 = vpop.f32.mrb[0].mxu0
  %5581 = vdwg.mxu0
  %v5582 = vmul.f32 %v4959, 0.5
  %v5583 = vmul.f32 %v4964, 0.5
  %v5584 = vmul.f32 %v4969, 0.5
  %v5585 = vmul.f32 %v4974, 0.5
  %v5586 = vmul.f32 %v4979, 0.5
  %v5587 = vmul.f32 %v4984, 0.5
  %v5588 = vmul.f32 %v4989, 0.5
  %v5589 = vmul.f32 %v4994, 0.5
  %v5590 = vmul.f32 %v4999, 0.5
  %v5591 = vmul.f32 %v5004, 0.5
  %v5592 = vmul.f32 %v5009, 0.5
  %v5593 = vmul.f32 %v5014, 0.5
  %v5594 = vmul.f32 %v5019, 0.5
  %v5595 = vmul.f32 %v5024, 0.5
  %v5596 = vmul.f32 %v5029, 0.5
  %v5597 = vmul.f32 %v5034, 0.5
  %v5598 = vmul.f32 %v5039, 0.5
  %v5599 = vmul.f32 %v5044, 0.5
  %v5600 = vmul.f32 %v5049, 0.5
  %v5601 = vmul.f32 %v5054, 0.5
  %v5602 = vmul.f32 %v5059, 0.5
  %v5603 = vmul.f32 %v5064, 0.5
  %v5604 = vmul.f32 %v5069, 0.5
  %v5605 = vmul.f32 %v5074, 0.5
  %v5606 = vmul.f32 %v5079, 0.5
  %v5607 = vmul.f32 %v5084, 0.5
  %v5608 = vmul.f32 %v5089, 0.5
  %v5609 = vmul.f32 %v5094, 0.5
  %v5610 = vmul.f32 %v5099, 0.5
  %v5611 = vmul.f32 %v5104, 0.5
  %v5612 = vmul.f32 %v5109, 0.5
  %v5613 = vmul.f32 %v5114, 0.5
  %v5614 = vmul.f32 %v5119, 0.5
  %v5615 = vmul.f32 %v5124, 0.5
  %v5616 = vmul.f32 %v5129, 0.5
  %v5617 = vmul.f32 %v5134, 0.5
  %v5618 = vmul.f32 %v5139, 0.5
  %v5619 = vmul.f32 %v5144, 0.5
  %v5620 = vmul.f32 %v5149, 0.5
  %v5621 = vmul.f32 %v5154, 0.5
  %v5622 = vmul.f32 %v5159, 0.5
  %v5623 = vmul.f32 %v5164, 0.5
  %v5624 = vmul.f32 %v5169, 0.5
  %v5625 = vmul.f32 %v5174, 0.5
  %v5626 = vmul.f32 %v5179, 0.5
  %v5627 = vmul.f32 %v5184, 0.5
  %v5628 = vmul.f32 %v5189, 0.5
  %v5629 = vmul.f32 %v5194, 0.5
  %v5630 = vmul.f32 %v5199, 0.5
  %v5631 = vmul.f32 %v5204, 0.5
  %v5632 = vmul.f32 %v5209, 0.5
  %v5633 = vmul.f32 %v5214, 0.5
  %v5634 = vmul.f32 %v5219, 0.5
  %v5635 = vmul.f32 %v5224, 0.5
  %v5636 = vmul.f32 %v5229, 0.5
  %v5637 = vmul.f32 %v5234, 0.5
  %v5638 = vmul.f32 %v5239, 0.5
  %v5639 = vmul.f32 %v5244, 0.5
  %v5640 = vmul.f32 %v5249, 0.5
  %v5641 = vmul.f32 %v5254, 0.5
  %v5642 = vmul.f32 %v5259, 0.5
  %v5643 = vmul.f32 %v5264, 0.5
  %v5644 = vmul.f32 %v5269, 0.5
  %v5645 = vmul.f32 %v5274, 0.5
  %v5646 = vmul.f32 %v5279, 0.5
  %v5647 = vmul.f32 %v5284, 0.5
  %v5648 = vmul.f32 %v5289, 0.5
  %v5649 = vmul.f32 %v5294, 0.5
  %v5650 = vmul.f32 %v5299, 0.5
  %v5651 = vmul.f32 %v5304, 0.5
  %v5652 = vmul.f32 %v5309, 0.5
  %v5653 = vmul.f32 %v5314, 0.5
  %v5654 = vmul.f32 %v5319, 0.5
  %v5655 = vmul.f32 %v5324, 0.5
  %v5656 = vmul.f32 %v5329, 0.5
  %v5657 = vmul.f32 %v5334, 0.5
  %v5658 = vmul.f32 %v5339, 0.5
  %v5659 = vmul.f32 %v5344, 0.5
  %v5660 = vmul.f32 %v5349, 0.5
  %v5661 = vmul.f32 %v5354, 0.5
  %v5662 = vmul.f32 %v5359, 0.5
  %v5663 = vmul.f32 %v5364, 0.5
  %v5664 = vmul.f32 %v5369, 0.5
  %v5665 = vmul.f32 %v5374, 0.5
  %v5666 = vmul.f32 %v5379, 0.5
  %v5667 = vmul.f32 %v5384, 0.5
  %v5668 = vmul.f32 %v5389, 0.5
  %v5669 = vmul.f32 %v5394, 0.5
  %v5670 = vmul.f32 %v5399, 0.5
  %v5671 = vmul.f32 %v5404, 0.5
  %v5672 = vmul.f32 %v5409, 0.5
  %v5673 = vmul.f32 %v5414, 0.5
  %v5674 = vmul.f32 %v5419, 0.5
  %v5675 = vmul.f32 %v5424, 0.5
  %v5676 = vmul.f32 %v5429, 0.5
  %v5677 = vmul.f32 %v5434, 0.5
  %v5678 = vmul.f32 %v5439, 0.5
  %v5679 = vmul.f32 %v5444, 0.5
  %v5680 = vmul.f32 %v5449, 0.5
  %v5681 = vmul.f32 %v5454, 0.5
  %v5682 = vmul.f32 %v5459, 0.5
  %v5683 = vmul.f32 %v5464, 0.5
  %v5684 = vmul.f32 %v5469, 0.5
  %v5685 = vmul.f32 %v5474, 0.5
  %v5686 = vmul.f32 %v5479, 0.5
  %v5687 = vmul.f32 %v5484, 0.5
  %v5688 = vmul.f32 %v5489, 0.5
  %v5689 = vmul.f32 %v5494, 0.5
  %v5690 = vmul.f32 %v5499, 0.5
  %v5691 = vmul.f32 %v5504, 0.5
  %v5692 = vmul.f32 %v5509, 0.5
  %v5693 = vmul.f32 %v5514, 0.5
  %v5694 = vmul.f32 %v5519, 0.5
  %v5695 = vmul.f32 %v5524, 0.5
  %v5696 = vmul.f32 %v5529, 0.5
  %v5697 = vmul.f32 %v5534, 0.5
  %v5698 = vmul.f32 %v5539, 0.5
  %v5699 = vmul.f32 %v5544, 0.5
  %v5700 = vmul.f32 %v5549, 0.5
  %v5701 = vmul.f32 %v5554, 0.5
  %v5702 = vmul.f32 %v5559, 0.5
  %v5703 = vmul.f32 %v5564, 0.5
  %v5704 = vmul.f32 %v5569, 0.5
  %v5705 = vmul.f32 %v5574, 0.5
  %v5706 = vmul.f32 %v5579, 0.5
  %v5707 = vtanh.pop %v5582
  %v5708 = vtanh.pop %v5583
  %v5709 = vtanh.pop %v5584
  %v5710 = vtanh.pop %v5585
  %v5711 = vtanh.pop %v5586
  %v5712 = vtanh.pop %v5587
  %v5713 = vtanh.pop %v5588
  %v5714 = vtanh.pop %v5589
  %v5715 = vtanh.pop %v5590
  %v5716 = vtanh.pop %v5591
  %v5717 = vtanh.pop %v5592
  %v5718 = vtanh.pop %v5593
  %v5719 = vtanh.pop %v5594
  %v5720 = vtanh.pop %v5595
  %v5721 = vtanh.pop %v5596
  %v5722 = vtanh.pop %v5597
  %v5723 = vtanh.pop %v5598
  %v5724 = vtanh.pop %v5599
  %v5725 = vtanh.pop %v5600
  %v5726 = vtanh.pop %v5601
  %v5727 = vtanh.pop %v5602
  %v5728 = vtanh.pop %v5603
  %v5729 = vtanh.pop %v5604
  %v5730 = vtanh.pop %v5605
  %v5731 = vtanh.pop %v5606
  %v5732 = vtanh.pop %v5607
  %v5733 = vtanh.pop %v5608
  %v5734 = vtanh.pop %v5609
  %v5735 = vtanh.pop %v5610
  %v5736 = vtanh.pop %v5611
  %v5737 = vtanh.pop %v5612
  %v5738 = vtanh.pop %v5613
  %v5739 = vtanh.pop %v5614
  %v5740 = vtanh.pop %v5615
  %v5741 = vtanh.pop %v5616
  %v5742 = vtanh.pop %v5617
  %v5743 = vtanh.pop %v5618
  %v5744 = vtanh.pop %v5619
  %v5745 = vtanh.pop %v5620
  %v5746 = vtanh.pop %v5621
  %v5747 = vtanh.pop %v5622
  %v5748 = vtanh.pop %v5623
  %v5749 = vtanh.pop %v5624
  %v5750 = vtanh.pop %v5625
  %v5751 = vtanh.pop %v5626
  %v5752 = vtanh.pop %v5627
  %v5753 = vtanh.pop %v5628
  %v5754 = vtanh.pop %v5629
  %v5755 = vtanh.pop %v5630
  %v5756 = vtanh.pop %v5631
  %v5757 = vtanh.pop %v5632
  %v5758 = vtanh.pop %v5633
  %v5759 = vtanh.pop %v5634
  %v5760 = vtanh.pop %v5635
  %v5761 = vtanh.pop %v5636
  %v5762 = vtanh.pop %v5637
  %v5763 = vtanh.pop %v5638
  %v5764 = vtanh.pop %v5639
  %v5765 = vtanh.pop %v5640
  %v5766 = vtanh.pop %v5641
  %v5767 = vtanh.pop %v5642
  %v5768 = vtanh.pop %v5643
  %v5769 = vtanh.pop %v5644
  %v5770 = vtanh.pop %v5645
  %v5771 = vtanh.pop %v5646
  %v5772 = vtanh.pop %v5647
  %v5773 = vtanh.pop %v5648
  %v5774 = vtanh.pop %v5649
  %v5775 = vtanh.pop %v5650
  %v5776 = vtanh.pop %v5651
  %v5777 = vtanh.pop %v5652
  %v5778 = vtanh.pop %v5653
  %v5779 = vtanh.pop %v5654
  %v5780 = vtanh.pop %v5655
  %v5781 = vtanh.pop %v5656
  %v5782 = vtanh.pop %v5657
  %v5783 = vtanh.pop %v5658
  %v5784 = vtanh.pop %v5659
  %v5785 = vtanh.pop %v5660
  %v5786 = vtanh.pop %v5661
  %v5787 = vtanh.pop %v5662
  %v5788 = vtanh.pop %v5663
  %v5789 = vtanh.pop %v5664
  %v5790 = vtanh.pop %v5665
  %v5791 = vtanh.pop %v5666
  %v5792 = vtanh.pop %v5667
  %v5793 = vtanh.pop %v5668
  %v5794 = vtanh.pop %v5669
  %v5795 = vtanh.pop %v5670
  %v5796 = vtanh.pop %v5671
  %v5797 = vtanh.pop %v5672
  %v5798 = vtanh.pop %v5673
  %v5799 = vtanh.pop %v5674
  %v5800 = vtanh.pop %v5675
  %v5801 = vtanh.pop %v5676
  %v5802 = vtanh.pop %v5677
  %v5803 = vtanh.pop %v5678
  %v5804 = vtanh.pop %v5679
  %v5805 = vtanh.pop %v5680
  %v5806 = vtanh.pop %v5681
  %v5807 = vtanh.pop %v5682
  %v5808 = vtanh.pop %v5683
  %v5809 = vtanh.pop %v5684
  %v5810 = vtanh.pop %v5685
  %v5811 = vtanh.pop %v5686
  %v5812 = vtanh.pop %v5687
  %v5813 = vtanh.pop %v5688
  %v5814 = vtanh.pop %v5689
  %v5815 = vtanh.pop %v5690
  %v5816 = vtanh.pop %v5691
  %v5817 = vtanh.pop %v5692
  %v5818 = vtanh.pop %v5693
  %v5819 = vtanh.pop %v5694
  %v5820 = vtanh.pop %v5695
  %v5821 = vtanh.pop %v5696
  %v5822 = vtanh.pop %v5697
  %v5823 = vtanh.pop %v5698
  %v5824 = vtanh.pop %v5699
  %v5825 = vtanh.pop %v5700
  %v5826 = vtanh.pop %v5701
  %v5827 = vtanh.pop %v5702
  %v5828 = vtanh.pop %v5703
  %v5829 = vtanh.pop %v5704
  %v5830 = vtanh.pop %v5705
  %v5831 = vtanh.pop %v5706
  %v5832 = vmul.f32 %v5707, 0.5
  %v5833 = vmul.f32 %v5708, 0.5
  %v5834 = vmul.f32 %v5709, 0.5
  %v5835 = vmul.f32 %v5710, 0.5
  %v5836 = vmul.f32 %v5711, 0.5
  %v5837 = vmul.f32 %v5712, 0.5
  %v5838 = vmul.f32 %v5713, 0.5
  %v5839 = vmul.f32 %v5714, 0.5
  %v5840 = vmul.f32 %v5715, 0.5
  %v5841 = vmul.f32 %v5716, 0.5
  %v5842 = vmul.f32 %v5717, 0.5
  %v5843 = vmul.f32 %v5718, 0.5
  %v5844 = vmul.f32 %v5719, 0.5
  %v5845 = vmul.f32 %v5720, 0.5
  %v5846 = vmul.f32 %v5721, 0.5
  %v5847 = vmul.f32 %v5722, 0.5
  %v5848 = vmul.f32 %v5723, 0.5
  %v5849 = vmul.f32 %v5724, 0.5
  %v5850 = vmul.f32 %v5725, 0.5
  %v5851 = vmul.f32 %v5726, 0.5
  %v5852 = vmul.f32 %v5727, 0.5
  %v5853 = vmul.f32 %v5728, 0.5
  %v5854 = vmul.f32 %v5729, 0.5
  %v5855 = vmul.f32 %v5730, 0.5
  %v5856 = vmul.f32 %v5731, 0.5
  %v5857 = vmul.f32 %v5732, 0.5
  %v5858 = vmul.f32 %v5733, 0.5
  %v5859 = vmul.f32 %v5734, 0.5
  %v5860 = vmul.f32 %v5735, 0.5
  %v5861 = vmul.f32 %v5736, 0.5
  %v5862 = vmul.f32 %v5737, 0.5
  %v5863 = vmul.f32 %v5738, 0.5
  %v5864 = vmul.f32 %v5739, 0.5
  %v5865 = vmul.f32 %v5740, 0.5
  %v5866 = vmul.f32 %v5741, 0.5
  %v5867 = vmul.f32 %v5742, 0.5
  %v5868 = vmul.f32 %v5743, 0.5
  %v5869 = vmul.f32 %v5744, 0.5
  %v5870 = vmul.f32 %v5745, 0.5
  %v5871 = vmul.f32 %v5746, 0.5
  %v5872 = vmul.f32 %v5747, 0.5
  %v5873 = vmul.f32 %v5748, 0.5
  %v5874 = vmul.f32 %v5749, 0.5
  %v5875 = vmul.f32 %v5750, 0.5
  %v5876 = vmul.f32 %v5751, 0.5
  %v5877 = vmul.f32 %v5752, 0.5
  %v5878 = vmul.f32 %v5753, 0.5
  %v5879 = vmul.f32 %v5754, 0.5
  %v5880 = vmul.f32 %v5755, 0.5
  %v5881 = vmul.f32 %v5756, 0.5
  %v5882 = vmul.f32 %v5757, 0.5
  %v5883 = vmul.f32 %v5758, 0.5
  %v5884 = vmul.f32 %v5759, 0.5
  %v5885 = vmul.f32 %v5760, 0.5
  %v5886 = vmul.f32 %v5761, 0.5
  %v5887 = vmul.f32 %v5762, 0.5
  %v5888 = vmul.f32 %v5763, 0.5
  %v5889 = vmul.f32 %v5764, 0.5
  %v5890 = vmul.f32 %v5765, 0.5
  %v5891 = vmul.f32 %v5766, 0.5
  %v5892 = vmul.f32 %v5767, 0.5
  %v5893 = vmul.f32 %v5768, 0.5
  %v5894 = vmul.f32 %v5769, 0.5
  %v5895 = vmul.f32 %v5770, 0.5
  %v5896 = vmul.f32 %v5771, 0.5
  %v5897 = vmul.f32 %v5772, 0.5
  %v5898 = vmul.f32 %v5773, 0.5
  %v5899 = vmul.f32 %v5774, 0.5
  %v5900 = vmul.f32 %v5775, 0.5
  %v5901 = vmul.f32 %v5776, 0.5
  %v5902 = vmul.f32 %v5777, 0.5
  %v5903 = vmul.f32 %v5778, 0.5
  %v5904 = vmul.f32 %v5779, 0.5
  %v5905 = vmul.f32 %v5780, 0.5
  %v5906 = vmul.f32 %v5781, 0.5
  %v5907 = vmul.f32 %v5782, 0.5
  %v5908 = vmul.f32 %v5783, 0.5
  %v5909 = vmul.f32 %v5784, 0.5
  %v5910 = vmul.f32 %v5785, 0.5
  %v5911 = vmul.f32 %v5786, 0.5
  %v5912 = vmul.f32 %v5787, 0.5
  %v5913 = vmul.f32 %v5788, 0.5
  %v5914 = vmul.f32 %v5789, 0.5
  %v5915 = vmul.f32 %v5790, 0.5
  %v5916 = vmul.f32 %v5791, 0.5
  %v5917 = vmul.f32 %v5792, 0.5
  %v5918 = vmul.f32 %v5793, 0.5
  %v5919 = vmul.f32 %v5794, 0.5
  %v5920 = vmul.f32 %v5795, 0.5
  %v5921 = vmul.f32 %v5796, 0.5
  %v5922 = vmul.f32 %v5797, 0.5
  %v5923 = vmul.f32 %v5798, 0.5
  %v5924 = vmul.f32 %v5799, 0.5
  %v5925 = vmul.f32 %v5800, 0.5
  %v5926 = vmul.f32 %v5801, 0.5
  %v5927 = vmul.f32 %v5802, 0.5
  %v5928 = vmul.f32 %v5803, 0.5
  %v5929 = vmul.f32 %v5804, 0.5
  %v5930 = vmul.f32 %v5805, 0.5
  %v5931 = vmul.f32 %v5806, 0.5
  %v5932 = vmul.f32 %v5807, 0.5
  %v5933 = vmul.f32 %v5808, 0.5
  %v5934 = vmul.f32 %v5809, 0.5
  %v5935 = vmul.f32 %v5810, 0.5
  %v5936 = vmul.f32 %v5811, 0.5
  %v5937 = vmul.f32 %v5812, 0.5
  %v5938 = vmul.f32 %v5813, 0.5
  %v5939 = vmul.f32 %v5814, 0.5
  %v5940 = vmul.f32 %v5815, 0.5
  %v5941 = vmul.f32 %v5816, 0.5
  %v5942 = vmul.f32 %v5817, 0.5
  %v5943 = vmul.f32 %v5818, 0.5
  %v5944 = vmul.f32 %v5819, 0.5
  %v5945 = vmul.f32 %v5820, 0.5
  %v5946 = vmul.f32 %v5821, 0.5
  %v5947 = vmul.f32 %v5822, 0.5
  %v5948 = vmul.f32 %v5823, 0.5
  %v5949 = vmul.f32 %v5824, 0.5
  %v5950 = vmul.f32 %v5825, 0.5
  %v5951 = vmul.f32 %v5826, 0.5
  %v5952 = vmul.f32 %v5827, 0.5
  %v5953 = vmul.f32 %v5828, 0.5
  %v5954 = vmul.f32 %v5829, 0.5
  %v5955 = vmul.f32 %v5830, 0.5
  %v5956 = vmul.f32 %v5831, 0.5
  %v5957 = vadd.f32 %v5832, 0.5
  %v5958 = vadd.f32 %v5833, 0.5
  %v5959 = vadd.f32 %v5834, 0.5
  %v5960 = vadd.f32 %v5835, 0.5
  %v5961 = vadd.f32 %v5836, 0.5
  %v5962 = vadd.f32 %v5837, 0.5
  %v5963 = vadd.f32 %v5838, 0.5
  %v5964 = vadd.f32 %v5839, 0.5
  %v5965 = vadd.f32 %v5840, 0.5
  %v5966 = vadd.f32 %v5841, 0.5
  %v5967 = vadd.f32 %v5842, 0.5
  %v5968 = vadd.f32 %v5843, 0.5
  %v5969 = vadd.f32 %v5844, 0.5
  %v5970 = vadd.f32 %v5845, 0.5
  %v5971 = vadd.f32 %v5846, 0.5
  %v5972 = vadd.f32 %v5847, 0.5
  %v5973 = vadd.f32 %v5848, 0.5
  %v5974 = vadd.f32 %v5849, 0.5
  %v5975 = vadd.f32 %v5850, 0.5
  %v5976 = vadd.f32 %v5851, 0.5
  %v5977 = vadd.f32 %v5852, 0.5
  %v5978 = vadd.f32 %v5853, 0.5
  %v5979 = vadd.f32 %v5854, 0.5
  %v5980 = vadd.f32 %v5855, 0.5
  %v5981 = vadd.f32 %v5856, 0.5
  %v5982 = vadd.f32 %v5857, 0.5
  %v5983 = vadd.f32 %v5858, 0.5
  %v5984 = vadd.f32 %v5859, 0.5
  %v5985 = vadd.f32 %v5860, 0.5
  %v5986 = vadd.f32 %v5861, 0.5
  %v5987 = vadd.f32 %v5862, 0.5
  %v5988 = vadd.f32 %v5863, 0.5
  %v5989 = vadd.f32 %v5864, 0.5
  %v5990 = vadd.f32 %v5865, 0.5
  %v5991 = vadd.f32 %v5866, 0.5
  %v5992 = vadd.f32 %v5867, 0.5
  %v5993 = vadd.f32 %v5868, 0.5
  %v5994 = vadd.f32 %v5869, 0.5
  %v5995 = vadd.f32 %v5870, 0.5
  %v5996 = vadd.f32 %v5871, 0.5
  %v5997 = vadd.f32 %v5872, 0.5
  %v5998 = vadd.f32 %v5873, 0.5
  %v5999 = vadd.f32 %v5874, 0.5
  %v6000 = vadd.f32 %v5875, 0.5
  %v6001 = vadd.f32 %v5876, 0.5
  %v6002 = vadd.f32 %v5877, 0.5
  %v6003 = vadd.f32 %v5878, 0.5
  %v6004 = vadd.f32 %v5879, 0.5
  %v6005 = vadd.f32 %v5880, 0.5
  %v6006 = vadd.f32 %v5881, 0.5
  %v6007 = vadd.f32 %v5882, 0.5
  %v6008 = vadd.f32 %v5883, 0.5
  %v6009 = vadd.f32 %v5884, 0.5
  %v6010 = vadd.f32 %v5885, 0.5
  %v6011 = vadd.f32 %v5886, 0.5
  %v6012 = vadd.f32 %v5887, 0.5
  %v6013 = vadd.f32 %v5888, 0.5
  %v6014 = vadd.f32 %v5889, 0.5
  %v6015 = vadd.f32 %v5890, 0.5
  %v6016 = vadd.f32 %v5891, 0.5
  %v6017 = vadd.f32 %v5892, 0.5
  %v6018 = vadd.f32 %v5893, 0.5
  %v6019 = vadd.f32 %v5894, 0.5
  %v6020 = vadd.f32 %v5895, 0.5
  %v6021 = vadd.f32 %v5896, 0.5
  %v6022 = vadd.f32 %v5897, 0.5
  %v6023 = vadd.f32 %v5898, 0.5
  %v6024 = vadd.f32 %v5899, 0.5
  %v6025 = vadd.f32 %v5900, 0.5
  %v6026 = vadd.f32 %v5901, 0.5
  %v6027 = vadd.f32 %v5902, 0.5
  %v6028 = vadd.f32 %v5903, 0.5
  %v6029 = vadd.f32 %v5904, 0.5
  %v6030 = vadd.f32 %v5905, 0.5
  %v6031 = vadd.f32 %v5906, 0.5
  %v6032 = vadd.f32 %v5907, 0.5
  %v6033 = vadd.f32 %v5908, 0.5
  %v6034 = vadd.f32 %v5909, 0.5
  %v6035 = vadd.f32 %v5910, 0.5
  %v6036 = vadd.f32 %v5911, 0.5
  %v6037 = vadd.f32 %v5912, 0.5
  %v6038 = vadd.f32 %v5913, 0.5
  %v6039 = vadd.f32 %v5914, 0.5
  %v6040 = vadd.f32 %v5915, 0.5
  %v6041 = vadd.f32 %v5916, 0.5
  %v6042 = vadd.f32 %v5917, 0.5
  %v6043 = vadd.f32 %v5918, 0.5
  %v6044 = vadd.f32 %v5919, 0.5
  %v6045 = vadd.f32 %v5920, 0.5
  %v6046 = vadd.f32 %v5921, 0.5
  %v6047 = vadd.f32 %v5922, 0.5
  %v6048 = vadd.f32 %v5923, 0.5
  %v6049 = vadd.f32 %v5924, 0.5
  %v6050 = vadd.f32 %v5925, 0.5
  %v6051 = vadd.f32 %v5926, 0.5
  %v6052 = vadd.f32 %v5927, 0.5
  %v6053 = vadd.f32 %v5928, 0.5
  %v6054 = vadd.f32 %v5929, 0.5
  %v6055 = vadd.f32 %v5930, 0.5
  %v6056 = vadd.f32 %v5931, 0.5
  %v6057 = vadd.f32 %v5932, 0.5
  %v6058 = vadd.f32 %v5933, 0.5
  %v6059 = vadd.f32 %v5934, 0.5
  %v6060 = vadd.f32 %v5935, 0.5
  %v6061 = vadd.f32 %v5936, 0.5
  %v6062 = vadd.f32 %v5937, 0.5
  %v6063 = vadd.f32 %v5938, 0.5
  %v6064 = vadd.f32 %v5939, 0.5
  %v6065 = vadd.f32 %v5940, 0.5
  %v6066 = vadd.f32 %v5941, 0.5
  %v6067 = vadd.f32 %v5942, 0.5
  %v6068 = vadd.f32 %v5943, 0.5
  %v6069 = vadd.f32 %v5944, 0.5
  %v6070 = vadd.f32 %v5945, 0.5
  %v6071 = vadd.f32 %v5946, 0.5
  %v6072 = vadd.f32 %v5947, 0.5
  %v6073 = vadd.f32 %v5948, 0.5
  %v6074 = vadd.f32 %v5949, 0.5
  %v6075 = vadd.f32 %v5950, 0.5
  %v6076 = vadd.f32 %v5951, 0.5
  %v6077 = vadd.f32 %v5952, 0.5
  %v6078 = vadd.f32 %v5953, 0.5
  %v6079 = vadd.f32 %v5954, 0.5
  %v6080 = vadd.f32 %v5955, 0.5
  %v6081 = vadd.f32 %v5956, 0.5
  %v6082 = vld [vmem:[%s3] sm:$0xff]
  %v6083 = vld [vmem:[%s3 + $0x8] sm:$0xff]
  %v6084 = vld [vmem:[%s3 + $0x10] sm:$0xff]
  %v6085 = vld [vmem:[%s3 + $0x18] sm:$0xff]
  %v6086 = vld [vmem:[%s3 + $0x20] sm:$0xff]
  %v6087 = vld [vmem:[%s3 + $0x28] sm:$0xff]
  %v6088 = vld [vmem:[%s3 + $0x30] sm:$0xff]
  %v6089 = vld [vmem:[%s3 + $0x38] sm:$0xff]
  %v6090 = vld [vmem:[%s3 + $0x40] sm:$0xff]
  %v6091 = vld [vmem:[%s3 + $0x48] sm:$0xff]
  %v6092 = vld [vmem:[%s3 + $0x50] sm:$0xff]
  %v6093 = vld [vmem:[%s3 + $0x58] sm:$0xff]
  %v6094 = vld [vmem:[%s3 + $0x60] sm:$0xff]
  %v6095 = vld [vmem:[%s3 + $0x68] sm:$0xff]
  %v6096 = vld [vmem:[%s3 + $0x70] sm:$0xff]
  %v6097 = vld [vmem:[%s3 + $0x78] sm:$0xff]
  %v6098 = vld [vmem:[%s5] sm:$0x1]
  %v6100 = vlaneseq
  %v6101 = vshrl.u32 %v6100, 7
  %v6102 = vsub.s32 0, %v6101
  %v6103 = vrot.slane %v6098, %v6102
  %6105 = vmatprep.subr.mxu0 0.0
  %6106 = vmatpush1.msra.mxu0 %v6082
  %6107 = vmatprep.subr.mxu0 0.0
  %6108 = vmatpush1.msra.mxu0 %v6083
  %6109 = vmatprep.subr.mxu0 0.0
  %6110 = vmatpush1.msra.mxu0 %v6084
  %6111 = vmatprep.subr.mxu0 0.0
  %6112 = vmatpush1.msra.mxu0 %v6085
  %6113 = vmatprep.subr.mxu0 0.0
  %6114 = vmatpush1.msra.mxu0 %v6086
  %6115 = vmatprep.subr.mxu0 0.0
  %6116 = vmatpush1.msra.mxu0 %v6087
  %6117 = vmatprep.subr.mxu0 0.0
  %6118 = vmatpush1.msra.mxu0 %v6088
  %6119 = vmatprep.subr.mxu0 0.0
  %6120 = vmatpush1.msra.mxu0 %v6089
  %6121 = vmatprep.subr.mxu0 0.0
  %6122 = vmatpush1.msra.mxu0 %v6090
  %6123 = vmatprep.subr.mxu0 0.0
  %6124 = vmatpush1.msra.mxu0 %v6091
  %6125 = vmatprep.subr.mxu0 0.0
  %6126 = vmatpush1.msra.mxu0 %v6092
  %6127 = vmatprep.subr.mxu0 0.0
  %6128 = vmatpush1.msra.mxu0 %v6093
  %6129 = vmatprep.subr.mxu0 0.0
  %6130 = vmatpush1.msra.mxu0 %v6094
  %6131 = vmatprep.subr.mxu0 0.0
  %6132 = vmatpush1.msra.mxu0 %v6095
  %6133 = vmatprep.subr.mxu0 0.0
  %6134 = vmatpush1.msra.mxu0 %v6096
  %6135 = vmatprep.subr.mxu0 0.0
  %6136 = vmatpush1.msra.mxu0 %v6097
  %6137 = vmatprep.subr.mxu0 0.0
  %6138 = vmatpush1.msra.mxu0 0.0
  %6139 = vmatprep.subr.mxu0 0.0
  %6140 = vmatpush1.msra.mxu0 0.0
  %6141 = vmatprep.subr.mxu0 0.0
  %6142 = vmatpush1.msra.mxu0 0.0
  %6143 = vmatprep.subr.mxu0 0.0
  %6144 = vmatpush1.msra.mxu0 0.0
  %6145 = vmatprep.subr.mxu0 0.0
  %6146 = vmatpush1.msra.mxu0 0.0
  %6147 = vmatprep.subr.mxu0 0.0
  %6148 = vmatpush1.msra.mxu0 0.0
  %6149 = vmatprep.subr.mxu0 0.0
  %6150 = vmatpush1.msra.mxu0 0.0
  %6151 = vmatprep.subr.mxu0 0.0
  %6152 = vmatpush1.msra.mxu0 0.0
  %6153 = vmatprep.subr.mxu0 0.0
  %6154 = vmatpush1.msra.mxu0 0.0
  %6155 = vmatprep.subr.mxu0 0.0
  %6156 = vmatpush1.msra.mxu0 0.0
  %6157 = vmatprep.subr.mxu0 0.0
  %6158 = vmatpush1.msra.mxu0 0.0
  %6159 = vmatprep.subr.mxu0 0.0
  %6160 = vmatpush1.msra.mxu0 0.0
  %6161 = vmatprep.subr.mxu0 0.0
  %6162 = vmatpush1.msra.mxu0 0.0
  %6163 = vmatprep.subr.mxu0 0.0
  %6164 = vmatpush1.msra.mxu0 0.0
  %6165 = vmatprep.subr.mxu0 0.0
  %6166 = vmatpush1.msra.mxu0 0.0
  %6167 = vmatprep.subr.mxu0 0.0
  %6168 = vmatpush1.msra.mxu0 0.0
  %6169 = vmatprep.mubr.f32.mxu0 0.0
  %6170 = vmatmul.mubr.f32.gmra.mrb[0].mxu0 %v5957
  %v6171 = vpop.f32.mrb[0].mxu0
  %v6172 = vadd.f32 %v6103, %v6171
  %v6173 = vpop.f32.mrb[0].mxu0
  %6174 = vmatprep.mubr.f32.mxu0 0.0
  %6175 = vmatmul.mubr.f32.gmra.mrb[0].mxu0 %v5958
  %v6176 = vpop.f32.mrb[0].mxu0
  %v6177 = vadd.f32 %v6103, %v6176
  %v6178 = vpop.f32.mrb[0].mxu0
  %6179 = vmatprep.mubr.f32.mxu0 0.0
  %6180 = vmatmul.mubr.f32.gmra.mrb[0].mxu0 %v5959
  %v6181 = vpop.f32.mrb[0].mxu0
  %v6182 = vadd.f32 %v6103, %v6181
  %v6183 = vpop.f32.mrb[0].mxu0
  %6184 = vmatprep.mubr.f32.mxu0 0.0
  %6185 = vmatmul.mubr.f32.gmra.mrb[0].mxu0 %v5960
  %v6186 = vpop.f32.mrb[0].mxu0
  %v6187 = vadd.f32 %v6103, %v6186
  %v6188 = vpop.f32.mrb[0].mxu0
  %6189 = vmatprep.mubr.f32.mxu0 0.0
  %6190 = vmatmul.mubr.f32.gmra.mrb[0].mxu0 %v5961
  %v6191 = vpop.f32.mrb[0].mxu0
  %v6192 = vadd.f32 %v6103, %v6191
  %v6193 = vpop.f32.mrb[0].mxu0
  %6194 = vmatprep.mubr.f32.mxu0 0.0
  %6195 = vmatmul.mubr.f32.gmra.mrb[0].mxu0 %v5962
  %v6196 = vpop.f32.mrb[0].mxu0
  %v6197 = vadd.f32 %v6103, %v6196
  %v6198 = vpop.f32.mrb[0].mxu0
  %6199 = vmatprep.mubr.f32.mxu0 0.0
  %6200 = vmatmul.mubr.f32.gmra.mrb[0].mxu0 %v5963
  %v6201 = vpop.f32.mrb[0].mxu0
  %v6202 = vadd.f32 %v6103, %v6201
  %v6203 = vpop.f32.mrb[0].mxu0
  %6204 = vmatprep.mubr.f32.mxu0 0.0
  %6205 = vmatmul.mubr.f32.gmra.mrb[0].mxu0 %v5964
  %v6206 = vpop.f32.mrb[0].mxu0
  %v6207 = vadd.f32 %v6103, %v6206
  %v6208 = vpop.f32.mrb[0].mxu0
  %6209 = vmatprep.mubr.f32.mxu0 0.0
  %6210 = vmatmul.mubr.f32.gmra.mrb[0].mxu0 %v5965
  %v6211 = vpop.f32.mrb[0].mxu0
  %v6212 = vadd.f32 %v6103, %v6211
  %v6213 = vpop.f32.mrb[0].mxu0
  %6214 = vmatprep.mubr.f32.mxu0 0.0
  %6215 = vmatmul.mubr.f32.gmra.mrb[0].mxu0 %v5966
  %v6216 = vpop.f32.mrb[0].mxu0
  %v6217 = vadd.f32 %v6103, %v6216
  %v6218 = vpop.f32.mrb[0].mxu0
  %6219 = vmatprep.mubr.f32.mxu0 0.0
  %6220 = vmatmul.mubr.f32.gmra.mrb[0].mxu0 %v5967
  %v6221 = vpop.f32.mrb[0].mxu0
  %v6222 = vadd.f32 %v6103, %v6221
  %v6223 = vpop.f32.mrb[0].mxu0
  %6224 = vmatprep.mubr.f32.mxu0 0.0
  %6225 = vmatmul.mubr.f32.gmra.mrb[0].mxu0 %v5968
  %v6226 = vpop.f32.mrb[0].mxu0
  %v6227 = vadd.f32 %v6103, %v6226
  %v6228 = vpop.f32.mrb[0].mxu0
  %6229 = vmatprep.mubr.f32.mxu0 0.0
  %6230 = vmatmul.mubr.f32.gmra.mrb[0].mxu0 %v5969
  %v6231 = vpop.f32.mrb[0].mxu0
  %v6232 = vadd.f32 %v6103, %v6231
  %v6233 = vpop.f32.mrb[0].mxu0
  %6234 = vmatprep.mubr.f32.mxu0 0.0
  %6235 = vmatmul.mubr.f32.gmra.mrb[0].mxu0 %v5970
  %v6236 = vpop.f32.mrb[0].mxu0
  %v6237 = vadd.f32 %v6103, %v6236
  %v6238 = vpop.f32.mrb[0].mxu0
  %6239 = vmatprep.mubr.f32.mxu0 0.0
  %6240 = vmatmul.mubr.f32.gmra.mrb[0].mxu0 %v5971
  %v6241 = vpop.f32.mrb[0].mxu0
  %v6242 = vadd.f32 %v6103, %v6241
  %v6243 = vpop.f32.mrb[0].mxu0
  %6244 = vmatprep.mubr.f32.mxu0 0.0
  %6245 = vmatmul.mubr.f32.gmra.mrb[0].mxu0 %v5972
  %v6246 = vpop.f32.mrb[0].mxu0
  %v6247 = vadd.f32 %v6103, %v6246
  %v6248 = vpop.f32.mrb[0].mxu0
  %6249 = vmatprep.mubr.f32.mxu0 0.0
  %6250 = vmatmul.mubr.f32.gmra.mrb[0].mxu0 %v5973
  %v6251 = vpop.f32.mrb[0].mxu0
  %v6252 = vadd.f32 %v6103, %v6251
  %v6253 = vpop.f32.mrb[0].mxu0
  %6254 = vmatprep.mubr.f32.mxu0 0.0
  %6255 = vmatmul.mubr.f32.gmra.mrb[0].mxu0 %v5974
  %v6256 = vpop.f32.mrb[0].mxu0
  %v6257 = vadd.f32 %v6103, %v6256
  %v6258 = vpop.f32.mrb[0].mxu0
  %6259 = vmatprep.mubr.f32.mxu0 0.0
  %6260 = vmatmul.mubr.f32.gmra.mrb[0].mxu0 %v5975
  %v6261 = vpop.f32.mrb[0].mxu0
  %v6262 = vadd.f32 %v6103, %v6261
  %v6263 = vpop.f32.mrb[0].mxu0
  %6264 = vmatprep.mubr.f32.mxu0 0.0
  %6265 = vmatmul.mubr.f32.gmra.mrb[0].mxu0 %v5976
  %v6266 = vpop.f32.mrb[0].mxu0
  %v6267 = vadd.f32 %v6103, %v6266
  %v6268 = vpop.f32.mrb[0].mxu0
  %6269 = vmatprep.mubr.f32.mxu0 0.0
  %6270 = vmatmul.mubr.f32.gmra.mrb[0].mxu0 %v5977
  %v6271 = vpop.f32.mrb[0].mxu0
  %v6272 = vadd.f32 %v6103, %v6271
  %v6273 = vpop.f32.mrb[0].mxu0
  %6274 = vmatprep.mubr.f32.mxu0 0.0
  %6275 = vmatmul.mubr.f32.gmra.mrb[0].mxu0 %v5978
  %v6276 = vpop.f32.mrb[0].mxu0
  %v6277 = vadd.f32 %v6103, %v6276
  %v6278 = vpop.f32.mrb[0].mxu0
  %6279 = vmatprep.mubr.f32.mxu0 0.0
  %6280 = vmatmul.mubr.f32.gmra.mrb[0].mxu0 %v5979
  %v6281 = vpop.f32.mrb[0].mxu0
  %v6282 = vadd.f32 %v6103, %v6281
  %v6283 = vpop.f32.mrb[0].mxu0
  %6284 = vmatprep.mubr.f32.mxu0 0.0
  %6285 = vmatmul.mubr.f32.gmra.mrb[0].mxu0 %v5980
  %v6286 = vpop.f32.mrb[0].mxu0
  %v6287 = vadd.f32 %v6103, %v6286
  %v6288 = vpop.f32.mrb[0].mxu0
  %6289 = vmatprep.mubr.f32.mxu0 0.0
  %6290 = vmatmul.mubr.f32.gmra.mrb[0].mxu0 %v5981
  %v6291 = vpop.f32.mrb[0].mxu0
  %v6292 = vadd.f32 %v6103, %v6291
  %v6293 = vpop.f32.mrb[0].mxu0
  %6294 = vmatprep.mubr.f32.mxu0 0.0
  %6295 = vmatmul.mubr.f32.gmra.mrb[0].mxu0 %v5982
  %v6296 = vpop.f32.mrb[0].mxu0
  %v6297 = vadd.f32 %v6103, %v6296
  %v6298 = vpop.f32.mrb[0].mxu0
  %6299 = vmatprep.mubr.f32.mxu0 0.0
  %6300 = vmatmul.mubr.f32.gmra.mrb[0].mxu0 %v5983
  %v6301 = vpop.f32.mrb[0].mxu0
  %v6302 = vadd.f32 %v6103, %v6301
  %v6303 = vpop.f32.mrb[0].mxu0
  %6304 = vmatprep.mubr.f32.mxu0 0.0
  %6305 = vmatmul.mubr.f32.gmra.mrb[0].mxu0 %v5984
  %v6306 = vpop.f32.mrb[0].mxu0
  %v6307 = vadd.f32 %v6103, %v6306
  %v6308 = vpop.f32.mrb[0].mxu0
  %6309 = vmatprep.mubr.f32.mxu0 0.0
  %6310 = vmatmul.mubr.f32.gmra.mrb[0].mxu0 %v5985
  %v6311 = vpop.f32.mrb[0].mxu0
  %v6312 = vadd.f32 %v6103, %v6311
  %v6313 = vpop.f32.mrb[0].mxu0
  %6314 = vmatprep.mubr.f32.mxu0 0.0
  %6315 = vmatmul.mubr.f32.gmra.mrb[0].mxu0 %v5986
  %v6316 = vpop.f32.mrb[0].mxu0
  %v6317 = vadd.f32 %v6103, %v6316
  %v6318 = vpop.f32.mrb[0].mxu0
  %6319 = vmatprep.mubr.f32.mxu0 0.0
  %6320 = vmatmul.mubr.f32.gmra.mrb[0].mxu0 %v5987
  %v6321 = vpop.f32.mrb[0].mxu0
  %v6322 = vadd.f32 %v6103, %v6321
  %v6323 = vpop.f32.mrb[0].mxu0
  %6324 = vmatprep.mubr.f32.mxu0 0.0
  %6325 = vmatmul.mubr.f32.gmra.mrb[0].mxu0 %v5988
  %v6326 = vpop.f32.mrb[0].mxu0
  %v6327 = vadd.f32 %v6103, %v6326
  %v6328 = vpop.f32.mrb[0].mxu0
  %6329 = vmatprep.mubr.f32.mxu0 0.0
  %6330 = vmatmul.mubr.f32.gmra.mrb[0].mxu0 %v5989
  %v6331 = vpop.f32.mrb[0].mxu0
  %v6332 = vadd.f32 %v6103, %v6331
  %v6333 = vpop.f32.mrb[0].mxu0
  %6334 = vmatprep.mubr.f32.mxu0 0.0
  %6335 = vmatmul.mubr.f32.gmra.mrb[0].mxu0 %v5990
  %v6336 = vpop.f32.mrb[0].mxu0
  %v6337 = vadd.f32 %v6103, %v6336
  %v6338 = vpop.f32.mrb[0].mxu0
  %6339 = vmatprep.mubr.f32.mxu0 0.0
  %6340 = vmatmul.mubr.f32.gmra.mrb[0].mxu0 %v5991
  %v6341 = vpop.f32.mrb[0].mxu0
  %v6342 = vadd.f32 %v6103, %v6341
  %v6343 = vpop.f32.mrb[0].mxu0
  %6344 = vmatprep.mubr.f32.mxu0 0.0
  %6345 = vmatmul.mubr.f32.gmra.mrb[0].mxu0 %v5992
  %v6346 = vpop.f32.mrb[0].mxu0
  %v6347 = vadd.f32 %v6103, %v6346
  %v6348 = vpop.f32.mrb[0].mxu0
  %6349 = vmatprep.mubr.f32.mxu0 0.0
  %6350 = vmatmul.mubr.f32.gmra.mrb[0].mxu0 %v5993
  %v6351 = vpop.f32.mrb[0].mxu0
  %v6352 = vadd.f32 %v6103, %v6351
  %v6353 = vpop.f32.mrb[0].mxu0
  %6354 = vmatprep.mubr.f32.mxu0 0.0
  %6355 = vmatmul.mubr.f32.gmra.mrb[0].mxu0 %v5994
  %v6356 = vpop.f32.mrb[0].mxu0
  %v6357 = vadd.f32 %v6103, %v6356
  %v6358 = vpop.f32.mrb[0].mxu0
  %6359 = vmatprep.mubr.f32.mxu0 0.0
  %6360 = vmatmul.mubr.f32.gmra.mrb[0].mxu0 %v5995
  %v6361 = vpop.f32.mrb[0].mxu0
  %v6362 = vadd.f32 %v6103, %v6361
  %v6363 = vpop.f32.mrb[0].mxu0
  %6364 = vmatprep.mubr.f32.mxu0 0.0
  %6365 = vmatmul.mubr.f32.gmra.mrb[0].mxu0 %v5996
  %v6366 = vpop.f32.mrb[0].mxu0
  %v6367 = vadd.f32 %v6103, %v6366
  %v6368 = vpop.f32.mrb[0].mxu0
  %6369 = vmatprep.mubr.f32.mxu0 0.0
  %6370 = vmatmul.mubr.f32.gmra.mrb[0].mxu0 %v5997
  %v6371 = vpop.f32.mrb[0].mxu0
  %v6372 = vadd.f32 %v6103, %v6371
  %v6373 = vpop.f32.mrb[0].mxu0
  %6374 = vmatprep.mubr.f32.mxu0 0.0
  %6375 = vmatmul.mubr.f32.gmra.mrb[0].mxu0 %v5998
  %v6376 = vpop.f32.mrb[0].mxu0
  %v6377 = vadd.f32 %v6103, %v6376
  %v6378 = vpop.f32.mrb[0].mxu0
  %6379 = vmatprep.mubr.f32.mxu0 0.0
  %6380 = vmatmul.mubr.f32.gmra.mrb[0].mxu0 %v5999
  %v6381 = vpop.f32.mrb[0].mxu0
  %v6382 = vadd.f32 %v6103, %v6381
  %v6383 = vpop.f32.mrb[0].mxu0
  %6384 = vmatprep.mubr.f32.mxu0 0.0
  %6385 = vmatmul.mubr.f32.gmra.mrb[0].mxu0 %v6000
  %v6386 = vpop.f32.mrb[0].mxu0
  %v6387 = vadd.f32 %v6103, %v6386
  %v6388 = vpop.f32.mrb[0].mxu0
  %6389 = vmatprep.mubr.f32.mxu0 0.0
  %6390 = vmatmul.mubr.f32.gmra.mrb[0].mxu0 %v6001
  %v6391 = vpop.f32.mrb[0].mxu0
  %v6392 = vadd.f32 %v6103, %v6391
  %v6393 = vpop.f32.mrb[0].mxu0
  %6394 = vmatprep.mubr.f32.mxu0 0.0
  %6395 = vmatmul.mubr.f32.gmra.mrb[0].mxu0 %v6002
  %v6396 = vpop.f32.mrb[0].mxu0
  %v6397 = vadd.f32 %v6103, %v6396
  %v6398 = vpop.f32.mrb[0].mxu0
  %6399 = vmatprep.mubr.f32.mxu0 0.0
  %6400 = vmatmul.mubr.f32.gmra.mrb[0].mxu0 %v6003
  %v6401 = vpop.f32.mrb[0].mxu0
  %v6402 = vadd.f32 %v6103, %v6401
  %v6403 = vpop.f32.mrb[0].mxu0
  %6404 = vmatprep.mubr.f32.mxu0 0.0
  %6405 = vmatmul.mubr.f32.gmra.mrb[0].mxu0 %v6004
  %v6406 = vpop.f32.mrb[0].mxu0
  %v6407 = vadd.f32 %v6103, %v6406
  %v6408 = vpop.f32.mrb[0].mxu0
  %6409 = vmatprep.mubr.f32.mxu0 0.0
  %6410 = vmatmul.mubr.f32.gmra.mrb[0].mxu0 %v6005
  %v6411 = vpop.f32.mrb[0].mxu0
  %v6412 = vadd.f32 %v6103, %v6411
  %v6413 = vpop.f32.mrb[0].mxu0
  %6414 = vmatprep.mubr.f32.mxu0 0.0
  %6415 = vmatmul.mubr.f32.gmra.mrb[0].mxu0 %v6006
  %v6416 = vpop.f32.mrb[0].mxu0
  %v6417 = vadd.f32 %v6103, %v6416
  %v6418 = vpop.f32.mrb[0].mxu0
  %6419 = vmatprep.mubr.f32.mxu0 0.0
  %6420 = vmatmul.mubr.f32.gmra.mrb[0].mxu0 %v6007
  %v6421 = vpop.f32.mrb[0].mxu0
  %v6422 = vadd.f32 %v6103, %v6421
  %v6423 = vpop.f32.mrb[0].mxu0
  %6424 = vmatprep.mubr.f32.mxu0 0.0
  %6425 = vmatmul.mubr.f32.gmra.mrb[0].mxu0 %v6008
  %v6426 = vpop.f32.mrb[0].mxu0
  %v6427 = vadd.f32 %v6103, %v6426
  %v6428 = vpop.f32.mrb[0].mxu0
  %6429 = vmatprep.mubr.f32.mxu0 0.0
  %6430 = vmatmul.mubr.f32.gmra.mrb[0].mxu0 %v6009
  %v6431 = vpop.f32.mrb[0].mxu0
  %v6432 = vadd.f32 %v6103, %v6431
  %v6433 = vpop.f32.mrb[0].mxu0
  %6434 = vmatprep.mubr.f32.mxu0 0.0
  %6435 = vmatmul.mubr.f32.gmra.mrb[0].mxu0 %v6010
  %v6436 = vpop.f32.mrb[0].mxu0
  %v6437 = vadd.f32 %v6103, %v6436
  %v6438 = vpop.f32.mrb[0].mxu0
  %6439 = vmatprep.mubr.f32.mxu0 0.0
  %6440 = vmatmul.mubr.f32.gmra.mrb[0].mxu0 %v6011
  %v6441 = vpop.f32.mrb[0].mxu0
  %v6442 = vadd.f32 %v6103, %v6441
  %v6443 = vpop.f32.mrb[0].mxu0
  %6444 = vmatprep.mubr.f32.mxu0 0.0
  %6445 = vmatmul.mubr.f32.gmra.mrb[0].mxu0 %v6012
  %v6446 = vpop.f32.mrb[0].mxu0
  %v6447 = vadd.f32 %v6103, %v6446
  %v6448 = vpop.f32.mrb[0].mxu0
  %6449 = vmatprep.mubr.f32.mxu0 0.0
  %6450 = vmatmul.mubr.f32.gmra.mrb[0].mxu0 %v6013
  %v6451 = vpop.f32.mrb[0].mxu0
  %v6452 = vadd.f32 %v6103, %v6451
  %v6453 = vpop.f32.mrb[0].mxu0
  %6454 = vmatprep.mubr.f32.mxu0 0.0
  %6455 = vmatmul.mubr.f32.gmra.mrb[0].mxu0 %v6014
  %v6456 = vpop.f32.mrb[0].mxu0
  %v6457 = vadd.f32 %v6103, %v6456
  %v6458 = vpop.f32.mrb[0].mxu0
  %6459 = vmatprep.mubr.f32.mxu0 0.0
  %6460 = vmatmul.mubr.f32.gmra.mrb[0].mxu0 %v6015
  %v6461 = vpop.f32.mrb[0].mxu0
  %v6462 = vadd.f32 %v6103, %v6461
  %v6463 = vpop.f32.mrb[0].mxu0
  %6464 = vmatprep.mubr.f32.mxu0 0.0
  %6465 = vmatmul.mubr.f32.gmra.mrb[0].mxu0 %v6016
  %v6466 = vpop.f32.mrb[0].mxu0
  %v6467 = vadd.f32 %v6103, %v6466
  %v6468 = vpop.f32.mrb[0].mxu0
  %6469 = vmatprep.mubr.f32.mxu0 0.0
  %6470 = vmatmul.mubr.f32.gmra.mrb[0].mxu0 %v6017
  %v6471 = vpop.f32.mrb[0].mxu0
  %v6472 = vadd.f32 %v6103, %v6471
  %v6473 = vpop.f32.mrb[0].mxu0
  %6474 = vmatprep.mubr.f32.mxu0 0.0
  %6475 = vmatmul.mubr.f32.gmra.mrb[0].mxu0 %v6018
  %v6476 = vpop.f32.mrb[0].mxu0
  %v6477 = vadd.f32 %v6103, %v6476
  %v6478 = vpop.f32.mrb[0].mxu0
  %6479 = vmatprep.mubr.f32.mxu0 0.0
  %6480 = vmatmul.mubr.f32.gmra.mrb[0].mxu0 %v6019
  %v6481 = vpop.f32.mrb[0].mxu0
  %v6482 = vadd.f32 %v6103, %v6481
  %v6483 = vpop.f32.mrb[0].mxu0
  %6484 = vmatprep.mubr.f32.mxu0 0.0
  %6485 = vmatmul.mubr.f32.gmra.mrb[0].mxu0 %v6020
  %v6486 = vpop.f32.mrb[0].mxu0
  %v6487 = vadd.f32 %v6103, %v6486
  %v6488 = vpop.f32.mrb[0].mxu0
  %6489 = vmatprep.mubr.f32.mxu0 0.0
  %6490 = vmatmul.mubr.f32.gmra.mrb[0].mxu0 %v6021
  %v6491 = vpop.f32.mrb[0].mxu0
  %v6492 = vadd.f32 %v6103, %v6491
  %v6493 = vpop.f32.mrb[0].mxu0
  %6494 = vmatprep.mubr.f32.mxu0 0.0
  %6495 = vmatmul.mubr.f32.gmra.mrb[0].mxu0 %v6022
  %v6496 = vpop.f32.mrb[0].mxu0
  %v6497 = vadd.f32 %v6103, %v6496
  %v6498 = vpop.f32.mrb[0].mxu0
  %6499 = vmatprep.mubr.f32.mxu0 0.0
  %6500 = vmatmul.mubr.f32.gmra.mrb[0].mxu0 %v6023
  %v6501 = vpop.f32.mrb[0].mxu0
  %v6502 = vadd.f32 %v6103, %v6501
  %v6503 = vpop.f32.mrb[0].mxu0
  %6504 = vmatprep.mubr.f32.mxu0 0.0
  %6505 = vmatmul.mubr.f32.gmra.mrb[0].mxu0 %v6024
  %v6506 = vpop.f32.mrb[0].mxu0
  %v6507 = vadd.f32 %v6103, %v6506
  %v6508 = vpop.f32.mrb[0].mxu0
  %6509 = vmatprep.mubr.f32.mxu0 0.0
  %6510 = vmatmul.mubr.f32.gmra.mrb[0].mxu0 %v6025
  %v6511 = vpop.f32.mrb[0].mxu0
  %v6512 = vadd.f32 %v6103, %v6511
  %v6513 = vpop.f32.mrb[0].mxu0
  %6514 = vmatprep.mubr.f32.mxu0 0.0
  %6515 = vmatmul.mubr.f32.gmra.mrb[0].mxu0 %v6026
  %v6516 = vpop.f32.mrb[0].mxu0
  %v6517 = vadd.f32 %v6103, %v6516
  %v6518 = vpop.f32.mrb[0].mxu0
  %6519 = vmatprep.mubr.f32.mxu0 0.0
  %6520 = vmatmul.mubr.f32.gmra.mrb[0].mxu0 %v6027
  %v6521 = vpop.f32.mrb[0].mxu0
  %v6522 = vadd.f32 %v6103, %v6521
  %v6523 = vpop.f32.mrb[0].mxu0
  %6524 = vmatprep.mubr.f32.mxu0 0.0
  %6525 = vmatmul.mubr.f32.gmra.mrb[0].mxu0 %v6028
  %v6526 = vpop.f32.mrb[0].mxu0
  %v6527 = vadd.f32 %v6103, %v6526
  %v6528 = vpop.f32.mrb[0].mxu0
  %6529 = vmatprep.mubr.f32.mxu0 0.0
  %6530 = vmatmul.mubr.f32.gmra.mrb[0].mxu0 %v6029
  %v6531 = vpop.f32.mrb[0].mxu0
  %v6532 = vadd.f32 %v6103, %v6531
  %v6533 = vpop.f32.mrb[0].mxu0
  %6534 = vmatprep.mubr.f32.mxu0 0.0
  %6535 = vmatmul.mubr.f32.gmra.mrb[0].mxu0 %v6030
  %v6536 = vpop.f32.mrb[0].mxu0
  %v6537 = vadd.f32 %v6103, %v6536
  %v6538 = vpop.f32.mrb[0].mxu0
  %6539 = vmatprep.mubr.f32.mxu0 0.0
  %6540 = vmatmul.mubr.f32.gmra.mrb[0].mxu0 %v6031
  %v6541 = vpop.f32.mrb[0].mxu0
  %v6542 = vadd.f32 %v6103, %v6541
  %v6543 = vpop.f32.mrb[0].mxu0
  %6544 = vmatprep.mubr.f32.mxu0 0.0
  %6545 = vmatmul.mubr.f32.gmra.mrb[0].mxu0 %v6032
  %v6546 = vpop.f32.mrb[0].mxu0
  %v6547 = vadd.f32 %v6103, %v6546
  %v6548 = vpop.f32.mrb[0].mxu0
  %6549 = vmatprep.mubr.f32.mxu0 0.0
  %6550 = vmatmul.mubr.f32.gmra.mrb[0].mxu0 %v6033
  %v6551 = vpop.f32.mrb[0].mxu0
  %v6552 = vadd.f32 %v6103, %v6551
  %v6553 = vpop.f32.mrb[0].mxu0
  %6554 = vmatprep.mubr.f32.mxu0 0.0
  %6555 = vmatmul.mubr.f32.gmra.mrb[0].mxu0 %v6034
  %v6556 = vpop.f32.mrb[0].mxu0
  %v6557 = vadd.f32 %v6103, %v6556
  %v6558 = vpop.f32.mrb[0].mxu0
  %6559 = vmatprep.mubr.f32.mxu0 0.0
  %6560 = vmatmul.mubr.f32.gmra.mrb[0].mxu0 %v6035
  %v6561 = vpop.f32.mrb[0].mxu0
  %v6562 = vadd.f32 %v6103, %v6561
  %v6563 = vpop.f32.mrb[0].mxu0
  %6564 = vmatprep.mubr.f32.mxu0 0.0
  %6565 = vmatmul.mubr.f32.gmra.mrb[0].mxu0 %v6036
  %v6566 = vpop.f32.mrb[0].mxu0
  %v6567 = vadd.f32 %v6103, %v6566
  %v6568 = vpop.f32.mrb[0].mxu0
  %6569 = vmatprep.mubr.f32.mxu0 0.0
  %6570 = vmatmul.mubr.f32.gmra.mrb[0].mxu0 %v6037
  %v6571 = vpop.f32.mrb[0].mxu0
  %v6572 = vadd.f32 %v6103, %v6571
  %v6573 = vpop.f32.mrb[0].mxu0
  %6574 = vmatprep.mubr.f32.mxu0 0.0
  %6575 = vmatmul.mubr.f32.gmra.mrb[0].mxu0 %v6038
  %v6576 = vpop.f32.mrb[0].mxu0
  %v6577 = vadd.f32 %v6103, %v6576
  %v6578 = vpop.f32.mrb[0].mxu0
  %6579 = vmatprep.mubr.f32.mxu0 0.0
  %6580 = vmatmul.mubr.f32.gmra.mrb[0].mxu0 %v6039
  %v6581 = vpop.f32.mrb[0].mxu0
  %v6582 = vadd.f32 %v6103, %v6581
  %v6583 = vpop.f32.mrb[0].mxu0
  %6584 = vmatprep.mubr.f32.mxu0 0.0
  %6585 = vmatmul.mubr.f32.gmra.mrb[0].mxu0 %v6040
  %v6586 = vpop.f32.mrb[0].mxu0
  %v6587 = vadd.f32 %v6103, %v6586
  %v6588 = vpop.f32.mrb[0].mxu0
  %6589 = vmatprep.mubr.f32.mxu0 0.0
  %6590 = vmatmul.mubr.f32.gmra.mrb[0].mxu0 %v6041
  %v6591 = vpop.f32.mrb[0].mxu0
  %v6592 = vadd.f32 %v6103, %v6591
  %v6593 = vpop.f32.mrb[0].mxu0
  %6594 = vmatprep.mubr.f32.mxu0 0.0
  %6595 = vmatmul.mubr.f32.gmra.mrb[0].mxu0 %v6042
  %v6596 = vpop.f32.mrb[0].mxu0
  %v6597 = vadd.f32 %v6103, %v6596
  %v6598 = vpop.f32.mrb[0].mxu0
  %6599 = vmatprep.mubr.f32.mxu0 0.0
  %6600 = vmatmul.mubr.f32.gmra.mrb[0].mxu0 %v6043
  %v6601 = vpop.f32.mrb[0].mxu0
  %v6602 = vadd.f32 %v6103, %v6601
  %v6603 = vpop.f32.mrb[0].mxu0
  %6604 = vmatprep.mubr.f32.mxu0 0.0
  %6605 = vmatmul.mubr.f32.gmra.mrb[0].mxu0 %v6044
  %v6606 = vpop.f32.mrb[0].mxu0
  %v6607 = vadd.f32 %v6103, %v6606
  %v6608 = vpop.f32.mrb[0].mxu0
  %6609 = vmatprep.mubr.f32.mxu0 0.0
  %6610 = vmatmul.mubr.f32.gmra.mrb[0].mxu0 %v6045
  %v6611 = vpop.f32.mrb[0].mxu0
  %v6612 = vadd.f32 %v6103, %v6611
  %v6613 = vpop.f32.mrb[0].mxu0
  %6614 = vmatprep.mubr.f32.mxu0 0.0
  %6615 = vmatmul.mubr.f32.gmra.mrb[0].mxu0 %v6046
  %v6616 = vpop.f32.mrb[0].mxu0
  %v6617 = vadd.f32 %v6103, %v6616
  %v6618 = vpop.f32.mrb[0].mxu0
  %6619 = vmatprep.mubr.f32.mxu0 0.0
  %6620 = vmatmul.mubr.f32.gmra.mrb[0].mxu0 %v6047
  %v6621 = vpop.f32.mrb[0].mxu0
  %v6622 = vadd.f32 %v6103, %v6621
  %v6623 = vpop.f32.mrb[0].mxu0
  %6624 = vmatprep.mubr.f32.mxu0 0.0
  %6625 = vmatmul.mubr.f32.gmra.mrb[0].mxu0 %v6048
  %v6626 = vpop.f32.mrb[0].mxu0
  %v6627 = vadd.f32 %v6103, %v6626
  %v6628 = vpop.f32.mrb[0].mxu0
  %6629 = vmatprep.mubr.f32.mxu0 0.0
  %6630 = vmatmul.mubr.f32.gmra.mrb[0].mxu0 %v6049
  %v6631 = vpop.f32.mrb[0].mxu0
  %v6632 = vadd.f32 %v6103, %v6631
  %v6633 = vpop.f32.mrb[0].mxu0
  %6634 = vmatprep.mubr.f32.mxu0 0.0
  %6635 = vmatmul.mubr.f32.gmra.mrb[0].mxu0 %v6050
  %v6636 = vpop.f32.mrb[0].mxu0
  %v6637 = vadd.f32 %v6103, %v6636
  %v6638 = vpop.f32.mrb[0].mxu0
  %6639 = vmatprep.mubr.f32.mxu0 0.0
  %6640 = vmatmul.mubr.f32.gmra.mrb[0].mxu0 %v6051
  %v6641 = vpop.f32.mrb[0].mxu0
  %v6642 = vadd.f32 %v6103, %v6641
  %v6643 = vpop.f32.mrb[0].mxu0
  %6644 = vmatprep.mubr.f32.mxu0 0.0
  %6645 = vmatmul.mubr.f32.gmra.mrb[0].mxu0 %v6052
  %v6646 = vpop.f32.mrb[0].mxu0
  %v6647 = vadd.f32 %v6103, %v6646
  %v6648 = vpop.f32.mrb[0].mxu0
  %6649 = vmatprep.mubr.f32.mxu0 0.0
  %6650 = vmatmul.mubr.f32.gmra.mrb[0].mxu0 %v6053
  %v6651 = vpop.f32.mrb[0].mxu0
  %v6652 = vadd.f32 %v6103, %v6651
  %v6653 = vpop.f32.mrb[0].mxu0
  %6654 = vmatprep.mubr.f32.mxu0 0.0
  %6655 = vmatmul.mubr.f32.gmra.mrb[0].mxu0 %v6054
  %v6656 = vpop.f32.mrb[0].mxu0
  %v6657 = vadd.f32 %v6103, %v6656
  %v6658 = vpop.f32.mrb[0].mxu0
  %6659 = vmatprep.mubr.f32.mxu0 0.0
  %6660 = vmatmul.mubr.f32.gmra.mrb[0].mxu0 %v6055
  %v6661 = vpop.f32.mrb[0].mxu0
  %v6662 = vadd.f32 %v6103, %v6661
  %v6663 = vpop.f32.mrb[0].mxu0
  %6664 = vmatprep.mubr.f32.mxu0 0.0
  %6665 = vmatmul.mubr.f32.gmra.mrb[0].mxu0 %v6056
  %v6666 = vpop.f32.mrb[0].mxu0
  %v6667 = vadd.f32 %v6103, %v6666
  %v6668 = vpop.f32.mrb[0].mxu0
  %6669 = vmatprep.mubr.f32.mxu0 0.0
  %6670 = vmatmul.mubr.f32.gmra.mrb[0].mxu0 %v6057
  %v6671 = vpop.f32.mrb[0].mxu0
  %v6672 = vadd.f32 %v6103, %v6671
  %v6673 = vpop.f32.mrb[0].mxu0
  %6674 = vmatprep.mubr.f32.mxu0 0.0
  %6675 = vmatmul.mubr.f32.gmra.mrb[0].mxu0 %v6058
  %v6676 = vpop.f32.mrb[0].mxu0
  %v6677 = vadd.f32 %v6103, %v6676
  %v6678 = vpop.f32.mrb[0].mxu0
  %6679 = vmatprep.mubr.f32.mxu0 0.0
  %6680 = vmatmul.mubr.f32.gmra.mrb[0].mxu0 %v6059
  %v6681 = vpop.f32.mrb[0].mxu0
  %v6682 = vadd.f32 %v6103, %v6681
  %v6683 = vpop.f32.mrb[0].mxu0
  %6684 = vmatprep.mubr.f32.mxu0 0.0
  %6685 = vmatmul.mubr.f32.gmra.mrb[0].mxu0 %v6060
  %v6686 = vpop.f32.mrb[0].mxu0
  %v6687 = vadd.f32 %v6103, %v6686
  %v6688 = vpop.f32.mrb[0].mxu0
  %6689 = vmatprep.mubr.f32.mxu0 0.0
  %6690 = vmatmul.mubr.f32.gmra.mrb[0].mxu0 %v6061
  %v6691 = vpop.f32.mrb[0].mxu0
  %v6692 = vadd.f32 %v6103, %v6691
  %v6693 = vpop.f32.mrb[0].mxu0
  %6694 = vmatprep.mubr.f32.mxu0 0.0
  %6695 = vmatmul.mubr.f32.gmra.mrb[0].mxu0 %v6062
  %v6696 = vpop.f32.mrb[0].mxu0
  %v6697 = vadd.f32 %v6103, %v6696
  %v6698 = vpop.f32.mrb[0].mxu0
  %6699 = vmatprep.mubr.f32.mxu0 0.0
  %6700 = vmatmul.mubr.f32.gmra.mrb[0].mxu0 %v6063
  %v6701 = vpop.f32.mrb[0].mxu0
  %v6702 = vadd.f32 %v6103, %v6701
  %v6703 = vpop.f32.mrb[0].mxu0
  %6704 = vmatprep.mubr.f32.mxu0 0.0
  %6705 = vmatmul.mubr.f32.gmra.mrb[0].mxu0 %v6064
  %v6706 = vpop.f32.mrb[0].mxu0
  %v6707 = vadd.f32 %v6103, %v6706
  %v6708 = vpop.f32.mrb[0].mxu0
  %6709 = vmatprep.mubr.f32.mxu0 0.0
  %6710 = vmatmul.mubr.f32.gmra.mrb[0].mxu0 %v6065
  %v6711 = vpop.f32.mrb[0].mxu0
  %v6712 = vadd.f32 %v6103, %v6711
  %v6713 = vpop.f32.mrb[0].mxu0
  %6714 = vmatprep.mubr.f32.mxu0 0.0
  %6715 = vmatmul.mubr.f32.gmra.mrb[0].mxu0 %v6066
  %v6716 = vpop.f32.mrb[0].mxu0
  %v6717 = vadd.f32 %v6103, %v6716
  %v6718 = vpop.f32.mrb[0].mxu0
  %6719 = vmatprep.mubr.f32.mxu0 0.0
  %6720 = vmatmul.mubr.f32.gmra.mrb[0].mxu0 %v6067
  %v6721 = vpop.f32.mrb[0].mxu0
  %v6722 = vadd.f32 %v6103, %v6721
  %v6723 = vpop.f32.mrb[0].mxu0
  %6724 = vmatprep.mubr.f32.mxu0 0.0
  %6725 = vmatmul.mubr.f32.gmra.mrb[0].mxu0 %v6068
  %v6726 = vpop.f32.mrb[0].mxu0
  %v6727 = vadd.f32 %v6103, %v6726
  %v6728 = vpop.f32.mrb[0].mxu0
  %6729 = vmatprep.mubr.f32.mxu0 0.0
  %6730 = vmatmul.mubr.f32.gmra.mrb[0].mxu0 %v6069
  %v6731 = vpop.f32.mrb[0].mxu0
  %v6732 = vadd.f32 %v6103, %v6731
  %v6733 = vpop.f32.mrb[0].mxu0
  %6734 = vmatprep.mubr.f32.mxu0 0.0
  %6735 = vmatmul.mubr.f32.gmra.mrb[0].mxu0 %v6070
  %v6736 = vpop.f32.mrb[0].mxu0
  %v6737 = vadd.f32 %v6103, %v6736
  %v6738 = vpop.f32.mrb[0].mxu0
  %6739 = vmatprep.mubr.f32.mxu0 0.0
  %6740 = vmatmul.mubr.f32.gmra.mrb[0].mxu0 %v6071
  %v6741 = vpop.f32.mrb[0].mxu0
  %v6742 = vadd.f32 %v6103, %v6741
  %v6743 = vpop.f32.mrb[0].mxu0
  %6744 = vmatprep.mubr.f32.mxu0 0.0
  %6745 = vmatmul.mubr.f32.gmra.mrb[0].mxu0 %v6072
  %v6746 = vpop.f32.mrb[0].mxu0
  %v6747 = vadd.f32 %v6103, %v6746
  %v6748 = vpop.f32.mrb[0].mxu0
  %6749 = vmatprep.mubr.f32.mxu0 0.0
  %6750 = vmatmul.mubr.f32.gmra.mrb[0].mxu0 %v6073
  %v6751 = vpop.f32.mrb[0].mxu0
  %v6752 = vadd.f32 %v6103, %v6751
  %v6753 = vpop.f32.mrb[0].mxu0
  %6754 = vmatprep.mubr.f32.mxu0 0.0
  %6755 = vmatmul.mubr.f32.gmra.mrb[0].mxu0 %v6074
  %v6756 = vpop.f32.mrb[0].mxu0
  %v6757 = vadd.f32 %v6103, %v6756
  %v6758 = vpop.f32.mrb[0].mxu0
  %6759 = vmatprep.mubr.f32.mxu0 0.0
  %6760 = vmatmul.mubr.f32.gmra.mrb[0].mxu0 %v6075
  %v6761 = vpop.f32.mrb[0].mxu0
  %v6762 = vadd.f32 %v6103, %v6761
  %v6763 = vpop.f32.mrb[0].mxu0
  %6764 = vmatprep.mubr.f32.mxu0 0.0
  %6765 = vmatmul.mubr.f32.gmra.mrb[0].mxu0 %v6076
  %v6766 = vpop.f32.mrb[0].mxu0
  %v6767 = vadd.f32 %v6103, %v6766
  %v6768 = vpop.f32.mrb[0].mxu0
  %6769 = vmatprep.mubr.f32.mxu0 0.0
  %6770 = vmatmul.mubr.f32.gmra.mrb[0].mxu0 %v6077
  %v6771 = vpop.f32.mrb[0].mxu0
  %v6772 = vadd.f32 %v6103, %v6771
  %v6773 = vpop.f32.mrb[0].mxu0
  %6774 = vmatprep.mubr.f32.mxu0 0.0
  %6775 = vmatmul.mubr.f32.gmra.mrb[0].mxu0 %v6078
  %v6776 = vpop.f32.mrb[0].mxu0
  %v6777 = vadd.f32 %v6103, %v6776
  %v6778 = vpop.f32.mrb[0].mxu0
  %6779 = vmatprep.mubr.f32.mxu0 0.0
  %6780 = vmatmul.mubr.f32.gmra.mrb[0].mxu0 %v6079
  %v6781 = vpop.f32.mrb[0].mxu0
  %v6782 = vadd.f32 %v6103, %v6781
  %v6783 = vpop.f32.mrb[0].mxu0
  %6784 = vmatprep.mubr.f32.mxu0 0.0
  %6785 = vmatmul.mubr.f32.gmra.mrb[0].mxu0 %v6080
  %v6786 = vpop.f32.mrb[0].mxu0
  %v6787 = vadd.f32 %v6103, %v6786
  %v6788 = vpop.f32.mrb[0].mxu0
  %6789 = vmatprep.mubr.f32.mxu0 0.0
  %6790 = vmatmul.mubr.f32.gmra.mrb[0].mxu0 %v6081
  %v6791 = vpop.f32.mrb[0].mxu0
  %v6792 = vadd.f32 %v6103, %v6791
  %v6793 = vpop.f32.mrb[0].mxu0
  %6794 = vdwg.mxu0
  %6795 = vst.msk [vmem:[%s6] sm:$0xff] %vm157, %v6172
  %6796 = vst.msk [vmem:[%s6 + $0x8] sm:$0xff] %vm157, %v6177
  %6797 = vst.msk [vmem:[%s6 + $0x10] sm:$0xff] %vm157, %v6182
  %6798 = vst.msk [vmem:[%s6 + $0x18] sm:$0xff] %vm157, %v6187
  %6799 = vst.msk [vmem:[%s6 + $0x20] sm:$0xff] %vm157, %v6192
  %6800 = vst.msk [vmem:[%s6 + $0x28] sm:$0xff] %vm157, %v6197
  %6801 = vst.msk [vmem:[%s6 + $0x30] sm:$0xff] %vm157, %v6202
  %6802 = vst.msk [vmem:[%s6 + $0x38] sm:$0xff] %vm157, %v6207
  %6803 = vst.msk [vmem:[%s6 + $0x40] sm:$0xff] %vm157, %v6212
  %6804 = vst.msk [vmem:[%s6 + $0x48] sm:$0xff] %vm157, %v6217
  %6805 = vst.msk [vmem:[%s6 + $0x50] sm:$0xff] %vm157, %v6222
  %6806 = vst.msk [vmem:[%s6 + $0x58] sm:$0xff] %vm157, %v6227
  %6807 = vst.msk [vmem:[%s6 + $0x60] sm:$0xff] %vm157, %v6232
  %6808 = vst.msk [vmem:[%s6 + $0x68] sm:$0xff] %vm157, %v6237
  %6809 = vst.msk [vmem:[%s6 + $0x70] sm:$0xff] %vm157, %v6242
  %6810 = vst.msk [vmem:[%s6 + $0x78] sm:$0xff] %vm157, %v6247
  %6811 = vst.msk [vmem:[%s6 + $0x80] sm:$0xff] %vm157, %v6252
  %6812 = vst.msk [vmem:[%s6 + $0x88] sm:$0xff] %vm157, %v6257
  %6813 = vst.msk [vmem:[%s6 + $0x90] sm:$0xff] %vm157, %v6262
  %6814 = vst.msk [vmem:[%s6 + $0x98] sm:$0xff] %vm157, %v6267
  %6815 = vst.msk [vmem:[%s6 + $0xa0] sm:$0xff] %vm157, %v6272
  %6816 = vst.msk [vmem:[%s6 + $0xa8] sm:$0xff] %vm157, %v6277
  %6817 = vst.msk [vmem:[%s6 + $0xb0] sm:$0xff] %vm157, %v6282
  %6818 = vst.msk [vmem:[%s6 + $0xb8] sm:$0xff] %vm157, %v6287
  %6819 = vst.msk [vmem:[%s6 + $0xc0] sm:$0xff] %vm157, %v6292
  %6820 = vst.msk [vmem:[%s6 + $0xc8] sm:$0xff] %vm157, %v6297
  %6821 = vst.msk [vmem:[%s6 + $0xd0] sm:$0xff] %vm157, %v6302
  %6822 = vst.msk [vmem:[%s6 + $0xd8] sm:$0xff] %vm157, %v6307
  %6823 = vst.msk [vmem:[%s6 + $0xe0] sm:$0xff] %vm157, %v6312
  %6824 = vst.msk [vmem:[%s6 + $0xe8] sm:$0xff] %vm157, %v6317
  %6825 = vst.msk [vmem:[%s6 + $0xf0] sm:$0xff] %vm157, %v6322
  %6826 = vst.msk [vmem:[%s6 + $0xf8] sm:$0xff] %vm157, %v6327
  %6827 = vst.msk [vmem:[%s6 + $0x100] sm:$0xff] %vm157, %v6332
  %6828 = vst.msk [vmem:[%s6 + $0x108] sm:$0xff] %vm157, %v6337
  %6829 = vst.msk [vmem:[%s6 + $0x110] sm:$0xff] %vm157, %v6342
  %6830 = vst.msk [vmem:[%s6 + $0x118] sm:$0xff] %vm157, %v6347
  %6831 = vst.msk [vmem:[%s6 + $0x120] sm:$0xff] %vm157, %v6352
  %6832 = vst.msk [vmem:[%s6 + $0x128] sm:$0xff] %vm157, %v6357
  %6833 = vst.msk [vmem:[%s6 + $0x130] sm:$0xff] %vm157, %v6362
  %6834 = vst.msk [vmem:[%s6 + $0x138] sm:$0xff] %vm157, %v6367
  %6835 = vst.msk [vmem:[%s6 + $0x140] sm:$0xff] %vm157, %v6372
  %6836 = vst.msk [vmem:[%s6 + $0x148] sm:$0xff] %vm157, %v6377
  %6837 = vst.msk [vmem:[%s6 + $0x150] sm:$0xff] %vm157, %v6382
  %6838 = vst.msk [vmem:[%s6 + $0x158] sm:$0xff] %vm157, %v6387
  %6839 = vst.msk [vmem:[%s6 + $0x160] sm:$0xff] %vm157, %v6392
  %6840 = vst.msk [vmem:[%s6 + $0x168] sm:$0xff] %vm157, %v6397
  %6841 = vst.msk [vmem:[%s6 + $0x170] sm:$0xff] %vm157, %v6402
  %6842 = vst.msk [vmem:[%s6 + $0x178] sm:$0xff] %vm157, %v6407
  %6843 = vst.msk [vmem:[%s6 + $0x180] sm:$0xff] %vm157, %v6412
  %6844 = vst.msk [vmem:[%s6 + $0x188] sm:$0xff] %vm157, %v6417
  %6845 = vst.msk [vmem:[%s6 + $0x190] sm:$0xff] %vm157, %v6422
  %6846 = vst.msk [vmem:[%s6 + $0x198] sm:$0xff] %vm157, %v6427
  %6847 = vst.msk [vmem:[%s6 + $0x1a0] sm:$0xff] %vm157, %v6432
  %6848 = vst.msk [vmem:[%s6 + $0x1a8] sm:$0xff] %vm157, %v6437
  %6849 = vst.msk [vmem:[%s6 + $0x1b0] sm:$0xff] %vm157, %v6442
  %6850 = vst.msk [vmem:[%s6 + $0x1b8] sm:$0xff] %vm157, %v6447
  %6851 = vst.msk [vmem:[%s6 + $0x1c0] sm:$0xff] %vm157, %v6452
  %6852 = vst.msk [vmem:[%s6 + $0x1c8] sm:$0xff] %vm157, %v6457
  %6853 = vst.msk [vmem:[%s6 + $0x1d0] sm:$0xff] %vm157, %v6462
  %6854 = vst.msk [vmem:[%s6 + $0x1d8] sm:$0xff] %vm157, %v6467
  %6855 = vst.msk [vmem:[%s6 + $0x1e0] sm:$0xff] %vm157, %v6472
  %6856 = vst.msk [vmem:[%s6 + $0x1e8] sm:$0xff] %vm157, %v6477
  %6857 = vst.msk [vmem:[%s6 + $0x1f0] sm:$0xff] %vm157, %v6482
  %6858 = vst.msk [vmem:[%s6 + $0x1f8] sm:$0xff] %vm157, %v6487
  %6859 = vst.msk [vmem:[%s6 + $0x200] sm:$0xff] %vm157, %v6492
  %6860 = vst.msk [vmem:[%s6 + $0x208] sm:$0xff] %vm157, %v6497
  %6861 = vst.msk [vmem:[%s6 + $0x210] sm:$0xff] %vm157, %v6502
  %6862 = vst.msk [vmem:[%s6 + $0x218] sm:$0xff] %vm157, %v6507
  %6863 = vst.msk [vmem:[%s6 + $0x220] sm:$0xff] %vm157, %v6512
  %6864 = vst.msk [vmem:[%s6 + $0x228] sm:$0xff] %vm157, %v6517
  %6865 = vst.msk [vmem:[%s6 + $0x230] sm:$0xff] %vm157, %v6522
  %6866 = vst.msk [vmem:[%s6 + $0x238] sm:$0xff] %vm157, %v6527
  %6867 = vst.msk [vmem:[%s6 + $0x240] sm:$0xff] %vm157, %v6532
  %6868 = vst.msk [vmem:[%s6 + $0x248] sm:$0xff] %vm157, %v6537
  %6869 = vst.msk [vmem:[%s6 + $0x250] sm:$0xff] %vm157, %v6542
  %6870 = vst.msk [vmem:[%s6 + $0x258] sm:$0xff] %vm157, %v6547
  %6871 = vst.msk [vmem:[%s6 + $0x260] sm:$0xff] %vm157, %v6552
  %6872 = vst.msk [vmem:[%s6 + $0x268] sm:$0xff] %vm157, %v6557
  %6873 = vst.msk [vmem:[%s6 + $0x270] sm:$0xff] %vm157, %v6562
  %6874 = vst.msk [vmem:[%s6 + $0x278] sm:$0xff] %vm157, %v6567
  %6875 = vst.msk [vmem:[%s6 + $0x280] sm:$0xff] %vm157, %v6572
  %6876 = vst.msk [vmem:[%s6 + $0x288] sm:$0xff] %vm157, %v6577
  %6877 = vst.msk [vmem:[%s6 + $0x290] sm:$0xff] %vm157, %v6582
  %6878 = vst.msk [vmem:[%s6 + $0x298] sm:$0xff] %vm157, %v6587
  %6879 = vst.msk [vmem:[%s6 + $0x2a0] sm:$0xff] %vm157, %v6592
  %6880 = vst.msk [vmem:[%s6 + $0x2a8] sm:$0xff] %vm157, %v6597
  %6881 = vst.msk [vmem:[%s6 + $0x2b0] sm:$0xff] %vm157, %v6602
  %6882 = vst.msk [vmem:[%s6 + $0x2b8] sm:$0xff] %vm157, %v6607
  %6883 = vst.msk [vmem:[%s6 + $0x2c0] sm:$0xff] %vm157, %v6612
  %6884 = vst.msk [vmem:[%s6 + $0x2c8] sm:$0xff] %vm157, %v6617
  %6885 = vst.msk [vmem:[%s6 + $0x2d0] sm:$0xff] %vm157, %v6622
  %6886 = vst.msk [vmem:[%s6 + $0x2d8] sm:$0xff] %vm157, %v6627
  %6887 = vst.msk [vmem:[%s6 + $0x2e0] sm:$0xff] %vm157, %v6632
  %6888 = vst.msk [vmem:[%s6 + $0x2e8] sm:$0xff] %vm157, %v6637
  %6889 = vst.msk [vmem:[%s6 + $0x2f0] sm:$0xff] %vm157, %v6642
  %6890 = vst.msk [vmem:[%s6 + $0x2f8] sm:$0xff] %vm157, %v6647
  %6891 = vst.msk [vmem:[%s6 + $0x300] sm:$0xff] %vm157, %v6652
  %6892 = vst.msk [vmem:[%s6 + $0x308] sm:$0xff] %vm157, %v6657
  %6893 = vst.msk [vmem:[%s6 + $0x310] sm:$0xff] %vm157, %v6662
  %6894 = vst.msk [vmem:[%s6 + $0x318] sm:$0xff] %vm157, %v6667
  %6895 = vst.msk [vmem:[%s6 + $0x320] sm:$0xff] %vm157, %v6672
  %6896 = vst.msk [vmem:[%s6 + $0x328] sm:$0xff] %vm157, %v6677
  %6897 = vst.msk [vmem:[%s6 + $0x330] sm:$0xff] %vm157, %v6682
  %6898 = vst.msk [vmem:[%s6 + $0x338] sm:$0xff] %vm157, %v6687
  %6899 = vst.msk [vmem:[%s6 + $0x340] sm:$0xff] %vm157, %v6692
  %6900 = vst.msk [vmem:[%s6 + $0x348] sm:$0xff] %vm157, %v6697
  %6901 = vst.msk [vmem:[%s6 + $0x350] sm:$0xff] %vm157, %v6702
  %6902 = vst.msk [vmem:[%s6 + $0x358] sm:$0xff] %vm157, %v6707
  %6903 = vst.msk [vmem:[%s6 + $0x360] sm:$0xff] %vm157, %v6712
  %6904 = vst.msk [vmem:[%s6 + $0x368] sm:$0xff] %vm157, %v6717
  %6905 = vst.msk [vmem:[%s6 + $0x370] sm:$0xff] %vm157, %v6722
  %6906 = vst.msk [vmem:[%s6 + $0x378] sm:$0xff] %vm157, %v6727
  %6907 = vst.msk [vmem:[%s6 + $0x380] sm:$0xff] %vm157, %v6732
  %6908 = vst.msk [vmem:[%s6 + $0x388] sm:$0xff] %vm157, %v6737
  %6909 = vst.msk [vmem:[%s6 + $0x390] sm:$0xff] %vm157, %v6742
  %6910 = vst.msk [vmem:[%s6 + $0x398] sm:$0xff] %vm157, %v6747
  %6911 = vst.msk [vmem:[%s6 + $0x3a0] sm:$0xff] %vm157, %v6752
  %6912 = vst.msk [vmem:[%s6 + $0x3a8] sm:$0xff] %vm157, %v6757
  %6913 = vst.msk [vmem:[%s6 + $0x3b0] sm:$0xff] %vm157, %v6762
  %6914 = vst.msk [vmem:[%s6 + $0x3b8] sm:$0xff] %vm157, %v6767
  %6915 = vst.msk [vmem:[%s6 + $0x3c0] sm:$0xff] %vm157, %v6772
  %6916 = vst.msk [vmem:[%s6 + $0x3c8] sm:$0xff] %vm157, %v6777
  %6917 = vst.msk [vmem:[%s6 + $0x3d0] sm:$0xff] %vm157, %v6782
  %6918 = vst.msk [vmem:[%s6 + $0x3d8] sm:$0xff] %vm157, %v6787
  %6919 = vst.msk [vmem:[%s6 + $0x3e0] sm:$0xff] %vm157, %v6792
  // Predicated region
  $region26: #{autoencoder_forward.1} parent=0 // pred_check
    _
  $region27: #{autoencoder_forward.1} parent=0 // pred_check_branch
    %6921 = sbr.rel (0) target = $region29
  $region28: #{autoencoder_forward.1} parent=0 // pred_region
    _
  $region29: #{autoencoder_forward.1} parent=0 // pred_fallthru
    _
  // Predicated region
  $region30: #{autoencoder_forward.1} parent=0 // pred_check
    _
  $region31: #{autoencoder_forward.1} parent=0 // pred_check_branch
    %6923 = sbr.rel (0) target = $region33
  $region32: #{autoencoder_forward.1} parent=0 // pred_region
    _
  $region33: #{autoencoder_forward.1} parent=0 // pred_fallthru
    _

</llo_original>
